<compile_context>
chip_gen: v7x
topology: tpu7x:2x2x1
jax: 0.10.0
libtpu: 0.0.40
codegen_flags: <defaults>
</compile_context>

<pallas_src>
import functools

import numpy as np

import jax
import jax.numpy as jnp
from jax import lax
from jax.experimental import pallas as pl
from jax.experimental.pallas import tpu as pltpu


# --------------------------------------------------------------------------- vmem util
def _tpu_vmem_bytes():
    """Physical VMEM of the local TPU generation (guarded; fallback = v7x's 64 MiB)."""
    default = 64 * 1024 * 1024
    try:
        info = pltpu.get_tpu_info()
        v = getattr(info, "vmem_capacity_bytes", None)
        if v:
            return int(v)
    except Exception:
        pass
    return default


def _vmem_limit_bytes(estimate):
    phys = _tpu_vmem_bytes()
    hi = max(phys - (4 << 20), 16 << 20)
    return int(min(hi, max(32 << 20, 2 * int(estimate))))


def _col_tile(m, bytes_per_col, budget):
    """Largest lane tile that is a multiple of 128, divides m and fits the budget."""
    if m % 128 != 0:
        # TODO(synk): ragged widths should use pl.cdiv + an in-kernel lane mask; the
        # shapes used here are 128-aligned so a single full-width block is fine.
        return m
    t = 128
    while m % (t * 2) == 0 and (t * 2) * bytes_per_col <= budget:
        t *= 2
    return t


# ----------------------------------------------------------------------------- kernels
def _sparse_ae_kernel(x_ref, sw_ref, *refs, n_enc, n_dec):
    """Fused DiagPruneLinear + AutoEncoder on one (t, column-tile) block.  Layout is
    (features, columns) with the flattened B*H*W axis on lanes (lane-dense stores);
    weights are host-pre-cast bf16; intermediate activations never leave VMEM/vregs."""
    enc = [(refs[2 * i], refs[2 * i + 1]) for i in range(n_enc)]
    off = 2 * n_enc
    dec = [(refs[off + 2 * i], refs[off + 2 * i + 1]) for i in range(n_dec)]
    off += 2 * n_dec
    sp_ref, en_ref, de_ref = refs[off], refs[off + 1], refs[off + 2]

    sp = x_ref[0] * sw_ref[...]                      # DiagPruneLinear: diagonal scale
    sp_ref[0] = sp

    h = sp
    for w_ref, b_ref in enc:                         # encoder: Linear + ReLU
        h = jnp.dot(w_ref[...], h.astype(jnp.bfloat16),
                    preferred_element_type=jnp.float32) + b_ref[...]
        h = jnp.maximum(h, 0.0)
    en_ref[0] = h

    d = h
    # TODO(synk): the reference AutoEncoder may omit the activation on the final
    # decoder layer; ReLU is kept on every layer to match the previous implementation.
    for w_ref, b_ref in dec:                         # decoder: Linear + ReLU
        d = jnp.dot(w_ref[...], d.astype(jnp.bfloat16),
                    preferred_element_type=jnp.float32) + b_ref[...]
        d = jnp.maximum(d, 0.0)
    de_ref[0] = d


def _conv_lstm_branch_kernel(x_ref, mask_ref, *refs, num_layers, chs, c_ins,
                             w_dim, k_max, t_len, unroll):
    """One ConvLSTM branch per grid step (grid=(num_branches,), 'parallel' -> one
    branch per TensorCore on v7x).  All layers and all timesteps run inside this single
    grid step:
      * h/c state live as fori_loop carries (never touch HBM),
      * each timestep builds ONE (k_max^2*(c_in+ch), M) bf16 tap matrix in VMEM
        scratch (pltpu.roll on lanes + zero-padding mask per tap, f32 math, cast at
        the store) and issues ONE MXU matmul per layer against the host-packed fused
        gate weight instead of 2*k*k tiny-K dots,
      * only the final cell state of the last layer is written back to HBM (the
        per-timestep h sequence is dead in the reference forward and never emitted).
    Branches with k < k_max were zero-padded on the host so one body serves all."""
    kk = k_max * k_max
    p = k_max // 2
    m = x_ref.shape[-1]

    w_refs = [refs[2 * l] for l in range(num_layers)]
    b_refs = [refs[2 * l + 1] for l in range(num_layers)]
    c_out_ref = refs[2 * num_layers]
    tap_refs = list(refs[2 * num_layers + 1:])

    def fill_taps(tap_ref, val, row0, c):
        # Write the kk shifted (and zero-pad-masked) copies of `val` into consecutive
        # row blocks of the bf16 tap matrix.  Roll is XLU work; the mask multiply
        # stays f32 (v5e has no bf16 VALU); the bf16 cast happens at the store.
        for dy in range(k_max):
            for dx in range(k_max):
                j = dy * k_max + dx
                d = (dy - p) * w_dim + (dx - p)       # flat lane displacement
                if d == 0:
                    sh = val                          # centre tap: mask is all-ones
                else:
                    sh = pltpu.roll(val, (-d) % m, axis=1) * mask_ref[j]
                tap_ref[row0 + j * c: row0 + (j + 1) * c, :] = sh.astype(jnp.bfloat16)

    def step(t, carry):
        hs, cs = carry
        inp = x_ref[t]                                # (c_in0, M) f32
        new_hs, new_cs = [], []
        for l in range(num_layers):
            c_in, ch = c_ins[l], chs[l]
            tap_ref = tap_refs[l]
            fill_taps(tap_ref, inp, 0, c_in)          # x taps
            fill_taps(tap_ref, hs[l], kk * c_in, ch)  # h taps
            gates = jnp.dot(w_refs[l][0], tap_ref[...],
                            preferred_element_type=jnp.float32) + b_refs[l][0]
            # Gate split falls on the leading (sublane-major) axis at multiples of ch.
            sig = jax.nn.sigmoid(gates[:3 * ch])
            i_g = sig[0:ch]
            f_g = sig[ch:2 * ch]
            o_g = sig[2 * ch:3 * ch]
            g_g = jnp.tanh(gates[3 * ch:])
            c_new = f_g * cs[l] + i_g * g_g           # f32 elementwise
            h_new = o_g * jnp.tanh(c_new)
            new_hs.append(h_new)
            new_cs.append(c_new)
            inp = h_new                               # feeds the next stacked layer
        return tuple(new_hs), tuple(new_cs)

    hs0 = tuple(jnp.zeros((chs[l], m), jnp.float32) for l in range(num_layers))
    cs0 = tuple(jnp.zeros((chs[l], m), jnp.float32) for l in range(num_layers))
    _hs, cs = lax.fori_loop(0, t_len, step, (hs0, cs0), unroll=unroll)
    c_out_ref[0] = cs[-1]


def _head_kernel(x_ref, w1_ref, b1_ref, w2_ref, b2_ref, o_ref):
    """Fused Stack2Linear: Linear -> ReLU -> Linear; hidden activation stays in VMEM;
    weights are host-pre-cast bf16; output store is lane-dense (out, columns)."""
    h1 = jnp.dot(w1_ref[...], x_ref[...].astype(jnp.bfloat16),
                 preferred_element_type=jnp.float32) + b1_ref[...]
    h1 = jnp.maximum(h1, 0.0)
    o_ref[...] = jnp.dot(w2_ref[...], h1.astype(jnp.bfloat16),
                         preferred_element_type=jnp.float32) + b2_ref[...]


# ----------------------------------------------------------------------------- helpers
def _conv_masks(h_dim, w_dim, bsz, k_max):
    """masks[J, 0, s] == 1 iff the source pixel at displacement (dy, dx) from flat
    position s is in-bounds, J = (dy + p)*k_max + (dx + p).  The mask only depends on
    the displacement, not on the branch kernel size, so one set serves all branches."""
    assert k_max % 2 == 1, "ConvLSTM 'same' padding assumes odd kernel sizes"
    p = k_max // 2
    yy, xx = np.meshgrid(np.arange(h_dim), np.arange(w_dim), indexing="ij")
    rows = []
    for dy in range(-p, p + 1):
        for dx in range(-p, p + 1):
            valid = ((yy + dy >= 0) & (yy + dy < h_dim) &
                     (xx + dx >= 0) & (xx + dx < w_dim))
            # Wrap-around safety invariant: every in-bounds source stays inside the
            # same image after the flat lane displacement, so the lane roll only ever
            # wraps positions that this mask zeroes.
            s2 = yy * w_dim + xx + dy * w_dim + dx
            assert np.all(~valid | ((s2 >= 0) & (s2 < h_dim * w_dim)))
            rows.append(np.tile(valid.reshape(-1), bsz))
    m = np.stack(rows, 0).astype(np.float32)
    return jnp.asarray(m.reshape(k_max * k_max, 1, bsz * h_dim * w_dim))


# ----------------------------------------------------------------------------- wrappers
def sparse_autoencoder(x_3d, sparse_w, encoder, decoder):
    """x_3d: (T, C_in, B*H*W).  Emits sparse/en/de in the same (T, C, B*H*W) layout so
    the encoder output feeds the ConvLSTM directly (no re-layout pass over HBM)."""
    t_len, c_in, m = x_3d.shape
    c_en = encoder[-1][0].shape[0]
    c_de = decoder[-1][0].shape[0]

    widths = [c_in] + [w.shape[0] for w, _ in encoder] + [w.shape[0] for w, _ in decoder]
    per_col = 4 * (2 * (2 * c_in + c_en + c_de) + 3 * max(widths))
    tc = _col_tile(m, per_col, _tpu_vmem_bytes() // 4)
    w_bytes = 2 * sum(int(w.size) * 2 + int(b.size) * 4
                      for w, b in list(encoder) + list(decoder))
    est = per_col * tc + w_bytes

    in_specs = [pl.BlockSpec((1, c_in, tc), lambda t, j: (t, 0, j)),
                pl.BlockSpec((c_in, 1), lambda t, j: (0, 0))]
    args = [x_3d, sparse_w]
    for w, b in list(encoder) + list(decoder):
        in_specs.append(pl.BlockSpec(w.shape, lambda t, j: (0, 0)))
        in_specs.append(pl.BlockSpec((w.shape[0], 1), lambda t, j: (0, 0)))
        args.append(w)
        args.append(b)

    out_specs = [pl.BlockSpec((1, c_in, tc), lambda t, j: (t, 0, j)),
                 pl.BlockSpec((1, c_en, tc), lambda t, j: (t, 0, j)),
                 pl.BlockSpec((1, c_de, tc), lambda t, j: (t, 0, j))]
    out_shapes = (jax.ShapeDtypeStruct((t_len, c_in, m), jnp.float32),
                  jax.ShapeDtypeStruct((t_len, c_en, m), jnp.float32),
                  jax.ShapeDtypeStruct((t_len, c_de, m), jnp.float32))

    return pl.pallas_call(
        functools.partial(_sparse_ae_kernel, n_enc=len(encoder), n_dec=len(decoder)),
        out_shape=out_shapes,
        grid_spec=pltpu.PrefetchScalarGridSpec(
            num_scalar_prefetch=0,
            grid=(t_len, m // tc),
            in_specs=in_specs,
            out_specs=out_specs),
        compiler_params=pltpu.CompilerParams(
            dimension_semantics=("parallel", "parallel"),
            vmem_limit_bytes=_vmem_limit_bytes(est)),
    )(*args)


def conv_lstm_fused(x_seq, conv_packed, masks, w_dim, k_max):
    """x_seq: (T, C_in, B*H*W) straight from the AE kernel.  Returns the final cell
    state of the last layer for every branch: (num_branches, Ch, B*H*W)."""
    t_len, c_in0, m = x_seq.shape
    kk = k_max * k_max
    num_layers = len(conv_packed)
    nb = conv_packed[0]["w"].shape[0]

    chs, c_ins, ks = [], [], []
    c_in = c_in0
    for l in range(num_layers):
        four_ch, k_cols = conv_packed[l]["w"].shape[1], conv_packed[l]["w"].shape[2]
        ch = four_ch // 4
        assert k_cols == kk * (c_in + ch), "fused ConvLSTM weight packing mismatch"
        chs.append(ch)
        c_ins.append(c_in)
        ks.append(k_cols)
        c_in = ch

    in_specs = [
        pl.BlockSpec((t_len, c_in0, m), lambda b: (0, 0, 0)),   # full sequence resident
        pl.BlockSpec((kk, 1, m), lambda b: (0, 0, 0)),          # zero-pad masks resident
    ]
    args = [x_seq, masks]
    for l in range(num_layers):
        in_specs.append(pl.BlockSpec((1, 4 * chs[l], ks[l]), lambda b: (b, 0, 0)))
        in_specs.append(pl.BlockSpec((1, 4 * chs[l], 1), lambda b: (b, 0, 0)))
        args.append(conv_packed[l]["w"])
        args.append(conv_packed[l]["b"])

    est = (2 * t_len * c_in0 * m * 4 + 2 * kk * m * 4
           + sum(4 * 4 * chs[l] * ks[l] * 2 for l in range(num_layers))
           + sum(ks[l] * m * 2 for l in range(num_layers))
           + sum(8 * chs[l] * m * 4 for l in range(num_layers))
           + 2 * chs[-1] * m * 4)

    return pl.pallas_call(
        functools.partial(_conv_lstm_branch_kernel, num_layers=num_layers,
                          chs=tuple(chs), c_ins=tuple(c_ins), w_dim=w_dim,
                          k_max=k_max, t_len=t_len, unroll=bool(t_len <= 8)),
        out_shape=jax.ShapeDtypeStruct((nb, chs[-1], m), jnp.float32),
        grid_spec=pltpu.PrefetchScalarGridSpec(
            num_scalar_prefetch=0,
            grid=(nb,),
            in_specs=in_specs,
            out_specs=pl.BlockSpec((1, chs[-1], m), lambda b: (b, 0, 0)),
            scratch_shapes=[pltpu.VMEM((ks[l], m), jnp.bfloat16)
                            for l in range(num_layers)]),
        compiler_params=pltpu.CompilerParams(
            dimension_semantics=("parallel",),      # one branch per TensorCore on v7x
            vmem_limit_bytes=_vmem_limit_bytes(est)),
    )(*args)


def fc_head(x_cf, fc1, fc2):
    """x_cf: (Ch*len(kernel_sizes), B*H*W)."""
    c_cat, m = x_cf.shape
    w1, b1 = fc1
    w2, b2 = fc2
    fh, no = w1.shape[0], w2.shape[0]

    per_col = 4 * (2 * (c_cat + no) + 2 * fh)
    tc = _col_tile(m, per_col, _tpu_vmem_bytes() // 4)
    est = per_col * tc + 4 * (int(w1.size) + int(w2.size))

    return pl.pallas_call(
        _head_kernel,
        out_shape=jax.ShapeDtypeStruct((no, m), jnp.float32),
        grid_spec=pltpu.PrefetchScalarGridSpec(
            num_scalar_prefetch=0,
            grid=(m // tc,),
            in_specs=[pl.BlockSpec((c_cat, tc), lambda i: (0, i)),
                      pl.BlockSpec((fh, c_cat), lambda i: (0, 0)),
                      pl.BlockSpec((fh, 1), lambda i: (0, 0)),
                      pl.BlockSpec((no, fh), lambda i: (0, 0)),
                      pl.BlockSpec((no, 1), lambda i: (0, 0))],
            out_specs=pl.BlockSpec((no, tc), lambda i: (0, i))),
        compiler_params=pltpu.CompilerParams(
            dimension_semantics=("parallel",),
            vmem_limit_bytes=_vmem_limit_bytes(est)),
    )(x_cf, w1, b1, w2, b2)


# ----------------------------------------------------------------------------- model
def deeplatte_forward(prepared, x, kernel_sizes):
    """x: (B, T, C, H, W) float32 (PyTorch input layout); `prepared` from prepare_params."""
    bsz, t_len, c_in, hh, ww = x.shape
    m_sp = bsz * hh * ww
    k_max = max(kernel_sizes)

    # Channels-second, spatially-flattened (T, C, B*H*W) layout with (b, y, x) columns
    # on lanes: exactly the ConvLSTM input layout, so the AE output feeds the
    # recurrence with no intermediate re-layout pass.
    x_3d = jnp.transpose(x, (1, 2, 0, 3, 4)).reshape(t_len, c_in, m_sp)

    sparse_3d, en_3d, de_3d = sparse_autoencoder(
        x_3d, prepared["sparse_w"], prepared["encoder"], prepared["decoder"])
    c_en, c_de = en_3d.shape[1], de_3d.shape[1]

    # PyTorch-contract output layouts (boundary permutes only).
    sparse_x = jnp.transpose(sparse_3d.reshape(t_len, c_in, bsz, hh, ww),
                             (2, 0, 3, 4, 1))                        # (B,T,H,W,C)
    de_x = jnp.transpose(de_3d.reshape(t_len, c_de, bsz, hh, ww), (2, 0, 3, 4, 1))
    en_x = jnp.transpose(en_3d.reshape(t_len, c_en, bsz, hh, ww), (2, 0, 1, 3, 4))

    # Fused multi-branch / multi-layer ConvLSTM: single launch, one branch per grid
    # step ("parallel" -> v7x TC sharding), final cell state of the last layer only.
    masks = _conv_masks(hh, ww, bsz, k_max)
    c_last = conv_lstm_fused(en_3d, prepared["conv"], masks, ww, k_max)

    ch_last = c_last.shape[1]
    cat_cf = c_last.reshape(len(kernel_sizes) * ch_last, m_sp)       # branch-major cat
    conv_lstm_out = jnp.transpose(cat_cf.reshape(-1, bsz, hh, ww), (1, 0, 2, 3))

    out_cf = fc_head(cat_cf, prepared["fc1"], prepared["fc2"])       # (out, B*H*W)
    out = jnp.transpose(out_cf.reshape(-1, bsz, hh, ww), (1, 0, 2, 3))

    return out, sparse_x, en_x, de_x, conv_lstm_out


# ----------------------------------------------------------------------------- params
def init_params(key, in_features, en_features, de_features, h_channels,
                kernel_sizes, num_layers, fc_h_features, out_features):
    keys = iter(jax.random.split(key, 256))

    def dense(shape):
        return 0.1 * jax.random.normal(next(keys), shape, jnp.float32)

    if not isinstance(h_channels, list):
        h_channels = [h_channels] * num_layers

    params = {"sparse_w": dense((in_features,))}

    enc, prev = [], in_features
    for f in en_features:
        enc.append((dense((f, prev)), dense((f,))))      # (out, in) convention
        prev = f
    params["encoder"] = enc

    dec, prev = [], en_features[-1]
    for f in de_features:
        dec.append((dense((f, prev)), dense((f,))))
        prev = f
    params["decoder"] = dec

    convs = []
    for k in kernel_sizes:
        layers, cin = [], en_features[-1]
        for li in range(num_layers):
            ch = h_channels[li]
            layers.append({
                "wx": dense((k * k, 4 * ch, cin)),        # input-to-gate conv taps
                "wh": dense((k * k, 4 * ch, ch)),         # recurrent conv taps
                "b": dense((4 * ch,)),
            })
            cin = ch
        convs.append(layers)
    params["conv_lstm"] = convs

    params["fc1"] = (dense((fc_h_features, h_channels[-1] * len(kernel_sizes))),
                     dense((fc_h_features,)))
    params["fc2"] = (dense((out_features, fc_h_features)), dense((out_features,)))
    return params


def prepare_params(params, kernel_sizes):
    """Host-side (outside jit) repack: bf16 pre-cast of all MXU weights, (out, 1)
    biases, and the per-branch ConvLSTM tap weights fused into a single lane-dense
    (num_branches, 4*ch, k_max^2*(c_in+ch)) gate matrix.  Branches with k < k_max are
    padded with zero tap weights so one kernel body serves every kernel size."""
    k_max = max(kernel_sizes)
    kk = k_max * k_max
    p_max = k_max // 2
    nb = len(kernel_sizes)

    def lin(wb):
        w, b = wb
        return (jnp.asarray(w, jnp.bfloat16),
                jnp.asarray(b, jnp.float32).reshape(-1, 1))

    prep = {
        "sparse_w": jnp.asarray(params["sparse_w"], jnp.float32).reshape(-1, 1),
        "encoder": [lin(wb) for wb in params["encoder"]],
        "decoder": [lin(wb) for wb in params["decoder"]],
        "fc1": lin(params["fc1"]),
        "fc2": lin(params["fc2"]),
    }

    num_layers = len(params["conv_lstm"][0])
    conv = []
    for l in range(num_layers):
        wx0 = np.asarray(params["conv_lstm"][0][l]["wx"])
        ch, c_in = wx0.shape[1] // 4, wx0.shape[2]
        k_cols = kk * (c_in + ch)
        w_all = np.zeros((nb, 4 * ch, k_cols), np.float32)
        b_all = np.zeros((nb, 4 * ch, 1), np.float32)
        for bi, k in enumerate(kernel_sizes):
            assert k % 2 == 1 and k <= k_max
            p = k // 2
            layer = params["conv_lstm"][bi][l]
            wx = np.asarray(layer["wx"])              # (k*k, 4*ch, c_in)
            wh = np.asarray(layer["wh"])              # (k*k, 4*ch, ch)
            b_all[bi, :, 0] = np.asarray(layer["b"])
            for ty in range(k):
                for tx in range(k):
                    j_dst = (ty - p + p_max) * k_max + (tx - p + p_max)
                    w_all[bi, :, j_dst * c_in:(j_dst + 1) * c_in] = wx[ty * k + tx]
                    h0 = kk * c_in + j_dst * ch
                    w_all[bi, :, h0:h0 + ch] = wh[ty * k + tx]
        conv.append({"w": jnp.asarray(w_all, jnp.bfloat16),
                     "b": jnp.asarray(b_all, jnp.float32)})
    prep["conv"] = conv
    return prep


# ----------------------------------------------------------------------------- main
if __name__ == "__main__":
    B, T, C, H, W = 2, 4, 4, 8, 8
    en_features = [16, 8]
    de_features = [16, 4]
    h_channels = 8
    kernel_sizes = [3, 5]
    num_layers = 1
    fc_h_features = 16
    out_features = 1

    key = jax.random.PRNGKey(0)
    pkey, xkey = jax.random.split(key)
    params = init_params(pkey, C, en_features, de_features, h_channels,
                         kernel_sizes, num_layers, fc_h_features, out_features)
    prepared = prepare_params(params, kernel_sizes)
    x = jax.random.normal(xkey, (B, T, C, H, W), jnp.float32)

    fwd = jax.jit(functools.partial(deeplatte_forward, kernel_sizes=tuple(kernel_sizes)))
    out, sparse_x, en_x, de_x, conv_lstm_out = fwd(prepared, x)
    jax.block_until_ready(out)

    assert out.shape == (B, out_features, H, W)
    assert sparse_x.shape == (B, T, H, W, C)
    assert en_x.shape == (B, T, en_features[-1], H, W)
    assert de_x.shape == (B, T, H, W, de_features[-1])
    assert conv_lstm_out.shape == (B, h_channels * len(kernel_sizes), H, W)
    assert bool(jnp.all(jnp.isfinite(out)))
    print("KERNEL_OK")
</pallas_src>

<mosaic_0001>
module attributes {stable_mosaic.version = 11 : i64} {
  func.func @_sparse_ae_kernel(%arg0: i32, %arg1: i32, %arg2: memref<1x4x128xf32, #tpu.memory_space<vmem>>, %arg3: memref<4x1xf32, #tpu.memory_space<vmem>>, %arg4: memref<16x4xbf16, #tpu.memory_space<vmem>>, %arg5: memref<16x1xf32, #tpu.memory_space<vmem>>, %arg6: memref<8x16xbf16, #tpu.memory_space<vmem>>, %arg7: memref<8x1xf32, #tpu.memory_space<vmem>>, %arg8: memref<16x8xbf16, #tpu.memory_space<vmem>>, %arg9: memref<16x1xf32, #tpu.memory_space<vmem>>, %arg10: memref<4x16xbf16, #tpu.memory_space<vmem>>, %arg11: memref<4x1xf32, #tpu.memory_space<vmem>>, %arg12: memref<1x4x128xf32, #tpu.memory_space<vmem>>, %arg13: memref<1x8x128xf32, #tpu.memory_space<vmem>>, %arg14: memref<1x4x128xf32, #tpu.memory_space<vmem>>) attributes {dimension_semantics = [#tpu.dimension_semantics<parallel>, #tpu.dimension_semantics<parallel>], iteration_bounds = array<i64: 4, 1>, scalar_prefetch = 0 : i64, scratch_operands = 0 : i64, tpu.core_type = #tpu.core_type<tc>, window_params = [{transform_indices = @transform_0, window_bounds = array<i64: 1, 4, 128>}, {pipeline_mode = #tpu.pipeline_mode<synchronous>, transform_indices = @transform_1, window_bounds = array<i64: 4, 1>}, {pipeline_mode = #tpu.pipeline_mode<synchronous>, transform_indices = @transform_2, window_bounds = array<i64: 16, 4>}, {pipeline_mode = #tpu.pipeline_mode<synchronous>, transform_indices = @transform_3, window_bounds = array<i64: 16, 1>}, {pipeline_mode = #tpu.pipeline_mode<synchronous>, transform_indices = @transform_4, window_bounds = array<i64: 8, 16>}, {pipeline_mode = #tpu.pipeline_mode<synchronous>, transform_indices = @transform_5, window_bounds = array<i64: 8, 1>}, {pipeline_mode = #tpu.pipeline_mode<synchronous>, transform_indices = @transform_6, window_bounds = array<i64: 16, 8>}, {pipeline_mode = #tpu.pipeline_mode<synchronous>, transform_indices = @transform_7, window_bounds = array<i64: 16, 1>}, {pipeline_mode = #tpu.pipeline_mode<synchronous>, transform_indices = @transform_8, window_bounds = array<i64: 4, 16>}, {pipeline_mode = #tpu.pipeline_mode<synchronous>, transform_indices = @transform_9, window_bounds = array<i64: 4, 1>}, {transform_indices = @transform_10, window_bounds = array<i64: 1, 4, 128>}, {transform_indices = @transform_11, window_bounds = array<i64: 1, 8, 128>}, {transform_indices = @transform_12, window_bounds = array<i64: 1, 4, 128>}]} {
    %c0 = arith.constant 0 : index
    %c0_0 = arith.constant 0 : index
    %c0_1 = arith.constant 0 : index
    %0 = vector.load %arg2[%c0, %c0_0, %c0_1] : memref<1x4x128xf32, #tpu.memory_space<vmem>>, vector<1x4x128xf32>
    %1 = vector.shape_cast %0 : vector<1x4x128xf32> to vector<4x128xf32>
    %c0_2 = arith.constant 0 : index
    %c0_3 = arith.constant 0 : index
    %2 = vector.load %arg3[%c0_2, %c0_3] : memref<4x1xf32, #tpu.memory_space<vmem>>, vector<4x1xf32>
    %3 = vector.broadcast %2 : vector<4x1xf32> to vector<4x128xf32>
    %4 = arith.mulf %1, %3 : vector<4x128xf32>
    %c0_4 = arith.constant 0 : index
    %c0_5 = arith.constant 0 : index
    %c0_6 = arith.constant 0 : index
    %5 = vector.load %arg12[%c0_4, %c0_5, %c0_6] : memref<1x4x128xf32, #tpu.memory_space<vmem>>, vector<1x4x128xf32>
    %6 = vector.shape_cast %5 : vector<1x4x128xf32> to vector<4x128xf32>
    %7 = vector.shape_cast %4 : vector<4x128xf32> to vector<1x4x128xf32>
    tpu.vector_store %arg12[%c0_4, %c0_5, %c0_6], %7 {strides = array<i32>} : memref<1x4x128xf32, #tpu.memory_space<vmem>>, vector<1x4x128xf32>,
    %c0_7 = arith.constant 0 : index
    %c0_8 = arith.constant 0 : index
    %8 = vector.load %arg4[%c0_7, %c0_8] : memref<16x4xbf16, #tpu.memory_space<vmem>>, vector<16x4xbf16>
    %9 = arith.truncf %4 : vector<4x128xf32> to vector<4x128xbf16>
    %cst = arith.constant dense<0.000000e+00> : vector<16x128xf32>
    %10 = tpu.matmul %8, %9, %cst {dimension_numbers = #tpu.dot_dimension_numbers<[1], [0], [0], [1], [0, 0, 1, 1], [], []>} : vector<16x4xbf16>, vector<4x128xbf16>, vector<16x128xf32> -> vector<16x128xf32>
    %c0_9 = arith.constant 0 : index
    %c0_10 = arith.constant 0 : index
    %11 = vector.load %arg5[%c0_9, %c0_10] : memref<16x1xf32, #tpu.memory_space<vmem>>, vector<16x1xf32>
    %12 = vector.broadcast %11 : vector<16x1xf32> to vector<16x128xf32>
    %13 = arith.addf %10, %12 : vector<16x128xf32>
    %cst_11 = arith.constant 0.000000e+00 : f32
    %14 = vector.broadcast %cst_11 : f32 to vector<16x128xf32>
    %15 = arith.maximumf %13, %14 : vector<16x128xf32>
    %c0_12 = arith.constant 0 : index
    %c0_13 = arith.constant 0 : index
    %16 = vector.load %arg6[%c0_12, %c0_13] : memref<8x16xbf16, #tpu.memory_space<vmem>>, vector<8x16xbf16>
    %17 = arith.truncf %15 : vector<16x128xf32> to vector<16x128xbf16>
    %cst_14 = arith.constant dense<0.000000e+00> : vector<8x128xf32>
    %18 = tpu.matmul %16, %17, %cst_14 {dimension_numbers = #tpu.dot_dimension_numbers<[1], [0], [0], [1], [0, 0, 1, 1], [], []>} : vector<8x16xbf16>, vector<16x128xbf16>, vector<8x128xf32> -> vector<8x128xf32>
    %c0_15 = arith.constant 0 : index
    %c0_16 = arith.constant 0 : index
    %19 = vector.load %arg7[%c0_15, %c0_16] : memref<8x1xf32, #tpu.memory_space<vmem>>, vector<8x1xf32>
    %20 = vector.broadcast %19 : vector<8x1xf32> to vector<8x128xf32>
    %21 = arith.addf %18, %20 : vector<8x128xf32>
    %cst_17 = arith.constant 0.000000e+00 : f32
    %22 = vector.broadcast %cst_17 : f32 to vector<8x128xf32>
    %23 = arith.maximumf %21, %22 : vector<8x128xf32>
    %c0_18 = arith.constant 0 : index
    %c0_19 = arith.constant 0 : index
    %c0_20 = arith.constant 0 : index
    %24 = vector.load %arg13[%c0_18, %c0_19, %c0_20] : memref<1x8x128xf32, #tpu.memory_space<vmem>>, vector<1x8x128xf32>
    %25 = vector.shape_cast %24 : vector<1x8x128xf32> to vector<8x128xf32>
    %26 = vector.shape_cast %23 : vector<8x128xf32> to vector<1x8x128xf32>
    tpu.vector_store %arg13[%c0_18, %c0_19, %c0_20], %26 {strides = array<i32>} : memref<1x8x128xf32, #tpu.memory_space<vmem>>, vector<1x8x128xf32>,
    %c0_21 = arith.constant 0 : index
    %c0_22 = arith.constant 0 : index
    %27 = vector.load %arg8[%c0_21, %c0_22] : memref<16x8xbf16, #tpu.memory_space<vmem>>, vector<16x8xbf16>
    %28 = arith.truncf %23 : vector<8x128xf32> to vector<8x128xbf16>
    %cst_23 = arith.constant dense<0.000000e+00> : vector<16x128xf32>
    %29 = tpu.matmul %27, %28, %cst_23 {dimension_numbers = #tpu.dot_dimension_numbers<[1], [0], [0], [1], [0, 0, 1, 1], [], []>} : vector<16x8xbf16>, vector<8x128xbf16>, vector<16x128xf32> -> vector<16x128xf32>
    %c0_24 = arith.constant 0 : index
    %c0_25 = arith.constant 0 : index
    %30 = vector.load %arg9[%c0_24, %c0_25] : memref<16x1xf32, #tpu.memory_space<vmem>>, vector<16x1xf32>
    %31 = vector.broadcast %30 : vector<16x1xf32> to vector<16x128xf32>
    %32 = arith.addf %29, %31 : vector<16x128xf32>
    %cst_26 = arith.constant 0.000000e+00 : f32
    %33 = vector.broadcast %cst_26 : f32 to vector<16x128xf32>
    %34 = arith.maximumf %32, %33 : vector<16x128xf32>
    %c0_27 = arith.constant 0 : index
    %c0_28 = arith.constant 0 : index
    %35 = vector.load %arg10[%c0_27, %c0_28] : memref<4x16xbf16, #tpu.memory_space<vmem>>, vector<4x16xbf16>
    %36 = arith.truncf %34 : vector<16x128xf32> to vector<16x128xbf16>
    %cst_29 = arith.constant dense<0.000000e+00> : vector<4x128xf32>
    %37 = tpu.matmul %35, %36, %cst_29 {dimension_numbers = #tpu.dot_dimension_numbers<[1], [0], [0], [1], [0, 0, 1, 1], [], []>} : vector<4x16xbf16>, vector<16x128xbf16>, vector<4x128xf32> -> vector<4x128xf32>
    %c0_30 = arith.constant 0 : index
    %c0_31 = arith.constant 0 : index
    %38 = vector.load %arg11[%c0_30, %c0_31] : memref<4x1xf32, #tpu.memory_space<vmem>>, vector<4x1xf32>
    %39 = vector.broadcast %38 : vector<4x1xf32> to vector<4x128xf32>
    %40 = arith.addf %37, %39 : vector<4x128xf32>
    %cst_32 = arith.constant 0.000000e+00 : f32
    %41 = vector.broadcast %cst_32 : f32 to vector<4x128xf32>
    %42 = arith.maximumf %40, %41 : vector<4x128xf32>
    %c0_33 = arith.constant 0 : index
    %c0_34 = arith.constant 0 : index
    %c0_35 = arith.constant 0 : index
    %43 = vector.load %arg14[%c0_33, %c0_34, %c0_35] : memref<1x4x128xf32, #tpu.memory_space<vmem>>, vector<1x4x128xf32>
    %44 = vector.shape_cast %43 : vector<1x4x128xf32> to vector<4x128xf32>
    %45 = vector.shape_cast %42 : vector<4x128xf32> to vector<1x4x128xf32>
    tpu.vector_store %arg14[%c0_33, %c0_34, %c0_35], %45 {strides = array<i32>} : memref<1x4x128xf32, #tpu.memory_space<vmem>>, vector<1x4x128xf32>,
    return
  }
  func.func @transform_0(%arg0: i32, %arg1: i32) -> (i32, i32, i32) {
    %c0_i32 = arith.constant 0 : i32
    %c0_i32_0 = arith.constant 0 : i32
    return %arg0, %c0_i32, %arg1 : i32, i32, i32
  }
  func.func @transform_1(%arg0: i32, %arg1: i32) -> (i32, i32) {
    %c0_i32 = arith.constant 0 : i32
    %c0_i32_0 = arith.constant 0 : i32
    %c0_i32_1 = arith.constant 0 : i32
    return %c0_i32, %c0_i32_0 : i32, i32
  }
  func.func @transform_2(%arg0: i32, %arg1: i32) -> (i32, i32) {
    %c0_i32 = arith.constant 0 : i32
    %c0_i32_0 = arith.constant 0 : i32
    %c0_i32_1 = arith.constant 0 : i32
    return %c0_i32, %c0_i32_0 : i32, i32
  }
  func.func @transform_3(%arg0: i32, %arg1: i32) -> (i32, i32) {
    %c0_i32 = arith.constant 0 : i32
    %c0_i32_0 = arith.constant 0 : i32
    %c0_i32_1 = arith.constant 0 : i32
    return %c0_i32, %c0_i32_0 : i32, i32
  }
  func.func @transform_4(%arg0: i32, %arg1: i32) -> (i32, i32) {
    %c0_i32 = arith.constant 0 : i32
    %c0_i32_0 = arith.constant 0 : i32
    %c0_i32_1 = arith.constant 0 : i32
    return %c0_i32, %c0_i32_0 : i32, i32
  }
  func.func @transform_5(%arg0: i32, %arg1: i32) -> (i32, i32) {
    %c0_i32 = arith.constant 0 : i32
    %c0_i32_0 = arith.constant 0 : i32
    %c0_i32_1 = arith.constant 0 : i32
    return %c0_i32, %c0_i32_0 : i32, i32
  }
  func.func @transform_6(%arg0: i32, %arg1: i32) -> (i32, i32) {
    %c0_i32 = arith.constant 0 : i32
    %c0_i32_0 = arith.constant 0 : i32
    %c0_i32_1 = arith.constant 0 : i32
    return %c0_i32, %c0_i32_0 : i32, i32
  }
  func.func @transform_7(%arg0: i32, %arg1: i32) -> (i32, i32) {
    %c0_i32 = arith.constant 0 : i32
    %c0_i32_0 = arith.constant 0 : i32
    %c0_i32_1 = arith.constant 0 : i32
    return %c0_i32, %c0_i32_0 : i32, i32
  }
  func.func @transform_8(%arg0: i32, %arg1: i32) -> (i32, i32) {
    %c0_i32 = arith.constant 0 : i32
    %c0_i32_0 = arith.constant 0 : i32
    %c0_i32_1 = arith.constant 0 : i32
    return %c0_i32, %c0_i32_0 : i32, i32
  }
  func.func @transform_9(%arg0: i32, %arg1: i32) -> (i32, i32) {
    %c0_i32 = arith.constant 0 : i32
    %c0_i32_0 = arith.constant 0 : i32
    %c0_i32_1 = arith.constant 0 : i32
    return %c0_i32, %c0_i32_0 : i32, i32
  }
  func.func @transform_10(%arg0: i32, %arg1: i32) -> (i32, i32, i32) {
    %c0_i32 = arith.constant 0 : i32
    %c0_i32_0 = arith.constant 0 : i32
    return %arg0, %c0_i32, %arg1 : i32, i32, i32
  }
  func.func @transform_11(%arg0: i32, %arg1: i32) -> (i32, i32, i32) {
    %c0_i32 = arith.constant 0 : i32
    %c0_i32_0 = arith.constant 0 : i32
    return %arg0, %c0_i32, %arg1 : i32, i32, i32
  }
  func.func @transform_12(%arg0: i32, %arg1: i32) -> (i32, i32, i32) {
    %c0_i32 = arith.constant 0 : i32
    %c0_i32_0 = arith.constant 0 : i32
    return %arg0, %c0_i32, %arg1 : i32, i32, i32
  }
}

module attributes {stable_mosaic.version = 11 : i64} {
  func.func @_head_kernel(%arg0: i32, %arg1: memref<16x128xf32, #tpu.memory_space<vmem>>, %arg2: memref<16x16xbf16, #tpu.memory_space<vmem>>, %arg3: memref<16x1xf32, #tpu.memory_space<vmem>>, %arg4: memref<1x16xbf16, #tpu.memory_space<vmem>>, %arg5: memref<1x1xf32, #tpu.memory_space<vmem>>, %arg6: memref<1x128xf32, #tpu.memory_space<vmem>>) attributes {dimension_semantics = [#tpu.dimension_semantics<parallel>], iteration_bounds = array<i64: 1>, scalar_prefetch = 0 : i64, scratch_operands = 0 : i64, tpu.core_type = #tpu.core_type<tc>, window_params = [{transform_indices = @transform_0, window_bounds = array<i64: 16, 128>}, {pipeline_mode = #tpu.pipeline_mode<synchronous>, transform_indices = @transform_1, window_bounds = array<i64: 16, 16>}, {pipeline_mode = #tpu.pipeline_mode<synchronous>, transform_indices = @transform_2, window_bounds = array<i64: 16, 1>}, {pipeline_mode = #tpu.pipeline_mode<synchronous>, transform_indices = @transform_3, window_bounds = array<i64: 1, 16>}, {pipeline_mode = #tpu.pipeline_mode<synchronous>, transform_indices = @transform_4, window_bounds = array<i64: 1, 1>}, {transform_indices = @transform_5, window_bounds = array<i64: 1, 128>}]} {
    %c0 = arith.constant 0 : index
    %c0_0 = arith.constant 0 : index
    %0 = vector.load %arg2[%c0, %c0_0] : memref<16x16xbf16, #tpu.memory_space<vmem>>, vector<16x16xbf16>
    %c0_1 = arith.constant 0 : index
    %c0_2 = arith.constant 0 : index
    %1 = vector.load %arg1[%c0_1, %c0_2] : memref<16x128xf32, #tpu.memory_space<vmem>>, vector<16x128xf32>
    %2 = arith.truncf %1 : vector<16x128xf32> to vector<16x128xbf16>
    %cst = arith.constant dense<0.000000e+00> : vector<16x128xf32>
    %3 = tpu.matmul %0, %2, %cst {dimension_numbers = #tpu.dot_dimension_numbers<[1], [0], [0], [1], [0, 0, 1, 1], [], []>} : vector<16x16xbf16>, vector<16x128xbf16>, vector<16x128xf32> -> vector<16x128xf32>
    %c0_3 = arith.constant 0 : index
    %c0_4 = arith.constant 0 : index
    %4 = vector.load %arg3[%c0_3, %c0_4] : memref<16x1xf32, #tpu.memory_space<vmem>>, vector<16x1xf32>
    %5 = vector.broadcast %4 : vector<16x1xf32> to vector<16x128xf32>
    %6 = arith.addf %3, %5 : vector<16x128xf32>
    %cst_5 = arith.constant 0.000000e+00 : f32
    %7 = vector.broadcast %cst_5 : f32 to vector<16x128xf32>
    %8 = arith.maximumf %6, %7 : vector<16x128xf32>
    %c0_6 = arith.constant 0 : index
    %c0_7 = arith.constant 0 : index
    %9 = vector.load %arg4[%c0_6, %c0_7] : memref<1x16xbf16, #tpu.memory_space<vmem>>, vector<1x16xbf16>
    %10 = arith.truncf %8 : vector<16x128xf32> to vector<16x128xbf16>
    %cst_8 = arith.constant dense<0.000000e+00> : vector<1x128xf32>
    %11 = tpu.matmul %9, %10, %cst_8 {dimension_numbers = #tpu.dot_dimension_numbers<[1], [0], [0], [1], [0, 0, 1, 1], [], []>} : vector<1x16xbf16>, vector<16x128xbf16>, vector<1x128xf32> -> vector<1x128xf32>
    %c0_9 = arith.constant 0 : index
    %c0_10 = arith.constant 0 : index
    %12 = vector.load %arg5[%c0_9, %c0_10] : memref<1x1xf32, #tpu.memory_space<vmem>>, vector<1x1xf32>
    %13 = vector.broadcast %12 : vector<1x1xf32> to vector<1x128xf32>
    %14 = arith.addf %11, %13 : vector<1x128xf32>
    %c0_11 = arith.constant 0 : index
    %c0_12 = arith.constant 0 : index
    %15 = vector.load %arg6[%c0_11, %c0_12] : memref<1x128xf32, #tpu.memory_space<vmem>>, vector<1x128xf32>
    tpu.vector_store %arg6[%c0_11, %c0_12], %14 {strides = array<i32>} : memref<1x128xf32, #tpu.memory_space<vmem>>, vector<1x128xf32>,
    return
  }
  func.func @transform_0(%arg0: i32) -> (i32, i32) {
    %c0_i32 = arith.constant 0 : i32
    %c0_i32_0 = arith.constant 0 : i32
    return %c0_i32, %arg0 : i32, i32
  }
  func.func @transform_1(%arg0: i32) -> (i32, i32) {
    %c0_i32 = arith.constant 0 : i32
    %c0_i32_0 = arith.constant 0 : i32
    %c0_i32_1 = arith.constant 0 : i32
    return %c0_i32, %c0_i32_0 : i32, i32
  }
  func.func @transform_2(%arg0: i32) -> (i32, i32) {
    %c0_i32 = arith.constant 0 : i32
    %c0_i32_0 = arith.constant 0 : i32
    %c0_i32_1 = arith.constant 0 : i32
    return %c0_i32, %c0_i32_0 : i32, i32
  }
  func.func @transform_3(%arg0: i32) -> (i32, i32) {
    %c0_i32 = arith.constant 0 : i32
    %c0_i32_0 = arith.constant 0 : i32
    %c0_i32_1 = arith.constant 0 : i32
    return %c0_i32, %c0_i32_0 : i32, i32
  }
  func.func @transform_4(%arg0: i32) -> (i32, i32) {
    %c0_i32 = arith.constant 0 : i32
    %c0_i32_0 = arith.constant 0 : i32
    %c0_i32_1 = arith.constant 0 : i32
    return %c0_i32, %c0_i32_0 : i32, i32
  }
  func.func @transform_5(%arg0: i32) -> (i32, i32) {
    %c0_i32 = arith.constant 0 : i32
    %c0_i32_0 = arith.constant 0 : i32
    return %c0_i32, %arg0 : i32, i32
  }
}

module attributes {stable_mosaic.version = 11 : i64} {
  func.func @_conv_lstm_branch_kernel(%arg0: i32, %arg1: memref<4x8x128xf32, #tpu.memory_space<vmem>>, %arg2: memref<25x1x128xf32, #tpu.memory_space<vmem>>, %arg3: memref<1x32x400xbf16, #tpu.memory_space<vmem>>, %arg4: memref<1x32x1xf32, #tpu.memory_space<vmem>>, %arg5: memref<1x8x128xf32, #tpu.memory_space<vmem>>, %arg6: memref<400x128xbf16, #tpu.memory_space<vmem>>) attributes {dimension_semantics = [#tpu.dimension_semantics<parallel>], iteration_bounds = array<i64: 2>, scalar_prefetch = 0 : i64, scratch_operands = 1 : i64, tpu.core_type = #tpu.core_type<tc>, window_params = [{pipeline_mode = #tpu.pipeline_mode<synchronous>, transform_indices = @transform_0, window_bounds = array<i64: 4, 8, 128>}, {pipeline_mode = #tpu.pipeline_mode<synchronous>, transform_indices = @transform_1, window_bounds = array<i64: 25, 1, 128>}, {transform_indices = @transform_2, window_bounds = array<i64: 1, 32, 400>}, {transform_indices = @transform_3, window_bounds = array<i64: 1, 32, 1>}, {transform_indices = @transform_4, window_bounds = array<i64: 1, 8, 128>}]} {
    %cst = arith.constant 0.000000e+00 : f32
    %0 = vector.broadcast %cst : f32 to vector<8x128xf32>
    %cst_0 = arith.constant 0.000000e+00 : f32
    %1 = vector.broadcast %cst_0 : f32 to vector<8x128xf32>
    %c0_i32 = arith.constant 0 : i32
    %2 = arith.index_cast %c0_i32 : i32 to index
    %c0 = arith.constant 0 : index
    %c0_1 = arith.constant 0 : index
    %3 = vector.load %arg1[%2, %c0, %c0_1] : memref<4x8x128xf32, #tpu.memory_space<vmem>>, vector<1x8x128xf32>
    %4 = vector.shape_cast %3 : vector<1x8x128xf32> to vector<8x128xf32>
    %c18_i32 = arith.constant 18 : i32
    %5 = tpu.dynamic_rotate %4 by %c18_i32 dim 1 : vector<8x128xf32>, i32 -> vector<8x128xf32>
    %c0_2 = arith.constant 0 : index
    %c0_3 = arith.constant 0 : index
    %c0_4 = arith.constant 0 : index
    %6 = vector.load %arg2[%c0_2, %c0_3, %c0_4] : memref<25x1x128xf32, #tpu.memory_space<vmem>>, vector<1x1x128xf32>
    %7 = vector.shape_cast %6 : vector<1x1x128xf32> to vector<1x128xf32>
    %8 = vector.broadcast %7 : vector<1x128xf32> to vector<8x128xf32>
    %9 = arith.mulf %5, %8 : vector<8x128xf32>
    %10 = arith.truncf %9 : vector<8x128xf32> to vector<8x128xbf16>
    %c0_5 = arith.constant 0 : index
    %c0_6 = arith.constant 0 : index
    %11 = vector.load %arg6[%c0_5, %c0_6] : memref<400x128xbf16, #tpu.memory_space<vmem>>, vector<8x128xbf16>
    tpu.vector_store %arg6[%c0_5, %c0_6], %10 {strides = array<i32>} : memref<400x128xbf16, #tpu.memory_space<vmem>>, vector<8x128xbf16>,
    %c17_i32 = arith.constant 17 : i32
    %12 = tpu.dynamic_rotate %4 by %c17_i32 dim 1 : vector<8x128xf32>, i32 -> vector<8x128xf32>
    %c1 = arith.constant 1 : index
    %c0_7 = arith.constant 0 : index
    %c0_8 = arith.constant 0 : index
    %13 = vector.load %arg2[%c1, %c0_7, %c0_8] : memref<25x1x128xf32, #tpu.memory_space<vmem>>, vector<1x1x128xf32>
    %14 = vector.shape_cast %13 : vector<1x1x128xf32> to vector<1x128xf32>
    %15 = vector.broadcast %14 : vector<1x128xf32> to vector<8x128xf32>
    %16 = arith.mulf %12, %15 : vector<8x128xf32>
    %17 = arith.truncf %16 : vector<8x128xf32> to vector<8x128xbf16>
    %c8 = arith.constant 8 : index
    %c0_9 = arith.constant 0 : index
    %18 = vector.load %arg6[%c8, %c0_9] : memref<400x128xbf16, #tpu.memory_space<vmem>>, vector<8x128xbf16>
    tpu.vector_store %arg6[%c8, %c0_9], %17 {strides = array<i32>} : memref<400x128xbf16, #tpu.memory_space<vmem>>, vector<8x128xbf16>,
    %c16_i32 = arith.constant 16 : i32
    %19 = tpu.dynamic_rotate %4 by %c16_i32 dim 1 : vector<8x128xf32>, i32 -> vector<8x128xf32>
    %c2 = arith.constant 2 : index
    %c0_10 = arith.constant 0 : index
    %c0_11 = arith.constant 0 : index
    %20 = vector.load %arg2[%c2, %c0_10, %c0_11] : memref<25x1x128xf32, #tpu.memory_space<vmem>>, vector<1x1x128xf32>
    %21 = vector.shape_cast %20 : vector<1x1x128xf32> to vector<1x128xf32>
    %22 = vector.broadcast %21 : vector<1x128xf32> to vector<8x128xf32>
    %23 = arith.mulf %19, %22 : vector<8x128xf32>
    %24 = arith.truncf %23 : vector<8x128xf32> to vector<8x128xbf16>
    %c16 = arith.constant 16 : index
    %c0_12 = arith.constant 0 : index
    %25 = vector.load %arg6[%c16, %c0_12] : memref<400x128xbf16, #tpu.memory_space<vmem>>, vector<8x128xbf16>
    tpu.vector_store %arg6[%c16, %c0_12], %24 {strides = array<i32>} : memref<400x128xbf16, #tpu.memory_space<vmem>>, vector<8x128xbf16>,
    %c15_i32 = arith.constant 15 : i32
    %26 = tpu.dynamic_rotate %4 by %c15_i32 dim 1 : vector<8x128xf32>, i32 -> vector<8x128xf32>
    %c3 = arith.constant 3 : index
    %c0_13 = arith.constant 0 : index
    %c0_14 = arith.constant 0 : index
    %27 = vector.load %arg2[%c3, %c0_13, %c0_14] : memref<25x1x128xf32, #tpu.memory_space<vmem>>, vector<1x1x128xf32>
    %28 = vector.shape_cast %27 : vector<1x1x128xf32> to vector<1x128xf32>
    %29 = vector.broadcast %28 : vector<1x128xf32> to vector<8x128xf32>
    %30 = arith.mulf %26, %29 : vector<8x128xf32>
    %31 = arith.truncf %30 : vector<8x128xf32> to vector<8x128xbf16>
    %c24 = arith.constant 24 : index
    %c0_15 = arith.constant 0 : index
    %32 = vector.load %arg6[%c24, %c0_15] : memref<400x128xbf16, #tpu.memory_space<vmem>>, vector<8x128xbf16>
    tpu.vector_store %arg6[%c24, %c0_15], %31 {strides = array<i32>} : memref<400x128xbf16, #tpu.memory_space<vmem>>, vector<8x128xbf16>,
    %c14_i32 = arith.constant 14 : i32
    %33 = tpu.dynamic_rotate %4 by %c14_i32 dim 1 : vector<8x128xf32>, i32 -> vector<8x128xf32>
    %c4 = arith.constant 4 : index
    %c0_16 = arith.constant 0 : index
    %c0_17 = arith.constant 0 : index
    %34 = vector.load %arg2[%c4, %c0_16, %c0_17] : memref<25x1x128xf32, #tpu.memory_space<vmem>>, vector<1x1x128xf32>
    %35 = vector.shape_cast %34 : vector<1x1x128xf32> to vector<1x128xf32>
    %36 = vector.broadcast %35 : vector<1x128xf32> to vector<8x128xf32>
    %37 = arith.mulf %33, %36 : vector<8x128xf32>
    %38 = arith.truncf %37 : vector<8x128xf32> to vector<8x128xbf16>
    %c32 = arith.constant 32 : index
    %c0_18 = arith.constant 0 : index
    %39 = vector.load %arg6[%c32, %c0_18] : memref<400x128xbf16, #tpu.memory_space<vmem>>, vector<8x128xbf16>
    tpu.vector_store %arg6[%c32, %c0_18], %38 {strides = array<i32>} : memref<400x128xbf16, #tpu.memory_space<vmem>>, vector<8x128xbf16>,
    %c10_i32 = arith.constant 10 : i32
    %40 = tpu.dynamic_rotate %4 by %c10_i32 dim 1 : vector<8x128xf32>, i32 -> vector<8x128xf32>
    %c5 = arith.constant 5 : index
    %c0_19 = arith.constant 0 : index
    %c0_20 = arith.constant 0 : index
    %41 = vector.load %arg2[%c5, %c0_19, %c0_20] : memref<25x1x128xf32, #tpu.memory_space<vmem>>, vector<1x1x128xf32>
    %42 = vector.shape_cast %41 : vector<1x1x128xf32> to vector<1x128xf32>
    %43 = vector.broadcast %42 : vector<1x128xf32> to vector<8x128xf32>
    %44 = arith.mulf %40, %43 : vector<8x128xf32>
    %45 = arith.truncf %44 : vector<8x128xf32> to vector<8x128xbf16>
    %c40 = arith.constant 40 : index
    %c0_21 = arith.constant 0 : index
    %46 = vector.load %arg6[%c40, %c0_21] : memref<400x128xbf16, #tpu.memory_space<vmem>>, vector<8x128xbf16>
    tpu.vector_store %arg6[%c40, %c0_21], %45 {strides = array<i32>} : memref<400x128xbf16, #tpu.memory_space<vmem>>, vector<8x128xbf16>,
    %c9_i32 = arith.constant 9 : i32
    %47 = tpu.dynamic_rotate %4 by %c9_i32 dim 1 : vector<8x128xf32>, i32 -> vector<8x128xf32>
    %c6 = arith.constant 6 : index
    %c0_22 = arith.constant 0 : index
    %c0_23 = arith.constant 0 : index
    %48 = vector.load %arg2[%c6, %c0_22, %c0_23] : memref<25x1x128xf32, #tpu.memory_space<vmem>>, vector<1x1x128xf32>
    %49 = vector.shape_cast %48 : vector<1x1x128xf32> to vector<1x128xf32>
    %50 = vector.broadcast %49 : vector<1x128xf32> to vector<8x128xf32>
    %51 = arith.mulf %47, %50 : vector<8x128xf32>
    %52 = arith.truncf %51 : vector<8x128xf32> to vector<8x128xbf16>
    %c48 = arith.constant 48 : index
    %c0_24 = arith.constant 0 : index
    %53 = vector.load %arg6[%c48, %c0_24] : memref<400x128xbf16, #tpu.memory_space<vmem>>, vector<8x128xbf16>
    tpu.vector_store %arg6[%c48, %c0_24], %52 {strides = array<i32>} : memref<400x128xbf16, #tpu.memory_space<vmem>>, vector<8x128xbf16>,
    %c8_i32 = arith.constant 8 : i32
    %54 = tpu.dynamic_rotate %4 by %c8_i32 dim 1 : vector<8x128xf32>, i32 -> vector<8x128xf32>
    %c7 = arith.constant 7 : index
    %c0_25 = arith.constant 0 : index
    %c0_26 = arith.constant 0 : index
    %55 = vector.load %arg2[%c7, %c0_25, %c0_26] : memref<25x1x128xf32, #tpu.memory_space<vmem>>, vector<1x1x128xf32>
    %56 = vector.shape_cast %55 : vector<1x1x128xf32> to vector<1x128xf32>
    %57 = vector.broadcast %56 : vector<1x128xf32> to vector<8x128xf32>
    %58 = arith.mulf %54, %57 : vector<8x128xf32>
    %59 = arith.truncf %58 : vector<8x128xf32> to vector<8x128xbf16>
    %c56 = arith.constant 56 : index
    %c0_27 = arith.constant 0 : index
    %60 = vector.load %arg6[%c56, %c0_27] : memref<400x128xbf16, #tpu.memory_space<vmem>>, vector<8x128xbf16>
    tpu.vector_store %arg6[%c56, %c0_27], %59 {strides = array<i32>} : memref<400x128xbf16, #tpu.memory_space<vmem>>, vector<8x128xbf16>,
    %c7_i32 = arith.constant 7 : i32
    %61 = tpu.dynamic_rotate %4 by %c7_i32 dim 1 : vector<8x128xf32>, i32 -> vector<8x128xf32>
    %c8_28 = arith.constant 8 : index
    %c0_29 = arith.constant 0 : index
    %c0_30 = arith.constant 0 : index
    %62 = vector.load %arg2[%c8_28, %c0_29, %c0_30] : memref<25x1x128xf32, #tpu.memory_space<vmem>>, vector<1x1x128xf32>
    %63 = vector.shape_cast %62 : vector<1x1x128xf32> to vector<1x128xf32>
    %64 = vector.broadcast %63 : vector<1x128xf32> to vector<8x128xf32>
    %65 = arith.mulf %61, %64 : vector<8x128xf32>
    %66 = arith.truncf %65 : vector<8x128xf32> to vector<8x128xbf16>
    %c64 = arith.constant 64 : index
    %c0_31 = arith.constant 0 : index
    %67 = vector.load %arg6[%c64, %c0_31] : memref<400x128xbf16, #tpu.memory_space<vmem>>, vector<8x128xbf16>
    tpu.vector_store %arg6[%c64, %c0_31], %66 {strides = array<i32>} : memref<400x128xbf16, #tpu.memory_space<vmem>>, vector<8x128xbf16>,
    %c6_i32 = arith.constant 6 : i32
    %68 = tpu.dynamic_rotate %4 by %c6_i32 dim 1 : vector<8x128xf32>, i32 -> vector<8x128xf32>
    %c9 = arith.constant 9 : index
    %c0_32 = arith.constant 0 : index
    %c0_33 = arith.constant 0 : index
    %69 = vector.load %arg2[%c9, %c0_32, %c0_33] : memref<25x1x128xf32, #tpu.memory_space<vmem>>, vector<1x1x128xf32>
    %70 = vector.shape_cast %69 : vector<1x1x128xf32> to vector<1x128xf32>
    %71 = vector.broadcast %70 : vector<1x128xf32> to vector<8x128xf32>
    %72 = arith.mulf %68, %71 : vector<8x128xf32>
    %73 = arith.truncf %72 : vector<8x128xf32> to vector<8x128xbf16>
    %c72 = arith.constant 72 : index
    %c0_34 = arith.constant 0 : index
    %74 = vector.load %arg6[%c72, %c0_34] : memref<400x128xbf16, #tpu.memory_space<vmem>>, vector<8x128xbf16>
    tpu.vector_store %arg6[%c72, %c0_34], %73 {strides = array<i32>} : memref<400x128xbf16, #tpu.memory_space<vmem>>, vector<8x128xbf16>,
    %c2_i32 = arith.constant 2 : i32
    %75 = tpu.dynamic_rotate %4 by %c2_i32 dim 1 : vector<8x128xf32>, i32 -> vector<8x128xf32>
    %c10 = arith.constant 10 : index
    %c0_35 = arith.constant 0 : index
    %c0_36 = arith.constant 0 : index
    %76 = vector.load %arg2[%c10, %c0_35, %c0_36] : memref<25x1x128xf32, #tpu.memory_space<vmem>>, vector<1x1x128xf32>
    %77 = vector.shape_cast %76 : vector<1x1x128xf32> to vector<1x128xf32>
    %78 = vector.broadcast %77 : vector<1x128xf32> to vector<8x128xf32>
    %79 = arith.mulf %75, %78 : vector<8x128xf32>
    %80 = arith.truncf %79 : vector<8x128xf32> to vector<8x128xbf16>
    %c80 = arith.constant 80 : index
    %c0_37 = arith.constant 0 : index
    %81 = vector.load %arg6[%c80, %c0_37] : memref<400x128xbf16, #tpu.memory_space<vmem>>, vector<8x128xbf16>
    tpu.vector_store %arg6[%c80, %c0_37], %80 {strides = array<i32>} : memref<400x128xbf16, #tpu.memory_space<vmem>>, vector<8x128xbf16>,
    %c1_i32 = arith.constant 1 : i32
    %82 = tpu.dynamic_rotate %4 by %c1_i32 dim 1 : vector<8x128xf32>, i32 -> vector<8x128xf32>
    %c11 = arith.constant 11 : index
    %c0_38 = arith.constant 0 : index
    %c0_39 = arith.constant 0 : index
    %83 = vector.load %arg2[%c11, %c0_38, %c0_39] : memref<25x1x128xf32, #tpu.memory_space<vmem>>, vector<1x1x128xf32>
    %84 = vector.shape_cast %83 : vector<1x1x128xf32> to vector<1x128xf32>
    %85 = vector.broadcast %84 : vector<1x128xf32> to vector<8x128xf32>
    %86 = arith.mulf %82, %85 : vector<8x128xf32>
    %87 = arith.truncf %86 : vector<8x128xf32> to vector<8x128xbf16>
    %c88 = arith.constant 88 : index
    %c0_40 = arith.constant 0 : index
    %88 = vector.load %arg6[%c88, %c0_40] : memref<400x128xbf16, #tpu.memory_space<vmem>>, vector<8x128xbf16>
    tpu.vector_store %arg6[%c88, %c0_40], %87 {strides = array<i32>} : memref<400x128xbf16, #tpu.memory_space<vmem>>, vector<8x128xbf16>,
    %89 = arith.truncf %4 : vector<8x128xf32> to vector<8x128xbf16>
    %c96 = arith.constant 96 : index
    %c0_41 = arith.constant 0 : index
    %90 = vector.load %arg6[%c96, %c0_41] : memref<400x128xbf16, #tpu.memory_space<vmem>>, vector<8x128xbf16>
    tpu.vector_store %arg6[%c96, %c0_41], %89 {strides = array<i32>} : memref<400x128xbf16, #tpu.memory_space<vmem>>, vector<8x128xbf16>,
    %c127_i32 = arith.constant 127 : i32
    %91 = tpu.dynamic_rotate %4 by %c127_i32 dim 1 : vector<8x128xf32>, i32 -> vector<8x128xf32>
    %c13 = arith.constant 13 : index
    %c0_42 = arith.constant 0 : index
    %c0_43 = arith.constant 0 : index
    %92 = vector.load %arg2[%c13, %c0_42, %c0_43] : memref<25x1x128xf32, #tpu.memory_space<vmem>>, vector<1x1x128xf32>
    %93 = vector.shape_cast %92 : vector<1x1x128xf32> to vector<1x128xf32>
    %94 = vector.broadcast %93 : vector<1x128xf32> to vector<8x128xf32>
    %95 = arith.mulf %91, %94 : vector<8x128xf32>
    %96 = arith.truncf %95 : vector<8x128xf32> to vector<8x128xbf16>
    %c104 = arith.constant 104 : index
    %c0_44 = arith.constant 0 : index
    %97 = vector.load %arg6[%c104, %c0_44] : memref<400x128xbf16, #tpu.memory_space<vmem>>, vector<8x128xbf16>
    tpu.vector_store %arg6[%c104, %c0_44], %96 {strides = array<i32>} : memref<400x128xbf16, #tpu.memory_space<vmem>>, vector<8x128xbf16>,
    %c126_i32 = arith.constant 126 : i32
    %98 = tpu.dynamic_rotate %4 by %c126_i32 dim 1 : vector<8x128xf32>, i32 -> vector<8x128xf32>
    %c14 = arith.constant 14 : index
    %c0_45 = arith.constant 0 : index
    %c0_46 = arith.constant 0 : index
    %99 = vector.load %arg2[%c14, %c0_45, %c0_46] : memref<25x1x128xf32, #tpu.memory_space<vmem>>, vector<1x1x128xf32>
    %100 = vector.shape_cast %99 : vector<1x1x128xf32> to vector<1x128xf32>
    %101 = vector.broadcast %100 : vector<1x128xf32> to vector<8x128xf32>
    %102 = arith.mulf %98, %101 : vector<8x128xf32>
    %103 = arith.truncf %102 : vector<8x128xf32> to vector<8x128xbf16>
    %c112 = arith.constant 112 : index
    %c0_47 = arith.constant 0 : index
    %104 = vector.load %arg6[%c112, %c0_47] : memref<400x128xbf16, #tpu.memory_space<vmem>>, vector<8x128xbf16>
    tpu.vector_store %arg6[%c112, %c0_47], %103 {strides = array<i32>} : memref<400x128xbf16, #tpu.memory_space<vmem>>, vector<8x128xbf16>,
    %c122_i32 = arith.constant 122 : i32
    %105 = tpu.dynamic_rotate %4 by %c122_i32 dim 1 : vector<8x128xf32>, i32 -> vector<8x128xf32>
    %c15 = arith.constant 15 : index
    %c0_48 = arith.constant 0 : index
    %c0_49 = arith.constant 0 : index
    %106 = vector.load %arg2[%c15, %c0_48, %c0_49] : memref<25x1x128xf32, #tpu.memory_space<vmem>>, vector<1x1x128xf32>
    %107 = vector.shape_cast %106 : vector<1x1x128xf32> to vector<1x128xf32>
    %108 = vector.broadcast %107 : vector<1x128xf32> to vector<8x128xf32>
    %109 = arith.mulf %105, %108 : vector<8x128xf32>
    %110 = arith.truncf %109 : vector<8x128xf32> to vector<8x128xbf16>
    %c120 = arith.constant 120 : index
    %c0_50 = arith.constant 0 : index
    %111 = vector.load %arg6[%c120, %c0_50] : memref<400x128xbf16, #tpu.memory_space<vmem>>, vector<8x128xbf16>
    tpu.vector_store %arg6[%c120, %c0_50], %110 {strides = array<i32>} : memref<400x128xbf16, #tpu.memory_space<vmem>>, vector<8x128xbf16>,
    %c121_i32 = arith.constant 121 : i32
    %112 = tpu.dynamic_rotate %4 by %c121_i32 dim 1 : vector<8x128xf32>, i32 -> vector<8x128xf32>
    %c16_51 = arith.constant 16 : index
    %c0_52 = arith.constant 0 : index
    %c0_53 = arith.constant 0 : index
    %113 = vector.load %arg2[%c16_51, %c0_52, %c0_53] : memref<25x1x128xf32, #tpu.memory_space<vmem>>, vector<1x1x128xf32>
    %114 = vector.shape_cast %113 : vector<1x1x128xf32> to vector<1x128xf32>
    %115 = vector.broadcast %114 : vector<1x128xf32> to vector<8x128xf32>
    %116 = arith.mulf %112, %115 : vector<8x128xf32>
    %117 = arith.truncf %116 : vector<8x128xf32> to vector<8x128xbf16>
    %c128 = arith.constant 128 : index
    %c0_54 = arith.constant 0 : index
    %118 = vector.load %arg6[%c128, %c0_54] : memref<400x128xbf16, #tpu.memory_space<vmem>>, vector<8x128xbf16>
    tpu.vector_store %arg6[%c128, %c0_54], %117 {strides = array<i32>} : memref<400x128xbf16, #tpu.memory_space<vmem>>, vector<8x128xbf16>,
    %c120_i32 = arith.constant 120 : i32
    %119 = tpu.dynamic_rotate %4 by %c120_i32 dim 1 : vector<8x128xf32>, i32 -> vector<8x128xf32>
    %c17 = arith.constant 17 : index
    %c0_55 = arith.constant 0 : index
    %c0_56 = arith.constant 0 : index
    %120 = vector.load %arg2[%c17, %c0_55, %c0_56] : memref<25x1x128xf32, #tpu.memory_space<vmem>>, vector<1x1x128xf32>
    %121 = vector.shape_cast %120 : vector<1x1x128xf32> to vector<1x128xf32>
    %122 = vector.broadcast %121 : vector<1x128xf32> to vector<8x128xf32>
    %123 = arith.mulf %119, %122 : vector<8x128xf32>
    %124 = arith.truncf %123 : vector<8x128xf32> to vector<8x128xbf16>
    %c136 = arith.constant 136 : index
    %c0_57 = arith.constant 0 : index
    %125 = vector.load %arg6[%c136, %c0_57] : memref<400x128xbf16, #tpu.memory_space<vmem>>, vector<8x128xbf16>
    tpu.vector_store %arg6[%c136, %c0_57], %124 {strides = array<i32>} : memref<400x128xbf16, #tpu.memory_space<vmem>>, vector<8x128xbf16>,
    %c119_i32 = arith.constant 119 : i32
    %126 = tpu.dynamic_rotate %4 by %c119_i32 dim 1 : vector<8x128xf32>, i32 -> vector<8x128xf32>
    %c18 = arith.constant 18 : index
    %c0_58 = arith.constant 0 : index
    %c0_59 = arith.constant 0 : index
    %127 = vector.load %arg2[%c18, %c0_58, %c0_59] : memref<25x1x128xf32, #tpu.memory_space<vmem>>, vector<1x1x128xf32>
    %128 = vector.shape_cast %127 : vector<1x1x128xf32> to vector<1x128xf32>
    %129 = vector.broadcast %128 : vector<1x128xf32> to vector<8x128xf32>
    %130 = arith.mulf %126, %129 : vector<8x128xf32>
    %131 = arith.truncf %130 : vector<8x128xf32> to vector<8x128xbf16>
    %c144 = arith.constant 144 : index
    %c0_60 = arith.constant 0 : index
    %132 = vector.load %arg6[%c144, %c0_60] : memref<400x128xbf16, #tpu.memory_space<vmem>>, vector<8x128xbf16>
    tpu.vector_store %arg6[%c144, %c0_60], %131 {strides = array<i32>} : memref<400x128xbf16, #tpu.memory_space<vmem>>, vector<8x128xbf16>,
    %c118_i32 = arith.constant 118 : i32
    %133 = tpu.dynamic_rotate %4 by %c118_i32 dim 1 : vector<8x128xf32>, i32 -> vector<8x128xf32>
    %c19 = arith.constant 19 : index
    %c0_61 = arith.constant 0 : index
    %c0_62 = arith.constant 0 : index
    %134 = vector.load %arg2[%c19, %c0_61, %c0_62] : memref<25x1x128xf32, #tpu.memory_space<vmem>>, vector<1x1x128xf32>
    %135 = vector.shape_cast %134 : vector<1x1x128xf32> to vector<1x128xf32>
    %136 = vector.broadcast %135 : vector<1x128xf32> to vector<8x128xf32>
    %137 = arith.mulf %133, %136 : vector<8x128xf32>
    %138 = arith.truncf %137 : vector<8x128xf32> to vector<8x128xbf16>
    %c152 = arith.constant 152 : index
    %c0_63 = arith.constant 0 : index
    %139 = vector.load %arg6[%c152, %c0_63] : memref<400x128xbf16, #tpu.memory_space<vmem>>, vector<8x128xbf16>
    tpu.vector_store %arg6[%c152, %c0_63], %138 {strides = array<i32>} : memref<400x128xbf16, #tpu.memory_space<vmem>>, vector<8x128xbf16>,
    %c114_i32 = arith.constant 114 : i32
    %140 = tpu.dynamic_rotate %4 by %c114_i32 dim 1 : vector<8x128xf32>, i32 -> vector<8x128xf32>
    %c20 = arith.constant 20 : index
    %c0_64 = arith.constant 0 : index
    %c0_65 = arith.constant 0 : index
    %141 = vector.load %arg2[%c20, %c0_64, %c0_65] : memref<25x1x128xf32, #tpu.memory_space<vmem>>, vector<1x1x128xf32>
    %142 = vector.shape_cast %141 : vector<1x1x128xf32> to vector<1x128xf32>
    %143 = vector.broadcast %142 : vector<1x128xf32> to vector<8x128xf32>
    %144 = arith.mulf %140, %143 : vector<8x128xf32>
    %145 = arith.truncf %144 : vector<8x128xf32> to vector<8x128xbf16>
    %c160 = arith.constant 160 : index
    %c0_66 = arith.constant 0 : index
    %146 = vector.load %arg6[%c160, %c0_66] : memref<400x128xbf16, #tpu.memory_space<vmem>>, vector<8x128xbf16>
    tpu.vector_store %arg6[%c160, %c0_66], %145 {strides = array<i32>} : memref<400x128xbf16, #tpu.memory_space<vmem>>, vector<8x128xbf16>,
    %c113_i32 = arith.constant 113 : i32
    %147 = tpu.dynamic_rotate %4 by %c113_i32 dim 1 : vector<8x128xf32>, i32 -> vector<8x128xf32>
    %c21 = arith.constant 21 : index
    %c0_67 = arith.constant 0 : index
    %c0_68 = arith.constant 0 : index
    %148 = vector.load %arg2[%c21, %c0_67, %c0_68] : memref<25x1x128xf32, #tpu.memory_space<vmem>>, vector<1x1x128xf32>
    %149 = vector.shape_cast %148 : vector<1x1x128xf32> to vector<1x128xf32>
    %150 = vector.broadcast %149 : vector<1x128xf32> to vector<8x128xf32>
    %151 = arith.mulf %147, %150 : vector<8x128xf32>
    %152 = arith.truncf %151 : vector<8x128xf32> to vector<8x128xbf16>
    %c168 = arith.constant 168 : index
    %c0_69 = arith.constant 0 : index
    %153 = vector.load %arg6[%c168, %c0_69] : memref<400x128xbf16, #tpu.memory_space<vmem>>, vector<8x128xbf16>
    tpu.vector_store %arg6[%c168, %c0_69], %152 {strides = array<i32>} : memref<400x128xbf16, #tpu.memory_space<vmem>>, vector<8x128xbf16>,
    %c112_i32 = arith.constant 112 : i32
    %154 = tpu.dynamic_rotate %4 by %c112_i32 dim 1 : vector<8x128xf32>, i32 -> vector<8x128xf32>
    %c22 = arith.constant 22 : index
    %c0_70 = arith.constant 0 : index
    %c0_71 = arith.constant 0 : index
    %155 = vector.load %arg2[%c22, %c0_70, %c0_71] : memref<25x1x128xf32, #tpu.memory_space<vmem>>, vector<1x1x128xf32>
    %156 = vector.shape_cast %155 : vector<1x1x128xf32> to vector<1x128xf32>
    %157 = vector.broadcast %156 : vector<1x128xf32> to vector<8x128xf32>
    %158 = arith.mulf %154, %157 : vector<8x128xf32>
    %159 = arith.truncf %158 : vector<8x128xf32> to vector<8x128xbf16>
    %c176 = arith.constant 176 : index
    %c0_72 = arith.constant 0 : index
    %160 = vector.load %arg6[%c176, %c0_72] : memref<400x128xbf16, #tpu.memory_space<vmem>>, vector<8x128xbf16>
    tpu.vector_store %arg6[%c176, %c0_72], %159 {strides = array<i32>} : memref<400x128xbf16, #tpu.memory_space<vmem>>, vector<8x128xbf16>,
    %c111_i32 = arith.constant 111 : i32
    %161 = tpu.dynamic_rotate %4 by %c111_i32 dim 1 : vector<8x128xf32>, i32 -> vector<8x128xf32>
    %c23 = arith.constant 23 : index
    %c0_73 = arith.constant 0 : index
    %c0_74 = arith.constant 0 : index
    %162 = vector.load %arg2[%c23, %c0_73, %c0_74] : memref<25x1x128xf32, #tpu.memory_space<vmem>>, vector<1x1x128xf32>
    %163 = vector.shape_cast %162 : vector<1x1x128xf32> to vector<1x128xf32>
    %164 = vector.broadcast %163 : vector<1x128xf32> to vector<8x128xf32>
    %165 = arith.mulf %161, %164 : vector<8x128xf32>
    %166 = arith.truncf %165 : vector<8x128xf32> to vector<8x128xbf16>
    %c184 = arith.constant 184 : index
    %c0_75 = arith.constant 0 : index
    %167 = vector.load %arg6[%c184, %c0_75] : memref<400x128xbf16, #tpu.memory_space<vmem>>, vector<8x128xbf16>
    tpu.vector_store %arg6[%c184, %c0_75], %166 {strides = array<i32>} : memref<400x128xbf16, #tpu.memory_space<vmem>>, vector<8x128xbf16>,
    %c110_i32 = arith.constant 110 : i32
    %168 = tpu.dynamic_rotate %4 by %c110_i32 dim 1 : vector<8x128xf32>, i32 -> vector<8x128xf32>
    %c24_76 = arith.constant 24 : index
    %c0_77 = arith.constant 0 : index
    %c0_78 = arith.constant 0 : index
    %169 = vector.load %arg2[%c24_76, %c0_77, %c0_78] : memref<25x1x128xf32, #tpu.memory_space<vmem>>, vector<1x1x128xf32>
    %170 = vector.shape_cast %169 : vector<1x1x128xf32> to vector<1x128xf32>
    %171 = vector.broadcast %170 : vector<1x128xf32> to vector<8x128xf32>
    %172 = arith.mulf %168, %171 : vector<8x128xf32>
    %173 = arith.truncf %172 : vector<8x128xf32> to vector<8x128xbf16>
    %c192 = arith.constant 192 : index
    %c0_79 = arith.constant 0 : index
    %174 = vector.load %arg6[%c192, %c0_79] : memref<400x128xbf16, #tpu.memory_space<vmem>>, vector<8x128xbf16>
    tpu.vector_store %arg6[%c192, %c0_79], %173 {strides = array<i32>} : memref<400x128xbf16, #tpu.memory_space<vmem>>, vector<8x128xbf16>,
    %c18_i32_80 = arith.constant 18 : i32
    %175 = tpu.dynamic_rotate %0 by %c18_i32_80 dim 1 : vector<8x128xf32>, i32 -> vector<8x128xf32>
    %c0_81 = arith.constant 0 : index
    %c0_82 = arith.constant 0 : index
    %c0_83 = arith.constant 0 : index
    %176 = vector.load %arg2[%c0_81, %c0_82, %c0_83] : memref<25x1x128xf32, #tpu.memory_space<vmem>>, vector<1x1x128xf32>
    %177 = vector.shape_cast %176 : vector<1x1x128xf32> to vector<1x128xf32>
    %178 = vector.broadcast %177 : vector<1x128xf32> to vector<8x128xf32>
    %179 = arith.mulf %175, %178 : vector<8x128xf32>
    %180 = arith.truncf %179 : vector<8x128xf32> to vector<8x128xbf16>
    %c200 = arith.constant 200 : index
    %c0_84 = arith.constant 0 : index
    %181 = vector.load %arg6[%c200, %c0_84] : memref<400x128xbf16, #tpu.memory_space<vmem>>, vector<8x128xbf16>
    tpu.vector_store %arg6[%c200, %c0_84], %180 {strides = array<i32>} : memref<400x128xbf16, #tpu.memory_space<vmem>>, vector<8x128xbf16>,
    %c17_i32_85 = arith.constant 17 : i32
    %182 = tpu.dynamic_rotate %0 by %c17_i32_85 dim 1 : vector<8x128xf32>, i32 -> vector<8x128xf32>
    %c1_86 = arith.constant 1 : index
    %c0_87 = arith.constant 0 : index
    %c0_88 = arith.constant 0 : index
    %183 = vector.load %arg2[%c1_86, %c0_87, %c0_88] : memref<25x1x128xf32, #tpu.memory_space<vmem>>, vector<1x1x128xf32>
    %184 = vector.shape_cast %183 : vector<1x1x128xf32> to vector<1x128xf32>
    %185 = vector.broadcast %184 : vector<1x128xf32> to vector<8x128xf32>
    %186 = arith.mulf %182, %185 : vector<8x128xf32>
    %187 = arith.truncf %186 : vector<8x128xf32> to vector<8x128xbf16>
    %c208 = arith.constant 208 : index
    %c0_89 = arith.constant 0 : index
    %188 = vector.load %arg6[%c208, %c0_89] : memref<400x128xbf16, #tpu.memory_space<vmem>>, vector<8x128xbf16>
    tpu.vector_store %arg6[%c208, %c0_89], %187 {strides = array<i32>} : memref<400x128xbf16, #tpu.memory_space<vmem>>, vector<8x128xbf16>,
    %c16_i32_90 = arith.constant 16 : i32
    %189 = tpu.dynamic_rotate %0 by %c16_i32_90 dim 1 : vector<8x128xf32>, i32 -> vector<8x128xf32>
    %c2_91 = arith.constant 2 : index
    %c0_92 = arith.constant 0 : index
    %c0_93 = arith.constant 0 : index
    %190 = vector.load %arg2[%c2_91, %c0_92, %c0_93] : memref<25x1x128xf32, #tpu.memory_space<vmem>>, vector<1x1x128xf32>
    %191 = vector.shape_cast %190 : vector<1x1x128xf32> to vector<1x128xf32>
    %192 = vector.broadcast %191 : vector<1x128xf32> to vector<8x128xf32>
    %193 = arith.mulf %189, %192 : vector<8x128xf32>
    %194 = arith.truncf %193 : vector<8x128xf32> to vector<8x128xbf16>
    %c216 = arith.constant 216 : index
    %c0_94 = arith.constant 0 : index
    %195 = vector.load %arg6[%c216, %c0_94] : memref<400x128xbf16, #tpu.memory_space<vmem>>, vector<8x128xbf16>
    tpu.vector_store %arg6[%c216, %c0_94], %194 {strides = array<i32>} : memref<400x128xbf16, #tpu.memory_space<vmem>>, vector<8x128xbf16>,
    %c15_i32_95 = arith.constant 15 : i32
    %196 = tpu.dynamic_rotate %0 by %c15_i32_95 dim 1 : vector<8x128xf32>, i32 -> vector<8x128xf32>
    %c3_96 = arith.constant 3 : index
    %c0_97 = arith.constant 0 : index
    %c0_98 = arith.constant 0 : index
    %197 = vector.load %arg2[%c3_96, %c0_97, %c0_98] : memref<25x1x128xf32, #tpu.memory_space<vmem>>, vector<1x1x128xf32>
    %198 = vector.shape_cast %197 : vector<1x1x128xf32> to vector<1x128xf32>
    %199 = vector.broadcast %198 : vector<1x128xf32> to vector<8x128xf32>
    %200 = arith.mulf %196, %199 : vector<8x128xf32>
    %201 = arith.truncf %200 : vector<8x128xf32> to vector<8x128xbf16>
    %c224 = arith.constant 224 : index
    %c0_99 = arith.constant 0 : index
    %202 = vector.load %arg6[%c224, %c0_99] : memref<400x128xbf16, #tpu.memory_space<vmem>>, vector<8x128xbf16>
    tpu.vector_store %arg6[%c224, %c0_99], %201 {strides = array<i32>} : memref<400x128xbf16, #tpu.memory_space<vmem>>, vector<8x128xbf16>,
    %c14_i32_100 = arith.constant 14 : i32
    %203 = tpu.dynamic_rotate %0 by %c14_i32_100 dim 1 : vector<8x128xf32>, i32 -> vector<8x128xf32>
    %c4_101 = arith.constant 4 : index
    %c0_102 = arith.constant 0 : index
    %c0_103 = arith.constant 0 : index
    %204 = vector.load %arg2[%c4_101, %c0_102, %c0_103] : memref<25x1x128xf32, #tpu.memory_space<vmem>>, vector<1x1x128xf32>
    %205 = vector.shape_cast %204 : vector<1x1x128xf32> to vector<1x128xf32>
    %206 = vector.broadcast %205 : vector<1x128xf32> to vector<8x128xf32>
    %207 = arith.mulf %203, %206 : vector<8x128xf32>
    %208 = arith.truncf %207 : vector<8x128xf32> to vector<8x128xbf16>
    %c232 = arith.constant 232 : index
    %c0_104 = arith.constant 0 : index
    %209 = vector.load %arg6[%c232, %c0_104] : memref<400x128xbf16, #tpu.memory_space<vmem>>, vector<8x128xbf16>
    tpu.vector_store %arg6[%c232, %c0_104], %208 {strides = array<i32>} : memref<400x128xbf16, #tpu.memory_space<vmem>>, vector<8x128xbf16>,
    %c10_i32_105 = arith.constant 10 : i32
    %210 = tpu.dynamic_rotate %0 by %c10_i32_105 dim 1 : vector<8x128xf32>, i32 -> vector<8x128xf32>
    %c5_106 = arith.constant 5 : index
    %c0_107 = arith.constant 0 : index
    %c0_108 = arith.constant 0 : index
    %211 = vector.load %arg2[%c5_106, %c0_107, %c0_108] : memref<25x1x128xf32, #tpu.memory_space<vmem>>, vector<1x1x128xf32>
    %212 = vector.shape_cast %211 : vector<1x1x128xf32> to vector<1x128xf32>
    %213 = vector.broadcast %212 : vector<1x128xf32> to vector<8x128xf32>
    %214 = arith.mulf %210, %213 : vector<8x128xf32>
    %215 = arith.truncf %214 : vector<8x128xf32> to vector<8x128xbf16>
    %c240 = arith.constant 240 : index
    %c0_109 = arith.constant 0 : index
    %216 = vector.load %arg6[%c240, %c0_109] : memref<400x128xbf16, #tpu.memory_space<vmem>>, vector<8x128xbf16>
    tpu.vector_store %arg6[%c240, %c0_109], %215 {strides = array<i32>} : memref<400x128xbf16, #tpu.memory_space<vmem>>, vector<8x128xbf16>,
    %c9_i32_110 = arith.constant 9 : i32
    %217 = tpu.dynamic_rotate %0 by %c9_i32_110 dim 1 : vector<8x128xf32>, i32 -> vector<8x128xf32>
    %c6_111 = arith.constant 6 : index
    %c0_112 = arith.constant 0 : index
    %c0_113 = arith.constant 0 : index
    %218 = vector.load %arg2[%c6_111, %c0_112, %c0_113] : memref<25x1x128xf32, #tpu.memory_space<vmem>>, vector<1x1x128xf32>
    %219 = vector.shape_cast %218 : vector<1x1x128xf32> to vector<1x128xf32>
    %220 = vector.broadcast %219 : vector<1x128xf32> to vector<8x128xf32>
    %221 = arith.mulf %217, %220 : vector<8x128xf32>
    %222 = arith.truncf %221 : vector<8x128xf32> to vector<8x128xbf16>
    %c248 = arith.constant 248 : index
    %c0_114 = arith.constant 0 : index
    %223 = vector.load %arg6[%c248, %c0_114] : memref<400x128xbf16, #tpu.memory_space<vmem>>, vector<8x128xbf16>
    tpu.vector_store %arg6[%c248, %c0_114], %222 {strides = array<i32>} : memref<400x128xbf16, #tpu.memory_space<vmem>>, vector<8x128xbf16>,
    %c8_i32_115 = arith.constant 8 : i32
    %224 = tpu.dynamic_rotate %0 by %c8_i32_115 dim 1 : vector<8x128xf32>, i32 -> vector<8x128xf32>
    %c7_116 = arith.constant 7 : index
    %c0_117 = arith.constant 0 : index
    %c0_118 = arith.constant 0 : index
    %225 = vector.load %arg2[%c7_116, %c0_117, %c0_118] : memref<25x1x128xf32, #tpu.memory_space<vmem>>, vector<1x1x128xf32>
    %226 = vector.shape_cast %225 : vector<1x1x128xf32> to vector<1x128xf32>
    %227 = vector.broadcast %226 : vector<1x128xf32> to vector<8x128xf32>
    %228 = arith.mulf %224, %227 : vector<8x128xf32>
    %229 = arith.truncf %228 : vector<8x128xf32> to vector<8x128xbf16>
    %c256 = arith.constant 256 : index
    %c0_119 = arith.constant 0 : index
    %230 = vector.load %arg6[%c256, %c0_119] : memref<400x128xbf16, #tpu.memory_space<vmem>>, vector<8x128xbf16>
    tpu.vector_store %arg6[%c256, %c0_119], %229 {strides = array<i32>} : memref<400x128xbf16, #tpu.memory_space<vmem>>, vector<8x128xbf16>,
    %c7_i32_120 = arith.constant 7 : i32
    %231 = tpu.dynamic_rotate %0 by %c7_i32_120 dim 1 : vector<8x128xf32>, i32 -> vector<8x128xf32>
    %c8_121 = arith.constant 8 : index
    %c0_122 = arith.constant 0 : index
    %c0_123 = arith.constant 0 : index
    %232 = vector.load %arg2[%c8_121, %c0_122, %c0_123] : memref<25x1x128xf32, #tpu.memory_space<vmem>>, vector<1x1x128xf32>
    %233 = vector.shape_cast %232 : vector<1x1x128xf32> to vector<1x128xf32>
    %234 = vector.broadcast %233 : vector<1x128xf32> to vector<8x128xf32>
    %235 = arith.mulf %231, %234 : vector<8x128xf32>
    %236 = arith.truncf %235 : vector<8x128xf32> to vector<8x128xbf16>
    %c264 = arith.constant 264 : index
    %c0_124 = arith.constant 0 : index
    %237 = vector.load %arg6[%c264, %c0_124] : memref<400x128xbf16, #tpu.memory_space<vmem>>, vector<8x128xbf16>
    tpu.vector_store %arg6[%c264, %c0_124], %236 {strides = array<i32>} : memref<400x128xbf16, #tpu.memory_space<vmem>>, vector<8x128xbf16>,
    %c6_i32_125 = arith.constant 6 : i32
    %238 = tpu.dynamic_rotate %0 by %c6_i32_125 dim 1 : vector<8x128xf32>, i32 -> vector<8x128xf32>
    %c9_126 = arith.constant 9 : index
    %c0_127 = arith.constant 0 : index
    %c0_128 = arith.constant 0 : index
    %239 = vector.load %arg2[%c9_126, %c0_127, %c0_128] : memref<25x1x128xf32, #tpu.memory_space<vmem>>, vector<1x1x128xf32>
    %240 = vector.shape_cast %239 : vector<1x1x128xf32> to vector<1x128xf32>
    %241 = vector.broadcast %240 : vector<1x128xf32> to vector<8x128xf32>
    %242 = arith.mulf %238, %241 : vector<8x128xf32>
    %243 = arith.truncf %242 : vector<8x128xf32> to vector<8x128xbf16>
    %c272 = arith.constant 272 : index
    %c0_129 = arith.constant 0 : index
    %244 = vector.load %arg6[%c272, %c0_129] : memref<400x128xbf16, #tpu.memory_space<vmem>>, vector<8x128xbf16>
    tpu.vector_store %arg6[%c272, %c0_129], %243 {strides = array<i32>} : memref<400x128xbf16, #tpu.memory_space<vmem>>, vector<8x128xbf16>,
    %c2_i32_130 = arith.constant 2 : i32
    %245 = tpu.dynamic_rotate %0 by %c2_i32_130 dim 1 : vector<8x128xf32>, i32 -> vector<8x128xf32>
    %c10_131 = arith.constant 10 : index
    %c0_132 = arith.constant 0 : index
    %c0_133 = arith.constant 0 : index
    %246 = vector.load %arg2[%c10_131, %c0_132, %c0_133] : memref<25x1x128xf32, #tpu.memory_space<vmem>>, vector<1x1x128xf32>
    %247 = vector.shape_cast %246 : vector<1x1x128xf32> to vector<1x128xf32>
    %248 = vector.broadcast %247 : vector<1x128xf32> to vector<8x128xf32>
    %249 = arith.mulf %245, %248 : vector<8x128xf32>
    %250 = arith.truncf %249 : vector<8x128xf32> to vector<8x128xbf16>
    %c280 = arith.constant 280 : index
    %c0_134 = arith.constant 0 : index
    %251 = vector.load %arg6[%c280, %c0_134] : memref<400x128xbf16, #tpu.memory_space<vmem>>, vector<8x128xbf16>
    tpu.vector_store %arg6[%c280, %c0_134], %250 {strides = array<i32>} : memref<400x128xbf16, #tpu.memory_space<vmem>>, vector<8x128xbf16>,
    %c1_i32_135 = arith.constant 1 : i32
    %252 = tpu.dynamic_rotate %0 by %c1_i32_135 dim 1 : vector<8x128xf32>, i32 -> vector<8x128xf32>
    %c11_136 = arith.constant 11 : index
    %c0_137 = arith.constant 0 : index
    %c0_138 = arith.constant 0 : index
    %253 = vector.load %arg2[%c11_136, %c0_137, %c0_138] : memref<25x1x128xf32, #tpu.memory_space<vmem>>, vector<1x1x128xf32>
    %254 = vector.shape_cast %253 : vector<1x1x128xf32> to vector<1x128xf32>
    %255 = vector.broadcast %254 : vector<1x128xf32> to vector<8x128xf32>
    %256 = arith.mulf %252, %255 : vector<8x128xf32>
    %257 = arith.truncf %256 : vector<8x128xf32> to vector<8x128xbf16>
    %c288 = arith.constant 288 : index
    %c0_139 = arith.constant 0 : index
    %258 = vector.load %arg6[%c288, %c0_139] : memref<400x128xbf16, #tpu.memory_space<vmem>>, vector<8x128xbf16>
    tpu.vector_store %arg6[%c288, %c0_139], %257 {strides = array<i32>} : memref<400x128xbf16, #tpu.memory_space<vmem>>, vector<8x128xbf16>,
    %259 = arith.truncf %0 : vector<8x128xf32> to vector<8x128xbf16>
    %c296 = arith.constant 296 : index
    %c0_140 = arith.constant 0 : index
    %260 = vector.load %arg6[%c296, %c0_140] : memref<400x128xbf16, #tpu.memory_space<vmem>>, vector<8x128xbf16>
    tpu.vector_store %arg6[%c296, %c0_140], %259 {strides = array<i32>} : memref<400x128xbf16, #tpu.memory_space<vmem>>, vector<8x128xbf16>,
    %c127_i32_141 = arith.constant 127 : i32
    %261 = tpu.dynamic_rotate %0 by %c127_i32_141 dim 1 : vector<8x128xf32>, i32 -> vector<8x128xf32>
    %c13_142 = arith.constant 13 : index
    %c0_143 = arith.constant 0 : index
    %c0_144 = arith.constant 0 : index
    %262 = vector.load %arg2[%c13_142, %c0_143, %c0_144] : memref<25x1x128xf32, #tpu.memory_space<vmem>>, vector<1x1x128xf32>
    %263 = vector.shape_cast %262 : vector<1x1x128xf32> to vector<1x128xf32>
    %264 = vector.broadcast %263 : vector<1x128xf32> to vector<8x128xf32>
    %265 = arith.mulf %261, %264 : vector<8x128xf32>
    %266 = arith.truncf %265 : vector<8x128xf32> to vector<8x128xbf16>
    %c304 = arith.constant 304 : index
    %c0_145 = arith.constant 0 : index
    %267 = vector.load %arg6[%c304, %c0_145] : memref<400x128xbf16, #tpu.memory_space<vmem>>, vector<8x128xbf16>
    tpu.vector_store %arg6[%c304, %c0_145], %266 {strides = array<i32>} : memref<400x128xbf16, #tpu.memory_space<vmem>>, vector<8x128xbf16>,
    %c126_i32_146 = arith.constant 126 : i32
    %268 = tpu.dynamic_rotate %0 by %c126_i32_146 dim 1 : vector<8x128xf32>, i32 -> vector<8x128xf32>
    %c14_147 = arith.constant 14 : index
    %c0_148 = arith.constant 0 : index
    %c0_149 = arith.constant 0 : index
    %269 = vector.load %arg2[%c14_147, %c0_148, %c0_149] : memref<25x1x128xf32, #tpu.memory_space<vmem>>, vector<1x1x128xf32>
    %270 = vector.shape_cast %269 : vector<1x1x128xf32> to vector<1x128xf32>
    %271 = vector.broadcast %270 : vector<1x128xf32> to vector<8x128xf32>
    %272 = arith.mulf %268, %271 : vector<8x128xf32>
    %273 = arith.truncf %272 : vector<8x128xf32> to vector<8x128xbf16>
    %c312 = arith.constant 312 : index
    %c0_150 = arith.constant 0 : index
    %274 = vector.load %arg6[%c312, %c0_150] : memref<400x128xbf16, #tpu.memory_space<vmem>>, vector<8x128xbf16>
    tpu.vector_store %arg6[%c312, %c0_150], %273 {strides = array<i32>} : memref<400x128xbf16, #tpu.memory_space<vmem>>, vector<8x128xbf16>,
    %c122_i32_151 = arith.constant 122 : i32
    %275 = tpu.dynamic_rotate %0 by %c122_i32_151 dim 1 : vector<8x128xf32>, i32 -> vector<8x128xf32>
    %c15_152 = arith.constant 15 : index
    %c0_153 = arith.constant 0 : index
    %c0_154 = arith.constant 0 : index
    %276 = vector.load %arg2[%c15_152, %c0_153, %c0_154] : memref<25x1x128xf32, #tpu.memory_space<vmem>>, vector<1x1x128xf32>
    %277 = vector.shape_cast %276 : vector<1x1x128xf32> to vector<1x128xf32>
    %278 = vector.broadcast %277 : vector<1x128xf32> to vector<8x128xf32>
    %279 = arith.mulf %275, %278 : vector<8x128xf32>
    %280 = arith.truncf %279 : vector<8x128xf32> to vector<8x128xbf16>
    %c320 = arith.constant 320 : index
    %c0_155 = arith.constant 0 : index
    %281 = vector.load %arg6[%c320, %c0_155] : memref<400x128xbf16, #tpu.memory_space<vmem>>, vector<8x128xbf16>
    tpu.vector_store %arg6[%c320, %c0_155], %280 {strides = array<i32>} : memref<400x128xbf16, #tpu.memory_space<vmem>>, vector<8x128xbf16>,
    %c121_i32_156 = arith.constant 121 : i32
    %282 = tpu.dynamic_rotate %0 by %c121_i32_156 dim 1 : vector<8x128xf32>, i32 -> vector<8x128xf32>
    %c16_157 = arith.constant 16 : index
    %c0_158 = arith.constant 0 : index
    %c0_159 = arith.constant 0 : index
    %283 = vector.load %arg2[%c16_157, %c0_158, %c0_159] : memref<25x1x128xf32, #tpu.memory_space<vmem>>, vector<1x1x128xf32>
    %284 = vector.shape_cast %283 : vector<1x1x128xf32> to vector<1x128xf32>
    %285 = vector.broadcast %284 : vector<1x128xf32> to vector<8x128xf32>
    %286 = arith.mulf %282, %285 : vector<8x128xf32>
    %287 = arith.truncf %286 : vector<8x128xf32> to vector<8x128xbf16>
    %c328 = arith.constant 328 : index
    %c0_160 = arith.constant 0 : index
    %288 = vector.load %arg6[%c328, %c0_160] : memref<400x128xbf16, #tpu.memory_space<vmem>>, vector<8x128xbf16>
    tpu.vector_store %arg6[%c328, %c0_160], %287 {strides = array<i32>} : memref<400x128xbf16, #tpu.memory_space<vmem>>, vector<8x128xbf16>,
    %c120_i32_161 = arith.constant 120 : i32
    %289 = tpu.dynamic_rotate %0 by %c120_i32_161 dim 1 : vector<8x128xf32>, i32 -> vector<8x128xf32>
    %c17_162 = arith.constant 17 : index
    %c0_163 = arith.constant 0 : index
    %c0_164 = arith.constant 0 : index
    %290 = vector.load %arg2[%c17_162, %c0_163, %c0_164] : memref<25x1x128xf32, #tpu.memory_space<vmem>>, vector<1x1x128xf32>
    %291 = vector.shape_cast %290 : vector<1x1x128xf32> to vector<1x128xf32>
    %292 = vector.broadcast %291 : vector<1x128xf32> to vector<8x128xf32>
    %293 = arith.mulf %289, %292 : vector<8x128xf32>
    %294 = arith.truncf %293 : vector<8x128xf32> to vector<8x128xbf16>
    %c336 = arith.constant 336 : index
    %c0_165 = arith.constant 0 : index
    %295 = vector.load %arg6[%c336, %c0_165] : memref<400x128xbf16, #tpu.memory_space<vmem>>, vector<8x128xbf16>
    tpu.vector_store %arg6[%c336, %c0_165], %294 {strides = array<i32>} : memref<400x128xbf16, #tpu.memory_space<vmem>>, vector<8x128xbf16>,
    %c119_i32_166 = arith.constant 119 : i32
    %296 = tpu.dynamic_rotate %0 by %c119_i32_166 dim 1 : vector<8x128xf32>, i32 -> vector<8x128xf32>
    %c18_167 = arith.constant 18 : index
    %c0_168 = arith.constant 0 : index
    %c0_169 = arith.constant 0 : index
    %297 = vector.load %arg2[%c18_167, %c0_168, %c0_169] : memref<25x1x128xf32, #tpu.memory_space<vmem>>, vector<1x1x128xf32>
    %298 = vector.shape_cast %297 : vector<1x1x128xf32> to vector<1x128xf32>
    %299 = vector.broadcast %298 : vector<1x128xf32> to vector<8x128xf32>
    %300 = arith.mulf %296, %299 : vector<8x128xf32>
    %301 = arith.truncf %300 : vector<8x128xf32> to vector<8x128xbf16>
    %c344 = arith.constant 344 : index
    %c0_170 = arith.constant 0 : index
    %302 = vector.load %arg6[%c344, %c0_170] : memref<400x128xbf16, #tpu.memory_space<vmem>>, vector<8x128xbf16>
    tpu.vector_store %arg6[%c344, %c0_170], %301 {strides = array<i32>} : memref<400x128xbf16, #tpu.memory_space<vmem>>, vector<8x128xbf16>,
    %c118_i32_171 = arith.constant 118 : i32
    %303 = tpu.dynamic_rotate %0 by %c118_i32_171 dim 1 : vector<8x128xf32>, i32 -> vector<8x128xf32>
    %c19_172 = arith.constant 19 : index
    %c0_173 = arith.constant 0 : index
    %c0_174 = arith.constant 0 : index
    %304 = vector.load %arg2[%c19_172, %c0_173, %c0_174] : memref<25x1x128xf32, #tpu.memory_space<vmem>>, vector<1x1x128xf32>
    %305 = vector.shape_cast %304 : vector<1x1x128xf32> to vector<1x128xf32>
    %306 = vector.broadcast %305 : vector<1x128xf32> to vector<8x128xf32>
    %307 = arith.mulf %303, %306 : vector<8x128xf32>
    %308 = arith.truncf %307 : vector<8x128xf32> to vector<8x128xbf16>
    %c352 = arith.constant 352 : index
    %c0_175 = arith.constant 0 : index
    %309 = vector.load %arg6[%c352, %c0_175] : memref<400x128xbf16, #tpu.memory_space<vmem>>, vector<8x128xbf16>
    tpu.vector_store %arg6[%c352, %c0_175], %308 {strides = array<i32>} : memref<400x128xbf16, #tpu.memory_space<vmem>>, vector<8x128xbf16>,
    %c114_i32_176 = arith.constant 114 : i32
    %310 = tpu.dynamic_rotate %0 by %c114_i32_176 dim 1 : vector<8x128xf32>, i32 -> vector<8x128xf32>
    %c20_177 = arith.constant 20 : index
    %c0_178 = arith.constant 0 : index
    %c0_179 = arith.constant 0 : index
    %311 = vector.load %arg2[%c20_177, %c0_178, %c0_179] : memref<25x1x128xf32, #tpu.memory_space<vmem>>, vector<1x1x128xf32>
    %312 = vector.shape_cast %311 : vector<1x1x128xf32> to vector<1x128xf32>
    %313 = vector.broadcast %312 : vector<1x128xf32> to vector<8x128xf32>
    %314 = arith.mulf %310, %313 : vector<8x128xf32>
    %315 = arith.truncf %314 : vector<8x128xf32> to vector<8x128xbf16>
    %c360 = arith.constant 360 : index
    %c0_180 = arith.constant 0 : index
    %316 = vector.load %arg6[%c360, %c0_180] : memref<400x128xbf16, #tpu.memory_space<vmem>>, vector<8x128xbf16>
    tpu.vector_store %arg6[%c360, %c0_180], %315 {strides = array<i32>} : memref<400x128xbf16, #tpu.memory_space<vmem>>, vector<8x128xbf16>,
    %c113_i32_181 = arith.constant 113 : i32
    %317 = tpu.dynamic_rotate %0 by %c113_i32_181 dim 1 : vector<8x128xf32>, i32 -> vector<8x128xf32>
    %c21_182 = arith.constant 21 : index
    %c0_183 = arith.constant 0 : index
    %c0_184 = arith.constant 0 : index
    %318 = vector.load %arg2[%c21_182, %c0_183, %c0_184] : memref<25x1x128xf32, #tpu.memory_space<vmem>>, vector<1x1x128xf32>
    %319 = vector.shape_cast %318 : vector<1x1x128xf32> to vector<1x128xf32>
    %320 = vector.broadcast %319 : vector<1x128xf32> to vector<8x128xf32>
    %321 = arith.mulf %317, %320 : vector<8x128xf32>
    %322 = arith.truncf %321 : vector<8x128xf32> to vector<8x128xbf16>
    %c368 = arith.constant 368 : index
    %c0_185 = arith.constant 0 : index
    %323 = vector.load %arg6[%c368, %c0_185] : memref<400x128xbf16, #tpu.memory_space<vmem>>, vector<8x128xbf16>
    tpu.vector_store %arg6[%c368, %c0_185], %322 {strides = array<i32>} : memref<400x128xbf16, #tpu.memory_space<vmem>>, vector<8x128xbf16>,
    %c112_i32_186 = arith.constant 112 : i32
    %324 = tpu.dynamic_rotate %0 by %c112_i32_186 dim 1 : vector<8x128xf32>, i32 -> vector<8x128xf32>
    %c22_187 = arith.constant 22 : index
    %c0_188 = arith.constant 0 : index
    %c0_189 = arith.constant 0 : index
    %325 = vector.load %arg2[%c22_187, %c0_188, %c0_189] : memref<25x1x128xf32, #tpu.memory_space<vmem>>, vector<1x1x128xf32>
    %326 = vector.shape_cast %325 : vector<1x1x128xf32> to vector<1x128xf32>
    %327 = vector.broadcast %326 : vector<1x128xf32> to vector<8x128xf32>
    %328 = arith.mulf %324, %327 : vector<8x128xf32>
    %329 = arith.truncf %328 : vector<8x128xf32> to vector<8x128xbf16>
    %c376 = arith.constant 376 : index
    %c0_190 = arith.constant 0 : index
    %330 = vector.load %arg6[%c376, %c0_190] : memref<400x128xbf16, #tpu.memory_space<vmem>>, vector<8x128xbf16>
    tpu.vector_store %arg6[%c376, %c0_190], %329 {strides = array<i32>} : memref<400x128xbf16, #tpu.memory_space<vmem>>, vector<8x128xbf16>,
    %c111_i32_191 = arith.constant 111 : i32
    %331 = tpu.dynamic_rotate %0 by %c111_i32_191 dim 1 : vector<8x128xf32>, i32 -> vector<8x128xf32>
    %c23_192 = arith.constant 23 : index
    %c0_193 = arith.constant 0 : index
    %c0_194 = arith.constant 0 : index
    %332 = vector.load %arg2[%c23_192, %c0_193, %c0_194] : memref<25x1x128xf32, #tpu.memory_space<vmem>>, vector<1x1x128xf32>
    %333 = vector.shape_cast %332 : vector<1x1x128xf32> to vector<1x128xf32>
    %334 = vector.broadcast %333 : vector<1x128xf32> to vector<8x128xf32>
    %335 = arith.mulf %331, %334 : vector<8x128xf32>
    %336 = arith.truncf %335 : vector<8x128xf32> to vector<8x128xbf16>
    %c384 = arith.constant 384 : index
    %c0_195 = arith.constant 0 : index
    %337 = vector.load %arg6[%c384, %c0_195] : memref<400x128xbf16, #tpu.memory_space<vmem>>, vector<8x128xbf16>
    tpu.vector_store %arg6[%c384, %c0_195], %336 {strides = array<i32>} : memref<400x128xbf16, #tpu.memory_space<vmem>>, vector<8x128xbf16>,
    %c110_i32_196 = arith.constant 110 : i32
    %338 = tpu.dynamic_rotate %0 by %c110_i32_196 dim 1 : vector<8x128xf32>, i32 -> vector<8x128xf32>
    %c24_197 = arith.constant 24 : index
    %c0_198 = arith.constant 0 : index
    %c0_199 = arith.constant 0 : index
    %339 = vector.load %arg2[%c24_197, %c0_198, %c0_199] : memref<25x1x128xf32, #tpu.memory_space<vmem>>, vector<1x1x128xf32>
    %340 = vector.shape_cast %339 : vector<1x1x128xf32> to vector<1x128xf32>
    %341 = vector.broadcast %340 : vector<1x128xf32> to vector<8x128xf32>
    %342 = arith.mulf %338, %341 : vector<8x128xf32>
    %343 = arith.truncf %342 : vector<8x128xf32> to vector<8x128xbf16>
    %c392 = arith.constant 392 : index
    %c0_200 = arith.constant 0 : index
    %344 = vector.load %arg6[%c392, %c0_200] : memref<400x128xbf16, #tpu.memory_space<vmem>>, vector<8x128xbf16>
    tpu.vector_store %arg6[%c392, %c0_200], %343 {strides = array<i32>} : memref<400x128xbf16, #tpu.memory_space<vmem>>, vector<8x128xbf16>,
    %c0_201 = arith.constant 0 : index
    %c0_202 = arith.constant 0 : index
    %c0_203 = arith.constant 0 : index
    %345 = vector.load %arg3[%c0_201, %c0_202, %c0_203] : memref<1x32x400xbf16, #tpu.memory_space<vmem>>, vector<1x32x400xbf16>
    %346 = vector.shape_cast %345 : vector<1x32x400xbf16> to vector<32x400xbf16>
    %c0_204 = arith.constant 0 : index
    %c0_205 = arith.constant 0 : index
    %347 = vector.load %arg6[%c0_204, %c0_205] : memref<400x128xbf16, #tpu.memory_space<vmem>>, vector<400x128xbf16>
    %cst_206 = arith.constant dense<0.000000e+00> : vector<32x128xf32>
    %348 = tpu.matmul %346, %347, %cst_206 {dimension_numbers = #tpu.dot_dimension_numbers<[1], [0], [0], [1], [0, 0, 1, 1], [], []>} : vector<32x400xbf16>, vector<400x128xbf16>, vector<32x128xf32> -> vector<32x128xf32>
    %c0_207 = arith.constant 0 : index
    %c0_208 = arith.constant 0 : index
    %c0_209 = arith.constant 0 : index
    %349 = vector.load %arg4[%c0_207, %c0_208, %c0_209] : memref<1x32x1xf32, #tpu.memory_space<vmem>>, vector<1x32x1xf32>
    %350 = vector.shape_cast %349 : vector<1x32x1xf32> to vector<32x1xf32>
    %351 = vector.broadcast %350 : vector<32x1xf32> to vector<32x128xf32>
    %352 = arith.addf %348, %351 : vector<32x128xf32>
    %353 = vector.extract_strided_slice %352 {offsets = [0, 0], sizes = [24, 128], strides = [1, 1]} : vector<32x128xf32> to vector<24x128xf32>
    %354 = arith.negf %353 : vector<24x128xf32>
    %355 = math.exp %354 : vector<24x128xf32>
    %cst_210 = arith.constant 1.000000e+00 : f32
    %356 = vector.broadcast %cst_210 : f32 to vector<24x128xf32>
    %357 = arith.addf %356, %355 : vector<24x128xf32>
    %358 = arith.divf %356, %357 : vector<24x128xf32>
    %359 = vector.extract_strided_slice %358 {offsets = [0, 0], sizes = [8, 128], strides = [1, 1]} : vector<24x128xf32> to vector<8x128xf32>
    %360 = vector.extract_strided_slice %358 {offsets = [8, 0], sizes = [8, 128], strides = [1, 1]} : vector<24x128xf32> to vector<8x128xf32>
    %361 = vector.extract_strided_slice %358 {offsets = [16, 0], sizes = [8, 128], strides = [1, 1]} : vector<24x128xf32> to vector<8x128xf32>
    %362 = vector.extract_strided_slice %352 {offsets = [24, 0], sizes = [8, 128], strides = [1, 1]} : vector<32x128xf32> to vector<8x128xf32>
    %363 = math.tanh %362 : vector<8x128xf32>
    %364 = arith.mulf %360, %1 : vector<8x128xf32>
    %365 = arith.mulf %359, %363 : vector<8x128xf32>
    %366 = arith.addf %364, %365 : vector<8x128xf32>
    %367 = math.tanh %366 : vector<8x128xf32>
    %368 = arith.mulf %361, %367 : vector<8x128xf32>
    %c1_i32_211 = arith.constant 1 : i32
    %369 = arith.index_cast %c1_i32_211 : i32 to index
    %c0_212 = arith.constant 0 : index
    %c0_213 = arith.constant 0 : index
    %370 = vector.load %arg1[%369, %c0_212, %c0_213] : memref<4x8x128xf32, #tpu.memory_space<vmem>>, vector<1x8x128xf32>
    %371 = vector.shape_cast %370 : vector<1x8x128xf32> to vector<8x128xf32>
    %c18_i32_214 = arith.constant 18 : i32
    %372 = tpu.dynamic_rotate %371 by %c18_i32_214 dim 1 : vector<8x128xf32>, i32 -> vector<8x128xf32>
    %c0_215 = arith.constant 0 : index
    %c0_216 = arith.constant 0 : index
    %c0_217 = arith.constant 0 : index
    %373 = vector.load %arg2[%c0_215, %c0_216, %c0_217] : memref<25x1x128xf32, #tpu.memory_space<vmem>>, vector<1x1x128xf32>
    %374 = vector.shape_cast %373 : vector<1x1x128xf32> to vector<1x128xf32>
    %375 = vector.broadcast %374 : vector<1x128xf32> to vector<8x128xf32>
    %376 = arith.mulf %372, %375 : vector<8x128xf32>
    %377 = arith.truncf %376 : vector<8x128xf32> to vector<8x128xbf16>
    %c0_218 = arith.constant 0 : index
    %c0_219 = arith.constant 0 : index
    %378 = vector.load %arg6[%c0_218, %c0_219] : memref<400x128xbf16, #tpu.memory_space<vmem>>, vector<8x128xbf16>
    tpu.vector_store %arg6[%c0_218, %c0_219], %377 {strides = array<i32>} : memref<400x128xbf16, #tpu.memory_space<vmem>>, vector<8x128xbf16>,
    %c17_i32_220 = arith.constant 17 : i32
    %379 = tpu.dynamic_rotate %371 by %c17_i32_220 dim 1 : vector<8x128xf32>, i32 -> vector<8x128xf32>
    %c1_221 = arith.constant 1 : index
    %c0_222 = arith.constant 0 : index
    %c0_223 = arith.constant 0 : index
    %380 = vector.load %arg2[%c1_221, %c0_222, %c0_223] : memref<25x1x128xf32, #tpu.memory_space<vmem>>, vector<1x1x128xf32>
    %381 = vector.shape_cast %380 : vector<1x1x128xf32> to vector<1x128xf32>
    %382 = vector.broadcast %381 : vector<1x128xf32> to vector<8x128xf32>
    %383 = arith.mulf %379, %382 : vector<8x128xf32>
    %384 = arith.truncf %383 : vector<8x128xf32> to vector<8x128xbf16>
    %c8_224 = arith.constant 8 : index
    %c0_225 = arith.constant 0 : index
    %385 = vector.load %arg6[%c8_224, %c0_225] : memref<400x128xbf16, #tpu.memory_space<vmem>>, vector<8x128xbf16>
    tpu.vector_store %arg6[%c8_224, %c0_225], %384 {strides = array<i32>} : memref<400x128xbf16, #tpu.memory_space<vmem>>, vector<8x128xbf16>,
    %c16_i32_226 = arith.constant 16 : i32
    %386 = tpu.dynamic_rotate %371 by %c16_i32_226 dim 1 : vector<8x128xf32>, i32 -> vector<8x128xf32>
    %c2_227 = arith.constant 2 : index
    %c0_228 = arith.constant 0 : index
    %c0_229 = arith.constant 0 : index
    %387 = vector.load %arg2[%c2_227, %c0_228, %c0_229] : memref<25x1x128xf32, #tpu.memory_space<vmem>>, vector<1x1x128xf32>
    %388 = vector.shape_cast %387 : vector<1x1x128xf32> to vector<1x128xf32>
    %389 = vector.broadcast %388 : vector<1x128xf32> to vector<8x128xf32>
    %390 = arith.mulf %386, %389 : vector<8x128xf32>
    %391 = arith.truncf %390 : vector<8x128xf32> to vector<8x128xbf16>
    %c16_230 = arith.constant 16 : index
    %c0_231 = arith.constant 0 : index
    %392 = vector.load %arg6[%c16_230, %c0_231] : memref<400x128xbf16, #tpu.memory_space<vmem>>, vector<8x128xbf16>
    tpu.vector_store %arg6[%c16_230, %c0_231], %391 {strides = array<i32>} : memref<400x128xbf16, #tpu.memory_space<vmem>>, vector<8x128xbf16>,
    %c15_i32_232 = arith.constant 15 : i32
    %393 = tpu.dynamic_rotate %371 by %c15_i32_232 dim 1 : vector<8x128xf32>, i32 -> vector<8x128xf32>
    %c3_233 = arith.constant 3 : index
    %c0_234 = arith.constant 0 : index
    %c0_235 = arith.constant 0 : index
    %394 = vector.load %arg2[%c3_233, %c0_234, %c0_235] : memref<25x1x128xf32, #tpu.memory_space<vmem>>, vector<1x1x128xf32>
    %395 = vector.shape_cast %394 : vector<1x1x128xf32> to vector<1x128xf32>
    %396 = vector.broadcast %395 : vector<1x128xf32> to vector<8x128xf32>
    %397 = arith.mulf %393, %396 : vector<8x128xf32>
    %398 = arith.truncf %397 : vector<8x128xf32> to vector<8x128xbf16>
    %c24_236 = arith.constant 24 : index
    %c0_237 = arith.constant 0 : index
    %399 = vector.load %arg6[%c24_236, %c0_237] : memref<400x128xbf16, #tpu.memory_space<vmem>>, vector<8x128xbf16>
    tpu.vector_store %arg6[%c24_236, %c0_237], %398 {strides = array<i32>} : memref<400x128xbf16, #tpu.memory_space<vmem>>, vector<8x128xbf16>,
    %c14_i32_238 = arith.constant 14 : i32
    %400 = tpu.dynamic_rotate %371 by %c14_i32_238 dim 1 : vector<8x128xf32>, i32 -> vector<8x128xf32>
    %c4_239 = arith.constant 4 : index
    %c0_240 = arith.constant 0 : index
    %c0_241 = arith.constant 0 : index
    %401 = vector.load %arg2[%c4_239, %c0_240, %c0_241] : memref<25x1x128xf32, #tpu.memory_space<vmem>>, vector<1x1x128xf32>
    %402 = vector.shape_cast %401 : vector<1x1x128xf32> to vector<1x128xf32>
    %403 = vector.broadcast %402 : vector<1x128xf32> to vector<8x128xf32>
    %404 = arith.mulf %400, %403 : vector<8x128xf32>
    %405 = arith.truncf %404 : vector<8x128xf32> to vector<8x128xbf16>
    %c32_242 = arith.constant 32 : index
    %c0_243 = arith.constant 0 : index
    %406 = vector.load %arg6[%c32_242, %c0_243] : memref<400x128xbf16, #tpu.memory_space<vmem>>, vector<8x128xbf16>
    tpu.vector_store %arg6[%c32_242, %c0_243], %405 {strides = array<i32>} : memref<400x128xbf16, #tpu.memory_space<vmem>>, vector<8x128xbf16>,
    %c10_i32_244 = arith.constant 10 : i32
    %407 = tpu.dynamic_rotate %371 by %c10_i32_244 dim 1 : vector<8x128xf32>, i32 -> vector<8x128xf32>
    %c5_245 = arith.constant 5 : index
    %c0_246 = arith.constant 0 : index
    %c0_247 = arith.constant 0 : index
    %408 = vector.load %arg2[%c5_245, %c0_246, %c0_247] : memref<25x1x128xf32, #tpu.memory_space<vmem>>, vector<1x1x128xf32>
    %409 = vector.shape_cast %408 : vector<1x1x128xf32> to vector<1x128xf32>
    %410 = vector.broadcast %409 : vector<1x128xf32> to vector<8x128xf32>
    %411 = arith.mulf %407, %410 : vector<8x128xf32>
    %412 = arith.truncf %411 : vector<8x128xf32> to vector<8x128xbf16>
    %c40_248 = arith.constant 40 : index
    %c0_249 = arith.constant 0 : index
    %413 = vector.load %arg6[%c40_248, %c0_249] : memref<400x128xbf16, #tpu.memory_space<vmem>>, vector<8x128xbf16>
    tpu.vector_store %arg6[%c40_248, %c0_249], %412 {strides = array<i32>} : memref<400x128xbf16, #tpu.memory_space<vmem>>, vector<8x128xbf16>,
    %c9_i32_250 = arith.constant 9 : i32
    %414 = tpu.dynamic_rotate %371 by %c9_i32_250 dim 1 : vector<8x128xf32>, i32 -> vector<8x128xf32>
    %c6_251 = arith.constant 6 : index
    %c0_252 = arith.constant 0 : index
    %c0_253 = arith.constant 0 : index
    %415 = vector.load %arg2[%c6_251, %c0_252, %c0_253] : memref<25x1x128xf32, #tpu.memory_space<vmem>>, vector<1x1x128xf32>
    %416 = vector.shape_cast %415 : vector<1x1x128xf32> to vector<1x128xf32>
    %417 = vector.broadcast %416 : vector<1x128xf32> to vector<8x128xf32>
    %418 = arith.mulf %414, %417 : vector<8x128xf32>
    %419 = arith.truncf %418 : vector<8x128xf32> to vector<8x128xbf16>
    %c48_254 = arith.constant 48 : index
    %c0_255 = arith.constant 0 : index
    %420 = vector.load %arg6[%c48_254, %c0_255] : memref<400x128xbf16, #tpu.memory_space<vmem>>, vector<8x128xbf16>
    tpu.vector_store %arg6[%c48_254, %c0_255], %419 {strides = array<i32>} : memref<400x128xbf16, #tpu.memory_space<vmem>>, vector<8x128xbf16>,
    %c8_i32_256 = arith.constant 8 : i32
    %421 = tpu.dynamic_rotate %371 by %c8_i32_256 dim 1 : vector<8x128xf32>, i32 -> vector<8x128xf32>
    %c7_257 = arith.constant 7 : index
    %c0_258 = arith.constant 0 : index
    %c0_259 = arith.constant 0 : index
    %422 = vector.load %arg2[%c7_257, %c0_258, %c0_259] : memref<25x1x128xf32, #tpu.memory_space<vmem>>, vector<1x1x128xf32>
    %423 = vector.shape_cast %422 : vector<1x1x128xf32> to vector<1x128xf32>
    %424 = vector.broadcast %423 : vector<1x128xf32> to vector<8x128xf32>
    %425 = arith.mulf %421, %424 : vector<8x128xf32>
    %426 = arith.truncf %425 : vector<8x128xf32> to vector<8x128xbf16>
    %c56_260 = arith.constant 56 : index
    %c0_261 = arith.constant 0 : index
    %427 = vector.load %arg6[%c56_260, %c0_261] : memref<400x128xbf16, #tpu.memory_space<vmem>>, vector<8x128xbf16>
    tpu.vector_store %arg6[%c56_260, %c0_261], %426 {strides = array<i32>} : memref<400x128xbf16, #tpu.memory_space<vmem>>, vector<8x128xbf16>,
    %c7_i32_262 = arith.constant 7 : i32
    %428 = tpu.dynamic_rotate %371 by %c7_i32_262 dim 1 : vector<8x128xf32>, i32 -> vector<8x128xf32>
    %c8_263 = arith.constant 8 : index
    %c0_264 = arith.constant 0 : index
    %c0_265 = arith.constant 0 : index
    %429 = vector.load %arg2[%c8_263, %c0_264, %c0_265] : memref<25x1x128xf32, #tpu.memory_space<vmem>>, vector<1x1x128xf32>
    %430 = vector.shape_cast %429 : vector<1x1x128xf32> to vector<1x128xf32>
    %431 = vector.broadcast %430 : vector<1x128xf32> to vector<8x128xf32>
    %432 = arith.mulf %428, %431 : vector<8x128xf32>
    %433 = arith.truncf %432 : vector<8x128xf32> to vector<8x128xbf16>
    %c64_266 = arith.constant 64 : index
    %c0_267 = arith.constant 0 : index
    %434 = vector.load %arg6[%c64_266, %c0_267] : memref<400x128xbf16, #tpu.memory_space<vmem>>, vector<8x128xbf16>
    tpu.vector_store %arg6[%c64_266, %c0_267], %433 {strides = array<i32>} : memref<400x128xbf16, #tpu.memory_space<vmem>>, vector<8x128xbf16>,
    %c6_i32_268 = arith.constant 6 : i32
    %435 = tpu.dynamic_rotate %371 by %c6_i32_268 dim 1 : vector<8x128xf32>, i32 -> vector<8x128xf32>
    %c9_269 = arith.constant 9 : index
    %c0_270 = arith.constant 0 : index
    %c0_271 = arith.constant 0 : index
    %436 = vector.load %arg2[%c9_269, %c0_270, %c0_271] : memref<25x1x128xf32, #tpu.memory_space<vmem>>, vector<1x1x128xf32>
    %437 = vector.shape_cast %436 : vector<1x1x128xf32> to vector<1x128xf32>
    %438 = vector.broadcast %437 : vector<1x128xf32> to vector<8x128xf32>
    %439 = arith.mulf %435, %438 : vector<8x128xf32>
    %440 = arith.truncf %439 : vector<8x128xf32> to vector<8x128xbf16>
    %c72_272 = arith.constant 72 : index
    %c0_273 = arith.constant 0 : index
    %441 = vector.load %arg6[%c72_272, %c0_273] : memref<400x128xbf16, #tpu.memory_space<vmem>>, vector<8x128xbf16>
    tpu.vector_store %arg6[%c72_272, %c0_273], %440 {strides = array<i32>} : memref<400x128xbf16, #tpu.memory_space<vmem>>, vector<8x128xbf16>,
    %c2_i32_274 = arith.constant 2 : i32
    %442 = tpu.dynamic_rotate %371 by %c2_i32_274 dim 1 : vector<8x128xf32>, i32 -> vector<8x128xf32>
    %c10_275 = arith.constant 10 : index
    %c0_276 = arith.constant 0 : index
    %c0_277 = arith.constant 0 : index
    %443 = vector.load %arg2[%c10_275, %c0_276, %c0_277] : memref<25x1x128xf32, #tpu.memory_space<vmem>>, vector<1x1x128xf32>
    %444 = vector.shape_cast %443 : vector<1x1x128xf32> to vector<1x128xf32>
    %445 = vector.broadcast %444 : vector<1x128xf32> to vector<8x128xf32>
    %446 = arith.mulf %442, %445 : vector<8x128xf32>
    %447 = arith.truncf %446 : vector<8x128xf32> to vector<8x128xbf16>
    %c80_278 = arith.constant 80 : index
    %c0_279 = arith.constant 0 : index
    %448 = vector.load %arg6[%c80_278, %c0_279] : memref<400x128xbf16, #tpu.memory_space<vmem>>, vector<8x128xbf16>
    tpu.vector_store %arg6[%c80_278, %c0_279], %447 {strides = array<i32>} : memref<400x128xbf16, #tpu.memory_space<vmem>>, vector<8x128xbf16>,
    %c1_i32_280 = arith.constant 1 : i32
    %449 = tpu.dynamic_rotate %371 by %c1_i32_280 dim 1 : vector<8x128xf32>, i32 -> vector<8x128xf32>
    %c11_281 = arith.constant 11 : index
    %c0_282 = arith.constant 0 : index
    %c0_283 = arith.constant 0 : index
    %450 = vector.load %arg2[%c11_281, %c0_282, %c0_283] : memref<25x1x128xf32, #tpu.memory_space<vmem>>, vector<1x1x128xf32>
    %451 = vector.shape_cast %450 : vector<1x1x128xf32> to vector<1x128xf32>
    %452 = vector.broadcast %451 : vector<1x128xf32> to vector<8x128xf32>
    %453 = arith.mulf %449, %452 : vector<8x128xf32>
    %454 = arith.truncf %453 : vector<8x128xf32> to vector<8x128xbf16>
    %c88_284 = arith.constant 88 : index
    %c0_285 = arith.constant 0 : index
    %455 = vector.load %arg6[%c88_284, %c0_285] : memref<400x128xbf16, #tpu.memory_space<vmem>>, vector<8x128xbf16>
    tpu.vector_store %arg6[%c88_284, %c0_285], %454 {strides = array<i32>} : memref<400x128xbf16, #tpu.memory_space<vmem>>, vector<8x128xbf16>,
    %456 = arith.truncf %371 : vector<8x128xf32> to vector<8x128xbf16>
    %c96_286 = arith.constant 96 : index
    %c0_287 = arith.constant 0 : index
    %457 = vector.load %arg6[%c96_286, %c0_287] : memref<400x128xbf16, #tpu.memory_space<vmem>>, vector<8x128xbf16>
    tpu.vector_store %arg6[%c96_286, %c0_287], %456 {strides = array<i32>} : memref<400x128xbf16, #tpu.memory_space<vmem>>, vector<8x128xbf16>,
    %c127_i32_288 = arith.constant 127 : i32
    %458 = tpu.dynamic_rotate %371 by %c127_i32_288 dim 1 : vector<8x128xf32>, i32 -> vector<8x128xf32>
    %c13_289 = arith.constant 13 : index
    %c0_290 = arith.constant 0 : index
    %c0_291 = arith.constant 0 : index
    %459 = vector.load %arg2[%c13_289, %c0_290, %c0_291] : memref<25x1x128xf32, #tpu.memory_space<vmem>>, vector<1x1x128xf32>
    %460 = vector.shape_cast %459 : vector<1x1x128xf32> to vector<1x128xf32>
    %461 = vector.broadcast %460 : vector<1x128xf32> to vector<8x128xf32>
    %462 = arith.mulf %458, %461 : vector<8x128xf32>
    %463 = arith.truncf %462 : vector<8x128xf32> to vector<8x128xbf16>
    %c104_292 = arith.constant 104 : index
    %c0_293 = arith.constant 0 : index
    %464 = vector.load %arg6[%c104_292, %c0_293] : memref<400x128xbf16, #tpu.memory_space<vmem>>, vector<8x128xbf16>
    tpu.vector_store %arg6[%c104_292, %c0_293], %463 {strides = array<i32>} : memref<400x128xbf16, #tpu.memory_space<vmem>>, vector<8x128xbf16>,
    %c126_i32_294 = arith.constant 126 : i32
    %465 = tpu.dynamic_rotate %371 by %c126_i32_294 dim 1 : vector<8x128xf32>, i32 -> vector<8x128xf32>
    %c14_295 = arith.constant 14 : index
    %c0_296 = arith.constant 0 : index
    %c0_297 = arith.constant 0 : index
    %466 = vector.load %arg2[%c14_295, %c0_296, %c0_297] : memref<25x1x128xf32, #tpu.memory_space<vmem>>, vector<1x1x128xf32>
    %467 = vector.shape_cast %466 : vector<1x1x128xf32> to vector<1x128xf32>
    %468 = vector.broadcast %467 : vector<1x128xf32> to vector<8x128xf32>
    %469 = arith.mulf %465, %468 : vector<8x128xf32>
    %470 = arith.truncf %469 : vector<8x128xf32> to vector<8x128xbf16>
    %c112_298 = arith.constant 112 : index
    %c0_299 = arith.constant 0 : index
    %471 = vector.load %arg6[%c112_298, %c0_299] : memref<400x128xbf16, #tpu.memory_space<vmem>>, vector<8x128xbf16>
    tpu.vector_store %arg6[%c112_298, %c0_299], %470 {strides = array<i32>} : memref<400x128xbf16, #tpu.memory_space<vmem>>, vector<8x128xbf16>,
    %c122_i32_300 = arith.constant 122 : i32
    %472 = tpu.dynamic_rotate %371 by %c122_i32_300 dim 1 : vector<8x128xf32>, i32 -> vector<8x128xf32>
    %c15_301 = arith.constant 15 : index
    %c0_302 = arith.constant 0 : index
    %c0_303 = arith.constant 0 : index
    %473 = vector.load %arg2[%c15_301, %c0_302, %c0_303] : memref<25x1x128xf32, #tpu.memory_space<vmem>>, vector<1x1x128xf32>
    %474 = vector.shape_cast %473 : vector<1x1x128xf32> to vector<1x128xf32>
    %475 = vector.broadcast %474 : vector<1x128xf32> to vector<8x128xf32>
    %476 = arith.mulf %472, %475 : vector<8x128xf32>
    %477 = arith.truncf %476 : vector<8x128xf32> to vector<8x128xbf16>
    %c120_304 = arith.constant 120 : index
    %c0_305 = arith.constant 0 : index
    %478 = vector.load %arg6[%c120_304, %c0_305] : memref<400x128xbf16, #tpu.memory_space<vmem>>, vector<8x128xbf16>
    tpu.vector_store %arg6[%c120_304, %c0_305], %477 {strides = array<i32>} : memref<400x128xbf16, #tpu.memory_space<vmem>>, vector<8x128xbf16>,
    %c121_i32_306 = arith.constant 121 : i32
    %479 = tpu.dynamic_rotate %371 by %c121_i32_306 dim 1 : vector<8x128xf32>, i32 -> vector<8x128xf32>
    %c16_307 = arith.constant 16 : index
    %c0_308 = arith.constant 0 : index
    %c0_309 = arith.constant 0 : index
    %480 = vector.load %arg2[%c16_307, %c0_308, %c0_309] : memref<25x1x128xf32, #tpu.memory_space<vmem>>, vector<1x1x128xf32>
    %481 = vector.shape_cast %480 : vector<1x1x128xf32> to vector<1x128xf32>
    %482 = vector.broadcast %481 : vector<1x128xf32> to vector<8x128xf32>
    %483 = arith.mulf %479, %482 : vector<8x128xf32>
    %484 = arith.truncf %483 : vector<8x128xf32> to vector<8x128xbf16>
    %c128_310 = arith.constant 128 : index
    %c0_311 = arith.constant 0 : index
    %485 = vector.load %arg6[%c128_310, %c0_311] : memref<400x128xbf16, #tpu.memory_space<vmem>>, vector<8x128xbf16>
    tpu.vector_store %arg6[%c128_310, %c0_311], %484 {strides = array<i32>} : memref<400x128xbf16, #tpu.memory_space<vmem>>, vector<8x128xbf16>,
    %c120_i32_312 = arith.constant 120 : i32
    %486 = tpu.dynamic_rotate %371 by %c120_i32_312 dim 1 : vector<8x128xf32>, i32 -> vector<8x128xf32>
    %c17_313 = arith.constant 17 : index
    %c0_314 = arith.constant 0 : index
    %c0_315 = arith.constant 0 : index
    %487 = vector.load %arg2[%c17_313, %c0_314, %c0_315] : memref<25x1x128xf32, #tpu.memory_space<vmem>>, vector<1x1x128xf32>
    %488 = vector.shape_cast %487 : vector<1x1x128xf32> to vector<1x128xf32>
    %489 = vector.broadcast %488 : vector<1x128xf32> to vector<8x128xf32>
    %490 = arith.mulf %486, %489 : vector<8x128xf32>
    %491 = arith.truncf %490 : vector<8x128xf32> to vector<8x128xbf16>
    %c136_316 = arith.constant 136 : index
    %c0_317 = arith.constant 0 : index
    %492 = vector.load %arg6[%c136_316, %c0_317] : memref<400x128xbf16, #tpu.memory_space<vmem>>, vector<8x128xbf16>
    tpu.vector_store %arg6[%c136_316, %c0_317], %491 {strides = array<i32>} : memref<400x128xbf16, #tpu.memory_space<vmem>>, vector<8x128xbf16>,
    %c119_i32_318 = arith.constant 119 : i32
    %493 = tpu.dynamic_rotate %371 by %c119_i32_318 dim 1 : vector<8x128xf32>, i32 -> vector<8x128xf32>
    %c18_319 = arith.constant 18 : index
    %c0_320 = arith.constant 0 : index
    %c0_321 = arith.constant 0 : index
    %494 = vector.load %arg2[%c18_319, %c0_320, %c0_321] : memref<25x1x128xf32, #tpu.memory_space<vmem>>, vector<1x1x128xf32>
    %495 = vector.shape_cast %494 : vector<1x1x128xf32> to vector<1x128xf32>
    %496 = vector.broadcast %495 : vector<1x128xf32> to vector<8x128xf32>
    %497 = arith.mulf %493, %496 : vector<8x128xf32>
    %498 = arith.truncf %497 : vector<8x128xf32> to vector<8x128xbf16>
    %c144_322 = arith.constant 144 : index
    %c0_323 = arith.constant 0 : index
    %499 = vector.load %arg6[%c144_322, %c0_323] : memref<400x128xbf16, #tpu.memory_space<vmem>>, vector<8x128xbf16>
    tpu.vector_store %arg6[%c144_322, %c0_323], %498 {strides = array<i32>} : memref<400x128xbf16, #tpu.memory_space<vmem>>, vector<8x128xbf16>,
    %c118_i32_324 = arith.constant 118 : i32
    %500 = tpu.dynamic_rotate %371 by %c118_i32_324 dim 1 : vector<8x128xf32>, i32 -> vector<8x128xf32>
    %c19_325 = arith.constant 19 : index
    %c0_326 = arith.constant 0 : index
    %c0_327 = arith.constant 0 : index
    %501 = vector.load %arg2[%c19_325, %c0_326, %c0_327] : memref<25x1x128xf32, #tpu.memory_space<vmem>>, vector<1x1x128xf32>
    %502 = vector.shape_cast %501 : vector<1x1x128xf32> to vector<1x128xf32>
    %503 = vector.broadcast %502 : vector<1x128xf32> to vector<8x128xf32>
    %504 = arith.mulf %500, %503 : vector<8x128xf32>
    %505 = arith.truncf %504 : vector<8x128xf32> to vector<8x128xbf16>
    %c152_328 = arith.constant 152 : index
    %c0_329 = arith.constant 0 : index
    %506 = vector.load %arg6[%c152_328, %c0_329] : memref<400x128xbf16, #tpu.memory_space<vmem>>, vector<8x128xbf16>
    tpu.vector_store %arg6[%c152_328, %c0_329], %505 {strides = array<i32>} : memref<400x128xbf16, #tpu.memory_space<vmem>>, vector<8x128xbf16>,
    %c114_i32_330 = arith.constant 114 : i32
    %507 = tpu.dynamic_rotate %371 by %c114_i32_330 dim 1 : vector<8x128xf32>, i32 -> vector<8x128xf32>
    %c20_331 = arith.constant 20 : index
    %c0_332 = arith.constant 0 : index
    %c0_333 = arith.constant 0 : index
    %508 = vector.load %arg2[%c20_331, %c0_332, %c0_333] : memref<25x1x128xf32, #tpu.memory_space<vmem>>, vector<1x1x128xf32>
    %509 = vector.shape_cast %508 : vector<1x1x128xf32> to vector<1x128xf32>
    %510 = vector.broadcast %509 : vector<1x128xf32> to vector<8x128xf32>
    %511 = arith.mulf %507, %510 : vector<8x128xf32>
    %512 = arith.truncf %511 : vector<8x128xf32> to vector<8x128xbf16>
    %c160_334 = arith.constant 160 : index
    %c0_335 = arith.constant 0 : index
    %513 = vector.load %arg6[%c160_334, %c0_335] : memref<400x128xbf16, #tpu.memory_space<vmem>>, vector<8x128xbf16>
    tpu.vector_store %arg6[%c160_334, %c0_335], %512 {strides = array<i32>} : memref<400x128xbf16, #tpu.memory_space<vmem>>, vector<8x128xbf16>,
    %c113_i32_336 = arith.constant 113 : i32
    %514 = tpu.dynamic_rotate %371 by %c113_i32_336 dim 1 : vector<8x128xf32>, i32 -> vector<8x128xf32>
    %c21_337 = arith.constant 21 : index
    %c0_338 = arith.constant 0 : index
    %c0_339 = arith.constant 0 : index
    %515 = vector.load %arg2[%c21_337, %c0_338, %c0_339] : memref<25x1x128xf32, #tpu.memory_space<vmem>>, vector<1x1x128xf32>
    %516 = vector.shape_cast %515 : vector<1x1x128xf32> to vector<1x128xf32>
    %517 = vector.broadcast %516 : vector<1x128xf32> to vector<8x128xf32>
    %518 = arith.mulf %514, %517 : vector<8x128xf32>
    %519 = arith.truncf %518 : vector<8x128xf32> to vector<8x128xbf16>
    %c168_340 = arith.constant 168 : index
    %c0_341 = arith.constant 0 : index
    %520 = vector.load %arg6[%c168_340, %c0_341] : memref<400x128xbf16, #tpu.memory_space<vmem>>, vector<8x128xbf16>
    tpu.vector_store %arg6[%c168_340, %c0_341], %519 {strides = array<i32>} : memref<400x128xbf16, #tpu.memory_space<vmem>>, vector<8x128xbf16>,
    %c112_i32_342 = arith.constant 112 : i32
    %521 = tpu.dynamic_rotate %371 by %c112_i32_342 dim 1 : vector<8x128xf32>, i32 -> vector<8x128xf32>
    %c22_343 = arith.constant 22 : index
    %c0_344 = arith.constant 0 : index
    %c0_345 = arith.constant 0 : index
    %522 = vector.load %arg2[%c22_343, %c0_344, %c0_345] : memref<25x1x128xf32, #tpu.memory_space<vmem>>, vector<1x1x128xf32>
    %523 = vector.shape_cast %522 : vector<1x1x128xf32> to vector<1x128xf32>
    %524 = vector.broadcast %523 : vector<1x128xf32> to vector<8x128xf32>
    %525 = arith.mulf %521, %524 : vector<8x128xf32>
    %526 = arith.truncf %525 : vector<8x128xf32> to vector<8x128xbf16>
    %c176_346 = arith.constant 176 : index
    %c0_347 = arith.constant 0 : index
    %527 = vector.load %arg6[%c176_346, %c0_347] : memref<400x128xbf16, #tpu.memory_space<vmem>>, vector<8x128xbf16>
    tpu.vector_store %arg6[%c176_346, %c0_347], %526 {strides = array<i32>} : memref<400x128xbf16, #tpu.memory_space<vmem>>, vector<8x128xbf16>,
    %c111_i32_348 = arith.constant 111 : i32
    %528 = tpu.dynamic_rotate %371 by %c111_i32_348 dim 1 : vector<8x128xf32>, i32 -> vector<8x128xf32>
    %c23_349 = arith.constant 23 : index
    %c0_350 = arith.constant 0 : index
    %c0_351 = arith.constant 0 : index
    %529 = vector.load %arg2[%c23_349, %c0_350, %c0_351] : memref<25x1x128xf32, #tpu.memory_space<vmem>>, vector<1x1x128xf32>
    %530 = vector.shape_cast %529 : vector<1x1x128xf32> to vector<1x128xf32>
    %531 = vector.broadcast %530 : vector<1x128xf32> to vector<8x128xf32>
    %532 = arith.mulf %528, %531 : vector<8x128xf32>
    %533 = arith.truncf %532 : vector<8x128xf32> to vector<8x128xbf16>
    %c184_352 = arith.constant 184 : index
    %c0_353 = arith.constant 0 : index
    %534 = vector.load %arg6[%c184_352, %c0_353] : memref<400x128xbf16, #tpu.memory_space<vmem>>, vector<8x128xbf16>
    tpu.vector_store %arg6[%c184_352, %c0_353], %533 {strides = array<i32>} : memref<400x128xbf16, #tpu.memory_space<vmem>>, vector<8x128xbf16>,
    %c110_i32_354 = arith.constant 110 : i32
    %535 = tpu.dynamic_rotate %371 by %c110_i32_354 dim 1 : vector<8x128xf32>, i32 -> vector<8x128xf32>
    %c24_355 = arith.constant 24 : index
    %c0_356 = arith.constant 0 : index
    %c0_357 = arith.constant 0 : index
    %536 = vector.load %arg2[%c24_355, %c0_356, %c0_357] : memref<25x1x128xf32, #tpu.memory_space<vmem>>, vector<1x1x128xf32>
    %537 = vector.shape_cast %536 : vector<1x1x128xf32> to vector<1x128xf32>
    %538 = vector.broadcast %537 : vector<1x128xf32> to vector<8x128xf32>
    %539 = arith.mulf %535, %538 : vector<8x128xf32>
    %540 = arith.truncf %539 : vector<8x128xf32> to vector<8x128xbf16>
    %c192_358 = arith.constant 192 : index
    %c0_359 = arith.constant 0 : index
    %541 = vector.load %arg6[%c192_358, %c0_359] : memref<400x128xbf16, #tpu.memory_space<vmem>>, vector<8x128xbf16>
    tpu.vector_store %arg6[%c192_358, %c0_359], %540 {strides = array<i32>} : memref<400x128xbf16, #tpu.memory_space<vmem>>, vector<8x128xbf16>,
    %c18_i32_360 = arith.constant 18 : i32
    %542 = tpu.dynamic_rotate %368 by %c18_i32_360 dim 1 : vector<8x128xf32>, i32 -> vector<8x128xf32>
    %c0_361 = arith.constant 0 : index
    %c0_362 = arith.constant 0 : index
    %c0_363 = arith.constant 0 : index
    %543 = vector.load %arg2[%c0_361, %c0_362, %c0_363] : memref<25x1x128xf32, #tpu.memory_space<vmem>>, vector<1x1x128xf32>
    %544 = vector.shape_cast %543 : vector<1x1x128xf32> to vector<1x128xf32>
    %545 = vector.broadcast %544 : vector<1x128xf32> to vector<8x128xf32>
    %546 = arith.mulf %542, %545 : vector<8x128xf32>
    %547 = arith.truncf %546 : vector<8x128xf32> to vector<8x128xbf16>
    %c200_364 = arith.constant 200 : index
    %c0_365 = arith.constant 0 : index
    %548 = vector.load %arg6[%c200_364, %c0_365] : memref<400x128xbf16, #tpu.memory_space<vmem>>, vector<8x128xbf16>
    tpu.vector_store %arg6[%c200_364, %c0_365], %547 {strides = array<i32>} : memref<400x128xbf16, #tpu.memory_space<vmem>>, vector<8x128xbf16>,
    %c17_i32_366 = arith.constant 17 : i32
    %549 = tpu.dynamic_rotate %368 by %c17_i32_366 dim 1 : vector<8x128xf32>, i32 -> vector<8x128xf32>
    %c1_367 = arith.constant 1 : index
    %c0_368 = arith.constant 0 : index
    %c0_369 = arith.constant 0 : index
    %550 = vector.load %arg2[%c1_367, %c0_368, %c0_369] : memref<25x1x128xf32, #tpu.memory_space<vmem>>, vector<1x1x128xf32>
    %551 = vector.shape_cast %550 : vector<1x1x128xf32> to vector<1x128xf32>
    %552 = vector.broadcast %551 : vector<1x128xf32> to vector<8x128xf32>
    %553 = arith.mulf %549, %552 : vector<8x128xf32>
    %554 = arith.truncf %553 : vector<8x128xf32> to vector<8x128xbf16>
    %c208_370 = arith.constant 208 : index
    %c0_371 = arith.constant 0 : index
    %555 = vector.load %arg6[%c208_370, %c0_371] : memref<400x128xbf16, #tpu.memory_space<vmem>>, vector<8x128xbf16>
    tpu.vector_store %arg6[%c208_370, %c0_371], %554 {strides = array<i32>} : memref<400x128xbf16, #tpu.memory_space<vmem>>, vector<8x128xbf16>,
    %c16_i32_372 = arith.constant 16 : i32
    %556 = tpu.dynamic_rotate %368 by %c16_i32_372 dim 1 : vector<8x128xf32>, i32 -> vector<8x128xf32>
    %c2_373 = arith.constant 2 : index
    %c0_374 = arith.constant 0 : index
    %c0_375 = arith.constant 0 : index
    %557 = vector.load %arg2[%c2_373, %c0_374, %c0_375] : memref<25x1x128xf32, #tpu.memory_space<vmem>>, vector<1x1x128xf32>
    %558 = vector.shape_cast %557 : vector<1x1x128xf32> to vector<1x128xf32>
    %559 = vector.broadcast %558 : vector<1x128xf32> to vector<8x128xf32>
    %560 = arith.mulf %556, %559 : vector<8x128xf32>
    %561 = arith.truncf %560 : vector<8x128xf32> to vector<8x128xbf16>
    %c216_376 = arith.constant 216 : index
    %c0_377 = arith.constant 0 : index
    %562 = vector.load %arg6[%c216_376, %c0_377] : memref<400x128xbf16, #tpu.memory_space<vmem>>, vector<8x128xbf16>
    tpu.vector_store %arg6[%c216_376, %c0_377], %561 {strides = array<i32>} : memref<400x128xbf16, #tpu.memory_space<vmem>>, vector<8x128xbf16>,
    %c15_i32_378 = arith.constant 15 : i32
    %563 = tpu.dynamic_rotate %368 by %c15_i32_378 dim 1 : vector<8x128xf32>, i32 -> vector<8x128xf32>
    %c3_379 = arith.constant 3 : index
    %c0_380 = arith.constant 0 : index
    %c0_381 = arith.constant 0 : index
    %564 = vector.load %arg2[%c3_379, %c0_380, %c0_381] : memref<25x1x128xf32, #tpu.memory_space<vmem>>, vector<1x1x128xf32>
    %565 = vector.shape_cast %564 : vector<1x1x128xf32> to vector<1x128xf32>
    %566 = vector.broadcast %565 : vector<1x128xf32> to vector<8x128xf32>
    %567 = arith.mulf %563, %566 : vector<8x128xf32>
    %568 = arith.truncf %567 : vector<8x128xf32> to vector<8x128xbf16>
    %c224_382 = arith.constant 224 : index
    %c0_383 = arith.constant 0 : index
    %569 = vector.load %arg6[%c224_382, %c0_383] : memref<400x128xbf16, #tpu.memory_space<vmem>>, vector<8x128xbf16>
    tpu.vector_store %arg6[%c224_382, %c0_383], %568 {strides = array<i32>} : memref<400x128xbf16, #tpu.memory_space<vmem>>, vector<8x128xbf16>,
    %c14_i32_384 = arith.constant 14 : i32
    %570 = tpu.dynamic_rotate %368 by %c14_i32_384 dim 1 : vector<8x128xf32>, i32 -> vector<8x128xf32>
    %c4_385 = arith.constant 4 : index
    %c0_386 = arith.constant 0 : index
    %c0_387 = arith.constant 0 : index
    %571 = vector.load %arg2[%c4_385, %c0_386, %c0_387] : memref<25x1x128xf32, #tpu.memory_space<vmem>>, vector<1x1x128xf32>
    %572 = vector.shape_cast %571 : vector<1x1x128xf32> to vector<1x128xf32>
    %573 = vector.broadcast %572 : vector<1x128xf32> to vector<8x128xf32>
    %574 = arith.mulf %570, %573 : vector<8x128xf32>
    %575 = arith.truncf %574 : vector<8x128xf32> to vector<8x128xbf16>
    %c232_388 = arith.constant 232 : index
    %c0_389 = arith.constant 0 : index
    %576 = vector.load %arg6[%c232_388, %c0_389] : memref<400x128xbf16, #tpu.memory_space<vmem>>, vector<8x128xbf16>
    tpu.vector_store %arg6[%c232_388, %c0_389], %575 {strides = array<i32>} : memref<400x128xbf16, #tpu.memory_space<vmem>>, vector<8x128xbf16>,
    %c10_i32_390 = arith.constant 10 : i32
    %577 = tpu.dynamic_rotate %368 by %c10_i32_390 dim 1 : vector<8x128xf32>, i32 -> vector<8x128xf32>
    %c5_391 = arith.constant 5 : index
    %c0_392 = arith.constant 0 : index
    %c0_393 = arith.constant 0 : index
    %578 = vector.load %arg2[%c5_391, %c0_392, %c0_393] : memref<25x1x128xf32, #tpu.memory_space<vmem>>, vector<1x1x128xf32>
    %579 = vector.shape_cast %578 : vector<1x1x128xf32> to vector<1x128xf32>
    %580 = vector.broadcast %579 : vector<1x128xf32> to vector<8x128xf32>
    %581 = arith.mulf %577, %580 : vector<8x128xf32>
    %582 = arith.truncf %581 : vector<8x128xf32> to vector<8x128xbf16>
    %c240_394 = arith.constant 240 : index
    %c0_395 = arith.constant 0 : index
    %583 = vector.load %arg6[%c240_394, %c0_395] : memref<400x128xbf16, #tpu.memory_space<vmem>>, vector<8x128xbf16>
    tpu.vector_store %arg6[%c240_394, %c0_395], %582 {strides = array<i32>} : memref<400x128xbf16, #tpu.memory_space<vmem>>, vector<8x128xbf16>,
    %c9_i32_396 = arith.constant 9 : i32
    %584 = tpu.dynamic_rotate %368 by %c9_i32_396 dim 1 : vector<8x128xf32>, i32 -> vector<8x128xf32>
    %c6_397 = arith.constant 6 : index
    %c0_398 = arith.constant 0 : index
    %c0_399 = arith.constant 0 : index
    %585 = vector.load %arg2[%c6_397, %c0_398, %c0_399] : memref<25x1x128xf32, #tpu.memory_space<vmem>>, vector<1x1x128xf32>
    %586 = vector.shape_cast %585 : vector<1x1x128xf32> to vector<1x128xf32>
    %587 = vector.broadcast %586 : vector<1x128xf32> to vector<8x128xf32>
    %588 = arith.mulf %584, %587 : vector<8x128xf32>
    %589 = arith.truncf %588 : vector<8x128xf32> to vector<8x128xbf16>
    %c248_400 = arith.constant 248 : index
    %c0_401 = arith.constant 0 : index
    %590 = vector.load %arg6[%c248_400, %c0_401] : memref<400x128xbf16, #tpu.memory_space<vmem>>, vector<8x128xbf16>
    tpu.vector_store %arg6[%c248_400, %c0_401], %589 {strides = array<i32>} : memref<400x128xbf16, #tpu.memory_space<vmem>>, vector<8x128xbf16>,
    %c8_i32_402 = arith.constant 8 : i32
    %591 = tpu.dynamic_rotate %368 by %c8_i32_402 dim 1 : vector<8x128xf32>, i32 -> vector<8x128xf32>
    %c7_403 = arith.constant 7 : index
    %c0_404 = arith.constant 0 : index
    %c0_405 = arith.constant 0 : index
    %592 = vector.load %arg2[%c7_403, %c0_404, %c0_405] : memref<25x1x128xf32, #tpu.memory_space<vmem>>, vector<1x1x128xf32>
    %593 = vector.shape_cast %592 : vector<1x1x128xf32> to vector<1x128xf32>
    %594 = vector.broadcast %593 : vector<1x128xf32> to vector<8x128xf32>
    %595 = arith.mulf %591, %594 : vector<8x128xf32>
    %596 = arith.truncf %595 : vector<8x128xf32> to vector<8x128xbf16>
    %c256_406 = arith.constant 256 : index
    %c0_407 = arith.constant 0 : index
    %597 = vector.load %arg6[%c256_406, %c0_407] : memref<400x128xbf16, #tpu.memory_space<vmem>>, vector<8x128xbf16>
    tpu.vector_store %arg6[%c256_406, %c0_407], %596 {strides = array<i32>} : memref<400x128xbf16, #tpu.memory_space<vmem>>, vector<8x128xbf16>,
    %c7_i32_408 = arith.constant 7 : i32
    %598 = tpu.dynamic_rotate %368 by %c7_i32_408 dim 1 : vector<8x128xf32>, i32 -> vector<8x128xf32>
    %c8_409 = arith.constant 8 : index
    %c0_410 = arith.constant 0 : index
    %c0_411 = arith.constant 0 : index
    %599 = vector.load %arg2[%c8_409, %c0_410, %c0_411] : memref<25x1x128xf32, #tpu.memory_space<vmem>>, vector<1x1x128xf32>
    %600 = vector.shape_cast %599 : vector<1x1x128xf32> to vector<1x128xf32>
    %601 = vector.broadcast %600 : vector<1x128xf32> to vector<8x128xf32>
    %602 = arith.mulf %598, %601 : vector<8x128xf32>
    %603 = arith.truncf %602 : vector<8x128xf32> to vector<8x128xbf16>
    %c264_412 = arith.constant 264 : index
    %c0_413 = arith.constant 0 : index
    %604 = vector.load %arg6[%c264_412, %c0_413] : memref<400x128xbf16, #tpu.memory_space<vmem>>, vector<8x128xbf16>
    tpu.vector_store %arg6[%c264_412, %c0_413], %603 {strides = array<i32>} : memref<400x128xbf16, #tpu.memory_space<vmem>>, vector<8x128xbf16>,
    %c6_i32_414 = arith.constant 6 : i32
    %605 = tpu.dynamic_rotate %368 by %c6_i32_414 dim 1 : vector<8x128xf32>, i32 -> vector<8x128xf32>
    %c9_415 = arith.constant 9 : index
    %c0_416 = arith.constant 0 : index
    %c0_417 = arith.constant 0 : index
    %606 = vector.load %arg2[%c9_415, %c0_416, %c0_417] : memref<25x1x128xf32, #tpu.memory_space<vmem>>, vector<1x1x128xf32>
    %607 = vector.shape_cast %606 : vector<1x1x128xf32> to vector<1x128xf32>
    %608 = vector.broadcast %607 : vector<1x128xf32> to vector<8x128xf32>
    %609 = arith.mulf %605, %608 : vector<8x128xf32>
    %610 = arith.truncf %609 : vector<8x128xf32> to vector<8x128xbf16>
    %c272_418 = arith.constant 272 : index
    %c0_419 = arith.constant 0 : index
    %611 = vector.load %arg6[%c272_418, %c0_419] : memref<400x128xbf16, #tpu.memory_space<vmem>>, vector<8x128xbf16>
    tpu.vector_store %arg6[%c272_418, %c0_419], %610 {strides = array<i32>} : memref<400x128xbf16, #tpu.memory_space<vmem>>, vector<8x128xbf16>,
    %c2_i32_420 = arith.constant 2 : i32
    %612 = tpu.dynamic_rotate %368 by %c2_i32_420 dim 1 : vector<8x128xf32>, i32 -> vector<8x128xf32>
    %c10_421 = arith.constant 10 : index
    %c0_422 = arith.constant 0 : index
    %c0_423 = arith.constant 0 : index
    %613 = vector.load %arg2[%c10_421, %c0_422, %c0_423] : memref<25x1x128xf32, #tpu.memory_space<vmem>>, vector<1x1x128xf32>
    %614 = vector.shape_cast %613 : vector<1x1x128xf32> to vector<1x128xf32>
    %615 = vector.broadcast %614 : vector<1x128xf32> to vector<8x128xf32>
    %616 = arith.mulf %612, %615 : vector<8x128xf32>
    %617 = arith.truncf %616 : vector<8x128xf32> to vector<8x128xbf16>
    %c280_424 = arith.constant 280 : index
    %c0_425 = arith.constant 0 : index
    %618 = vector.load %arg6[%c280_424, %c0_425] : memref<400x128xbf16, #tpu.memory_space<vmem>>, vector<8x128xbf16>
    tpu.vector_store %arg6[%c280_424, %c0_425], %617 {strides = array<i32>} : memref<400x128xbf16, #tpu.memory_space<vmem>>, vector<8x128xbf16>,
    %c1_i32_426 = arith.constant 1 : i32
    %619 = tpu.dynamic_rotate %368 by %c1_i32_426 dim 1 : vector<8x128xf32>, i32 -> vector<8x128xf32>
    %c11_427 = arith.constant 11 : index
    %c0_428 = arith.constant 0 : index
    %c0_429 = arith.constant 0 : index
    %620 = vector.load %arg2[%c11_427, %c0_428, %c0_429] : memref<25x1x128xf32, #tpu.memory_space<vmem>>, vector<1x1x128xf32>
    %621 = vector.shape_cast %620 : vector<1x1x128xf32> to vector<1x128xf32>
    %622 = vector.broadcast %621 : vector<1x128xf32> to vector<8x128xf32>
    %623 = arith.mulf %619, %622 : vector<8x128xf32>
    %624 = arith.truncf %623 : vector<8x128xf32> to vector<8x128xbf16>
    %c288_430 = arith.constant 288 : index
    %c0_431 = arith.constant 0 : index
    %625 = vector.load %arg6[%c288_430, %c0_431] : memref<400x128xbf16, #tpu.memory_space<vmem>>, vector<8x128xbf16>
    tpu.vector_store %arg6[%c288_430, %c0_431], %624 {strides = array<i32>} : memref<400x128xbf16, #tpu.memory_space<vmem>>, vector<8x128xbf16>,
    %626 = arith.truncf %368 : vector<8x128xf32> to vector<8x128xbf16>
    %c296_432 = arith.constant 296 : index
    %c0_433 = arith.constant 0 : index
    %627 = vector.load %arg6[%c296_432, %c0_433] : memref<400x128xbf16, #tpu.memory_space<vmem>>, vector<8x128xbf16>
    tpu.vector_store %arg6[%c296_432, %c0_433], %626 {strides = array<i32>} : memref<400x128xbf16, #tpu.memory_space<vmem>>, vector<8x128xbf16>,
    %c127_i32_434 = arith.constant 127 : i32
    %628 = tpu.dynamic_rotate %368 by %c127_i32_434 dim 1 : vector<8x128xf32>, i32 -> vector<8x128xf32>
    %c13_435 = arith.constant 13 : index
    %c0_436 = arith.constant 0 : index
    %c0_437 = arith.constant 0 : index
    %629 = vector.load %arg2[%c13_435, %c0_436, %c0_437] : memref<25x1x128xf32, #tpu.memory_space<vmem>>, vector<1x1x128xf32>
    %630 = vector.shape_cast %629 : vector<1x1x128xf32> to vector<1x128xf32>
    %631 = vector.broadcast %630 : vector<1x128xf32> to vector<8x128xf32>
    %632 = arith.mulf %628, %631 : vector<8x128xf32>
    %633 = arith.truncf %632 : vector<8x128xf32> to vector<8x128xbf16>
    %c304_438 = arith.constant 304 : index
    %c0_439 = arith.constant 0 : index
    %634 = vector.load %arg6[%c304_438, %c0_439] : memref<400x128xbf16, #tpu.memory_space<vmem>>, vector<8x128xbf16>
    tpu.vector_store %arg6[%c304_438, %c0_439], %633 {strides = array<i32>} : memref<400x128xbf16, #tpu.memory_space<vmem>>, vector<8x128xbf16>,
    %c126_i32_440 = arith.constant 126 : i32
    %635 = tpu.dynamic_rotate %368 by %c126_i32_440 dim 1 : vector<8x128xf32>, i32 -> vector<8x128xf32>
    %c14_441 = arith.constant 14 : index
    %c0_442 = arith.constant 0 : index
    %c0_443 = arith.constant 0 : index
    %636 = vector.load %arg2[%c14_441, %c0_442, %c0_443] : memref<25x1x128xf32, #tpu.memory_space<vmem>>, vector<1x1x128xf32>
    %637 = vector.shape_cast %636 : vector<1x1x128xf32> to vector<1x128xf32>
    %638 = vector.broadcast %637 : vector<1x128xf32> to vector<8x128xf32>
    %639 = arith.mulf %635, %638 : vector<8x128xf32>
    %640 = arith.truncf %639 : vector<8x128xf32> to vector<8x128xbf16>
    %c312_444 = arith.constant 312 : index
    %c0_445 = arith.constant 0 : index
    %641 = vector.load %arg6[%c312_444, %c0_445] : memref<400x128xbf16, #tpu.memory_space<vmem>>, vector<8x128xbf16>
    tpu.vector_store %arg6[%c312_444, %c0_445], %640 {strides = array<i32>} : memref<400x128xbf16, #tpu.memory_space<vmem>>, vector<8x128xbf16>,
    %c122_i32_446 = arith.constant 122 : i32
    %642 = tpu.dynamic_rotate %368 by %c122_i32_446 dim 1 : vector<8x128xf32>, i32 -> vector<8x128xf32>
    %c15_447 = arith.constant 15 : index
    %c0_448 = arith.constant 0 : index
    %c0_449 = arith.constant 0 : index
    %643 = vector.load %arg2[%c15_447, %c0_448, %c0_449] : memref<25x1x128xf32, #tpu.memory_space<vmem>>, vector<1x1x128xf32>
    %644 = vector.shape_cast %643 : vector<1x1x128xf32> to vector<1x128xf32>
    %645 = vector.broadcast %644 : vector<1x128xf32> to vector<8x128xf32>
    %646 = arith.mulf %642, %645 : vector<8x128xf32>
    %647 = arith.truncf %646 : vector<8x128xf32> to vector<8x128xbf16>
    %c320_450 = arith.constant 320 : index
    %c0_451 = arith.constant 0 : index
    %648 = vector.load %arg6[%c320_450, %c0_451] : memref<400x128xbf16, #tpu.memory_space<vmem>>, vector<8x128xbf16>
    tpu.vector_store %arg6[%c320_450, %c0_451], %647 {strides = array<i32>} : memref<400x128xbf16, #tpu.memory_space<vmem>>, vector<8x128xbf16>,
    %c121_i32_452 = arith.constant 121 : i32
    %649 = tpu.dynamic_rotate %368 by %c121_i32_452 dim 1 : vector<8x128xf32>, i32 -> vector<8x128xf32>
    %c16_453 = arith.constant 16 : index
    %c0_454 = arith.constant 0 : index
    %c0_455 = arith.constant 0 : index
    %650 = vector.load %arg2[%c16_453, %c0_454, %c0_455] : memref<25x1x128xf32, #tpu.memory_space<vmem>>, vector<1x1x128xf32>
    %651 = vector.shape_cast %650 : vector<1x1x128xf32> to vector<1x128xf32>
    %652 = vector.broadcast %651 : vector<1x128xf32> to vector<8x128xf32>
    %653 = arith.mulf %649, %652 : vector<8x128xf32>
    %654 = arith.truncf %653 : vector<8x128xf32> to vector<8x128xbf16>
    %c328_456 = arith.constant 328 : index
    %c0_457 = arith.constant 0 : index
    %655 = vector.load %arg6[%c328_456, %c0_457] : memref<400x128xbf16, #tpu.memory_space<vmem>>, vector<8x128xbf16>
    tpu.vector_store %arg6[%c328_456, %c0_457], %654 {strides = array<i32>} : memref<400x128xbf16, #tpu.memory_space<vmem>>, vector<8x128xbf16>,
    %c120_i32_458 = arith.constant 120 : i32
    %656 = tpu.dynamic_rotate %368 by %c120_i32_458 dim 1 : vector<8x128xf32>, i32 -> vector<8x128xf32>
    %c17_459 = arith.constant 17 : index
    %c0_460 = arith.constant 0 : index
    %c0_461 = arith.constant 0 : index
    %657 = vector.load %arg2[%c17_459, %c0_460, %c0_461] : memref<25x1x128xf32, #tpu.memory_space<vmem>>, vector<1x1x128xf32>
    %658 = vector.shape_cast %657 : vector<1x1x128xf32> to vector<1x128xf32>
    %659 = vector.broadcast %658 : vector<1x128xf32> to vector<8x128xf32>
    %660 = arith.mulf %656, %659 : vector<8x128xf32>
    %661 = arith.truncf %660 : vector<8x128xf32> to vector<8x128xbf16>
    %c336_462 = arith.constant 336 : index
    %c0_463 = arith.constant 0 : index
    %662 = vector.load %arg6[%c336_462, %c0_463] : memref<400x128xbf16, #tpu.memory_space<vmem>>, vector<8x128xbf16>
    tpu.vector_store %arg6[%c336_462, %c0_463], %661 {strides = array<i32>} : memref<400x128xbf16, #tpu.memory_space<vmem>>, vector<8x128xbf16>,
    %c119_i32_464 = arith.constant 119 : i32
    %663 = tpu.dynamic_rotate %368 by %c119_i32_464 dim 1 : vector<8x128xf32>, i32 -> vector<8x128xf32>
    %c18_465 = arith.constant 18 : index
    %c0_466 = arith.constant 0 : index
    %c0_467 = arith.constant 0 : index
    %664 = vector.load %arg2[%c18_465, %c0_466, %c0_467] : memref<25x1x128xf32, #tpu.memory_space<vmem>>, vector<1x1x128xf32>
    %665 = vector.shape_cast %664 : vector<1x1x128xf32> to vector<1x128xf32>
    %666 = vector.broadcast %665 : vector<1x128xf32> to vector<8x128xf32>
    %667 = arith.mulf %663, %666 : vector<8x128xf32>
    %668 = arith.truncf %667 : vector<8x128xf32> to vector<8x128xbf16>
    %c344_468 = arith.constant 344 : index
    %c0_469 = arith.constant 0 : index
    %669 = vector.load %arg6[%c344_468, %c0_469] : memref<400x128xbf16, #tpu.memory_space<vmem>>, vector<8x128xbf16>
    tpu.vector_store %arg6[%c344_468, %c0_469], %668 {strides = array<i32>} : memref<400x128xbf16, #tpu.memory_space<vmem>>, vector<8x128xbf16>,
    %c118_i32_470 = arith.constant 118 : i32
    %670 = tpu.dynamic_rotate %368 by %c118_i32_470 dim 1 : vector<8x128xf32>, i32 -> vector<8x128xf32>
    %c19_471 = arith.constant 19 : index
    %c0_472 = arith.constant 0 : index
    %c0_473 = arith.constant 0 : index
    %671 = vector.load %arg2[%c19_471, %c0_472, %c0_473] : memref<25x1x128xf32, #tpu.memory_space<vmem>>, vector<1x1x128xf32>
    %672 = vector.shape_cast %671 : vector<1x1x128xf32> to vector<1x128xf32>
    %673 = vector.broadcast %672 : vector<1x128xf32> to vector<8x128xf32>
    %674 = arith.mulf %670, %673 : vector<8x128xf32>
    %675 = arith.truncf %674 : vector<8x128xf32> to vector<8x128xbf16>
    %c352_474 = arith.constant 352 : index
    %c0_475 = arith.constant 0 : index
    %676 = vector.load %arg6[%c352_474, %c0_475] : memref<400x128xbf16, #tpu.memory_space<vmem>>, vector<8x128xbf16>
    tpu.vector_store %arg6[%c352_474, %c0_475], %675 {strides = array<i32>} : memref<400x128xbf16, #tpu.memory_space<vmem>>, vector<8x128xbf16>,
    %c114_i32_476 = arith.constant 114 : i32
    %677 = tpu.dynamic_rotate %368 by %c114_i32_476 dim 1 : vector<8x128xf32>, i32 -> vector<8x128xf32>
    %c20_477 = arith.constant 20 : index
    %c0_478 = arith.constant 0 : index
    %c0_479 = arith.constant 0 : index
    %678 = vector.load %arg2[%c20_477, %c0_478, %c0_479] : memref<25x1x128xf32, #tpu.memory_space<vmem>>, vector<1x1x128xf32>
    %679 = vector.shape_cast %678 : vector<1x1x128xf32> to vector<1x128xf32>
    %680 = vector.broadcast %679 : vector<1x128xf32> to vector<8x128xf32>
    %681 = arith.mulf %677, %680 : vector<8x128xf32>
    %682 = arith.truncf %681 : vector<8x128xf32> to vector<8x128xbf16>
    %c360_480 = arith.constant 360 : index
    %c0_481 = arith.constant 0 : index
    %683 = vector.load %arg6[%c360_480, %c0_481] : memref<400x128xbf16, #tpu.memory_space<vmem>>, vector<8x128xbf16>
    tpu.vector_store %arg6[%c360_480, %c0_481], %682 {strides = array<i32>} : memref<400x128xbf16, #tpu.memory_space<vmem>>, vector<8x128xbf16>,
    %c113_i32_482 = arith.constant 113 : i32
    %684 = tpu.dynamic_rotate %368 by %c113_i32_482 dim 1 : vector<8x128xf32>, i32 -> vector<8x128xf32>
    %c21_483 = arith.constant 21 : index
    %c0_484 = arith.constant 0 : index
    %c0_485 = arith.constant 0 : index
    %685 = vector.load %arg2[%c21_483, %c0_484, %c0_485] : memref<25x1x128xf32, #tpu.memory_space<vmem>>, vector<1x1x128xf32>
    %686 = vector.shape_cast %685 : vector<1x1x128xf32> to vector<1x128xf32>
    %687 = vector.broadcast %686 : vector<1x128xf32> to vector<8x128xf32>
    %688 = arith.mulf %684, %687 : vector<8x128xf32>
    %689 = arith.truncf %688 : vector<8x128xf32> to vector<8x128xbf16>
    %c368_486 = arith.constant 368 : index
    %c0_487 = arith.constant 0 : index
    %690 = vector.load %arg6[%c368_486, %c0_487] : memref<400x128xbf16, #tpu.memory_space<vmem>>, vector<8x128xbf16>
    tpu.vector_store %arg6[%c368_486, %c0_487], %689 {strides = array<i32>} : memref<400x128xbf16, #tpu.memory_space<vmem>>, vector<8x128xbf16>,
    %c112_i32_488 = arith.constant 112 : i32
    %691 = tpu.dynamic_rotate %368 by %c112_i32_488 dim 1 : vector<8x128xf32>, i32 -> vector<8x128xf32>
    %c22_489 = arith.constant 22 : index
    %c0_490 = arith.constant 0 : index
    %c0_491 = arith.constant 0 : index
    %692 = vector.load %arg2[%c22_489, %c0_490, %c0_491] : memref<25x1x128xf32, #tpu.memory_space<vmem>>, vector<1x1x128xf32>
    %693 = vector.shape_cast %692 : vector<1x1x128xf32> to vector<1x128xf32>
    %694 = vector.broadcast %693 : vector<1x128xf32> to vector<8x128xf32>
    %695 = arith.mulf %691, %694 : vector<8x128xf32>
    %696 = arith.truncf %695 : vector<8x128xf32> to vector<8x128xbf16>
    %c376_492 = arith.constant 376 : index
    %c0_493 = arith.constant 0 : index
    %697 = vector.load %arg6[%c376_492, %c0_493] : memref<400x128xbf16, #tpu.memory_space<vmem>>, vector<8x128xbf16>
    tpu.vector_store %arg6[%c376_492, %c0_493], %696 {strides = array<i32>} : memref<400x128xbf16, #tpu.memory_space<vmem>>, vector<8x128xbf16>,
    %c111_i32_494 = arith.constant 111 : i32
    %698 = tpu.dynamic_rotate %368 by %c111_i32_494 dim 1 : vector<8x128xf32>, i32 -> vector<8x128xf32>
    %c23_495 = arith.constant 23 : index
    %c0_496 = arith.constant 0 : index
    %c0_497 = arith.constant 0 : index
    %699 = vector.load %arg2[%c23_495, %c0_496, %c0_497] : memref<25x1x128xf32, #tpu.memory_space<vmem>>, vector<1x1x128xf32>
    %700 = vector.shape_cast %699 : vector<1x1x128xf32> to vector<1x128xf32>
    %701 = vector.broadcast %700 : vector<1x128xf32> to vector<8x128xf32>
    %702 = arith.mulf %698, %701 : vector<8x128xf32>
    %703 = arith.truncf %702 : vector<8x128xf32> to vector<8x128xbf16>
    %c384_498 = arith.constant 384 : index
    %c0_499 = arith.constant 0 : index
    %704 = vector.load %arg6[%c384_498, %c0_499] : memref<400x128xbf16, #tpu.memory_space<vmem>>, vector<8x128xbf16>
    tpu.vector_store %arg6[%c384_498, %c0_499], %703 {strides = array<i32>} : memref<400x128xbf16, #tpu.memory_space<vmem>>, vector<8x128xbf16>,
    %c110_i32_500 = arith.constant 110 : i32
    %705 = tpu.dynamic_rotate %368 by %c110_i32_500 dim 1 : vector<8x128xf32>, i32 -> vector<8x128xf32>
    %c24_501 = arith.constant 24 : index
    %c0_502 = arith.constant 0 : index
    %c0_503 = arith.constant 0 : index
    %706 = vector.load %arg2[%c24_501, %c0_502, %c0_503] : memref<25x1x128xf32, #tpu.memory_space<vmem>>, vector<1x1x128xf32>
    %707 = vector.shape_cast %706 : vector<1x1x128xf32> to vector<1x128xf32>
    %708 = vector.broadcast %707 : vector<1x128xf32> to vector<8x128xf32>
    %709 = arith.mulf %705, %708 : vector<8x128xf32>
    %710 = arith.truncf %709 : vector<8x128xf32> to vector<8x128xbf16>
    %c392_504 = arith.constant 392 : index
    %c0_505 = arith.constant 0 : index
    %711 = vector.load %arg6[%c392_504, %c0_505] : memref<400x128xbf16, #tpu.memory_space<vmem>>, vector<8x128xbf16>
    tpu.vector_store %arg6[%c392_504, %c0_505], %710 {strides = array<i32>} : memref<400x128xbf16, #tpu.memory_space<vmem>>, vector<8x128xbf16>,
    %c0_506 = arith.constant 0 : index
    %c0_507 = arith.constant 0 : index
    %c0_508 = arith.constant 0 : index
    %712 = vector.load %arg3[%c0_506, %c0_507, %c0_508] : memref<1x32x400xbf16, #tpu.memory_space<vmem>>, vector<1x32x400xbf16>
    %713 = vector.shape_cast %712 : vector<1x32x400xbf16> to vector<32x400xbf16>
    %c0_509 = arith.constant 0 : index
    %c0_510 = arith.constant 0 : index
    %714 = vector.load %arg6[%c0_509, %c0_510] : memref<400x128xbf16, #tpu.memory_space<vmem>>, vector<400x128xbf16>
    %cst_511 = arith.constant dense<0.000000e+00> : vector<32x128xf32>
    %715 = tpu.matmul %713, %714, %cst_511 {dimension_numbers = #tpu.dot_dimension_numbers<[1], [0], [0], [1], [0, 0, 1, 1], [], []>} : vector<32x400xbf16>, vector<400x128xbf16>, vector<32x128xf32> -> vector<32x128xf32>
    %c0_512 = arith.constant 0 : index
    %c0_513 = arith.constant 0 : index
    %c0_514 = arith.constant 0 : index
    %716 = vector.load %arg4[%c0_512, %c0_513, %c0_514] : memref<1x32x1xf32, #tpu.memory_space<vmem>>, vector<1x32x1xf32>
    %717 = vector.shape_cast %716 : vector<1x32x1xf32> to vector<32x1xf32>
    %718 = vector.broadcast %717 : vector<32x1xf32> to vector<32x128xf32>
    %719 = arith.addf %715, %718 : vector<32x128xf32>
    %720 = vector.extract_strided_slice %719 {offsets = [0, 0], sizes = [24, 128], strides = [1, 1]} : vector<32x128xf32> to vector<24x128xf32>
    %721 = arith.negf %720 : vector<24x128xf32>
    %722 = math.exp %721 : vector<24x128xf32>
    %cst_515 = arith.constant 1.000000e+00 : f32
    %723 = vector.broadcast %cst_515 : f32 to vector<24x128xf32>
    %724 = arith.addf %723, %722 : vector<24x128xf32>
    %725 = arith.divf %723, %724 : vector<24x128xf32>
    %726 = vector.extract_strided_slice %725 {offsets = [0, 0], sizes = [8, 128], strides = [1, 1]} : vector<24x128xf32> to vector<8x128xf32>
    %727 = vector.extract_strided_slice %725 {offsets = [8, 0], sizes = [8, 128], strides = [1, 1]} : vector<24x128xf32> to vector<8x128xf32>
    %728 = vector.extract_strided_slice %725 {offsets = [16, 0], sizes = [8, 128], strides = [1, 1]} : vector<24x128xf32> to vector<8x128xf32>
    %729 = vector.extract_strided_slice %719 {offsets = [24, 0], sizes = [8, 128], strides = [1, 1]} : vector<32x128xf32> to vector<8x128xf32>
    %730 = math.tanh %729 : vector<8x128xf32>
    %731 = arith.mulf %727, %366 : vector<8x128xf32>
    %732 = arith.mulf %726, %730 : vector<8x128xf32>
    %733 = arith.addf %731, %732 : vector<8x128xf32>
    %734 = math.tanh %733 : vector<8x128xf32>
    %735 = arith.mulf %728, %734 : vector<8x128xf32>
    %c2_i32_516 = arith.constant 2 : i32
    %736 = arith.index_cast %c2_i32_516 : i32 to index
    %c0_517 = arith.constant 0 : index
    %c0_518 = arith.constant 0 : index
    %737 = vector.load %arg1[%736, %c0_517, %c0_518] : memref<4x8x128xf32, #tpu.memory_space<vmem>>, vector<1x8x128xf32>
    %738 = vector.shape_cast %737 : vector<1x8x128xf32> to vector<8x128xf32>
    %c18_i32_519 = arith.constant 18 : i32
    %739 = tpu.dynamic_rotate %738 by %c18_i32_519 dim 1 : vector<8x128xf32>, i32 -> vector<8x128xf32>
    %c0_520 = arith.constant 0 : index
    %c0_521 = arith.constant 0 : index
    %c0_522 = arith.constant 0 : index
    %740 = vector.load %arg2[%c0_520, %c0_521, %c0_522] : memref<25x1x128xf32, #tpu.memory_space<vmem>>, vector<1x1x128xf32>
    %741 = vector.shape_cast %740 : vector<1x1x128xf32> to vector<1x128xf32>
    %742 = vector.broadcast %741 : vector<1x128xf32> to vector<8x128xf32>
    %743 = arith.mulf %739, %742 : vector<8x128xf32>
    %744 = arith.truncf %743 : vector<8x128xf32> to vector<8x128xbf16>
    %c0_523 = arith.constant 0 : index
    %c0_524 = arith.constant 0 : index
    %745 = vector.load %arg6[%c0_523, %c0_524] : memref<400x128xbf16, #tpu.memory_space<vmem>>, vector<8x128xbf16>
    tpu.vector_store %arg6[%c0_523, %c0_524], %744 {strides = array<i32>} : memref<400x128xbf16, #tpu.memory_space<vmem>>, vector<8x128xbf16>,
    %c17_i32_525 = arith.constant 17 : i32
    %746 = tpu.dynamic_rotate %738 by %c17_i32_525 dim 1 : vector<8x128xf32>, i32 -> vector<8x128xf32>
    %c1_526 = arith.constant 1 : index
    %c0_527 = arith.constant 0 : index
    %c0_528 = arith.constant 0 : index
    %747 = vector.load %arg2[%c1_526, %c0_527, %c0_528] : memref<25x1x128xf32, #tpu.memory_space<vmem>>, vector<1x1x128xf32>
    %748 = vector.shape_cast %747 : vector<1x1x128xf32> to vector<1x128xf32>
    %749 = vector.broadcast %748 : vector<1x128xf32> to vector<8x128xf32>
    %750 = arith.mulf %746, %749 : vector<8x128xf32>
    %751 = arith.truncf %750 : vector<8x128xf32> to vector<8x128xbf16>
    %c8_529 = arith.constant 8 : index
    %c0_530 = arith.constant 0 : index
    %752 = vector.load %arg6[%c8_529, %c0_530] : memref<400x128xbf16, #tpu.memory_space<vmem>>, vector<8x128xbf16>
    tpu.vector_store %arg6[%c8_529, %c0_530], %751 {strides = array<i32>} : memref<400x128xbf16, #tpu.memory_space<vmem>>, vector<8x128xbf16>,
    %c16_i32_531 = arith.constant 16 : i32
    %753 = tpu.dynamic_rotate %738 by %c16_i32_531 dim 1 : vector<8x128xf32>, i32 -> vector<8x128xf32>
    %c2_532 = arith.constant 2 : index
    %c0_533 = arith.constant 0 : index
    %c0_534 = arith.constant 0 : index
    %754 = vector.load %arg2[%c2_532, %c0_533, %c0_534] : memref<25x1x128xf32, #tpu.memory_space<vmem>>, vector<1x1x128xf32>
    %755 = vector.shape_cast %754 : vector<1x1x128xf32> to vector<1x128xf32>
    %756 = vector.broadcast %755 : vector<1x128xf32> to vector<8x128xf32>
    %757 = arith.mulf %753, %756 : vector<8x128xf32>
    %758 = arith.truncf %757 : vector<8x128xf32> to vector<8x128xbf16>
    %c16_535 = arith.constant 16 : index
    %c0_536 = arith.constant 0 : index
    %759 = vector.load %arg6[%c16_535, %c0_536] : memref<400x128xbf16, #tpu.memory_space<vmem>>, vector<8x128xbf16>
    tpu.vector_store %arg6[%c16_535, %c0_536], %758 {strides = array<i32>} : memref<400x128xbf16, #tpu.memory_space<vmem>>, vector<8x128xbf16>,
    %c15_i32_537 = arith.constant 15 : i32
    %760 = tpu.dynamic_rotate %738 by %c15_i32_537 dim 1 : vector<8x128xf32>, i32 -> vector<8x128xf32>
    %c3_538 = arith.constant 3 : index
    %c0_539 = arith.constant 0 : index
    %c0_540 = arith.constant 0 : index
    %761 = vector.load %arg2[%c3_538, %c0_539, %c0_540] : memref<25x1x128xf32, #tpu.memory_space<vmem>>, vector<1x1x128xf32>
    %762 = vector.shape_cast %761 : vector<1x1x128xf32> to vector<1x128xf32>
    %763 = vector.broadcast %762 : vector<1x128xf32> to vector<8x128xf32>
    %764 = arith.mulf %760, %763 : vector<8x128xf32>
    %765 = arith.truncf %764 : vector<8x128xf32> to vector<8x128xbf16>
    %c24_541 = arith.constant 24 : index
    %c0_542 = arith.constant 0 : index
    %766 = vector.load %arg6[%c24_541, %c0_542] : memref<400x128xbf16, #tpu.memory_space<vmem>>, vector<8x128xbf16>
    tpu.vector_store %arg6[%c24_541, %c0_542], %765 {strides = array<i32>} : memref<400x128xbf16, #tpu.memory_space<vmem>>, vector<8x128xbf16>,
    %c14_i32_543 = arith.constant 14 : i32
    %767 = tpu.dynamic_rotate %738 by %c14_i32_543 dim 1 : vector<8x128xf32>, i32 -> vector<8x128xf32>
    %c4_544 = arith.constant 4 : index
    %c0_545 = arith.constant 0 : index
    %c0_546 = arith.constant 0 : index
    %768 = vector.load %arg2[%c4_544, %c0_545, %c0_546] : memref<25x1x128xf32, #tpu.memory_space<vmem>>, vector<1x1x128xf32>
    %769 = vector.shape_cast %768 : vector<1x1x128xf32> to vector<1x128xf32>
    %770 = vector.broadcast %769 : vector<1x128xf32> to vector<8x128xf32>
    %771 = arith.mulf %767, %770 : vector<8x128xf32>
    %772 = arith.truncf %771 : vector<8x128xf32> to vector<8x128xbf16>
    %c32_547 = arith.constant 32 : index
    %c0_548 = arith.constant 0 : index
    %773 = vector.load %arg6[%c32_547, %c0_548] : memref<400x128xbf16, #tpu.memory_space<vmem>>, vector<8x128xbf16>
    tpu.vector_store %arg6[%c32_547, %c0_548], %772 {strides = array<i32>} : memref<400x128xbf16, #tpu.memory_space<vmem>>, vector<8x128xbf16>,
    %c10_i32_549 = arith.constant 10 : i32
    %774 = tpu.dynamic_rotate %738 by %c10_i32_549 dim 1 : vector<8x128xf32>, i32 -> vector<8x128xf32>
    %c5_550 = arith.constant 5 : index
    %c0_551 = arith.constant 0 : index
    %c0_552 = arith.constant 0 : index
    %775 = vector.load %arg2[%c5_550, %c0_551, %c0_552] : memref<25x1x128xf32, #tpu.memory_space<vmem>>, vector<1x1x128xf32>
    %776 = vector.shape_cast %775 : vector<1x1x128xf32> to vector<1x128xf32>
    %777 = vector.broadcast %776 : vector<1x128xf32> to vector<8x128xf32>
    %778 = arith.mulf %774, %777 : vector<8x128xf32>
    %779 = arith.truncf %778 : vector<8x128xf32> to vector<8x128xbf16>
    %c40_553 = arith.constant 40 : index
    %c0_554 = arith.constant 0 : index
    %780 = vector.load %arg6[%c40_553, %c0_554] : memref<400x128xbf16, #tpu.memory_space<vmem>>, vector<8x128xbf16>
    tpu.vector_store %arg6[%c40_553, %c0_554], %779 {strides = array<i32>} : memref<400x128xbf16, #tpu.memory_space<vmem>>, vector<8x128xbf16>,
    %c9_i32_555 = arith.constant 9 : i32
    %781 = tpu.dynamic_rotate %738 by %c9_i32_555 dim 1 : vector<8x128xf32>, i32 -> vector<8x128xf32>
    %c6_556 = arith.constant 6 : index
    %c0_557 = arith.constant 0 : index
    %c0_558 = arith.constant 0 : index
    %782 = vector.load %arg2[%c6_556, %c0_557, %c0_558] : memref<25x1x128xf32, #tpu.memory_space<vmem>>, vector<1x1x128xf32>
    %783 = vector.shape_cast %782 : vector<1x1x128xf32> to vector<1x128xf32>
    %784 = vector.broadcast %783 : vector<1x128xf32> to vector<8x128xf32>
    %785 = arith.mulf %781, %784 : vector<8x128xf32>
    %786 = arith.truncf %785 : vector<8x128xf32> to vector<8x128xbf16>
    %c48_559 = arith.constant 48 : index
    %c0_560 = arith.constant 0 : index
    %787 = vector.load %arg6[%c48_559, %c0_560] : memref<400x128xbf16, #tpu.memory_space<vmem>>, vector<8x128xbf16>
    tpu.vector_store %arg6[%c48_559, %c0_560], %786 {strides = array<i32>} : memref<400x128xbf16, #tpu.memory_space<vmem>>, vector<8x128xbf16>,
    %c8_i32_561 = arith.constant 8 : i32
    %788 = tpu.dynamic_rotate %738 by %c8_i32_561 dim 1 : vector<8x128xf32>, i32 -> vector<8x128xf32>
    %c7_562 = arith.constant 7 : index
    %c0_563 = arith.constant 0 : index
    %c0_564 = arith.constant 0 : index
    %789 = vector.load %arg2[%c7_562, %c0_563, %c0_564] : memref<25x1x128xf32, #tpu.memory_space<vmem>>, vector<1x1x128xf32>
    %790 = vector.shape_cast %789 : vector<1x1x128xf32> to vector<1x128xf32>
    %791 = vector.broadcast %790 : vector<1x128xf32> to vector<8x128xf32>
    %792 = arith.mulf %788, %791 : vector<8x128xf32>
    %793 = arith.truncf %792 : vector<8x128xf32> to vector<8x128xbf16>
    %c56_565 = arith.constant 56 : index
    %c0_566 = arith.constant 0 : index
    %794 = vector.load %arg6[%c56_565, %c0_566] : memref<400x128xbf16, #tpu.memory_space<vmem>>, vector<8x128xbf16>
    tpu.vector_store %arg6[%c56_565, %c0_566], %793 {strides = array<i32>} : memref<400x128xbf16, #tpu.memory_space<vmem>>, vector<8x128xbf16>,
    %c7_i32_567 = arith.constant 7 : i32
    %795 = tpu.dynamic_rotate %738 by %c7_i32_567 dim 1 : vector<8x128xf32>, i32 -> vector<8x128xf32>
    %c8_568 = arith.constant 8 : index
    %c0_569 = arith.constant 0 : index
    %c0_570 = arith.constant 0 : index
    %796 = vector.load %arg2[%c8_568, %c0_569, %c0_570] : memref<25x1x128xf32, #tpu.memory_space<vmem>>, vector<1x1x128xf32>
    %797 = vector.shape_cast %796 : vector<1x1x128xf32> to vector<1x128xf32>
    %798 = vector.broadcast %797 : vector<1x128xf32> to vector<8x128xf32>
    %799 = arith.mulf %795, %798 : vector<8x128xf32>
    %800 = arith.truncf %799 : vector<8x128xf32> to vector<8x128xbf16>
    %c64_571 = arith.constant 64 : index
    %c0_572 = arith.constant 0 : index
    %801 = vector.load %arg6[%c64_571, %c0_572] : memref<400x128xbf16, #tpu.memory_space<vmem>>, vector<8x128xbf16>
    tpu.vector_store %arg6[%c64_571, %c0_572], %800 {strides = array<i32>} : memref<400x128xbf16, #tpu.memory_space<vmem>>, vector<8x128xbf16>,
    %c6_i32_573 = arith.constant 6 : i32
    %802 = tpu.dynamic_rotate %738 by %c6_i32_573 dim 1 : vector<8x128xf32>, i32 -> vector<8x128xf32>
    %c9_574 = arith.constant 9 : index
    %c0_575 = arith.constant 0 : index
    %c0_576 = arith.constant 0 : index
    %803 = vector.load %arg2[%c9_574, %c0_575, %c0_576] : memref<25x1x128xf32, #tpu.memory_space<vmem>>, vector<1x1x128xf32>
    %804 = vector.shape_cast %803 : vector<1x1x128xf32> to vector<1x128xf32>
    %805 = vector.broadcast %804 : vector<1x128xf32> to vector<8x128xf32>
    %806 = arith.mulf %802, %805 : vector<8x128xf32>
    %807 = arith.truncf %806 : vector<8x128xf32> to vector<8x128xbf16>
    %c72_577 = arith.constant 72 : index
    %c0_578 = arith.constant 0 : index
    %808 = vector.load %arg6[%c72_577, %c0_578] : memref<400x128xbf16, #tpu.memory_space<vmem>>, vector<8x128xbf16>
    tpu.vector_store %arg6[%c72_577, %c0_578], %807 {strides = array<i32>} : memref<400x128xbf16, #tpu.memory_space<vmem>>, vector<8x128xbf16>,
    %c2_i32_579 = arith.constant 2 : i32
    %809 = tpu.dynamic_rotate %738 by %c2_i32_579 dim 1 : vector<8x128xf32>, i32 -> vector<8x128xf32>
    %c10_580 = arith.constant 10 : index
    %c0_581 = arith.constant 0 : index
    %c0_582 = arith.constant 0 : index
    %810 = vector.load %arg2[%c10_580, %c0_581, %c0_582] : memref<25x1x128xf32, #tpu.memory_space<vmem>>, vector<1x1x128xf32>
    %811 = vector.shape_cast %810 : vector<1x1x128xf32> to vector<1x128xf32>
    %812 = vector.broadcast %811 : vector<1x128xf32> to vector<8x128xf32>
    %813 = arith.mulf %809, %812 : vector<8x128xf32>
    %814 = arith.truncf %813 : vector<8x128xf32> to vector<8x128xbf16>
    %c80_583 = arith.constant 80 : index
    %c0_584 = arith.constant 0 : index
    %815 = vector.load %arg6[%c80_583, %c0_584] : memref<400x128xbf16, #tpu.memory_space<vmem>>, vector<8x128xbf16>
    tpu.vector_store %arg6[%c80_583, %c0_584], %814 {strides = array<i32>} : memref<400x128xbf16, #tpu.memory_space<vmem>>, vector<8x128xbf16>,
    %c1_i32_585 = arith.constant 1 : i32
    %816 = tpu.dynamic_rotate %738 by %c1_i32_585 dim 1 : vector<8x128xf32>, i32 -> vector<8x128xf32>
    %c11_586 = arith.constant 11 : index
    %c0_587 = arith.constant 0 : index
    %c0_588 = arith.constant 0 : index
    %817 = vector.load %arg2[%c11_586, %c0_587, %c0_588] : memref<25x1x128xf32, #tpu.memory_space<vmem>>, vector<1x1x128xf32>
    %818 = vector.shape_cast %817 : vector<1x1x128xf32> to vector<1x128xf32>
    %819 = vector.broadcast %818 : vector<1x128xf32> to vector<8x128xf32>
    %820 = arith.mulf %816, %819 : vector<8x128xf32>
    %821 = arith.truncf %820 : vector<8x128xf32> to vector<8x128xbf16>
    %c88_589 = arith.constant 88 : index
    %c0_590 = arith.constant 0 : index
    %822 = vector.load %arg6[%c88_589, %c0_590] : memref<400x128xbf16, #tpu.memory_space<vmem>>, vector<8x128xbf16>
    tpu.vector_store %arg6[%c88_589, %c0_590], %821 {strides = array<i32>} : memref<400x128xbf16, #tpu.memory_space<vmem>>, vector<8x128xbf16>,
    %823 = arith.truncf %738 : vector<8x128xf32> to vector<8x128xbf16>
    %c96_591 = arith.constant 96 : index
    %c0_592 = arith.constant 0 : index
    %824 = vector.load %arg6[%c96_591, %c0_592] : memref<400x128xbf16, #tpu.memory_space<vmem>>, vector<8x128xbf16>
    tpu.vector_store %arg6[%c96_591, %c0_592], %823 {strides = array<i32>} : memref<400x128xbf16, #tpu.memory_space<vmem>>, vector<8x128xbf16>,
    %c127_i32_593 = arith.constant 127 : i32
    %825 = tpu.dynamic_rotate %738 by %c127_i32_593 dim 1 : vector<8x128xf32>, i32 -> vector<8x128xf32>
    %c13_594 = arith.constant 13 : index
    %c0_595 = arith.constant 0 : index
    %c0_596 = arith.constant 0 : index
    %826 = vector.load %arg2[%c13_594, %c0_595, %c0_596] : memref<25x1x128xf32, #tpu.memory_space<vmem>>, vector<1x1x128xf32>
    %827 = vector.shape_cast %826 : vector<1x1x128xf32> to vector<1x128xf32>
    %828 = vector.broadcast %827 : vector<1x128xf32> to vector<8x128xf32>
    %829 = arith.mulf %825, %828 : vector<8x128xf32>
    %830 = arith.truncf %829 : vector<8x128xf32> to vector<8x128xbf16>
    %c104_597 = arith.constant 104 : index
    %c0_598 = arith.constant 0 : index
    %831 = vector.load %arg6[%c104_597, %c0_598] : memref<400x128xbf16, #tpu.memory_space<vmem>>, vector<8x128xbf16>
    tpu.vector_store %arg6[%c104_597, %c0_598], %830 {strides = array<i32>} : memref<400x128xbf16, #tpu.memory_space<vmem>>, vector<8x128xbf16>,
    %c126_i32_599 = arith.constant 126 : i32
    %832 = tpu.dynamic_rotate %738 by %c126_i32_599 dim 1 : vector<8x128xf32>, i32 -> vector<8x128xf32>
    %c14_600 = arith.constant 14 : index
    %c0_601 = arith.constant 0 : index
    %c0_602 = arith.constant 0 : index
    %833 = vector.load %arg2[%c14_600, %c0_601, %c0_602] : memref<25x1x128xf32, #tpu.memory_space<vmem>>, vector<1x1x128xf32>
    %834 = vector.shape_cast %833 : vector<1x1x128xf32> to vector<1x128xf32>
    %835 = vector.broadcast %834 : vector<1x128xf32> to vector<8x128xf32>
    %836 = arith.mulf %832, %835 : vector<8x128xf32>
    %837 = arith.truncf %836 : vector<8x128xf32> to vector<8x128xbf16>
    %c112_603 = arith.constant 112 : index
    %c0_604 = arith.constant 0 : index
    %838 = vector.load %arg6[%c112_603, %c0_604] : memref<400x128xbf16, #tpu.memory_space<vmem>>, vector<8x128xbf16>
    tpu.vector_store %arg6[%c112_603, %c0_604], %837 {strides = array<i32>} : memref<400x128xbf16, #tpu.memory_space<vmem>>, vector<8x128xbf16>,
    %c122_i32_605 = arith.constant 122 : i32
    %839 = tpu.dynamic_rotate %738 by %c122_i32_605 dim 1 : vector<8x128xf32>, i32 -> vector<8x128xf32>
    %c15_606 = arith.constant 15 : index
    %c0_607 = arith.constant 0 : index
    %c0_608 = arith.constant 0 : index
    %840 = vector.load %arg2[%c15_606, %c0_607, %c0_608] : memref<25x1x128xf32, #tpu.memory_space<vmem>>, vector<1x1x128xf32>
    %841 = vector.shape_cast %840 : vector<1x1x128xf32> to vector<1x128xf32>
    %842 = vector.broadcast %841 : vector<1x128xf32> to vector<8x128xf32>
    %843 = arith.mulf %839, %842 : vector<8x128xf32>
    %844 = arith.truncf %843 : vector<8x128xf32> to vector<8x128xbf16>
    %c120_609 = arith.constant 120 : index
    %c0_610 = arith.constant 0 : index
    %845 = vector.load %arg6[%c120_609, %c0_610] : memref<400x128xbf16, #tpu.memory_space<vmem>>, vector<8x128xbf16>
    tpu.vector_store %arg6[%c120_609, %c0_610], %844 {strides = array<i32>} : memref<400x128xbf16, #tpu.memory_space<vmem>>, vector<8x128xbf16>,
    %c121_i32_611 = arith.constant 121 : i32
    %846 = tpu.dynamic_rotate %738 by %c121_i32_611 dim 1 : vector<8x128xf32>, i32 -> vector<8x128xf32>
    %c16_612 = arith.constant 16 : index
    %c0_613 = arith.constant 0 : index
    %c0_614 = arith.constant 0 : index
    %847 = vector.load %arg2[%c16_612, %c0_613, %c0_614] : memref<25x1x128xf32, #tpu.memory_space<vmem>>, vector<1x1x128xf32>
    %848 = vector.shape_cast %847 : vector<1x1x128xf32> to vector<1x128xf32>
    %849 = vector.broadcast %848 : vector<1x128xf32> to vector<8x128xf32>
    %850 = arith.mulf %846, %849 : vector<8x128xf32>
    %851 = arith.truncf %850 : vector<8x128xf32> to vector<8x128xbf16>
    %c128_615 = arith.constant 128 : index
    %c0_616 = arith.constant 0 : index
    %852 = vector.load %arg6[%c128_615, %c0_616] : memref<400x128xbf16, #tpu.memory_space<vmem>>, vector<8x128xbf16>
    tpu.vector_store %arg6[%c128_615, %c0_616], %851 {strides = array<i32>} : memref<400x128xbf16, #tpu.memory_space<vmem>>, vector<8x128xbf16>,
    %c120_i32_617 = arith.constant 120 : i32
    %853 = tpu.dynamic_rotate %738 by %c120_i32_617 dim 1 : vector<8x128xf32>, i32 -> vector<8x128xf32>
    %c17_618 = arith.constant 17 : index
    %c0_619 = arith.constant 0 : index
    %c0_620 = arith.constant 0 : index
    %854 = vector.load %arg2[%c17_618, %c0_619, %c0_620] : memref<25x1x128xf32, #tpu.memory_space<vmem>>, vector<1x1x128xf32>
    %855 = vector.shape_cast %854 : vector<1x1x128xf32> to vector<1x128xf32>
    %856 = vector.broadcast %855 : vector<1x128xf32> to vector<8x128xf32>
    %857 = arith.mulf %853, %856 : vector<8x128xf32>
    %858 = arith.truncf %857 : vector<8x128xf32> to vector<8x128xbf16>
    %c136_621 = arith.constant 136 : index
    %c0_622 = arith.constant 0 : index
    %859 = vector.load %arg6[%c136_621, %c0_622] : memref<400x128xbf16, #tpu.memory_space<vmem>>, vector<8x128xbf16>
    tpu.vector_store %arg6[%c136_621, %c0_622], %858 {strides = array<i32>} : memref<400x128xbf16, #tpu.memory_space<vmem>>, vector<8x128xbf16>,
    %c119_i32_623 = arith.constant 119 : i32
    %860 = tpu.dynamic_rotate %738 by %c119_i32_623 dim 1 : vector<8x128xf32>, i32 -> vector<8x128xf32>
    %c18_624 = arith.constant 18 : index
    %c0_625 = arith.constant 0 : index
    %c0_626 = arith.constant 0 : index
    %861 = vector.load %arg2[%c18_624, %c0_625, %c0_626] : memref<25x1x128xf32, #tpu.memory_space<vmem>>, vector<1x1x128xf32>
    %862 = vector.shape_cast %861 : vector<1x1x128xf32> to vector<1x128xf32>
    %863 = vector.broadcast %862 : vector<1x128xf32> to vector<8x128xf32>
    %864 = arith.mulf %860, %863 : vector<8x128xf32>
    %865 = arith.truncf %864 : vector<8x128xf32> to vector<8x128xbf16>
    %c144_627 = arith.constant 144 : index
    %c0_628 = arith.constant 0 : index
    %866 = vector.load %arg6[%c144_627, %c0_628] : memref<400x128xbf16, #tpu.memory_space<vmem>>, vector<8x128xbf16>
    tpu.vector_store %arg6[%c144_627, %c0_628], %865 {strides = array<i32>} : memref<400x128xbf16, #tpu.memory_space<vmem>>, vector<8x128xbf16>,
    %c118_i32_629 = arith.constant 118 : i32
    %867 = tpu.dynamic_rotate %738 by %c118_i32_629 dim 1 : vector<8x128xf32>, i32 -> vector<8x128xf32>
    %c19_630 = arith.constant 19 : index
    %c0_631 = arith.constant 0 : index
    %c0_632 = arith.constant 0 : index
    %868 = vector.load %arg2[%c19_630, %c0_631, %c0_632] : memref<25x1x128xf32, #tpu.memory_space<vmem>>, vector<1x1x128xf32>
    %869 = vector.shape_cast %868 : vector<1x1x128xf32> to vector<1x128xf32>
    %870 = vector.broadcast %869 : vector<1x128xf32> to vector<8x128xf32>
    %871 = arith.mulf %867, %870 : vector<8x128xf32>
    %872 = arith.truncf %871 : vector<8x128xf32> to vector<8x128xbf16>
    %c152_633 = arith.constant 152 : index
    %c0_634 = arith.constant 0 : index
    %873 = vector.load %arg6[%c152_633, %c0_634] : memref<400x128xbf16, #tpu.memory_space<vmem>>, vector<8x128xbf16>
    tpu.vector_store %arg6[%c152_633, %c0_634], %872 {strides = array<i32>} : memref<400x128xbf16, #tpu.memory_space<vmem>>, vector<8x128xbf16>,
    %c114_i32_635 = arith.constant 114 : i32
    %874 = tpu.dynamic_rotate %738 by %c114_i32_635 dim 1 : vector<8x128xf32>, i32 -> vector<8x128xf32>
    %c20_636 = arith.constant 20 : index
    %c0_637 = arith.constant 0 : index
    %c0_638 = arith.constant 0 : index
    %875 = vector.load %arg2[%c20_636, %c0_637, %c0_638] : memref<25x1x128xf32, #tpu.memory_space<vmem>>, vector<1x1x128xf32>
    %876 = vector.shape_cast %875 : vector<1x1x128xf32> to vector<1x128xf32>
    %877 = vector.broadcast %876 : vector<1x128xf32> to vector<8x128xf32>
    %878 = arith.mulf %874, %877 : vector<8x128xf32>
    %879 = arith.truncf %878 : vector<8x128xf32> to vector<8x128xbf16>
    %c160_639 = arith.constant 160 : index
    %c0_640 = arith.constant 0 : index
    %880 = vector.load %arg6[%c160_639, %c0_640] : memref<400x128xbf16, #tpu.memory_space<vmem>>, vector<8x128xbf16>
    tpu.vector_store %arg6[%c160_639, %c0_640], %879 {strides = array<i32>} : memref<400x128xbf16, #tpu.memory_space<vmem>>, vector<8x128xbf16>,
    %c113_i32_641 = arith.constant 113 : i32
    %881 = tpu.dynamic_rotate %738 by %c113_i32_641 dim 1 : vector<8x128xf32>, i32 -> vector<8x128xf32>
    %c21_642 = arith.constant 21 : index
    %c0_643 = arith.constant 0 : index
    %c0_644 = arith.constant 0 : index
    %882 = vector.load %arg2[%c21_642, %c0_643, %c0_644] : memref<25x1x128xf32, #tpu.memory_space<vmem>>, vector<1x1x128xf32>
    %883 = vector.shape_cast %882 : vector<1x1x128xf32> to vector<1x128xf32>
    %884 = vector.broadcast %883 : vector<1x128xf32> to vector<8x128xf32>
    %885 = arith.mulf %881, %884 : vector<8x128xf32>
    %886 = arith.truncf %885 : vector<8x128xf32> to vector<8x128xbf16>
    %c168_645 = arith.constant 168 : index
    %c0_646 = arith.constant 0 : index
    %887 = vector.load %arg6[%c168_645, %c0_646] : memref<400x128xbf16, #tpu.memory_space<vmem>>, vector<8x128xbf16>
    tpu.vector_store %arg6[%c168_645, %c0_646], %886 {strides = array<i32>} : memref<400x128xbf16, #tpu.memory_space<vmem>>, vector<8x128xbf16>,
    %c112_i32_647 = arith.constant 112 : i32
    %888 = tpu.dynamic_rotate %738 by %c112_i32_647 dim 1 : vector<8x128xf32>, i32 -> vector<8x128xf32>
    %c22_648 = arith.constant 22 : index
    %c0_649 = arith.constant 0 : index
    %c0_650 = arith.constant 0 : index
    %889 = vector.load %arg2[%c22_648, %c0_649, %c0_650] : memref<25x1x128xf32, #tpu.memory_space<vmem>>, vector<1x1x128xf32>
    %890 = vector.shape_cast %889 : vector<1x1x128xf32> to vector<1x128xf32>
    %891 = vector.broadcast %890 : vector<1x128xf32> to vector<8x128xf32>
    %892 = arith.mulf %888, %891 : vector<8x128xf32>
    %893 = arith.truncf %892 : vector<8x128xf32> to vector<8x128xbf16>
    %c176_651 = arith.constant 176 : index
    %c0_652 = arith.constant 0 : index
    %894 = vector.load %arg6[%c176_651, %c0_652] : memref<400x128xbf16, #tpu.memory_space<vmem>>, vector<8x128xbf16>
    tpu.vector_store %arg6[%c176_651, %c0_652], %893 {strides = array<i32>} : memref<400x128xbf16, #tpu.memory_space<vmem>>, vector<8x128xbf16>,
    %c111_i32_653 = arith.constant 111 : i32
    %895 = tpu.dynamic_rotate %738 by %c111_i32_653 dim 1 : vector<8x128xf32>, i32 -> vector<8x128xf32>
    %c23_654 = arith.constant 23 : index
    %c0_655 = arith.constant 0 : index
    %c0_656 = arith.constant 0 : index
    %896 = vector.load %arg2[%c23_654, %c0_655, %c0_656] : memref<25x1x128xf32, #tpu.memory_space<vmem>>, vector<1x1x128xf32>
    %897 = vector.shape_cast %896 : vector<1x1x128xf32> to vector<1x128xf32>
    %898 = vector.broadcast %897 : vector<1x128xf32> to vector<8x128xf32>
    %899 = arith.mulf %895, %898 : vector<8x128xf32>
    %900 = arith.truncf %899 : vector<8x128xf32> to vector<8x128xbf16>
    %c184_657 = arith.constant 184 : index
    %c0_658 = arith.constant 0 : index
    %901 = vector.load %arg6[%c184_657, %c0_658] : memref<400x128xbf16, #tpu.memory_space<vmem>>, vector<8x128xbf16>
    tpu.vector_store %arg6[%c184_657, %c0_658], %900 {strides = array<i32>} : memref<400x128xbf16, #tpu.memory_space<vmem>>, vector<8x128xbf16>,
    %c110_i32_659 = arith.constant 110 : i32
    %902 = tpu.dynamic_rotate %738 by %c110_i32_659 dim 1 : vector<8x128xf32>, i32 -> vector<8x128xf32>
    %c24_660 = arith.constant 24 : index
    %c0_661 = arith.constant 0 : index
    %c0_662 = arith.constant 0 : index
    %903 = vector.load %arg2[%c24_660, %c0_661, %c0_662] : memref<25x1x128xf32, #tpu.memory_space<vmem>>, vector<1x1x128xf32>
    %904 = vector.shape_cast %903 : vector<1x1x128xf32> to vector<1x128xf32>
    %905 = vector.broadcast %904 : vector<1x128xf32> to vector<8x128xf32>
    %906 = arith.mulf %902, %905 : vector<8x128xf32>
    %907 = arith.truncf %906 : vector<8x128xf32> to vector<8x128xbf16>
    %c192_663 = arith.constant 192 : index
    %c0_664 = arith.constant 0 : index
    %908 = vector.load %arg6[%c192_663, %c0_664] : memref<400x128xbf16, #tpu.memory_space<vmem>>, vector<8x128xbf16>
    tpu.vector_store %arg6[%c192_663, %c0_664], %907 {strides = array<i32>} : memref<400x128xbf16, #tpu.memory_space<vmem>>, vector<8x128xbf16>,
    %c18_i32_665 = arith.constant 18 : i32
    %909 = tpu.dynamic_rotate %735 by %c18_i32_665 dim 1 : vector<8x128xf32>, i32 -> vector<8x128xf32>
    %c0_666 = arith.constant 0 : index
    %c0_667 = arith.constant 0 : index
    %c0_668 = arith.constant 0 : index
    %910 = vector.load %arg2[%c0_666, %c0_667, %c0_668] : memref<25x1x128xf32, #tpu.memory_space<vmem>>, vector<1x1x128xf32>
    %911 = vector.shape_cast %910 : vector<1x1x128xf32> to vector<1x128xf32>
    %912 = vector.broadcast %911 : vector<1x128xf32> to vector<8x128xf32>
    %913 = arith.mulf %909, %912 : vector<8x128xf32>
    %914 = arith.truncf %913 : vector<8x128xf32> to vector<8x128xbf16>
    %c200_669 = arith.constant 200 : index
    %c0_670 = arith.constant 0 : index
    %915 = vector.load %arg6[%c200_669, %c0_670] : memref<400x128xbf16, #tpu.memory_space<vmem>>, vector<8x128xbf16>
    tpu.vector_store %arg6[%c200_669, %c0_670], %914 {strides = array<i32>} : memref<400x128xbf16, #tpu.memory_space<vmem>>, vector<8x128xbf16>,
    %c17_i32_671 = arith.constant 17 : i32
    %916 = tpu.dynamic_rotate %735 by %c17_i32_671 dim 1 : vector<8x128xf32>, i32 -> vector<8x128xf32>
    %c1_672 = arith.constant 1 : index
    %c0_673 = arith.constant 0 : index
    %c0_674 = arith.constant 0 : index
    %917 = vector.load %arg2[%c1_672, %c0_673, %c0_674] : memref<25x1x128xf32, #tpu.memory_space<vmem>>, vector<1x1x128xf32>
    %918 = vector.shape_cast %917 : vector<1x1x128xf32> to vector<1x128xf32>
    %919 = vector.broadcast %918 : vector<1x128xf32> to vector<8x128xf32>
    %920 = arith.mulf %916, %919 : vector<8x128xf32>
    %921 = arith.truncf %920 : vector<8x128xf32> to vector<8x128xbf16>
    %c208_675 = arith.constant 208 : index
    %c0_676 = arith.constant 0 : index
    %922 = vector.load %arg6[%c208_675, %c0_676] : memref<400x128xbf16, #tpu.memory_space<vmem>>, vector<8x128xbf16>
    tpu.vector_store %arg6[%c208_675, %c0_676], %921 {strides = array<i32>} : memref<400x128xbf16, #tpu.memory_space<vmem>>, vector<8x128xbf16>,
    %c16_i32_677 = arith.constant 16 : i32
    %923 = tpu.dynamic_rotate %735 by %c16_i32_677 dim 1 : vector<8x128xf32>, i32 -> vector<8x128xf32>
    %c2_678 = arith.constant 2 : index
    %c0_679 = arith.constant 0 : index
    %c0_680 = arith.constant 0 : index
    %924 = vector.load %arg2[%c2_678, %c0_679, %c0_680] : memref<25x1x128xf32, #tpu.memory_space<vmem>>, vector<1x1x128xf32>
    %925 = vector.shape_cast %924 : vector<1x1x128xf32> to vector<1x128xf32>
    %926 = vector.broadcast %925 : vector<1x128xf32> to vector<8x128xf32>
    %927 = arith.mulf %923, %926 : vector<8x128xf32>
    %928 = arith.truncf %927 : vector<8x128xf32> to vector<8x128xbf16>
    %c216_681 = arith.constant 216 : index
    %c0_682 = arith.constant 0 : index
    %929 = vector.load %arg6[%c216_681, %c0_682] : memref<400x128xbf16, #tpu.memory_space<vmem>>, vector<8x128xbf16>
    tpu.vector_store %arg6[%c216_681, %c0_682], %928 {strides = array<i32>} : memref<400x128xbf16, #tpu.memory_space<vmem>>, vector<8x128xbf16>,
    %c15_i32_683 = arith.constant 15 : i32
    %930 = tpu.dynamic_rotate %735 by %c15_i32_683 dim 1 : vector<8x128xf32>, i32 -> vector<8x128xf32>
    %c3_684 = arith.constant 3 : index
    %c0_685 = arith.constant 0 : index
    %c0_686 = arith.constant 0 : index
    %931 = vector.load %arg2[%c3_684, %c0_685, %c0_686] : memref<25x1x128xf32, #tpu.memory_space<vmem>>, vector<1x1x128xf32>
    %932 = vector.shape_cast %931 : vector<1x1x128xf32> to vector<1x128xf32>
    %933 = vector.broadcast %932 : vector<1x128xf32> to vector<8x128xf32>
    %934 = arith.mulf %930, %933 : vector<8x128xf32>
    %935 = arith.truncf %934 : vector<8x128xf32> to vector<8x128xbf16>
    %c224_687 = arith.constant 224 : index
    %c0_688 = arith.constant 0 : index
    %936 = vector.load %arg6[%c224_687, %c0_688] : memref<400x128xbf16, #tpu.memory_space<vmem>>, vector<8x128xbf16>
    tpu.vector_store %arg6[%c224_687, %c0_688], %935 {strides = array<i32>} : memref<400x128xbf16, #tpu.memory_space<vmem>>, vector<8x128xbf16>,
    %c14_i32_689 = arith.constant 14 : i32
    %937 = tpu.dynamic_rotate %735 by %c14_i32_689 dim 1 : vector<8x128xf32>, i32 -> vector<8x128xf32>
    %c4_690 = arith.constant 4 : index
    %c0_691 = arith.constant 0 : index
    %c0_692 = arith.constant 0 : index
    %938 = vector.load %arg2[%c4_690, %c0_691, %c0_692] : memref<25x1x128xf32, #tpu.memory_space<vmem>>, vector<1x1x128xf32>
    %939 = vector.shape_cast %938 : vector<1x1x128xf32> to vector<1x128xf32>
    %940 = vector.broadcast %939 : vector<1x128xf32> to vector<8x128xf32>
    %941 = arith.mulf %937, %940 : vector<8x128xf32>
    %942 = arith.truncf %941 : vector<8x128xf32> to vector<8x128xbf16>
    %c232_693 = arith.constant 232 : index
    %c0_694 = arith.constant 0 : index
    %943 = vector.load %arg6[%c232_693, %c0_694] : memref<400x128xbf16, #tpu.memory_space<vmem>>, vector<8x128xbf16>
    tpu.vector_store %arg6[%c232_693, %c0_694], %942 {strides = array<i32>} : memref<400x128xbf16, #tpu.memory_space<vmem>>, vector<8x128xbf16>,
    %c10_i32_695 = arith.constant 10 : i32
    %944 = tpu.dynamic_rotate %735 by %c10_i32_695 dim 1 : vector<8x128xf32>, i32 -> vector<8x128xf32>
    %c5_696 = arith.constant 5 : index
    %c0_697 = arith.constant 0 : index
    %c0_698 = arith.constant 0 : index
    %945 = vector.load %arg2[%c5_696, %c0_697, %c0_698] : memref<25x1x128xf32, #tpu.memory_space<vmem>>, vector<1x1x128xf32>
    %946 = vector.shape_cast %945 : vector<1x1x128xf32> to vector<1x128xf32>
    %947 = vector.broadcast %946 : vector<1x128xf32> to vector<8x128xf32>
    %948 = arith.mulf %944, %947 : vector<8x128xf32>
    %949 = arith.truncf %948 : vector<8x128xf32> to vector<8x128xbf16>
    %c240_699 = arith.constant 240 : index
    %c0_700 = arith.constant 0 : index
    %950 = vector.load %arg6[%c240_699, %c0_700] : memref<400x128xbf16, #tpu.memory_space<vmem>>, vector<8x128xbf16>
    tpu.vector_store %arg6[%c240_699, %c0_700], %949 {strides = array<i32>} : memref<400x128xbf16, #tpu.memory_space<vmem>>, vector<8x128xbf16>,
    %c9_i32_701 = arith.constant 9 : i32
    %951 = tpu.dynamic_rotate %735 by %c9_i32_701 dim 1 : vector<8x128xf32>, i32 -> vector<8x128xf32>
    %c6_702 = arith.constant 6 : index
    %c0_703 = arith.constant 0 : index
    %c0_704 = arith.constant 0 : index
    %952 = vector.load %arg2[%c6_702, %c0_703, %c0_704] : memref<25x1x128xf32, #tpu.memory_space<vmem>>, vector<1x1x128xf32>
    %953 = vector.shape_cast %952 : vector<1x1x128xf32> to vector<1x128xf32>
    %954 = vector.broadcast %953 : vector<1x128xf32> to vector<8x128xf32>
    %955 = arith.mulf %951, %954 : vector<8x128xf32>
    %956 = arith.truncf %955 : vector<8x128xf32> to vector<8x128xbf16>
    %c248_705 = arith.constant 248 : index
    %c0_706 = arith.constant 0 : index
    %957 = vector.load %arg6[%c248_705, %c0_706] : memref<400x128xbf16, #tpu.memory_space<vmem>>, vector<8x128xbf16>
    tpu.vector_store %arg6[%c248_705, %c0_706], %956 {strides = array<i32>} : memref<400x128xbf16, #tpu.memory_space<vmem>>, vector<8x128xbf16>,
    %c8_i32_707 = arith.constant 8 : i32
    %958 = tpu.dynamic_rotate %735 by %c8_i32_707 dim 1 : vector<8x128xf32>, i32 -> vector<8x128xf32>
    %c7_708 = arith.constant 7 : index
    %c0_709 = arith.constant 0 : index
    %c0_710 = arith.constant 0 : index
    %959 = vector.load %arg2[%c7_708, %c0_709, %c0_710] : memref<25x1x128xf32, #tpu.memory_space<vmem>>, vector<1x1x128xf32>
    %960 = vector.shape_cast %959 : vector<1x1x128xf32> to vector<1x128xf32>
    %961 = vector.broadcast %960 : vector<1x128xf32> to vector<8x128xf32>
    %962 = arith.mulf %958, %961 : vector<8x128xf32>
    %963 = arith.truncf %962 : vector<8x128xf32> to vector<8x128xbf16>
    %c256_711 = arith.constant 256 : index
    %c0_712 = arith.constant 0 : index
    %964 = vector.load %arg6[%c256_711, %c0_712] : memref<400x128xbf16, #tpu.memory_space<vmem>>, vector<8x128xbf16>
    tpu.vector_store %arg6[%c256_711, %c0_712], %963 {strides = array<i32>} : memref<400x128xbf16, #tpu.memory_space<vmem>>, vector<8x128xbf16>,
    %c7_i32_713 = arith.constant 7 : i32
    %965 = tpu.dynamic_rotate %735 by %c7_i32_713 dim 1 : vector<8x128xf32>, i32 -> vector<8x128xf32>
    %c8_714 = arith.constant 8 : index
    %c0_715 = arith.constant 0 : index
    %c0_716 = arith.constant 0 : index
    %966 = vector.load %arg2[%c8_714, %c0_715, %c0_716] : memref<25x1x128xf32, #tpu.memory_space<vmem>>, vector<1x1x128xf32>
    %967 = vector.shape_cast %966 : vector<1x1x128xf32> to vector<1x128xf32>
    %968 = vector.broadcast %967 : vector<1x128xf32> to vector<8x128xf32>
    %969 = arith.mulf %965, %968 : vector<8x128xf32>
    %970 = arith.truncf %969 : vector<8x128xf32> to vector<8x128xbf16>
    %c264_717 = arith.constant 264 : index
    %c0_718 = arith.constant 0 : index
    %971 = vector.load %arg6[%c264_717, %c0_718] : memref<400x128xbf16, #tpu.memory_space<vmem>>, vector<8x128xbf16>
    tpu.vector_store %arg6[%c264_717, %c0_718], %970 {strides = array<i32>} : memref<400x128xbf16, #tpu.memory_space<vmem>>, vector<8x128xbf16>,
    %c6_i32_719 = arith.constant 6 : i32
    %972 = tpu.dynamic_rotate %735 by %c6_i32_719 dim 1 : vector<8x128xf32>, i32 -> vector<8x128xf32>
    %c9_720 = arith.constant 9 : index
    %c0_721 = arith.constant 0 : index
    %c0_722 = arith.constant 0 : index
    %973 = vector.load %arg2[%c9_720, %c0_721, %c0_722] : memref<25x1x128xf32, #tpu.memory_space<vmem>>, vector<1x1x128xf32>
    %974 = vector.shape_cast %973 : vector<1x1x128xf32> to vector<1x128xf32>
    %975 = vector.broadcast %974 : vector<1x128xf32> to vector<8x128xf32>
    %976 = arith.mulf %972, %975 : vector<8x128xf32>
    %977 = arith.truncf %976 : vector<8x128xf32> to vector<8x128xbf16>
    %c272_723 = arith.constant 272 : index
    %c0_724 = arith.constant 0 : index
    %978 = vector.load %arg6[%c272_723, %c0_724] : memref<400x128xbf16, #tpu.memory_space<vmem>>, vector<8x128xbf16>
    tpu.vector_store %arg6[%c272_723, %c0_724], %977 {strides = array<i32>} : memref<400x128xbf16, #tpu.memory_space<vmem>>, vector<8x128xbf16>,
    %c2_i32_725 = arith.constant 2 : i32
    %979 = tpu.dynamic_rotate %735 by %c2_i32_725 dim 1 : vector<8x128xf32>, i32 -> vector<8x128xf32>
    %c10_726 = arith.constant 10 : index
    %c0_727 = arith.constant 0 : index
    %c0_728 = arith.constant 0 : index
    %980 = vector.load %arg2[%c10_726, %c0_727, %c0_728] : memref<25x1x128xf32, #tpu.memory_space<vmem>>, vector<1x1x128xf32>
    %981 = vector.shape_cast %980 : vector<1x1x128xf32> to vector<1x128xf32>
    %982 = vector.broadcast %981 : vector<1x128xf32> to vector<8x128xf32>
    %983 = arith.mulf %979, %982 : vector<8x128xf32>
    %984 = arith.truncf %983 : vector<8x128xf32> to vector<8x128xbf16>
    %c280_729 = arith.constant 280 : index
    %c0_730 = arith.constant 0 : index
    %985 = vector.load %arg6[%c280_729, %c0_730] : memref<400x128xbf16, #tpu.memory_space<vmem>>, vector<8x128xbf16>
    tpu.vector_store %arg6[%c280_729, %c0_730], %984 {strides = array<i32>} : memref<400x128xbf16, #tpu.memory_space<vmem>>, vector<8x128xbf16>,
    %c1_i32_731 = arith.constant 1 : i32
    %986 = tpu.dynamic_rotate %735 by %c1_i32_731 dim 1 : vector<8x128xf32>, i32 -> vector<8x128xf32>
    %c11_732 = arith.constant 11 : index
    %c0_733 = arith.constant 0 : index
    %c0_734 = arith.constant 0 : index
    %987 = vector.load %arg2[%c11_732, %c0_733, %c0_734] : memref<25x1x128xf32, #tpu.memory_space<vmem>>, vector<1x1x128xf32>
    %988 = vector.shape_cast %987 : vector<1x1x128xf32> to vector<1x128xf32>
    %989 = vector.broadcast %988 : vector<1x128xf32> to vector<8x128xf32>
    %990 = arith.mulf %986, %989 : vector<8x128xf32>
    %991 = arith.truncf %990 : vector<8x128xf32> to vector<8x128xbf16>
    %c288_735 = arith.constant 288 : index
    %c0_736 = arith.constant 0 : index
    %992 = vector.load %arg6[%c288_735, %c0_736] : memref<400x128xbf16, #tpu.memory_space<vmem>>, vector<8x128xbf16>
    tpu.vector_store %arg6[%c288_735, %c0_736], %991 {strides = array<i32>} : memref<400x128xbf16, #tpu.memory_space<vmem>>, vector<8x128xbf16>,
    %993 = arith.truncf %735 : vector<8x128xf32> to vector<8x128xbf16>
    %c296_737 = arith.constant 296 : index
    %c0_738 = arith.constant 0 : index
    %994 = vector.load %arg6[%c296_737, %c0_738] : memref<400x128xbf16, #tpu.memory_space<vmem>>, vector<8x128xbf16>
    tpu.vector_store %arg6[%c296_737, %c0_738], %993 {strides = array<i32>} : memref<400x128xbf16, #tpu.memory_space<vmem>>, vector<8x128xbf16>,
    %c127_i32_739 = arith.constant 127 : i32
    %995 = tpu.dynamic_rotate %735 by %c127_i32_739 dim 1 : vector<8x128xf32>, i32 -> vector<8x128xf32>
    %c13_740 = arith.constant 13 : index
    %c0_741 = arith.constant 0 : index
    %c0_742 = arith.constant 0 : index
    %996 = vector.load %arg2[%c13_740, %c0_741, %c0_742] : memref<25x1x128xf32, #tpu.memory_space<vmem>>, vector<1x1x128xf32>
    %997 = vector.shape_cast %996 : vector<1x1x128xf32> to vector<1x128xf32>
    %998 = vector.broadcast %997 : vector<1x128xf32> to vector<8x128xf32>
    %999 = arith.mulf %995, %998 : vector<8x128xf32>
    %1000 = arith.truncf %999 : vector<8x128xf32> to vector<8x128xbf16>
    %c304_743 = arith.constant 304 : index
    %c0_744 = arith.constant 0 : index
    %1001 = vector.load %arg6[%c304_743, %c0_744] : memref<400x128xbf16, #tpu.memory_space<vmem>>, vector<8x128xbf16>
    tpu.vector_store %arg6[%c304_743, %c0_744], %1000 {strides = array<i32>} : memref<400x128xbf16, #tpu.memory_space<vmem>>, vector<8x128xbf16>,
    %c126_i32_745 = arith.constant 126 : i32
    %1002 = tpu.dynamic_rotate %735 by %c126_i32_745 dim 1 : vector<8x128xf32>, i32 -> vector<8x128xf32>
    %c14_746 = arith.constant 14 : index
    %c0_747 = arith.constant 0 : index
    %c0_748 = arith.constant 0 : index
    %1003 = vector.load %arg2[%c14_746, %c0_747, %c0_748] : memref<25x1x128xf32, #tpu.memory_space<vmem>>, vector<1x1x128xf32>
    %1004 = vector.shape_cast %1003 : vector<1x1x128xf32> to vector<1x128xf32>
    %1005 = vector.broadcast %1004 : vector<1x128xf32> to vector<8x128xf32>
    %1006 = arith.mulf %1002, %1005 : vector<8x128xf32>
    %1007 = arith.truncf %1006 : vector<8x128xf32> to vector<8x128xbf16>
    %c312_749 = arith.constant 312 : index
    %c0_750 = arith.constant 0 : index
    %1008 = vector.load %arg6[%c312_749, %c0_750] : memref<400x128xbf16, #tpu.memory_space<vmem>>, vector<8x128xbf16>
    tpu.vector_store %arg6[%c312_749, %c0_750], %1007 {strides = array<i32>} : memref<400x128xbf16, #tpu.memory_space<vmem>>, vector<8x128xbf16>,
    %c122_i32_751 = arith.constant 122 : i32
    %1009 = tpu.dynamic_rotate %735 by %c122_i32_751 dim 1 : vector<8x128xf32>, i32 -> vector<8x128xf32>
    %c15_752 = arith.constant 15 : index
    %c0_753 = arith.constant 0 : index
    %c0_754 = arith.constant 0 : index
    %1010 = vector.load %arg2[%c15_752, %c0_753, %c0_754] : memref<25x1x128xf32, #tpu.memory_space<vmem>>, vector<1x1x128xf32>
    %1011 = vector.shape_cast %1010 : vector<1x1x128xf32> to vector<1x128xf32>
    %1012 = vector.broadcast %1011 : vector<1x128xf32> to vector<8x128xf32>
    %1013 = arith.mulf %1009, %1012 : vector<8x128xf32>
    %1014 = arith.truncf %1013 : vector<8x128xf32> to vector<8x128xbf16>
    %c320_755 = arith.constant 320 : index
    %c0_756 = arith.constant 0 : index
    %1015 = vector.load %arg6[%c320_755, %c0_756] : memref<400x128xbf16, #tpu.memory_space<vmem>>, vector<8x128xbf16>
    tpu.vector_store %arg6[%c320_755, %c0_756], %1014 {strides = array<i32>} : memref<400x128xbf16, #tpu.memory_space<vmem>>, vector<8x128xbf16>,
    %c121_i32_757 = arith.constant 121 : i32
    %1016 = tpu.dynamic_rotate %735 by %c121_i32_757 dim 1 : vector<8x128xf32>, i32 -> vector<8x128xf32>
    %c16_758 = arith.constant 16 : index
    %c0_759 = arith.constant 0 : index
    %c0_760 = arith.constant 0 : index
    %1017 = vector.load %arg2[%c16_758, %c0_759, %c0_760] : memref<25x1x128xf32, #tpu.memory_space<vmem>>, vector<1x1x128xf32>
    %1018 = vector.shape_cast %1017 : vector<1x1x128xf32> to vector<1x128xf32>
    %1019 = vector.broadcast %1018 : vector<1x128xf32> to vector<8x128xf32>
    %1020 = arith.mulf %1016, %1019 : vector<8x128xf32>
    %1021 = arith.truncf %1020 : vector<8x128xf32> to vector<8x128xbf16>
    %c328_761 = arith.constant 328 : index
    %c0_762 = arith.constant 0 : index
    %1022 = vector.load %arg6[%c328_761, %c0_762] : memref<400x128xbf16, #tpu.memory_space<vmem>>, vector<8x128xbf16>
    tpu.vector_store %arg6[%c328_761, %c0_762], %1021 {strides = array<i32>} : memref<400x128xbf16, #tpu.memory_space<vmem>>, vector<8x128xbf16>,
    %c120_i32_763 = arith.constant 120 : i32
    %1023 = tpu.dynamic_rotate %735 by %c120_i32_763 dim 1 : vector<8x128xf32>, i32 -> vector<8x128xf32>
    %c17_764 = arith.constant 17 : index
    %c0_765 = arith.constant 0 : index
    %c0_766 = arith.constant 0 : index
    %1024 = vector.load %arg2[%c17_764, %c0_765, %c0_766] : memref<25x1x128xf32, #tpu.memory_space<vmem>>, vector<1x1x128xf32>
    %1025 = vector.shape_cast %1024 : vector<1x1x128xf32> to vector<1x128xf32>
    %1026 = vector.broadcast %1025 : vector<1x128xf32> to vector<8x128xf32>
    %1027 = arith.mulf %1023, %1026 : vector<8x128xf32>
    %1028 = arith.truncf %1027 : vector<8x128xf32> to vector<8x128xbf16>
    %c336_767 = arith.constant 336 : index
    %c0_768 = arith.constant 0 : index
    %1029 = vector.load %arg6[%c336_767, %c0_768] : memref<400x128xbf16, #tpu.memory_space<vmem>>, vector<8x128xbf16>
    tpu.vector_store %arg6[%c336_767, %c0_768], %1028 {strides = array<i32>} : memref<400x128xbf16, #tpu.memory_space<vmem>>, vector<8x128xbf16>,
    %c119_i32_769 = arith.constant 119 : i32
    %1030 = tpu.dynamic_rotate %735 by %c119_i32_769 dim 1 : vector<8x128xf32>, i32 -> vector<8x128xf32>
    %c18_770 = arith.constant 18 : index
    %c0_771 = arith.constant 0 : index
    %c0_772 = arith.constant 0 : index
    %1031 = vector.load %arg2[%c18_770, %c0_771, %c0_772] : memref<25x1x128xf32, #tpu.memory_space<vmem>>, vector<1x1x128xf32>
    %1032 = vector.shape_cast %1031 : vector<1x1x128xf32> to vector<1x128xf32>
    %1033 = vector.broadcast %1032 : vector<1x128xf32> to vector<8x128xf32>
    %1034 = arith.mulf %1030, %1033 : vector<8x128xf32>
    %1035 = arith.truncf %1034 : vector<8x128xf32> to vector<8x128xbf16>
    %c344_773 = arith.constant 344 : index
    %c0_774 = arith.constant 0 : index
    %1036 = vector.load %arg6[%c344_773, %c0_774] : memref<400x128xbf16, #tpu.memory_space<vmem>>, vector<8x128xbf16>
    tpu.vector_store %arg6[%c344_773, %c0_774], %1035 {strides = array<i32>} : memref<400x128xbf16, #tpu.memory_space<vmem>>, vector<8x128xbf16>,
    %c118_i32_775 = arith.constant 118 : i32
    %1037 = tpu.dynamic_rotate %735 by %c118_i32_775 dim 1 : vector<8x128xf32>, i32 -> vector<8x128xf32>
    %c19_776 = arith.constant 19 : index
    %c0_777 = arith.constant 0 : index
    %c0_778 = arith.constant 0 : index
    %1038 = vector.load %arg2[%c19_776, %c0_777, %c0_778] : memref<25x1x128xf32, #tpu.memory_space<vmem>>, vector<1x1x128xf32>
    %1039 = vector.shape_cast %1038 : vector<1x1x128xf32> to vector<1x128xf32>
    %1040 = vector.broadcast %1039 : vector<1x128xf32> to vector<8x128xf32>
    %1041 = arith.mulf %1037, %1040 : vector<8x128xf32>
    %1042 = arith.truncf %1041 : vector<8x128xf32> to vector<8x128xbf16>
    %c352_779 = arith.constant 352 : index
    %c0_780 = arith.constant 0 : index
    %1043 = vector.load %arg6[%c352_779, %c0_780] : memref<400x128xbf16, #tpu.memory_space<vmem>>, vector<8x128xbf16>
    tpu.vector_store %arg6[%c352_779, %c0_780], %1042 {strides = array<i32>} : memref<400x128xbf16, #tpu.memory_space<vmem>>, vector<8x128xbf16>,
    %c114_i32_781 = arith.constant 114 : i32
    %1044 = tpu.dynamic_rotate %735 by %c114_i32_781 dim 1 : vector<8x128xf32>, i32 -> vector<8x128xf32>
    %c20_782 = arith.constant 20 : index
    %c0_783 = arith.constant 0 : index
    %c0_784 = arith.constant 0 : index
    %1045 = vector.load %arg2[%c20_782, %c0_783, %c0_784] : memref<25x1x128xf32, #tpu.memory_space<vmem>>, vector<1x1x128xf32>
    %1046 = vector.shape_cast %1045 : vector<1x1x128xf32> to vector<1x128xf32>
    %1047 = vector.broadcast %1046 : vector<1x128xf32> to vector<8x128xf32>
    %1048 = arith.mulf %1044, %1047 : vector<8x128xf32>
    %1049 = arith.truncf %1048 : vector<8x128xf32> to vector<8x128xbf16>
    %c360_785 = arith.constant 360 : index
    %c0_786 = arith.constant 0 : index
    %1050 = vector.load %arg6[%c360_785, %c0_786] : memref<400x128xbf16, #tpu.memory_space<vmem>>, vector<8x128xbf16>
    tpu.vector_store %arg6[%c360_785, %c0_786], %1049 {strides = array<i32>} : memref<400x128xbf16, #tpu.memory_space<vmem>>, vector<8x128xbf16>,
    %c113_i32_787 = arith.constant 113 : i32
    %1051 = tpu.dynamic_rotate %735 by %c113_i32_787 dim 1 : vector<8x128xf32>, i32 -> vector<8x128xf32>
    %c21_788 = arith.constant 21 : index
    %c0_789 = arith.constant 0 : index
    %c0_790 = arith.constant 0 : index
    %1052 = vector.load %arg2[%c21_788, %c0_789, %c0_790] : memref<25x1x128xf32, #tpu.memory_space<vmem>>, vector<1x1x128xf32>
    %1053 = vector.shape_cast %1052 : vector<1x1x128xf32> to vector<1x128xf32>
    %1054 = vector.broadcast %1053 : vector<1x128xf32> to vector<8x128xf32>
    %1055 = arith.mulf %1051, %1054 : vector<8x128xf32>
    %1056 = arith.truncf %1055 : vector<8x128xf32> to vector<8x128xbf16>
    %c368_791 = arith.constant 368 : index
    %c0_792 = arith.constant 0 : index
    %1057 = vector.load %arg6[%c368_791, %c0_792] : memref<400x128xbf16, #tpu.memory_space<vmem>>, vector<8x128xbf16>
    tpu.vector_store %arg6[%c368_791, %c0_792], %1056 {strides = array<i32>} : memref<400x128xbf16, #tpu.memory_space<vmem>>, vector<8x128xbf16>,
    %c112_i32_793 = arith.constant 112 : i32
    %1058 = tpu.dynamic_rotate %735 by %c112_i32_793 dim 1 : vector<8x128xf32>, i32 -> vector<8x128xf32>
    %c22_794 = arith.constant 22 : index
    %c0_795 = arith.constant 0 : index
    %c0_796 = arith.constant 0 : index
    %1059 = vector.load %arg2[%c22_794, %c0_795, %c0_796] : memref<25x1x128xf32, #tpu.memory_space<vmem>>, vector<1x1x128xf32>
    %1060 = vector.shape_cast %1059 : vector<1x1x128xf32> to vector<1x128xf32>
    %1061 = vector.broadcast %1060 : vector<1x128xf32> to vector<8x128xf32>
    %1062 = arith.mulf %1058, %1061 : vector<8x128xf32>
    %1063 = arith.truncf %1062 : vector<8x128xf32> to vector<8x128xbf16>
    %c376_797 = arith.constant 376 : index
    %c0_798 = arith.constant 0 : index
    %1064 = vector.load %arg6[%c376_797, %c0_798] : memref<400x128xbf16, #tpu.memory_space<vmem>>, vector<8x128xbf16>
    tpu.vector_store %arg6[%c376_797, %c0_798], %1063 {strides = array<i32>} : memref<400x128xbf16, #tpu.memory_space<vmem>>, vector<8x128xbf16>,
    %c111_i32_799 = arith.constant 111 : i32
    %1065 = tpu.dynamic_rotate %735 by %c111_i32_799 dim 1 : vector<8x128xf32>, i32 -> vector<8x128xf32>
    %c23_800 = arith.constant 23 : index
    %c0_801 = arith.constant 0 : index
    %c0_802 = arith.constant 0 : index
    %1066 = vector.load %arg2[%c23_800, %c0_801, %c0_802] : memref<25x1x128xf32, #tpu.memory_space<vmem>>, vector<1x1x128xf32>
    %1067 = vector.shape_cast %1066 : vector<1x1x128xf32> to vector<1x128xf32>
    %1068 = vector.broadcast %1067 : vector<1x128xf32> to vector<8x128xf32>
    %1069 = arith.mulf %1065, %1068 : vector<8x128xf32>
    %1070 = arith.truncf %1069 : vector<8x128xf32> to vector<8x128xbf16>
    %c384_803 = arith.constant 384 : index
    %c0_804 = arith.constant 0 : index
    %1071 = vector.load %arg6[%c384_803, %c0_804] : memref<400x128xbf16, #tpu.memory_space<vmem>>, vector<8x128xbf16>
    tpu.vector_store %arg6[%c384_803, %c0_804], %1070 {strides = array<i32>} : memref<400x128xbf16, #tpu.memory_space<vmem>>, vector<8x128xbf16>,
    %c110_i32_805 = arith.constant 110 : i32
    %1072 = tpu.dynamic_rotate %735 by %c110_i32_805 dim 1 : vector<8x128xf32>, i32 -> vector<8x128xf32>
    %c24_806 = arith.constant 24 : index
    %c0_807 = arith.constant 0 : index
    %c0_808 = arith.constant 0 : index
    %1073 = vector.load %arg2[%c24_806, %c0_807, %c0_808] : memref<25x1x128xf32, #tpu.memory_space<vmem>>, vector<1x1x128xf32>
    %1074 = vector.shape_cast %1073 : vector<1x1x128xf32> to vector<1x128xf32>
    %1075 = vector.broadcast %1074 : vector<1x128xf32> to vector<8x128xf32>
    %1076 = arith.mulf %1072, %1075 : vector<8x128xf32>
    %1077 = arith.truncf %1076 : vector<8x128xf32> to vector<8x128xbf16>
    %c392_809 = arith.constant 392 : index
    %c0_810 = arith.constant 0 : index
    %1078 = vector.load %arg6[%c392_809, %c0_810] : memref<400x128xbf16, #tpu.memory_space<vmem>>, vector<8x128xbf16>
    tpu.vector_store %arg6[%c392_809, %c0_810], %1077 {strides = array<i32>} : memref<400x128xbf16, #tpu.memory_space<vmem>>, vector<8x128xbf16>,
    %c0_811 = arith.constant 0 : index
    %c0_812 = arith.constant 0 : index
    %c0_813 = arith.constant 0 : index
    %1079 = vector.load %arg3[%c0_811, %c0_812, %c0_813] : memref<1x32x400xbf16, #tpu.memory_space<vmem>>, vector<1x32x400xbf16>
    %1080 = vector.shape_cast %1079 : vector<1x32x400xbf16> to vector<32x400xbf16>
    %c0_814 = arith.constant 0 : index
    %c0_815 = arith.constant 0 : index
    %1081 = vector.load %arg6[%c0_814, %c0_815] : memref<400x128xbf16, #tpu.memory_space<vmem>>, vector<400x128xbf16>
    %cst_816 = arith.constant dense<0.000000e+00> : vector<32x128xf32>
    %1082 = tpu.matmul %1080, %1081, %cst_816 {dimension_numbers = #tpu.dot_dimension_numbers<[1], [0], [0], [1], [0, 0, 1, 1], [], []>} : vector<32x400xbf16>, vector<400x128xbf16>, vector<32x128xf32> -> vector<32x128xf32>
    %c0_817 = arith.constant 0 : index
    %c0_818 = arith.constant 0 : index
    %c0_819 = arith.constant 0 : index
    %1083 = vector.load %arg4[%c0_817, %c0_818, %c0_819] : memref<1x32x1xf32, #tpu.memory_space<vmem>>, vector<1x32x1xf32>
    %1084 = vector.shape_cast %1083 : vector<1x32x1xf32> to vector<32x1xf32>
    %1085 = vector.broadcast %1084 : vector<32x1xf32> to vector<32x128xf32>
    %1086 = arith.addf %1082, %1085 : vector<32x128xf32>
    %1087 = vector.extract_strided_slice %1086 {offsets = [0, 0], sizes = [24, 128], strides = [1, 1]} : vector<32x128xf32> to vector<24x128xf32>
    %1088 = arith.negf %1087 : vector<24x128xf32>
    %1089 = math.exp %1088 : vector<24x128xf32>
    %cst_820 = arith.constant 1.000000e+00 : f32
    %1090 = vector.broadcast %cst_820 : f32 to vector<24x128xf32>
    %1091 = arith.addf %1090, %1089 : vector<24x128xf32>
    %1092 = arith.divf %1090, %1091 : vector<24x128xf32>
    %1093 = vector.extract_strided_slice %1092 {offsets = [0, 0], sizes = [8, 128], strides = [1, 1]} : vector<24x128xf32> to vector<8x128xf32>
    %1094 = vector.extract_strided_slice %1092 {offsets = [8, 0], sizes = [8, 128], strides = [1, 1]} : vector<24x128xf32> to vector<8x128xf32>
    %1095 = vector.extract_strided_slice %1092 {offsets = [16, 0], sizes = [8, 128], strides = [1, 1]} : vector<24x128xf32> to vector<8x128xf32>
    %1096 = vector.extract_strided_slice %1086 {offsets = [24, 0], sizes = [8, 128], strides = [1, 1]} : vector<32x128xf32> to vector<8x128xf32>
    %1097 = math.tanh %1096 : vector<8x128xf32>
    %1098 = arith.mulf %1094, %733 : vector<8x128xf32>
    %1099 = arith.mulf %1093, %1097 : vector<8x128xf32>
    %1100 = arith.addf %1098, %1099 : vector<8x128xf32>
    %1101 = math.tanh %1100 : vector<8x128xf32>
    %1102 = arith.mulf %1095, %1101 : vector<8x128xf32>
    %c3_i32 = arith.constant 3 : i32
    %1103 = arith.index_cast %c3_i32 : i32 to index
    %c0_821 = arith.constant 0 : index
    %c0_822 = arith.constant 0 : index
    %1104 = vector.load %arg1[%1103, %c0_821, %c0_822] : memref<4x8x128xf32, #tpu.memory_space<vmem>>, vector<1x8x128xf32>
    %1105 = vector.shape_cast %1104 : vector<1x8x128xf32> to vector<8x128xf32>
    %c18_i32_823 = arith.constant 18 : i32
    %1106 = tpu.dynamic_rotate %1105 by %c18_i32_823 dim 1 : vector<8x128xf32>, i32 -> vector<8x128xf32>
    %c0_824 = arith.constant 0 : index
    %c0_825 = arith.constant 0 : index
    %c0_826 = arith.constant 0 : index
    %1107 = vector.load %arg2[%c0_824, %c0_825, %c0_826] : memref<25x1x128xf32, #tpu.memory_space<vmem>>, vector<1x1x128xf32>
    %1108 = vector.shape_cast %1107 : vector<1x1x128xf32> to vector<1x128xf32>
    %1109 = vector.broadcast %1108 : vector<1x128xf32> to vector<8x128xf32>
    %1110 = arith.mulf %1106, %1109 : vector<8x128xf32>
    %1111 = arith.truncf %1110 : vector<8x128xf32> to vector<8x128xbf16>
    %c0_827 = arith.constant 0 : index
    %c0_828 = arith.constant 0 : index
    %1112 = vector.load %arg6[%c0_827, %c0_828] : memref<400x128xbf16, #tpu.memory_space<vmem>>, vector<8x128xbf16>
    tpu.vector_store %arg6[%c0_827, %c0_828], %1111 {strides = array<i32>} : memref<400x128xbf16, #tpu.memory_space<vmem>>, vector<8x128xbf16>,
    %c17_i32_829 = arith.constant 17 : i32
    %1113 = tpu.dynamic_rotate %1105 by %c17_i32_829 dim 1 : vector<8x128xf32>, i32 -> vector<8x128xf32>
    %c1_830 = arith.constant 1 : index
    %c0_831 = arith.constant 0 : index
    %c0_832 = arith.constant 0 : index
    %1114 = vector.load %arg2[%c1_830, %c0_831, %c0_832] : memref<25x1x128xf32, #tpu.memory_space<vmem>>, vector<1x1x128xf32>
    %1115 = vector.shape_cast %1114 : vector<1x1x128xf32> to vector<1x128xf32>
    %1116 = vector.broadcast %1115 : vector<1x128xf32> to vector<8x128xf32>
    %1117 = arith.mulf %1113, %1116 : vector<8x128xf32>
    %1118 = arith.truncf %1117 : vector<8x128xf32> to vector<8x128xbf16>
    %c8_833 = arith.constant 8 : index
    %c0_834 = arith.constant 0 : index
    %1119 = vector.load %arg6[%c8_833, %c0_834] : memref<400x128xbf16, #tpu.memory_space<vmem>>, vector<8x128xbf16>
    tpu.vector_store %arg6[%c8_833, %c0_834], %1118 {strides = array<i32>} : memref<400x128xbf16, #tpu.memory_space<vmem>>, vector<8x128xbf16>,
    %c16_i32_835 = arith.constant 16 : i32
    %1120 = tpu.dynamic_rotate %1105 by %c16_i32_835 dim 1 : vector<8x128xf32>, i32 -> vector<8x128xf32>
    %c2_836 = arith.constant 2 : index
    %c0_837 = arith.constant 0 : index
    %c0_838 = arith.constant 0 : index
    %1121 = vector.load %arg2[%c2_836, %c0_837, %c0_838] : memref<25x1x128xf32, #tpu.memory_space<vmem>>, vector<1x1x128xf32>
    %1122 = vector.shape_cast %1121 : vector<1x1x128xf32> to vector<1x128xf32>
    %1123 = vector.broadcast %1122 : vector<1x128xf32> to vector<8x128xf32>
    %1124 = arith.mulf %1120, %1123 : vector<8x128xf32>
    %1125 = arith.truncf %1124 : vector<8x128xf32> to vector<8x128xbf16>
    %c16_839 = arith.constant 16 : index
    %c0_840 = arith.constant 0 : index
    %1126 = vector.load %arg6[%c16_839, %c0_840] : memref<400x128xbf16, #tpu.memory_space<vmem>>, vector<8x128xbf16>
    tpu.vector_store %arg6[%c16_839, %c0_840], %1125 {strides = array<i32>} : memref<400x128xbf16, #tpu.memory_space<vmem>>, vector<8x128xbf16>,
    %c15_i32_841 = arith.constant 15 : i32
    %1127 = tpu.dynamic_rotate %1105 by %c15_i32_841 dim 1 : vector<8x128xf32>, i32 -> vector<8x128xf32>
    %c3_842 = arith.constant 3 : index
    %c0_843 = arith.constant 0 : index
    %c0_844 = arith.constant 0 : index
    %1128 = vector.load %arg2[%c3_842, %c0_843, %c0_844] : memref<25x1x128xf32, #tpu.memory_space<vmem>>, vector<1x1x128xf32>
    %1129 = vector.shape_cast %1128 : vector<1x1x128xf32> to vector<1x128xf32>
    %1130 = vector.broadcast %1129 : vector<1x128xf32> to vector<8x128xf32>
    %1131 = arith.mulf %1127, %1130 : vector<8x128xf32>
    %1132 = arith.truncf %1131 : vector<8x128xf32> to vector<8x128xbf16>
    %c24_845 = arith.constant 24 : index
    %c0_846 = arith.constant 0 : index
    %1133 = vector.load %arg6[%c24_845, %c0_846] : memref<400x128xbf16, #tpu.memory_space<vmem>>, vector<8x128xbf16>
    tpu.vector_store %arg6[%c24_845, %c0_846], %1132 {strides = array<i32>} : memref<400x128xbf16, #tpu.memory_space<vmem>>, vector<8x128xbf16>,
    %c14_i32_847 = arith.constant 14 : i32
    %1134 = tpu.dynamic_rotate %1105 by %c14_i32_847 dim 1 : vector<8x128xf32>, i32 -> vector<8x128xf32>
    %c4_848 = arith.constant 4 : index
    %c0_849 = arith.constant 0 : index
    %c0_850 = arith.constant 0 : index
    %1135 = vector.load %arg2[%c4_848, %c0_849, %c0_850] : memref<25x1x128xf32, #tpu.memory_space<vmem>>, vector<1x1x128xf32>
    %1136 = vector.shape_cast %1135 : vector<1x1x128xf32> to vector<1x128xf32>
    %1137 = vector.broadcast %1136 : vector<1x128xf32> to vector<8x128xf32>
    %1138 = arith.mulf %1134, %1137 : vector<8x128xf32>
    %1139 = arith.truncf %1138 : vector<8x128xf32> to vector<8x128xbf16>
    %c32_851 = arith.constant 32 : index
    %c0_852 = arith.constant 0 : index
    %1140 = vector.load %arg6[%c32_851, %c0_852] : memref<400x128xbf16, #tpu.memory_space<vmem>>, vector<8x128xbf16>
    tpu.vector_store %arg6[%c32_851, %c0_852], %1139 {strides = array<i32>} : memref<400x128xbf16, #tpu.memory_space<vmem>>, vector<8x128xbf16>,
    %c10_i32_853 = arith.constant 10 : i32
    %1141 = tpu.dynamic_rotate %1105 by %c10_i32_853 dim 1 : vector<8x128xf32>, i32 -> vector<8x128xf32>
    %c5_854 = arith.constant 5 : index
    %c0_855 = arith.constant 0 : index
    %c0_856 = arith.constant 0 : index
    %1142 = vector.load %arg2[%c5_854, %c0_855, %c0_856] : memref<25x1x128xf32, #tpu.memory_space<vmem>>, vector<1x1x128xf32>
    %1143 = vector.shape_cast %1142 : vector<1x1x128xf32> to vector<1x128xf32>
    %1144 = vector.broadcast %1143 : vector<1x128xf32> to vector<8x128xf32>
    %1145 = arith.mulf %1141, %1144 : vector<8x128xf32>
    %1146 = arith.truncf %1145 : vector<8x128xf32> to vector<8x128xbf16>
    %c40_857 = arith.constant 40 : index
    %c0_858 = arith.constant 0 : index
    %1147 = vector.load %arg6[%c40_857, %c0_858] : memref<400x128xbf16, #tpu.memory_space<vmem>>, vector<8x128xbf16>
    tpu.vector_store %arg6[%c40_857, %c0_858], %1146 {strides = array<i32>} : memref<400x128xbf16, #tpu.memory_space<vmem>>, vector<8x128xbf16>,
    %c9_i32_859 = arith.constant 9 : i32
    %1148 = tpu.dynamic_rotate %1105 by %c9_i32_859 dim 1 : vector<8x128xf32>, i32 -> vector<8x128xf32>
    %c6_860 = arith.constant 6 : index
    %c0_861 = arith.constant 0 : index
    %c0_862 = arith.constant 0 : index
    %1149 = vector.load %arg2[%c6_860, %c0_861, %c0_862] : memref<25x1x128xf32, #tpu.memory_space<vmem>>, vector<1x1x128xf32>
    %1150 = vector.shape_cast %1149 : vector<1x1x128xf32> to vector<1x128xf32>
    %1151 = vector.broadcast %1150 : vector<1x128xf32> to vector<8x128xf32>
    %1152 = arith.mulf %1148, %1151 : vector<8x128xf32>
    %1153 = arith.truncf %1152 : vector<8x128xf32> to vector<8x128xbf16>
    %c48_863 = arith.constant 48 : index
    %c0_864 = arith.constant 0 : index
    %1154 = vector.load %arg6[%c48_863, %c0_864] : memref<400x128xbf16, #tpu.memory_space<vmem>>, vector<8x128xbf16>
    tpu.vector_store %arg6[%c48_863, %c0_864], %1153 {strides = array<i32>} : memref<400x128xbf16, #tpu.memory_space<vmem>>, vector<8x128xbf16>,
    %c8_i32_865 = arith.constant 8 : i32
    %1155 = tpu.dynamic_rotate %1105 by %c8_i32_865 dim 1 : vector<8x128xf32>, i32 -> vector<8x128xf32>
    %c7_866 = arith.constant 7 : index
    %c0_867 = arith.constant 0 : index
    %c0_868 = arith.constant 0 : index
    %1156 = vector.load %arg2[%c7_866, %c0_867, %c0_868] : memref<25x1x128xf32, #tpu.memory_space<vmem>>, vector<1x1x128xf32>
    %1157 = vector.shape_cast %1156 : vector<1x1x128xf32> to vector<1x128xf32>
    %1158 = vector.broadcast %1157 : vector<1x128xf32> to vector<8x128xf32>
    %1159 = arith.mulf %1155, %1158 : vector<8x128xf32>
    %1160 = arith.truncf %1159 : vector<8x128xf32> to vector<8x128xbf16>
    %c56_869 = arith.constant 56 : index
    %c0_870 = arith.constant 0 : index
    %1161 = vector.load %arg6[%c56_869, %c0_870] : memref<400x128xbf16, #tpu.memory_space<vmem>>, vector<8x128xbf16>
    tpu.vector_store %arg6[%c56_869, %c0_870], %1160 {strides = array<i32>} : memref<400x128xbf16, #tpu.memory_space<vmem>>, vector<8x128xbf16>,
    %c7_i32_871 = arith.constant 7 : i32
    %1162 = tpu.dynamic_rotate %1105 by %c7_i32_871 dim 1 : vector<8x128xf32>, i32 -> vector<8x128xf32>
    %c8_872 = arith.constant 8 : index
    %c0_873 = arith.constant 0 : index
    %c0_874 = arith.constant 0 : index
    %1163 = vector.load %arg2[%c8_872, %c0_873, %c0_874] : memref<25x1x128xf32, #tpu.memory_space<vmem>>, vector<1x1x128xf32>
    %1164 = vector.shape_cast %1163 : vector<1x1x128xf32> to vector<1x128xf32>
    %1165 = vector.broadcast %1164 : vector<1x128xf32> to vector<8x128xf32>
    %1166 = arith.mulf %1162, %1165 : vector<8x128xf32>
    %1167 = arith.truncf %1166 : vector<8x128xf32> to vector<8x128xbf16>
    %c64_875 = arith.constant 64 : index
    %c0_876 = arith.constant 0 : index
    %1168 = vector.load %arg6[%c64_875, %c0_876] : memref<400x128xbf16, #tpu.memory_space<vmem>>, vector<8x128xbf16>
    tpu.vector_store %arg6[%c64_875, %c0_876], %1167 {strides = array<i32>} : memref<400x128xbf16, #tpu.memory_space<vmem>>, vector<8x128xbf16>,
    %c6_i32_877 = arith.constant 6 : i32
    %1169 = tpu.dynamic_rotate %1105 by %c6_i32_877 dim 1 : vector<8x128xf32>, i32 -> vector<8x128xf32>
    %c9_878 = arith.constant 9 : index
    %c0_879 = arith.constant 0 : index
    %c0_880 = arith.constant 0 : index
    %1170 = vector.load %arg2[%c9_878, %c0_879, %c0_880] : memref<25x1x128xf32, #tpu.memory_space<vmem>>, vector<1x1x128xf32>
    %1171 = vector.shape_cast %1170 : vector<1x1x128xf32> to vector<1x128xf32>
    %1172 = vector.broadcast %1171 : vector<1x128xf32> to vector<8x128xf32>
    %1173 = arith.mulf %1169, %1172 : vector<8x128xf32>
    %1174 = arith.truncf %1173 : vector<8x128xf32> to vector<8x128xbf16>
    %c72_881 = arith.constant 72 : index
    %c0_882 = arith.constant 0 : index
    %1175 = vector.load %arg6[%c72_881, %c0_882] : memref<400x128xbf16, #tpu.memory_space<vmem>>, vector<8x128xbf16>
    tpu.vector_store %arg6[%c72_881, %c0_882], %1174 {strides = array<i32>} : memref<400x128xbf16, #tpu.memory_space<vmem>>, vector<8x128xbf16>,
    %c2_i32_883 = arith.constant 2 : i32
    %1176 = tpu.dynamic_rotate %1105 by %c2_i32_883 dim 1 : vector<8x128xf32>, i32 -> vector<8x128xf32>
    %c10_884 = arith.constant 10 : index
    %c0_885 = arith.constant 0 : index
    %c0_886 = arith.constant 0 : index
    %1177 = vector.load %arg2[%c10_884, %c0_885, %c0_886] : memref<25x1x128xf32, #tpu.memory_space<vmem>>, vector<1x1x128xf32>
    %1178 = vector.shape_cast %1177 : vector<1x1x128xf32> to vector<1x128xf32>
    %1179 = vector.broadcast %1178 : vector<1x128xf32> to vector<8x128xf32>
    %1180 = arith.mulf %1176, %1179 : vector<8x128xf32>
    %1181 = arith.truncf %1180 : vector<8x128xf32> to vector<8x128xbf16>
    %c80_887 = arith.constant 80 : index
    %c0_888 = arith.constant 0 : index
    %1182 = vector.load %arg6[%c80_887, %c0_888] : memref<400x128xbf16, #tpu.memory_space<vmem>>, vector<8x128xbf16>
    tpu.vector_store %arg6[%c80_887, %c0_888], %1181 {strides = array<i32>} : memref<400x128xbf16, #tpu.memory_space<vmem>>, vector<8x128xbf16>,
    %c1_i32_889 = arith.constant 1 : i32
    %1183 = tpu.dynamic_rotate %1105 by %c1_i32_889 dim 1 : vector<8x128xf32>, i32 -> vector<8x128xf32>
    %c11_890 = arith.constant 11 : index
    %c0_891 = arith.constant 0 : index
    %c0_892 = arith.constant 0 : index
    %1184 = vector.load %arg2[%c11_890, %c0_891, %c0_892] : memref<25x1x128xf32, #tpu.memory_space<vmem>>, vector<1x1x128xf32>
    %1185 = vector.shape_cast %1184 : vector<1x1x128xf32> to vector<1x128xf32>
    %1186 = vector.broadcast %1185 : vector<1x128xf32> to vector<8x128xf32>
    %1187 = arith.mulf %1183, %1186 : vector<8x128xf32>
    %1188 = arith.truncf %1187 : vector<8x128xf32> to vector<8x128xbf16>
    %c88_893 = arith.constant 88 : index
    %c0_894 = arith.constant 0 : index
    %1189 = vector.load %arg6[%c88_893, %c0_894] : memref<400x128xbf16, #tpu.memory_space<vmem>>, vector<8x128xbf16>
    tpu.vector_store %arg6[%c88_893, %c0_894], %1188 {strides = array<i32>} : memref<400x128xbf16, #tpu.memory_space<vmem>>, vector<8x128xbf16>,
    %1190 = arith.truncf %1105 : vector<8x128xf32> to vector<8x128xbf16>
    %c96_895 = arith.constant 96 : index
    %c0_896 = arith.constant 0 : index
    %1191 = vector.load %arg6[%c96_895, %c0_896] : memref<400x128xbf16, #tpu.memory_space<vmem>>, vector<8x128xbf16>
    tpu.vector_store %arg6[%c96_895, %c0_896], %1190 {strides = array<i32>} : memref<400x128xbf16, #tpu.memory_space<vmem>>, vector<8x128xbf16>,
    %c127_i32_897 = arith.constant 127 : i32
    %1192 = tpu.dynamic_rotate %1105 by %c127_i32_897 dim 1 : vector<8x128xf32>, i32 -> vector<8x128xf32>
    %c13_898 = arith.constant 13 : index
    %c0_899 = arith.constant 0 : index
    %c0_900 = arith.constant 0 : index
    %1193 = vector.load %arg2[%c13_898, %c0_899, %c0_900] : memref<25x1x128xf32, #tpu.memory_space<vmem>>, vector<1x1x128xf32>
    %1194 = vector.shape_cast %1193 : vector<1x1x128xf32> to vector<1x128xf32>
    %1195 = vector.broadcast %1194 : vector<1x128xf32> to vector<8x128xf32>
    %1196 = arith.mulf %1192, %1195 : vector<8x128xf32>
    %1197 = arith.truncf %1196 : vector<8x128xf32> to vector<8x128xbf16>
    %c104_901 = arith.constant 104 : index
    %c0_902 = arith.constant 0 : index
    %1198 = vector.load %arg6[%c104_901, %c0_902] : memref<400x128xbf16, #tpu.memory_space<vmem>>, vector<8x128xbf16>
    tpu.vector_store %arg6[%c104_901, %c0_902], %1197 {strides = array<i32>} : memref<400x128xbf16, #tpu.memory_space<vmem>>, vector<8x128xbf16>,
    %c126_i32_903 = arith.constant 126 : i32
    %1199 = tpu.dynamic_rotate %1105 by %c126_i32_903 dim 1 : vector<8x128xf32>, i32 -> vector<8x128xf32>
    %c14_904 = arith.constant 14 : index
    %c0_905 = arith.constant 0 : index
    %c0_906 = arith.constant 0 : index
    %1200 = vector.load %arg2[%c14_904, %c0_905, %c0_906] : memref<25x1x128xf32, #tpu.memory_space<vmem>>, vector<1x1x128xf32>
    %1201 = vector.shape_cast %1200 : vector<1x1x128xf32> to vector<1x128xf32>
    %1202 = vector.broadcast %1201 : vector<1x128xf32> to vector<8x128xf32>
    %1203 = arith.mulf %1199, %1202 : vector<8x128xf32>
    %1204 = arith.truncf %1203 : vector<8x128xf32> to vector<8x128xbf16>
    %c112_907 = arith.constant 112 : index
    %c0_908 = arith.constant 0 : index
    %1205 = vector.load %arg6[%c112_907, %c0_908] : memref<400x128xbf16, #tpu.memory_space<vmem>>, vector<8x128xbf16>
    tpu.vector_store %arg6[%c112_907, %c0_908], %1204 {strides = array<i32>} : memref<400x128xbf16, #tpu.memory_space<vmem>>, vector<8x128xbf16>,
    %c122_i32_909 = arith.constant 122 : i32
    %1206 = tpu.dynamic_rotate %1105 by %c122_i32_909 dim 1 : vector<8x128xf32>, i32 -> vector<8x128xf32>
    %c15_910 = arith.constant 15 : index
    %c0_911 = arith.constant 0 : index
    %c0_912 = arith.constant 0 : index
    %1207 = vector.load %arg2[%c15_910, %c0_911, %c0_912] : memref<25x1x128xf32, #tpu.memory_space<vmem>>, vector<1x1x128xf32>
    %1208 = vector.shape_cast %1207 : vector<1x1x128xf32> to vector<1x128xf32>
    %1209 = vector.broadcast %1208 : vector<1x128xf32> to vector<8x128xf32>
    %1210 = arith.mulf %1206, %1209 : vector<8x128xf32>
    %1211 = arith.truncf %1210 : vector<8x128xf32> to vector<8x128xbf16>
    %c120_913 = arith.constant 120 : index
    %c0_914 = arith.constant 0 : index
    %1212 = vector.load %arg6[%c120_913, %c0_914] : memref<400x128xbf16, #tpu.memory_space<vmem>>, vector<8x128xbf16>
    tpu.vector_store %arg6[%c120_913, %c0_914], %1211 {strides = array<i32>} : memref<400x128xbf16, #tpu.memory_space<vmem>>, vector<8x128xbf16>,
    %c121_i32_915 = arith.constant 121 : i32
    %1213 = tpu.dynamic_rotate %1105 by %c121_i32_915 dim 1 : vector<8x128xf32>, i32 -> vector<8x128xf32>
    %c16_916 = arith.constant 16 : index
    %c0_917 = arith.constant 0 : index
    %c0_918 = arith.constant 0 : index
    %1214 = vector.load %arg2[%c16_916, %c0_917, %c0_918] : memref<25x1x128xf32, #tpu.memory_space<vmem>>, vector<1x1x128xf32>
    %1215 = vector.shape_cast %1214 : vector<1x1x128xf32> to vector<1x128xf32>
    %1216 = vector.broadcast %1215 : vector<1x128xf32> to vector<8x128xf32>
    %1217 = arith.mulf %1213, %1216 : vector<8x128xf32>
    %1218 = arith.truncf %1217 : vector<8x128xf32> to vector<8x128xbf16>
    %c128_919 = arith.constant 128 : index
    %c0_920 = arith.constant 0 : index
    %1219 = vector.load %arg6[%c128_919, %c0_920] : memref<400x128xbf16, #tpu.memory_space<vmem>>, vector<8x128xbf16>
    tpu.vector_store %arg6[%c128_919, %c0_920], %1218 {strides = array<i32>} : memref<400x128xbf16, #tpu.memory_space<vmem>>, vector<8x128xbf16>,
    %c120_i32_921 = arith.constant 120 : i32
    %1220 = tpu.dynamic_rotate %1105 by %c120_i32_921 dim 1 : vector<8x128xf32>, i32 -> vector<8x128xf32>
    %c17_922 = arith.constant 17 : index
    %c0_923 = arith.constant 0 : index
    %c0_924 = arith.constant 0 : index
    %1221 = vector.load %arg2[%c17_922, %c0_923, %c0_924] : memref<25x1x128xf32, #tpu.memory_space<vmem>>, vector<1x1x128xf32>
    %1222 = vector.shape_cast %1221 : vector<1x1x128xf32> to vector<1x128xf32>
    %1223 = vector.broadcast %1222 : vector<1x128xf32> to vector<8x128xf32>
    %1224 = arith.mulf %1220, %1223 : vector<8x128xf32>
    %1225 = arith.truncf %1224 : vector<8x128xf32> to vector<8x128xbf16>
    %c136_925 = arith.constant 136 : index
    %c0_926 = arith.constant 0 : index
    %1226 = vector.load %arg6[%c136_925, %c0_926] : memref<400x128xbf16, #tpu.memory_space<vmem>>, vector<8x128xbf16>
    tpu.vector_store %arg6[%c136_925, %c0_926], %1225 {strides = array<i32>} : memref<400x128xbf16, #tpu.memory_space<vmem>>, vector<8x128xbf16>,
    %c119_i32_927 = arith.constant 119 : i32
    %1227 = tpu.dynamic_rotate %1105 by %c119_i32_927 dim 1 : vector<8x128xf32>, i32 -> vector<8x128xf32>
    %c18_928 = arith.constant 18 : index
    %c0_929 = arith.constant 0 : index
    %c0_930 = arith.constant 0 : index
    %1228 = vector.load %arg2[%c18_928, %c0_929, %c0_930] : memref<25x1x128xf32, #tpu.memory_space<vmem>>, vector<1x1x128xf32>
    %1229 = vector.shape_cast %1228 : vector<1x1x128xf32> to vector<1x128xf32>
    %1230 = vector.broadcast %1229 : vector<1x128xf32> to vector<8x128xf32>
    %1231 = arith.mulf %1227, %1230 : vector<8x128xf32>
    %1232 = arith.truncf %1231 : vector<8x128xf32> to vector<8x128xbf16>
    %c144_931 = arith.constant 144 : index
    %c0_932 = arith.constant 0 : index
    %1233 = vector.load %arg6[%c144_931, %c0_932] : memref<400x128xbf16, #tpu.memory_space<vmem>>, vector<8x128xbf16>
    tpu.vector_store %arg6[%c144_931, %c0_932], %1232 {strides = array<i32>} : memref<400x128xbf16, #tpu.memory_space<vmem>>, vector<8x128xbf16>,
    %c118_i32_933 = arith.constant 118 : i32
    %1234 = tpu.dynamic_rotate %1105 by %c118_i32_933 dim 1 : vector<8x128xf32>, i32 -> vector<8x128xf32>
    %c19_934 = arith.constant 19 : index
    %c0_935 = arith.constant 0 : index
    %c0_936 = arith.constant 0 : index
    %1235 = vector.load %arg2[%c19_934, %c0_935, %c0_936] : memref<25x1x128xf32, #tpu.memory_space<vmem>>, vector<1x1x128xf32>
    %1236 = vector.shape_cast %1235 : vector<1x1x128xf32> to vector<1x128xf32>
    %1237 = vector.broadcast %1236 : vector<1x128xf32> to vector<8x128xf32>
    %1238 = arith.mulf %1234, %1237 : vector<8x128xf32>
    %1239 = arith.truncf %1238 : vector<8x128xf32> to vector<8x128xbf16>
    %c152_937 = arith.constant 152 : index
    %c0_938 = arith.constant 0 : index
    %1240 = vector.load %arg6[%c152_937, %c0_938] : memref<400x128xbf16, #tpu.memory_space<vmem>>, vector<8x128xbf16>
    tpu.vector_store %arg6[%c152_937, %c0_938], %1239 {strides = array<i32>} : memref<400x128xbf16, #tpu.memory_space<vmem>>, vector<8x128xbf16>,
    %c114_i32_939 = arith.constant 114 : i32
    %1241 = tpu.dynamic_rotate %1105 by %c114_i32_939 dim 1 : vector<8x128xf32>, i32 -> vector<8x128xf32>
    %c20_940 = arith.constant 20 : index
    %c0_941 = arith.constant 0 : index
    %c0_942 = arith.constant 0 : index
    %1242 = vector.load %arg2[%c20_940, %c0_941, %c0_942] : memref<25x1x128xf32, #tpu.memory_space<vmem>>, vector<1x1x128xf32>
    %1243 = vector.shape_cast %1242 : vector<1x1x128xf32> to vector<1x128xf32>
    %1244 = vector.broadcast %1243 : vector<1x128xf32> to vector<8x128xf32>
    %1245 = arith.mulf %1241, %1244 : vector<8x128xf32>
    %1246 = arith.truncf %1245 : vector<8x128xf32> to vector<8x128xbf16>
    %c160_943 = arith.constant 160 : index
    %c0_944 = arith.constant 0 : index
    %1247 = vector.load %arg6[%c160_943, %c0_944] : memref<400x128xbf16, #tpu.memory_space<vmem>>, vector<8x128xbf16>
    tpu.vector_store %arg6[%c160_943, %c0_944], %1246 {strides = array<i32>} : memref<400x128xbf16, #tpu.memory_space<vmem>>, vector<8x128xbf16>,
    %c113_i32_945 = arith.constant 113 : i32
    %1248 = tpu.dynamic_rotate %1105 by %c113_i32_945 dim 1 : vector<8x128xf32>, i32 -> vector<8x128xf32>
    %c21_946 = arith.constant 21 : index
    %c0_947 = arith.constant 0 : index
    %c0_948 = arith.constant 0 : index
    %1249 = vector.load %arg2[%c21_946, %c0_947, %c0_948] : memref<25x1x128xf32, #tpu.memory_space<vmem>>, vector<1x1x128xf32>
    %1250 = vector.shape_cast %1249 : vector<1x1x128xf32> to vector<1x128xf32>
    %1251 = vector.broadcast %1250 : vector<1x128xf32> to vector<8x128xf32>
    %1252 = arith.mulf %1248, %1251 : vector<8x128xf32>
    %1253 = arith.truncf %1252 : vector<8x128xf32> to vector<8x128xbf16>
    %c168_949 = arith.constant 168 : index
    %c0_950 = arith.constant 0 : index
    %1254 = vector.load %arg6[%c168_949, %c0_950] : memref<400x128xbf16, #tpu.memory_space<vmem>>, vector<8x128xbf16>
    tpu.vector_store %arg6[%c168_949, %c0_950], %1253 {strides = array<i32>} : memref<400x128xbf16, #tpu.memory_space<vmem>>, vector<8x128xbf16>,
    %c112_i32_951 = arith.constant 112 : i32
    %1255 = tpu.dynamic_rotate %1105 by %c112_i32_951 dim 1 : vector<8x128xf32>, i32 -> vector<8x128xf32>
    %c22_952 = arith.constant 22 : index
    %c0_953 = arith.constant 0 : index
    %c0_954 = arith.constant 0 : index
    %1256 = vector.load %arg2[%c22_952, %c0_953, %c0_954] : memref<25x1x128xf32, #tpu.memory_space<vmem>>, vector<1x1x128xf32>
    %1257 = vector.shape_cast %1256 : vector<1x1x128xf32> to vector<1x128xf32>
    %1258 = vector.broadcast %1257 : vector<1x128xf32> to vector<8x128xf32>
    %1259 = arith.mulf %1255, %1258 : vector<8x128xf32>
    %1260 = arith.truncf %1259 : vector<8x128xf32> to vector<8x128xbf16>
    %c176_955 = arith.constant 176 : index
    %c0_956 = arith.constant 0 : index
    %1261 = vector.load %arg6[%c176_955, %c0_956] : memref<400x128xbf16, #tpu.memory_space<vmem>>, vector<8x128xbf16>
    tpu.vector_store %arg6[%c176_955, %c0_956], %1260 {strides = array<i32>} : memref<400x128xbf16, #tpu.memory_space<vmem>>, vector<8x128xbf16>,
    %c111_i32_957 = arith.constant 111 : i32
    %1262 = tpu.dynamic_rotate %1105 by %c111_i32_957 dim 1 : vector<8x128xf32>, i32 -> vector<8x128xf32>
    %c23_958 = arith.constant 23 : index
    %c0_959 = arith.constant 0 : index
    %c0_960 = arith.constant 0 : index
    %1263 = vector.load %arg2[%c23_958, %c0_959, %c0_960] : memref<25x1x128xf32, #tpu.memory_space<vmem>>, vector<1x1x128xf32>
    %1264 = vector.shape_cast %1263 : vector<1x1x128xf32> to vector<1x128xf32>
    %1265 = vector.broadcast %1264 : vector<1x128xf32> to vector<8x128xf32>
    %1266 = arith.mulf %1262, %1265 : vector<8x128xf32>
    %1267 = arith.truncf %1266 : vector<8x128xf32> to vector<8x128xbf16>
    %c184_961 = arith.constant 184 : index
    %c0_962 = arith.constant 0 : index
    %1268 = vector.load %arg6[%c184_961, %c0_962] : memref<400x128xbf16, #tpu.memory_space<vmem>>, vector<8x128xbf16>
    tpu.vector_store %arg6[%c184_961, %c0_962], %1267 {strides = array<i32>} : memref<400x128xbf16, #tpu.memory_space<vmem>>, vector<8x128xbf16>,
    %c110_i32_963 = arith.constant 110 : i32
    %1269 = tpu.dynamic_rotate %1105 by %c110_i32_963 dim 1 : vector<8x128xf32>, i32 -> vector<8x128xf32>
    %c24_964 = arith.constant 24 : index
    %c0_965 = arith.constant 0 : index
    %c0_966 = arith.constant 0 : index
    %1270 = vector.load %arg2[%c24_964, %c0_965, %c0_966] : memref<25x1x128xf32, #tpu.memory_space<vmem>>, vector<1x1x128xf32>
    %1271 = vector.shape_cast %1270 : vector<1x1x128xf32> to vector<1x128xf32>
    %1272 = vector.broadcast %1271 : vector<1x128xf32> to vector<8x128xf32>
    %1273 = arith.mulf %1269, %1272 : vector<8x128xf32>
    %1274 = arith.truncf %1273 : vector<8x128xf32> to vector<8x128xbf16>
    %c192_967 = arith.constant 192 : index
    %c0_968 = arith.constant 0 : index
    %1275 = vector.load %arg6[%c192_967, %c0_968] : memref<400x128xbf16, #tpu.memory_space<vmem>>, vector<8x128xbf16>
    tpu.vector_store %arg6[%c192_967, %c0_968], %1274 {strides = array<i32>} : memref<400x128xbf16, #tpu.memory_space<vmem>>, vector<8x128xbf16>,
    %c18_i32_969 = arith.constant 18 : i32
    %1276 = tpu.dynamic_rotate %1102 by %c18_i32_969 dim 1 : vector<8x128xf32>, i32 -> vector<8x128xf32>
    %c0_970 = arith.constant 0 : index
    %c0_971 = arith.constant 0 : index
    %c0_972 = arith.constant 0 : index
    %1277 = vector.load %arg2[%c0_970, %c0_971, %c0_972] : memref<25x1x128xf32, #tpu.memory_space<vmem>>, vector<1x1x128xf32>
    %1278 = vector.shape_cast %1277 : vector<1x1x128xf32> to vector<1x128xf32>
    %1279 = vector.broadcast %1278 : vector<1x128xf32> to vector<8x128xf32>
    %1280 = arith.mulf %1276, %1279 : vector<8x128xf32>
    %1281 = arith.truncf %1280 : vector<8x128xf32> to vector<8x128xbf16>
    %c200_973 = arith.constant 200 : index
    %c0_974 = arith.constant 0 : index
    %1282 = vector.load %arg6[%c200_973, %c0_974] : memref<400x128xbf16, #tpu.memory_space<vmem>>, vector<8x128xbf16>
    tpu.vector_store %arg6[%c200_973, %c0_974], %1281 {strides = array<i32>} : memref<400x128xbf16, #tpu.memory_space<vmem>>, vector<8x128xbf16>,
    %c17_i32_975 = arith.constant 17 : i32
    %1283 = tpu.dynamic_rotate %1102 by %c17_i32_975 dim 1 : vector<8x128xf32>, i32 -> vector<8x128xf32>
    %c1_976 = arith.constant 1 : index
    %c0_977 = arith.constant 0 : index
    %c0_978 = arith.constant 0 : index
    %1284 = vector.load %arg2[%c1_976, %c0_977, %c0_978] : memref<25x1x128xf32, #tpu.memory_space<vmem>>, vector<1x1x128xf32>
    %1285 = vector.shape_cast %1284 : vector<1x1x128xf32> to vector<1x128xf32>
    %1286 = vector.broadcast %1285 : vector<1x128xf32> to vector<8x128xf32>
    %1287 = arith.mulf %1283, %1286 : vector<8x128xf32>
    %1288 = arith.truncf %1287 : vector<8x128xf32> to vector<8x128xbf16>
    %c208_979 = arith.constant 208 : index
    %c0_980 = arith.constant 0 : index
    %1289 = vector.load %arg6[%c208_979, %c0_980] : memref<400x128xbf16, #tpu.memory_space<vmem>>, vector<8x128xbf16>
    tpu.vector_store %arg6[%c208_979, %c0_980], %1288 {strides = array<i32>} : memref<400x128xbf16, #tpu.memory_space<vmem>>, vector<8x128xbf16>,
    %c16_i32_981 = arith.constant 16 : i32
    %1290 = tpu.dynamic_rotate %1102 by %c16_i32_981 dim 1 : vector<8x128xf32>, i32 -> vector<8x128xf32>
    %c2_982 = arith.constant 2 : index
    %c0_983 = arith.constant 0 : index
    %c0_984 = arith.constant 0 : index
    %1291 = vector.load %arg2[%c2_982, %c0_983, %c0_984] : memref<25x1x128xf32, #tpu.memory_space<vmem>>, vector<1x1x128xf32>
    %1292 = vector.shape_cast %1291 : vector<1x1x128xf32> to vector<1x128xf32>
    %1293 = vector.broadcast %1292 : vector<1x128xf32> to vector<8x128xf32>
    %1294 = arith.mulf %1290, %1293 : vector<8x128xf32>
    %1295 = arith.truncf %1294 : vector<8x128xf32> to vector<8x128xbf16>
    %c216_985 = arith.constant 216 : index
    %c0_986 = arith.constant 0 : index
    %1296 = vector.load %arg6[%c216_985, %c0_986] : memref<400x128xbf16, #tpu.memory_space<vmem>>, vector<8x128xbf16>
    tpu.vector_store %arg6[%c216_985, %c0_986], %1295 {strides = array<i32>} : memref<400x128xbf16, #tpu.memory_space<vmem>>, vector<8x128xbf16>,
    %c15_i32_987 = arith.constant 15 : i32
    %1297 = tpu.dynamic_rotate %1102 by %c15_i32_987 dim 1 : vector<8x128xf32>, i32 -> vector<8x128xf32>
    %c3_988 = arith.constant 3 : index
    %c0_989 = arith.constant 0 : index
    %c0_990 = arith.constant 0 : index
    %1298 = vector.load %arg2[%c3_988, %c0_989, %c0_990] : memref<25x1x128xf32, #tpu.memory_space<vmem>>, vector<1x1x128xf32>
    %1299 = vector.shape_cast %1298 : vector<1x1x128xf32> to vector<1x128xf32>
    %1300 = vector.broadcast %1299 : vector<1x128xf32> to vector<8x128xf32>
    %1301 = arith.mulf %1297, %1300 : vector<8x128xf32>
    %1302 = arith.truncf %1301 : vector<8x128xf32> to vector<8x128xbf16>
    %c224_991 = arith.constant 224 : index
    %c0_992 = arith.constant 0 : index
    %1303 = vector.load %arg6[%c224_991, %c0_992] : memref<400x128xbf16, #tpu.memory_space<vmem>>, vector<8x128xbf16>
    tpu.vector_store %arg6[%c224_991, %c0_992], %1302 {strides = array<i32>} : memref<400x128xbf16, #tpu.memory_space<vmem>>, vector<8x128xbf16>,
    %c14_i32_993 = arith.constant 14 : i32
    %1304 = tpu.dynamic_rotate %1102 by %c14_i32_993 dim 1 : vector<8x128xf32>, i32 -> vector<8x128xf32>
    %c4_994 = arith.constant 4 : index
    %c0_995 = arith.constant 0 : index
    %c0_996 = arith.constant 0 : index
    %1305 = vector.load %arg2[%c4_994, %c0_995, %c0_996] : memref<25x1x128xf32, #tpu.memory_space<vmem>>, vector<1x1x128xf32>
    %1306 = vector.shape_cast %1305 : vector<1x1x128xf32> to vector<1x128xf32>
    %1307 = vector.broadcast %1306 : vector<1x128xf32> to vector<8x128xf32>
    %1308 = arith.mulf %1304, %1307 : vector<8x128xf32>
    %1309 = arith.truncf %1308 : vector<8x128xf32> to vector<8x128xbf16>
    %c232_997 = arith.constant 232 : index
    %c0_998 = arith.constant 0 : index
    %1310 = vector.load %arg6[%c232_997, %c0_998] : memref<400x128xbf16, #tpu.memory_space<vmem>>, vector<8x128xbf16>
    tpu.vector_store %arg6[%c232_997, %c0_998], %1309 {strides = array<i32>} : memref<400x128xbf16, #tpu.memory_space<vmem>>, vector<8x128xbf16>,
    %c10_i32_999 = arith.constant 10 : i32
    %1311 = tpu.dynamic_rotate %1102 by %c10_i32_999 dim 1 : vector<8x128xf32>, i32 -> vector<8x128xf32>
    %c5_1000 = arith.constant 5 : index
    %c0_1001 = arith.constant 0 : index
    %c0_1002 = arith.constant 0 : index
    %1312 = vector.load %arg2[%c5_1000, %c0_1001, %c0_1002] : memref<25x1x128xf32, #tpu.memory_space<vmem>>, vector<1x1x128xf32>
    %1313 = vector.shape_cast %1312 : vector<1x1x128xf32> to vector<1x128xf32>
    %1314 = vector.broadcast %1313 : vector<1x128xf32> to vector<8x128xf32>
    %1315 = arith.mulf %1311, %1314 : vector<8x128xf32>
    %1316 = arith.truncf %1315 : vector<8x128xf32> to vector<8x128xbf16>
    %c240_1003 = arith.constant 240 : index
    %c0_1004 = arith.constant 0 : index
    %1317 = vector.load %arg6[%c240_1003, %c0_1004] : memref<400x128xbf16, #tpu.memory_space<vmem>>, vector<8x128xbf16>
    tpu.vector_store %arg6[%c240_1003, %c0_1004], %1316 {strides = array<i32>} : memref<400x128xbf16, #tpu.memory_space<vmem>>, vector<8x128xbf16>,
    %c9_i32_1005 = arith.constant 9 : i32
    %1318 = tpu.dynamic_rotate %1102 by %c9_i32_1005 dim 1 : vector<8x128xf32>, i32 -> vector<8x128xf32>
    %c6_1006 = arith.constant 6 : index
    %c0_1007 = arith.constant 0 : index
    %c0_1008 = arith.constant 0 : index
    %1319 = vector.load %arg2[%c6_1006, %c0_1007, %c0_1008] : memref<25x1x128xf32, #tpu.memory_space<vmem>>, vector<1x1x128xf32>
    %1320 = vector.shape_cast %1319 : vector<1x1x128xf32> to vector<1x128xf32>
    %1321 = vector.broadcast %1320 : vector<1x128xf32> to vector<8x128xf32>
    %1322 = arith.mulf %1318, %1321 : vector<8x128xf32>
    %1323 = arith.truncf %1322 : vector<8x128xf32> to vector<8x128xbf16>
    %c248_1009 = arith.constant 248 : index
    %c0_1010 = arith.constant 0 : index
    %1324 = vector.load %arg6[%c248_1009, %c0_1010] : memref<400x128xbf16, #tpu.memory_space<vmem>>, vector<8x128xbf16>
    tpu.vector_store %arg6[%c248_1009, %c0_1010], %1323 {strides = array<i32>} : memref<400x128xbf16, #tpu.memory_space<vmem>>, vector<8x128xbf16>,
    %c8_i32_1011 = arith.constant 8 : i32
    %1325 = tpu.dynamic_rotate %1102 by %c8_i32_1011 dim 1 : vector<8x128xf32>, i32 -> vector<8x128xf32>
    %c7_1012 = arith.constant 7 : index
    %c0_1013 = arith.constant 0 : index
    %c0_1014 = arith.constant 0 : index
    %1326 = vector.load %arg2[%c7_1012, %c0_1013, %c0_1014] : memref<25x1x128xf32, #tpu.memory_space<vmem>>, vector<1x1x128xf32>
    %1327 = vector.shape_cast %1326 : vector<1x1x128xf32> to vector<1x128xf32>
    %1328 = vector.broadcast %1327 : vector<1x128xf32> to vector<8x128xf32>
    %1329 = arith.mulf %1325, %1328 : vector<8x128xf32>
    %1330 = arith.truncf %1329 : vector<8x128xf32> to vector<8x128xbf16>
    %c256_1015 = arith.constant 256 : index
    %c0_1016 = arith.constant 0 : index
    %1331 = vector.load %arg6[%c256_1015, %c0_1016] : memref<400x128xbf16, #tpu.memory_space<vmem>>, vector<8x128xbf16>
    tpu.vector_store %arg6[%c256_1015, %c0_1016], %1330 {strides = array<i32>} : memref<400x128xbf16, #tpu.memory_space<vmem>>, vector<8x128xbf16>,
    %c7_i32_1017 = arith.constant 7 : i32
    %1332 = tpu.dynamic_rotate %1102 by %c7_i32_1017 dim 1 : vector<8x128xf32>, i32 -> vector<8x128xf32>
    %c8_1018 = arith.constant 8 : index
    %c0_1019 = arith.constant 0 : index
    %c0_1020 = arith.constant 0 : index
    %1333 = vector.load %arg2[%c8_1018, %c0_1019, %c0_1020] : memref<25x1x128xf32, #tpu.memory_space<vmem>>, vector<1x1x128xf32>
    %1334 = vector.shape_cast %1333 : vector<1x1x128xf32> to vector<1x128xf32>
    %1335 = vector.broadcast %1334 : vector<1x128xf32> to vector<8x128xf32>
    %1336 = arith.mulf %1332, %1335 : vector<8x128xf32>
    %1337 = arith.truncf %1336 : vector<8x128xf32> to vector<8x128xbf16>
    %c264_1021 = arith.constant 264 : index
    %c0_1022 = arith.constant 0 : index
    %1338 = vector.load %arg6[%c264_1021, %c0_1022] : memref<400x128xbf16, #tpu.memory_space<vmem>>, vector<8x128xbf16>
    tpu.vector_store %arg6[%c264_1021, %c0_1022], %1337 {strides = array<i32>} : memref<400x128xbf16, #tpu.memory_space<vmem>>, vector<8x128xbf16>,
    %c6_i32_1023 = arith.constant 6 : i32
    %1339 = tpu.dynamic_rotate %1102 by %c6_i32_1023 dim 1 : vector<8x128xf32>, i32 -> vector<8x128xf32>
    %c9_1024 = arith.constant 9 : index
    %c0_1025 = arith.constant 0 : index
    %c0_1026 = arith.constant 0 : index
    %1340 = vector.load %arg2[%c9_1024, %c0_1025, %c0_1026] : memref<25x1x128xf32, #tpu.memory_space<vmem>>, vector<1x1x128xf32>
    %1341 = vector.shape_cast %1340 : vector<1x1x128xf32> to vector<1x128xf32>
    %1342 = vector.broadcast %1341 : vector<1x128xf32> to vector<8x128xf32>
    %1343 = arith.mulf %1339, %1342 : vector<8x128xf32>
    %1344 = arith.truncf %1343 : vector<8x128xf32> to vector<8x128xbf16>
    %c272_1027 = arith.constant 272 : index
    %c0_1028 = arith.constant 0 : index
    %1345 = vector.load %arg6[%c272_1027, %c0_1028] : memref<400x128xbf16, #tpu.memory_space<vmem>>, vector<8x128xbf16>
    tpu.vector_store %arg6[%c272_1027, %c0_1028], %1344 {strides = array<i32>} : memref<400x128xbf16, #tpu.memory_space<vmem>>, vector<8x128xbf16>,
    %c2_i32_1029 = arith.constant 2 : i32
    %1346 = tpu.dynamic_rotate %1102 by %c2_i32_1029 dim 1 : vector<8x128xf32>, i32 -> vector<8x128xf32>
    %c10_1030 = arith.constant 10 : index
    %c0_1031 = arith.constant 0 : index
    %c0_1032 = arith.constant 0 : index
    %1347 = vector.load %arg2[%c10_1030, %c0_1031, %c0_1032] : memref<25x1x128xf32, #tpu.memory_space<vmem>>, vector<1x1x128xf32>
    %1348 = vector.shape_cast %1347 : vector<1x1x128xf32> to vector<1x128xf32>
    %1349 = vector.broadcast %1348 : vector<1x128xf32> to vector<8x128xf32>
    %1350 = arith.mulf %1346, %1349 : vector<8x128xf32>
    %1351 = arith.truncf %1350 : vector<8x128xf32> to vector<8x128xbf16>
    %c280_1033 = arith.constant 280 : index
    %c0_1034 = arith.constant 0 : index
    %1352 = vector.load %arg6[%c280_1033, %c0_1034] : memref<400x128xbf16, #tpu.memory_space<vmem>>, vector<8x128xbf16>
    tpu.vector_store %arg6[%c280_1033, %c0_1034], %1351 {strides = array<i32>} : memref<400x128xbf16, #tpu.memory_space<vmem>>, vector<8x128xbf16>,
    %c1_i32_1035 = arith.constant 1 : i32
    %1353 = tpu.dynamic_rotate %1102 by %c1_i32_1035 dim 1 : vector<8x128xf32>, i32 -> vector<8x128xf32>
    %c11_1036 = arith.constant 11 : index
    %c0_1037 = arith.constant 0 : index
    %c0_1038 = arith.constant 0 : index
    %1354 = vector.load %arg2[%c11_1036, %c0_1037, %c0_1038] : memref<25x1x128xf32, #tpu.memory_space<vmem>>, vector<1x1x128xf32>
    %1355 = vector.shape_cast %1354 : vector<1x1x128xf32> to vector<1x128xf32>
    %1356 = vector.broadcast %1355 : vector<1x128xf32> to vector<8x128xf32>
    %1357 = arith.mulf %1353, %1356 : vector<8x128xf32>
    %1358 = arith.truncf %1357 : vector<8x128xf32> to vector<8x128xbf16>
    %c288_1039 = arith.constant 288 : index
    %c0_1040 = arith.constant 0 : index
    %1359 = vector.load %arg6[%c288_1039, %c0_1040] : memref<400x128xbf16, #tpu.memory_space<vmem>>, vector<8x128xbf16>
    tpu.vector_store %arg6[%c288_1039, %c0_1040], %1358 {strides = array<i32>} : memref<400x128xbf16, #tpu.memory_space<vmem>>, vector<8x128xbf16>,
    %1360 = arith.truncf %1102 : vector<8x128xf32> to vector<8x128xbf16>
    %c296_1041 = arith.constant 296 : index
    %c0_1042 = arith.constant 0 : index
    %1361 = vector.load %arg6[%c296_1041, %c0_1042] : memref<400x128xbf16, #tpu.memory_space<vmem>>, vector<8x128xbf16>
    tpu.vector_store %arg6[%c296_1041, %c0_1042], %1360 {strides = array<i32>} : memref<400x128xbf16, #tpu.memory_space<vmem>>, vector<8x128xbf16>,
    %c127_i32_1043 = arith.constant 127 : i32
    %1362 = tpu.dynamic_rotate %1102 by %c127_i32_1043 dim 1 : vector<8x128xf32>, i32 -> vector<8x128xf32>
    %c13_1044 = arith.constant 13 : index
    %c0_1045 = arith.constant 0 : index
    %c0_1046 = arith.constant 0 : index
    %1363 = vector.load %arg2[%c13_1044, %c0_1045, %c0_1046] : memref<25x1x128xf32, #tpu.memory_space<vmem>>, vector<1x1x128xf32>
    %1364 = vector.shape_cast %1363 : vector<1x1x128xf32> to vector<1x128xf32>
    %1365 = vector.broadcast %1364 : vector<1x128xf32> to vector<8x128xf32>
    %1366 = arith.mulf %1362, %1365 : vector<8x128xf32>
    %1367 = arith.truncf %1366 : vector<8x128xf32> to vector<8x128xbf16>
    %c304_1047 = arith.constant 304 : index
    %c0_1048 = arith.constant 0 : index
    %1368 = vector.load %arg6[%c304_1047, %c0_1048] : memref<400x128xbf16, #tpu.memory_space<vmem>>, vector<8x128xbf16>
    tpu.vector_store %arg6[%c304_1047, %c0_1048], %1367 {strides = array<i32>} : memref<400x128xbf16, #tpu.memory_space<vmem>>, vector<8x128xbf16>,
    %c126_i32_1049 = arith.constant 126 : i32
    %1369 = tpu.dynamic_rotate %1102 by %c126_i32_1049 dim 1 : vector<8x128xf32>, i32 -> vector<8x128xf32>
    %c14_1050 = arith.constant 14 : index
    %c0_1051 = arith.constant 0 : index
    %c0_1052 = arith.constant 0 : index
    %1370 = vector.load %arg2[%c14_1050, %c0_1051, %c0_1052] : memref<25x1x128xf32, #tpu.memory_space<vmem>>, vector<1x1x128xf32>
    %1371 = vector.shape_cast %1370 : vector<1x1x128xf32> to vector<1x128xf32>
    %1372 = vector.broadcast %1371 : vector<1x128xf32> to vector<8x128xf32>
    %1373 = arith.mulf %1369, %1372 : vector<8x128xf32>
    %1374 = arith.truncf %1373 : vector<8x128xf32> to vector<8x128xbf16>
    %c312_1053 = arith.constant 312 : index
    %c0_1054 = arith.constant 0 : index
    %1375 = vector.load %arg6[%c312_1053, %c0_1054] : memref<400x128xbf16, #tpu.memory_space<vmem>>, vector<8x128xbf16>
    tpu.vector_store %arg6[%c312_1053, %c0_1054], %1374 {strides = array<i32>} : memref<400x128xbf16, #tpu.memory_space<vmem>>, vector<8x128xbf16>,
    %c122_i32_1055 = arith.constant 122 : i32
    %1376 = tpu.dynamic_rotate %1102 by %c122_i32_1055 dim 1 : vector<8x128xf32>, i32 -> vector<8x128xf32>
    %c15_1056 = arith.constant 15 : index
    %c0_1057 = arith.constant 0 : index
    %c0_1058 = arith.constant 0 : index
    %1377 = vector.load %arg2[%c15_1056, %c0_1057, %c0_1058] : memref<25x1x128xf32, #tpu.memory_space<vmem>>, vector<1x1x128xf32>
    %1378 = vector.shape_cast %1377 : vector<1x1x128xf32> to vector<1x128xf32>
    %1379 = vector.broadcast %1378 : vector<1x128xf32> to vector<8x128xf32>
    %1380 = arith.mulf %1376, %1379 : vector<8x128xf32>
    %1381 = arith.truncf %1380 : vector<8x128xf32> to vector<8x128xbf16>
    %c320_1059 = arith.constant 320 : index
    %c0_1060 = arith.constant 0 : index
    %1382 = vector.load %arg6[%c320_1059, %c0_1060] : memref<400x128xbf16, #tpu.memory_space<vmem>>, vector<8x128xbf16>
    tpu.vector_store %arg6[%c320_1059, %c0_1060], %1381 {strides = array<i32>} : memref<400x128xbf16, #tpu.memory_space<vmem>>, vector<8x128xbf16>,
    %c121_i32_1061 = arith.constant 121 : i32
    %1383 = tpu.dynamic_rotate %1102 by %c121_i32_1061 dim 1 : vector<8x128xf32>, i32 -> vector<8x128xf32>
    %c16_1062 = arith.constant 16 : index
    %c0_1063 = arith.constant 0 : index
    %c0_1064 = arith.constant 0 : index
    %1384 = vector.load %arg2[%c16_1062, %c0_1063, %c0_1064] : memref<25x1x128xf32, #tpu.memory_space<vmem>>, vector<1x1x128xf32>
    %1385 = vector.shape_cast %1384 : vector<1x1x128xf32> to vector<1x128xf32>
    %1386 = vector.broadcast %1385 : vector<1x128xf32> to vector<8x128xf32>
    %1387 = arith.mulf %1383, %1386 : vector<8x128xf32>
    %1388 = arith.truncf %1387 : vector<8x128xf32> to vector<8x128xbf16>
    %c328_1065 = arith.constant 328 : index
    %c0_1066 = arith.constant 0 : index
    %1389 = vector.load %arg6[%c328_1065, %c0_1066] : memref<400x128xbf16, #tpu.memory_space<vmem>>, vector<8x128xbf16>
    tpu.vector_store %arg6[%c328_1065, %c0_1066], %1388 {strides = array<i32>} : memref<400x128xbf16, #tpu.memory_space<vmem>>, vector<8x128xbf16>,
    %c120_i32_1067 = arith.constant 120 : i32
    %1390 = tpu.dynamic_rotate %1102 by %c120_i32_1067 dim 1 : vector<8x128xf32>, i32 -> vector<8x128xf32>
    %c17_1068 = arith.constant 17 : index
    %c0_1069 = arith.constant 0 : index
    %c0_1070 = arith.constant 0 : index
    %1391 = vector.load %arg2[%c17_1068, %c0_1069, %c0_1070] : memref<25x1x128xf32, #tpu.memory_space<vmem>>, vector<1x1x128xf32>
    %1392 = vector.shape_cast %1391 : vector<1x1x128xf32> to vector<1x128xf32>
    %1393 = vector.broadcast %1392 : vector<1x128xf32> to vector<8x128xf32>
    %1394 = arith.mulf %1390, %1393 : vector<8x128xf32>
    %1395 = arith.truncf %1394 : vector<8x128xf32> to vector<8x128xbf16>
    %c336_1071 = arith.constant 336 : index
    %c0_1072 = arith.constant 0 : index
    %1396 = vector.load %arg6[%c336_1071, %c0_1072] : memref<400x128xbf16, #tpu.memory_space<vmem>>, vector<8x128xbf16>
    tpu.vector_store %arg6[%c336_1071, %c0_1072], %1395 {strides = array<i32>} : memref<400x128xbf16, #tpu.memory_space<vmem>>, vector<8x128xbf16>,
    %c119_i32_1073 = arith.constant 119 : i32
    %1397 = tpu.dynamic_rotate %1102 by %c119_i32_1073 dim 1 : vector<8x128xf32>, i32 -> vector<8x128xf32>
    %c18_1074 = arith.constant 18 : index
    %c0_1075 = arith.constant 0 : index
    %c0_1076 = arith.constant 0 : index
    %1398 = vector.load %arg2[%c18_1074, %c0_1075, %c0_1076] : memref<25x1x128xf32, #tpu.memory_space<vmem>>, vector<1x1x128xf32>
    %1399 = vector.shape_cast %1398 : vector<1x1x128xf32> to vector<1x128xf32>
    %1400 = vector.broadcast %1399 : vector<1x128xf32> to vector<8x128xf32>
    %1401 = arith.mulf %1397, %1400 : vector<8x128xf32>
    %1402 = arith.truncf %1401 : vector<8x128xf32> to vector<8x128xbf16>
    %c344_1077 = arith.constant 344 : index
    %c0_1078 = arith.constant 0 : index
    %1403 = vector.load %arg6[%c344_1077, %c0_1078] : memref<400x128xbf16, #tpu.memory_space<vmem>>, vector<8x128xbf16>
    tpu.vector_store %arg6[%c344_1077, %c0_1078], %1402 {strides = array<i32>} : memref<400x128xbf16, #tpu.memory_space<vmem>>, vector<8x128xbf16>,
    %c118_i32_1079 = arith.constant 118 : i32
    %1404 = tpu.dynamic_rotate %1102 by %c118_i32_1079 dim 1 : vector<8x128xf32>, i32 -> vector<8x128xf32>
    %c19_1080 = arith.constant 19 : index
    %c0_1081 = arith.constant 0 : index
    %c0_1082 = arith.constant 0 : index
    %1405 = vector.load %arg2[%c19_1080, %c0_1081, %c0_1082] : memref<25x1x128xf32, #tpu.memory_space<vmem>>, vector<1x1x128xf32>
    %1406 = vector.shape_cast %1405 : vector<1x1x128xf32> to vector<1x128xf32>
    %1407 = vector.broadcast %1406 : vector<1x128xf32> to vector<8x128xf32>
    %1408 = arith.mulf %1404, %1407 : vector<8x128xf32>
    %1409 = arith.truncf %1408 : vector<8x128xf32> to vector<8x128xbf16>
    %c352_1083 = arith.constant 352 : index
    %c0_1084 = arith.constant 0 : index
    %1410 = vector.load %arg6[%c352_1083, %c0_1084] : memref<400x128xbf16, #tpu.memory_space<vmem>>, vector<8x128xbf16>
    tpu.vector_store %arg6[%c352_1083, %c0_1084], %1409 {strides = array<i32>} : memref<400x128xbf16, #tpu.memory_space<vmem>>, vector<8x128xbf16>,
    %c114_i32_1085 = arith.constant 114 : i32
    %1411 = tpu.dynamic_rotate %1102 by %c114_i32_1085 dim 1 : vector<8x128xf32>, i32 -> vector<8x128xf32>
    %c20_1086 = arith.constant 20 : index
    %c0_1087 = arith.constant 0 : index
    %c0_1088 = arith.constant 0 : index
    %1412 = vector.load %arg2[%c20_1086, %c0_1087, %c0_1088] : memref<25x1x128xf32, #tpu.memory_space<vmem>>, vector<1x1x128xf32>
    %1413 = vector.shape_cast %1412 : vector<1x1x128xf32> to vector<1x128xf32>
    %1414 = vector.broadcast %1413 : vector<1x128xf32> to vector<8x128xf32>
    %1415 = arith.mulf %1411, %1414 : vector<8x128xf32>
    %1416 = arith.truncf %1415 : vector<8x128xf32> to vector<8x128xbf16>
    %c360_1089 = arith.constant 360 : index
    %c0_1090 = arith.constant 0 : index
    %1417 = vector.load %arg6[%c360_1089, %c0_1090] : memref<400x128xbf16, #tpu.memory_space<vmem>>, vector<8x128xbf16>
    tpu.vector_store %arg6[%c360_1089, %c0_1090], %1416 {strides = array<i32>} : memref<400x128xbf16, #tpu.memory_space<vmem>>, vector<8x128xbf16>,
    %c113_i32_1091 = arith.constant 113 : i32
    %1418 = tpu.dynamic_rotate %1102 by %c113_i32_1091 dim 1 : vector<8x128xf32>, i32 -> vector<8x128xf32>
    %c21_1092 = arith.constant 21 : index
    %c0_1093 = arith.constant 0 : index
    %c0_1094 = arith.constant 0 : index
    %1419 = vector.load %arg2[%c21_1092, %c0_1093, %c0_1094] : memref<25x1x128xf32, #tpu.memory_space<vmem>>, vector<1x1x128xf32>
    %1420 = vector.shape_cast %1419 : vector<1x1x128xf32> to vector<1x128xf32>
    %1421 = vector.broadcast %1420 : vector<1x128xf32> to vector<8x128xf32>
    %1422 = arith.mulf %1418, %1421 : vector<8x128xf32>
    %1423 = arith.truncf %1422 : vector<8x128xf32> to vector<8x128xbf16>
    %c368_1095 = arith.constant 368 : index
    %c0_1096 = arith.constant 0 : index
    %1424 = vector.load %arg6[%c368_1095, %c0_1096] : memref<400x128xbf16, #tpu.memory_space<vmem>>, vector<8x128xbf16>
    tpu.vector_store %arg6[%c368_1095, %c0_1096], %1423 {strides = array<i32>} : memref<400x128xbf16, #tpu.memory_space<vmem>>, vector<8x128xbf16>,
    %c112_i32_1097 = arith.constant 112 : i32
    %1425 = tpu.dynamic_rotate %1102 by %c112_i32_1097 dim 1 : vector<8x128xf32>, i32 -> vector<8x128xf32>
    %c22_1098 = arith.constant 22 : index
    %c0_1099 = arith.constant 0 : index
    %c0_1100 = arith.constant 0 : index
    %1426 = vector.load %arg2[%c22_1098, %c0_1099, %c0_1100] : memref<25x1x128xf32, #tpu.memory_space<vmem>>, vector<1x1x128xf32>
    %1427 = vector.shape_cast %1426 : vector<1x1x128xf32> to vector<1x128xf32>
    %1428 = vector.broadcast %1427 : vector<1x128xf32> to vector<8x128xf32>
    %1429 = arith.mulf %1425, %1428 : vector<8x128xf32>
    %1430 = arith.truncf %1429 : vector<8x128xf32> to vector<8x128xbf16>
    %c376_1101 = arith.constant 376 : index
    %c0_1102 = arith.constant 0 : index
    %1431 = vector.load %arg6[%c376_1101, %c0_1102] : memref<400x128xbf16, #tpu.memory_space<vmem>>, vector<8x128xbf16>
    tpu.vector_store %arg6[%c376_1101, %c0_1102], %1430 {strides = array<i32>} : memref<400x128xbf16, #tpu.memory_space<vmem>>, vector<8x128xbf16>,
    %c111_i32_1103 = arith.constant 111 : i32
    %1432 = tpu.dynamic_rotate %1102 by %c111_i32_1103 dim 1 : vector<8x128xf32>, i32 -> vector<8x128xf32>
    %c23_1104 = arith.constant 23 : index
    %c0_1105 = arith.constant 0 : index
    %c0_1106 = arith.constant 0 : index
    %1433 = vector.load %arg2[%c23_1104, %c0_1105, %c0_1106] : memref<25x1x128xf32, #tpu.memory_space<vmem>>, vector<1x1x128xf32>
    %1434 = vector.shape_cast %1433 : vector<1x1x128xf32> to vector<1x128xf32>
    %1435 = vector.broadcast %1434 : vector<1x128xf32> to vector<8x128xf32>
    %1436 = arith.mulf %1432, %1435 : vector<8x128xf32>
    %1437 = arith.truncf %1436 : vector<8x128xf32> to vector<8x128xbf16>
    %c384_1107 = arith.constant 384 : index
    %c0_1108 = arith.constant 0 : index
    %1438 = vector.load %arg6[%c384_1107, %c0_1108] : memref<400x128xbf16, #tpu.memory_space<vmem>>, vector<8x128xbf16>
    tpu.vector_store %arg6[%c384_1107, %c0_1108], %1437 {strides = array<i32>} : memref<400x128xbf16, #tpu.memory_space<vmem>>, vector<8x128xbf16>,
    %c110_i32_1109 = arith.constant 110 : i32
    %1439 = tpu.dynamic_rotate %1102 by %c110_i32_1109 dim 1 : vector<8x128xf32>, i32 -> vector<8x128xf32>
    %c24_1110 = arith.constant 24 : index
    %c0_1111 = arith.constant 0 : index
    %c0_1112 = arith.constant 0 : index
    %1440 = vector.load %arg2[%c24_1110, %c0_1111, %c0_1112] : memref<25x1x128xf32, #tpu.memory_space<vmem>>, vector<1x1x128xf32>
    %1441 = vector.shape_cast %1440 : vector<1x1x128xf32> to vector<1x128xf32>
    %1442 = vector.broadcast %1441 : vector<1x128xf32> to vector<8x128xf32>
    %1443 = arith.mulf %1439, %1442 : vector<8x128xf32>
    %1444 = arith.truncf %1443 : vector<8x128xf32> to vector<8x128xbf16>
    %c392_1113 = arith.constant 392 : index
    %c0_1114 = arith.constant 0 : index
    %1445 = vector.load %arg6[%c392_1113, %c0_1114] : memref<400x128xbf16, #tpu.memory_space<vmem>>, vector<8x128xbf16>
    tpu.vector_store %arg6[%c392_1113, %c0_1114], %1444 {strides = array<i32>} : memref<400x128xbf16, #tpu.memory_space<vmem>>, vector<8x128xbf16>,
    %c0_1115 = arith.constant 0 : index
    %c0_1116 = arith.constant 0 : index
    %c0_1117 = arith.constant 0 : index
    %1446 = vector.load %arg3[%c0_1115, %c0_1116, %c0_1117] : memref<1x32x400xbf16, #tpu.memory_space<vmem>>, vector<1x32x400xbf16>
    %1447 = vector.shape_cast %1446 : vector<1x32x400xbf16> to vector<32x400xbf16>
    %c0_1118 = arith.constant 0 : index
    %c0_1119 = arith.constant 0 : index
    %1448 = vector.load %arg6[%c0_1118, %c0_1119] : memref<400x128xbf16, #tpu.memory_space<vmem>>, vector<400x128xbf16>
    %cst_1120 = arith.constant dense<0.000000e+00> : vector<32x128xf32>
    %1449 = tpu.matmul %1447, %1448, %cst_1120 {dimension_numbers = #tpu.dot_dimension_numbers<[1], [0], [0], [1], [0, 0, 1, 1], [], []>} : vector<32x400xbf16>, vector<400x128xbf16>, vector<32x128xf32> -> vector<32x128xf32>
    %c0_1121 = arith.constant 0 : index
    %c0_1122 = arith.constant 0 : index
    %c0_1123 = arith.constant 0 : index
    %1450 = vector.load %arg4[%c0_1121, %c0_1122, %c0_1123] : memref<1x32x1xf32, #tpu.memory_space<vmem>>, vector<1x32x1xf32>
    %1451 = vector.shape_cast %1450 : vector<1x32x1xf32> to vector<32x1xf32>
    %1452 = vector.broadcast %1451 : vector<32x1xf32> to vector<32x128xf32>
    %1453 = arith.addf %1449, %1452 : vector<32x128xf32>
    %1454 = vector.extract_strided_slice %1453 {offsets = [0, 0], sizes = [24, 128], strides = [1, 1]} : vector<32x128xf32> to vector<24x128xf32>
    %1455 = arith.negf %1454 : vector<24x128xf32>
    %1456 = math.exp %1455 : vector<24x128xf32>
    %cst_1124 = arith.constant 1.000000e+00 : f32
    %1457 = vector.broadcast %cst_1124 : f32 to vector<24x128xf32>
    %1458 = arith.addf %1457, %1456 : vector<24x128xf32>
    %1459 = arith.divf %1457, %1458 : vector<24x128xf32>
    %1460 = vector.extract_strided_slice %1459 {offsets = [0, 0], sizes = [8, 128], strides = [1, 1]} : vector<24x128xf32> to vector<8x128xf32>
    %1461 = vector.extract_strided_slice %1459 {offsets = [8, 0], sizes = [8, 128], strides = [1, 1]} : vector<24x128xf32> to vector<8x128xf32>
    %1462 = vector.extract_strided_slice %1459 {offsets = [16, 0], sizes = [8, 128], strides = [1, 1]} : vector<24x128xf32> to vector<8x128xf32>
    %1463 = vector.extract_strided_slice %1453 {offsets = [24, 0], sizes = [8, 128], strides = [1, 1]} : vector<32x128xf32> to vector<8x128xf32>
    %1464 = math.tanh %1463 : vector<8x128xf32>
    %1465 = arith.mulf %1461, %1100 : vector<8x128xf32>
    %1466 = arith.mulf %1460, %1464 : vector<8x128xf32>
    %1467 = arith.addf %1465, %1466 : vector<8x128xf32>
    %1468 = math.tanh %1467 : vector<8x128xf32>
    %1469 = arith.mulf %1462, %1468 : vector<8x128xf32>
    %c4_i32 = arith.constant 4 : i32
    %c0_1125 = arith.constant 0 : index
    %c0_1126 = arith.constant 0 : index
    %c0_1127 = arith.constant 0 : index
    %1470 = vector.load %arg5[%c0_1125, %c0_1126, %c0_1127] : memref<1x8x128xf32, #tpu.memory_space<vmem>>, vector<1x8x128xf32>
    %1471 = vector.shape_cast %1470 : vector<1x8x128xf32> to vector<8x128xf32>
    %1472 = vector.shape_cast %1467 : vector<8x128xf32> to vector<1x8x128xf32>
    tpu.vector_store %arg5[%c0_1125, %c0_1126, %c0_1127], %1472 {strides = array<i32>} : memref<1x8x128xf32, #tpu.memory_space<vmem>>, vector<1x8x128xf32>,
    return
  }
  func.func @transform_0(%arg0: i32) -> (i32, i32, i32) {
    %c0_i32 = arith.constant 0 : i32
    %c0_i32_0 = arith.constant 0 : i32
    %c0_i32_1 = arith.constant 0 : i32
    %c0_i32_2 = arith.constant 0 : i32
    return %c0_i32, %c0_i32_0, %c0_i32_1 : i32, i32, i32
  }
  func.func @transform_1(%arg0: i32) -> (i32, i32, i32) {
    %c0_i32 = arith.constant 0 : i32
    %c0_i32_0 = arith.constant 0 : i32
    %c0_i32_1 = arith.constant 0 : i32
    %c0_i32_2 = arith.constant 0 : i32
    return %c0_i32, %c0_i32_0, %c0_i32_1 : i32, i32, i32
  }
  func.func @transform_2(%arg0: i32) -> (i32, i32, i32) {
    %c0_i32 = arith.constant 0 : i32
    %c0_i32_0 = arith.constant 0 : i32
    %c0_i32_1 = arith.constant 0 : i32
    return %arg0, %c0_i32, %c0_i32_0 : i32, i32, i32
  }
  func.func @transform_3(%arg0: i32) -> (i32, i32, i32) {
    %c0_i32 = arith.constant 0 : i32
    %c0_i32_0 = arith.constant 0 : i32
    %c0_i32_1 = arith.constant 0 : i32
    return %arg0, %c0_i32, %c0_i32_0 : i32, i32, i32
  }
  func.func @transform_4(%arg0: i32) -> (i32, i32, i32) {
    %c0_i32 = arith.constant 0 : i32
    %c0_i32_0 = arith.constant 0 : i32
    %c0_i32_1 = arith.constant 0 : i32
    return %arg0, %c0_i32, %c0_i32_0 : i32, i32, i32
  }
}

</mosaic_0001>

<llo_original>
// kernel: deeplatte_forward.5
$region0: #{deeplatte_forward.5}
  #allocation0 [shape = 'u32[]', space=smem, size = 0x4, offset = 0x4, fixed_abs, tag = 'smem constant byte address 0x4 - core index']
  #allocation1 [shape = 'u32[144,128]{1,0:T(1,128)}', space=vmem, size = 0x12000, scoped, tag = 'internal scratch']
  #allocation2 [shape = 'f32[1,1]{1,0:T(1,128)S(1)}', space=vmem, size = 0x200, scoped, tag = 'scoped memory for deeplatte_forward.5']
  %s0 = inlined_call_operand.vmem [shape: f32[16,128], index: 0, kind: input, shape index: {}]
  %s1 = inlined_call_operand.vmem [shape: bf16[16,16], index: 1, kind: input, shape index: {}]
  %s2 = inlined_call_operand.vmem [shape: f32[16,1], index: 2, kind: input, shape index: {}]
  %s3 = inlined_call_operand.vmem [shape: bf16[1,16], index: 3, kind: input, shape index: {}]
  %s4 = inlined_call_operand.<no memory space> [shape: f32[1,1], index: 4, kind: input, shape index: {}]
  %s5 = inlined_call_operand.vmem [shape: f32[1,128], index: 5, kind: output, shape index: {}]
  %s6 = sld [smem:[#allocation0]]
  $region30: #{deeplatte_forward.5} parent=0
    _
  %s8 = ssub.s32 1, %s6
  %s9 = scalar_select 0, %s8, %s6
  %v10 = vstv %s4
  %11 = vst [vmem:[#allocation2] sm:$0x1] %v10
  // Predicated region
  $region2: #{deeplatte_forward.5} parent=0 // pred_check
    _
  $region3: #{deeplatte_forward.5} parent=0 // pred_check_branch
    %13 = sbr.rel (0) target = $region5
  $region4: #{deeplatte_forward.5} parent=0 // pred_region
    _
  $region5: #{deeplatte_forward.5} parent=0 // pred_fallthru
    _
  // Predicated region
  $region6: #{deeplatte_forward.5} parent=0 // pred_check
    _
  $region7: #{deeplatte_forward.5} parent=0 // pred_check_branch
    %15 = sbr.rel (0) target = $region9
  $region8: #{deeplatte_forward.5} parent=0 // pred_region
    _
  $region9: #{deeplatte_forward.5} parent=0 // pred_fallthru
    _
  // Predicated region
  $region10: #{deeplatte_forward.5} parent=0 // pred_check
    _
  $region11: #{deeplatte_forward.5} parent=0 // pred_check_branch
    %17 = sbr.rel (0) target = $region13
  $region12: #{deeplatte_forward.5} parent=0 // pred_region
    _
  $region13: #{deeplatte_forward.5} parent=0 // pred_fallthru
    _
  // Predicated region
  $region14: #{deeplatte_forward.5} parent=0 // pred_check
    _
  $region15: #{deeplatte_forward.5} parent=0 // pred_check_branch
    %19 = sbr.rel (0) target = $region17
  $region16: #{deeplatte_forward.5} parent=0 // pred_region
    _
  $region17: #{deeplatte_forward.5} parent=0 // pred_fallthru
    _
  // Predicated region
  $region18: #{deeplatte_forward.5} parent=0 // pred_check
    _
  $region19: #{deeplatte_forward.5} parent=0 // pred_check_branch
    %21 = sbr.rel (0) target = $region21
  $region20: #{deeplatte_forward.5} parent=0 // pred_region
    _
  $region21: #{deeplatte_forward.5} parent=0 // pred_fallthru
    _
  %v23 = vld [vmem:[%s1] sm:$0xf]
  %v24 = vld [vmem:[%s1 + $0x4] sm:$0xf]
  %v25 = vld [vmem:[%s0] sm:$0xff]
  %v26 = vld [vmem:[%s0 + $0x8] sm:$0xff]
  %v27 = vpack.c.bf16 %v26, %v25
  %v28 = vld [vmem:[%s2] sm:$0xff]
  %v29 = vld [vmem:[%s2 + $0x8] sm:$0xff]
  %31 = vset.pattern.permute.xlu0 0
  %32 = vperm.xlu0 %31, %v28
  %v33 = vpop.permute.xlu0 %32
  %36 = vset.pattern.permute.xlu0 0
  %37 = vperm.xlu0 %36, %v29
  %v38 = vpop.permute.xlu0 %37
  %v42 = vunpack.c.l.b16 %v23
  %v43 = vunpack.c.l.b16 %v24
  %v44 = vpack.c.b16 %v43, %v42
  %vm45 = vcmask 130048
  %v47 = vsel %vm45, %v44, 0
  %49 = vmatprep.subr.bf16.mxu0 0
  %50 = vmatpush1.bf16.msra.mxu0 %v27
  %51 = vmatprep.subr.bf16.mxu0 0
  %52 = vmatpush1.bf16.msra.mxu0 0
  %53 = vmatprep.subr.bf16.mxu0 0
  %54 = vmatpush1.bf16.msra.mxu0 0
  %55 = vmatprep.subr.bf16.mxu0 0
  %56 = vmatpush1.bf16.msra.mxu0 0
  %57 = vmatprep.subr.bf16.mxu0 0
  %58 = vmatpush1.bf16.msra.mxu0 0
  %59 = vmatprep.subr.bf16.mxu0 0
  %60 = vmatpush1.bf16.msra.mxu0 0
  %61 = vmatprep.subr.bf16.mxu0 0
  %62 = vmatpush1.bf16.msra.mxu0 0
  %63 = vmatprep.subr.bf16.mxu0 0
  %64 = vmatpush1.bf16.msra.mxu0 0
  %65 = vmatprep.subr.bf16.mxu0 0
  %66 = vmatpush1.bf16.msra.mxu0 0
  %67 = vmatprep.subr.bf16.mxu0 0
  %68 = vmatpush1.bf16.msra.mxu0 0
  %69 = vmatprep.subr.bf16.mxu0 0
  %70 = vmatpush1.bf16.msra.mxu0 0
  %71 = vmatprep.subr.bf16.mxu0 0
  %72 = vmatpush1.bf16.msra.mxu0 0
  %73 = vmatprep.subr.bf16.mxu0 0
  %74 = vmatpush1.bf16.msra.mxu0 0
  %75 = vmatprep.subr.bf16.mxu0 0
  %76 = vmatpush1.bf16.msra.mxu0 0
  %77 = vmatprep.subr.bf16.mxu0 0
  %78 = vmatpush1.bf16.msra.mxu0 0
  %79 = vmatprep.subr.bf16.mxu0 0
  %80 = vmatpush1.bf16.msra.mxu0 0
  %81 = vmatprep.mubr.bf16.mxu0 0
  %82 = vmatmul.mubr.bf16.gmra.mrb[0].mxu0 %v47
  %v83 = vpop.f32.mrb[0].mxu0
  %v84 = vadd.f32 %v33, %v83
  %v85 = vpop.f32.mrb[0].mxu0
  %v86 = vpop.f32.mrb[0].mxu0
  %v87 = vadd.f32 %v38, %v86
  %v88 = vpop.f32.mrb[0].mxu0
  %89 = vdwg.mxu0
  %v90 = vmax.f32 %v84, 0.0
  %v91 = vmax.f32 %v87, 0.0
  %v92 = vld [vmem:[%s3] sm:$0x1]
  %v93 = vpack.c.bf16 %v91, %v90
  %v94 = vld [vmem:[#allocation2] sm:$0x1]
  %96 = vset.pattern.permute.xlu0 0
  %97 = vperm.xlu0 %96, %v94
  %v98 = vpop.permute.xlu0 %97
  %v100 = vlaneseq
  %v101 = vshrl.u32 %v100, 7
  %v102 = vsub.s32 0, %v101
  %v103 = vrot.slane %v98, %v102
  %v105 = vsel %vm45, %v92, 0
  %107 = vmatprep.subr.bf16.mxu0 0
  %108 = vmatpush1.bf16.msra.mxu0 %v93
  %109 = vmatprep.subr.bf16.mxu0 0
  %110 = vmatpush1.bf16.msra.mxu0 0
  %111 = vmatprep.subr.bf16.mxu0 0
  %112 = vmatpush1.bf16.msra.mxu0 0
  %113 = vmatprep.subr.bf16.mxu0 0
  %114 = vmatpush1.bf16.msra.mxu0 0
  %115 = vmatprep.subr.bf16.mxu0 0
  %116 = vmatpush1.bf16.msra.mxu0 0
  %117 = vmatprep.subr.bf16.mxu0 0
  %118 = vmatpush1.bf16.msra.mxu0 0
  %119 = vmatprep.subr.bf16.mxu0 0
  %120 = vmatpush1.bf16.msra.mxu0 0
  %121 = vmatprep.subr.bf16.mxu0 0
  %122 = vmatpush1.bf16.msra.mxu0 0
  %123 = vmatprep.subr.bf16.mxu0 0
  %124 = vmatpush1.bf16.msra.mxu0 0
  %125 = vmatprep.subr.bf16.mxu0 0
  %126 = vmatpush1.bf16.msra.mxu0 0
  %127 = vmatprep.subr.bf16.mxu0 0
  %128 = vmatpush1.bf16.msra.mxu0 0
  %129 = vmatprep.subr.bf16.mxu0 0
  %130 = vmatpush1.bf16.msra.mxu0 0
  %131 = vmatprep.subr.bf16.mxu0 0
  %132 = vmatpush1.bf16.msra.mxu0 0
  %133 = vmatprep.subr.bf16.mxu0 0
  %134 = vmatpush1.bf16.msra.mxu0 0
  %135 = vmatprep.subr.bf16.mxu0 0
  %136 = vmatpush1.bf16.msra.mxu0 0
  %137 = vmatprep.subr.bf16.mxu0 0
  %138 = vmatpush1.bf16.msra.mxu0 0
  %139 = vmatprep.mubr.bf16.mxu0 0
  %140 = vmatmul.mubr.bf16.gmra.mrb[0].mxu0 %v105
  %v141 = vpop.f32.mrb[0].mxu0
  %v142 = vadd.f32 %v103, %v141
  %v143 = vpop.f32.mrb[0].mxu0
  %v144 = vpop.f32.mrb[0].mxu0
  %v145 = vpop.f32.mrb[0].mxu0
  %146 = vdwg.mxu0
  %147 = vst [vmem:[%s5] sm:$0x1] %v142
  // Predicated region
  $region22: #{deeplatte_forward.5} parent=0 // pred_check
    _
  $region23: #{deeplatte_forward.5} parent=0 // pred_check_branch
    %149 = sbr.rel (0) target = $region25
  $region24: #{deeplatte_forward.5} parent=0 // pred_region
    _
  $region25: #{deeplatte_forward.5} parent=0 // pred_fallthru
    _
  // Predicated region
  $region26: #{deeplatte_forward.5} parent=0 // pred_check
    _
  $region27: #{deeplatte_forward.5} parent=0 // pred_check_branch
    %151 = sbr.rel (0) target = $region29
  $region28: #{deeplatte_forward.5} parent=0 // pred_region
    _
  $region29: #{deeplatte_forward.5} parent=0 // pred_fallthru
    _

// kernel: deeplatte_forward.3
$region0: #{deeplatte_forward.3}
  #allocation0 [shape = 'u32[]', space=smem, size = 0x4, offset = 0x4, fixed_abs, tag = 'smem constant byte address 0x4 - core index']
  #allocation1 [shape = 'u32[144,128]{1,0:T(1,128)}', space=vmem, size = 0x12000, scoped, tag = 'internal scratch']
  %s0 = inlined_call_operand.vmem [shape: f32[4,4,128], index: 0, kind: input, shape index: {}]
  %s1 = inlined_call_operand.vmem [shape: f32[4,1], index: 1, kind: input, shape index: {}]
  %s2 = inlined_call_operand.vmem [shape: bf16[16,4], index: 2, kind: input, shape index: {}]
  %s3 = inlined_call_operand.vmem [shape: f32[16,1], index: 3, kind: input, shape index: {}]
  %s4 = inlined_call_operand.vmem [shape: bf16[8,16], index: 4, kind: input, shape index: {}]
  %s5 = inlined_call_operand.vmem [shape: f32[8,1], index: 5, kind: input, shape index: {}]
  %s6 = inlined_call_operand.vmem [shape: bf16[16,8], index: 6, kind: input, shape index: {}]
  %s7 = inlined_call_operand.vmem [shape: f32[16,1], index: 7, kind: input, shape index: {}]
  %s8 = inlined_call_operand.vmem [shape: bf16[4,16], index: 8, kind: input, shape index: {}]
  %s9 = inlined_call_operand.vmem [shape: f32[4,1], index: 9, kind: input, shape index: {}]
  %s10 = inlined_call_operand.vmem [shape: f32[4,4,128], index: 10, kind: output, shape index: {0}]
  %s11 = inlined_call_operand.vmem [shape: f32[4,8,128], index: 11, kind: output, shape index: {1}]
  %s12 = inlined_call_operand.vmem [shape: f32[4,4,128], index: 12, kind: output, shape index: {2}]
  %13 = xla_tuple %s10, %s11, %s12
  %s14 = sld [smem:[#allocation0]]
  $region89: #{deeplatte_forward.3} parent=0
    _
  %s16 = ssub.s32 1, %s14
  %s17 = scalar_select 0, %s16, %s14
  loop: start=0, step=1, limit=6
  $region2: #{deeplatte_forward.3} parent=0 // loop_pre_header
    _
  $region3: #{deeplatte_forward.3} parent=0 // loop_header
    %s19 = sphi 0, %s23
    %p20 = scmp.ge.s32.totalorder %s19, 6
    %s26 = sphi 0, %s38
    %s27 = sphi 0, %s34
    %s28 = sphi 0, %s26
    %s29 = sphi 0, %s27
    %s30 = sphi 0, %s28
    %s31 = sphi 0, %s29
    %s43 = sphi 0, %s45
    %s46 = sphi 0, %s43
    %s47 = sphi 0, %s46
    %s63 = sphi 0, %s47
    %s67 = sphi 0, %s67
    %s69 = sphi 0, %s67
    %s70 = sphi 0, %s69
    %s84 = sphi 0, %s70
    %s88 = sphi 0, %s88
    %s90 = sphi 0, %s88
    %s91 = sphi 0, %s90
    %s105 = sphi 0, %s91
    %s109 = sphi 0, %s109
    %s111 = sphi 0, %s109
    %s112 = sphi 0, %s111
    %s126 = sphi 0, %s112
    %s130 = sphi 0, %s130
    %s132 = sphi 0, %s130
    %s133 = sphi 0, %s132
    %s147 = sphi 0, %s133
    %s151 = sphi 0, %s151
    %s153 = sphi 0, %s151
    %s154 = sphi 0, %s153
    %s168 = sphi 0, %s154
    %s172 = sphi 0, %s172
    %s174 = sphi 0, %s172
    %s175 = sphi 0, %s174
    %s189 = sphi 0, %s175
    %s193 = sphi 0, %s193
    %s195 = sphi 0, %s193
    %s196 = sphi 0, %s195
    %s210 = sphi 0, %s196
    %s214 = sphi 0, %s214
    %s216 = sphi 0, %s214
    %s217 = sphi 0, %s216
    %s231 = sphi 0, %s217
    %s235 = sphi 0, %s235
    %s237 = sphi 0, %s235
    %s238 = sphi 0, %s237
    %s252 = sphi 0, %s238
    %s260 = sphi 0, %s262
    %s263 = sphi 0, %s260
    %s264 = sphi 0, %s263
    %s280 = sphi 0, %s264
    %s288 = sphi 0, %s290
    %s291 = sphi 0, %s288
    %s292 = sphi 0, %s291
    %s308 = sphi 0, %s292
    %s316 = sphi 0, %s318
    %s319 = sphi 0, %s316
    %s320 = sphi 0, %s319
    %s336 = sphi 0, %s320
  $region4: #{deeplatte_forward.3} parent=0 // loop_header_branch
    %22 = sbr.rel (%p20) target = $region8
  $region5: #{deeplatte_forward.3} parent=0 // loop_body
    %s24 = ssub.s32 %s19, 1
    %s25 = ssub.s32 %s19, 2
    %s32 = sadd.s32 1, %s27
    %p33 = scmp.ge.s32.totalorder %s32, 1
    %s34 = scalar_select %p33, 0, %s32
    %s35 = sadd.s32 1, %s26
    %s36 = scalar_select %p33, %s35, %s26
    %p37 = scmp.ge.s32.totalorder %s36, 4
    %s38 = scalar_select %p37, 0, %s36
    %s39 = ssub.s32 %s26, %s38
    %s40 = ssub.s32 %s27, %s34
    %s41 = sor.u32 %s39, %s40
    %p42 = scmp.eq.s32.totalorder %s41, 0
    %s44 = sadd.s32 %s43, 1
    %s45 = scalar_select %p42, %s43, %s44
    %p48 = pneg %p42
    %p49 = scmp.eq.s32.totalorder %s19, 3
    %p50 = por %p48, %p49
    %p51 = scmp.ne.s32.totalorder %s43, %s46
    %p52 = scmp.eq.s32.totalorder %s19, 0
    %p53 = por %p51, %p52
    %p54 = scmp.ne.s32.totalorder %s43, %s46
    %p55 = scmp.eq.s32.totalorder %s24, 3
    %p56 = por %p54, %p55
    %p57 = scmp.ne.s32.totalorder %s46, %s47
    %p58 = scmp.eq.s32.totalorder %s24, 0
    %p59 = por %p57, %p58
    %p60 = scmp.ne.s32.totalorder %s46, %s47
    %p61 = scmp.eq.s32.totalorder %s25, 3
    %p62 = por %p60, %p61
    %p64 = scmp.ne.s32.totalorder %s47, %s63
    %p65 = scmp.eq.s32.totalorder %s25, 0
    %p66 = por %p64, %p65
    %s68 = sadd.s32 %s67, 1
    %p71 = scmp.eq.s32.totalorder %s19, 3
    %p72 = scmp.ne.s32.totalorder %s67, %s69
    %p73 = scmp.eq.s32.totalorder %s19, 0
    %p74 = por %p72, %p73
    %p75 = scmp.ne.s32.totalorder %s67, %s69
    %p76 = scmp.eq.s32.totalorder %s24, 3
    %p77 = por %p75, %p76
    %p78 = scmp.ne.s32.totalorder %s69, %s70
    %p79 = scmp.eq.s32.totalorder %s24, 0
    %p80 = por %p78, %p79
    %p81 = scmp.ne.s32.totalorder %s69, %s70
    %p82 = scmp.eq.s32.totalorder %s25, 3
    %p83 = por %p81, %p82
    %p85 = scmp.ne.s32.totalorder %s70, %s84
    %p86 = scmp.eq.s32.totalorder %s25, 0
    %p87 = por %p85, %p86
    %s89 = sadd.s32 %s88, 1
    %p92 = scmp.eq.s32.totalorder %s19, 3
    %p93 = scmp.ne.s32.totalorder %s88, %s90
    %p94 = scmp.eq.s32.totalorder %s19, 0
    %p95 = por %p93, %p94
    %p96 = scmp.ne.s32.totalorder %s88, %s90
    %p97 = scmp.eq.s32.totalorder %s24, 3
    %p98 = por %p96, %p97
    %p99 = scmp.ne.s32.totalorder %s90, %s91
    %p100 = scmp.eq.s32.totalorder %s24, 0
    %p101 = por %p99, %p100
    %p102 = scmp.ne.s32.totalorder %s90, %s91
    %p103 = scmp.eq.s32.totalorder %s25, 3
    %p104 = por %p102, %p103
    %p106 = scmp.ne.s32.totalorder %s91, %s105
    %p107 = scmp.eq.s32.totalorder %s25, 0
    %p108 = por %p106, %p107
    %s110 = sadd.s32 %s109, 1
    %p113 = scmp.eq.s32.totalorder %s19, 3
    %p114 = scmp.ne.s32.totalorder %s109, %s111
    %p115 = scmp.eq.s32.totalorder %s19, 0
    %p116 = por %p114, %p115
    %p117 = scmp.ne.s32.totalorder %s109, %s111
    %p118 = scmp.eq.s32.totalorder %s24, 3
    %p119 = por %p117, %p118
    %p120 = scmp.ne.s32.totalorder %s111, %s112
    %p121 = scmp.eq.s32.totalorder %s24, 0
    %p122 = por %p120, %p121
    %p123 = scmp.ne.s32.totalorder %s111, %s112
    %p124 = scmp.eq.s32.totalorder %s25, 3
    %p125 = por %p123, %p124
    %p127 = scmp.ne.s32.totalorder %s112, %s126
    %p128 = scmp.eq.s32.totalorder %s25, 0
    %p129 = por %p127, %p128
    %s131 = sadd.s32 %s130, 1
    %p134 = scmp.eq.s32.totalorder %s19, 3
    %p135 = scmp.ne.s32.totalorder %s130, %s132
    %p136 = scmp.eq.s32.totalorder %s19, 0
    %p137 = por %p135, %p136
    %p138 = scmp.ne.s32.totalorder %s130, %s132
    %p139 = scmp.eq.s32.totalorder %s24, 3
    %p140 = por %p138, %p139
    %p141 = scmp.ne.s32.totalorder %s132, %s133
    %p142 = scmp.eq.s32.totalorder %s24, 0
    %p143 = por %p141, %p142
    %p144 = scmp.ne.s32.totalorder %s132, %s133
    %p145 = scmp.eq.s32.totalorder %s25, 3
    %p146 = por %p144, %p145
    %p148 = scmp.ne.s32.totalorder %s133, %s147
    %p149 = scmp.eq.s32.totalorder %s25, 0
    %p150 = por %p148, %p149
    %s152 = sadd.s32 %s151, 1
    %p155 = scmp.eq.s32.totalorder %s19, 3
    %p156 = scmp.ne.s32.totalorder %s151, %s153
    %p157 = scmp.eq.s32.totalorder %s19, 0
    %p158 = por %p156, %p157
    %p159 = scmp.ne.s32.totalorder %s151, %s153
    %p160 = scmp.eq.s32.totalorder %s24, 3
    %p161 = por %p159, %p160
    %p162 = scmp.ne.s32.totalorder %s153, %s154
    %p163 = scmp.eq.s32.totalorder %s24, 0
    %p164 = por %p162, %p163
    %p165 = scmp.ne.s32.totalorder %s153, %s154
    %p166 = scmp.eq.s32.totalorder %s25, 3
    %p167 = por %p165, %p166
    %p169 = scmp.ne.s32.totalorder %s154, %s168
    %p170 = scmp.eq.s32.totalorder %s25, 0
    %p171 = por %p169, %p170
    %s173 = sadd.s32 %s172, 1
    %p176 = scmp.eq.s32.totalorder %s19, 3
    %p177 = scmp.ne.s32.totalorder %s172, %s174
    %p178 = scmp.eq.s32.totalorder %s19, 0
    %p179 = por %p177, %p178
    %p180 = scmp.ne.s32.totalorder %s172, %s174
    %p181 = scmp.eq.s32.totalorder %s24, 3
    %p182 = por %p180, %p181
    %p183 = scmp.ne.s32.totalorder %s174, %s175
    %p184 = scmp.eq.s32.totalorder %s24, 0
    %p185 = por %p183, %p184
    %p186 = scmp.ne.s32.totalorder %s174, %s175
    %p187 = scmp.eq.s32.totalorder %s25, 3
    %p188 = por %p186, %p187
    %p190 = scmp.ne.s32.totalorder %s175, %s189
    %p191 = scmp.eq.s32.totalorder %s25, 0
    %p192 = por %p190, %p191
    %s194 = sadd.s32 %s193, 1
    %p197 = scmp.eq.s32.totalorder %s19, 3
    %p198 = scmp.ne.s32.totalorder %s193, %s195
    %p199 = scmp.eq.s32.totalorder %s19, 0
    %p200 = por %p198, %p199
    %p201 = scmp.ne.s32.totalorder %s193, %s195
    %p202 = scmp.eq.s32.totalorder %s24, 3
    %p203 = por %p201, %p202
    %p204 = scmp.ne.s32.totalorder %s195, %s196
    %p205 = scmp.eq.s32.totalorder %s24, 0
    %p206 = por %p204, %p205
    %p207 = scmp.ne.s32.totalorder %s195, %s196
    %p208 = scmp.eq.s32.totalorder %s25, 3
    %p209 = por %p207, %p208
    %p211 = scmp.ne.s32.totalorder %s196, %s210
    %p212 = scmp.eq.s32.totalorder %s25, 0
    %p213 = por %p211, %p212
    %s215 = sadd.s32 %s214, 1
    %p218 = scmp.eq.s32.totalorder %s19, 3
    %p219 = scmp.ne.s32.totalorder %s214, %s216
    %p220 = scmp.eq.s32.totalorder %s19, 0
    %p221 = por %p219, %p220
    %p222 = scmp.ne.s32.totalorder %s214, %s216
    %p223 = scmp.eq.s32.totalorder %s24, 3
    %p224 = por %p222, %p223
    %p225 = scmp.ne.s32.totalorder %s216, %s217
    %p226 = scmp.eq.s32.totalorder %s24, 0
    %p227 = por %p225, %p226
    %p228 = scmp.ne.s32.totalorder %s216, %s217
    %p229 = scmp.eq.s32.totalorder %s25, 3
    %p230 = por %p228, %p229
    %p232 = scmp.ne.s32.totalorder %s217, %s231
    %p233 = scmp.eq.s32.totalorder %s25, 0
    %p234 = por %p232, %p233
    %s236 = sadd.s32 %s235, 1
    %p239 = scmp.eq.s32.totalorder %s19, 3
    %p240 = scmp.ne.s32.totalorder %s235, %s237
    %p241 = scmp.eq.s32.totalorder %s19, 0
    %p242 = por %p240, %p241
    %p243 = scmp.ne.s32.totalorder %s235, %s237
    %p244 = scmp.eq.s32.totalorder %s24, 3
    %p245 = por %p243, %p244
    %p246 = scmp.ne.s32.totalorder %s237, %s238
    %p247 = scmp.eq.s32.totalorder %s24, 0
    %p248 = por %p246, %p247
    %p249 = scmp.ne.s32.totalorder %s237, %s238
    %p250 = scmp.eq.s32.totalorder %s25, 3
    %p251 = por %p249, %p250
    %p253 = scmp.ne.s32.totalorder %s238, %s252
    %p254 = scmp.eq.s32.totalorder %s25, 0
    %p255 = por %p253, %p254
    %s256 = ssub.s32 %s26, %s38
    %s257 = ssub.s32 %s27, %s34
    %s258 = sor.u32 %s256, %s257
    %p259 = scmp.eq.s32.totalorder %s258, 0
    %s261 = sadd.s32 %s260, 1
    %s262 = scalar_select %p259, %s260, %s261
    %p265 = pneg %p259
    %p266 = scmp.eq.s32.totalorder %s19, 3
    %p267 = por %p265, %p266
    %p268 = scmp.ne.s32.totalorder %s260, %s263
    %p269 = scmp.eq.s32.totalorder %s19, 0
    %p270 = por %p268, %p269
    %p271 = scmp.ne.s32.totalorder %s260, %s263
    %p272 = scmp.eq.s32.totalorder %s24, 3
    %p273 = por %p271, %p272
    %p274 = scmp.ne.s32.totalorder %s263, %s264
    %p275 = scmp.eq.s32.totalorder %s24, 0
    %p276 = por %p274, %p275
    %p277 = scmp.ne.s32.totalorder %s263, %s264
    %p278 = scmp.eq.s32.totalorder %s25, 3
    %p279 = por %p277, %p278
    %p281 = scmp.ne.s32.totalorder %s264, %s280
    %p282 = scmp.eq.s32.totalorder %s25, 0
    %p283 = por %p281, %p282
    %s284 = ssub.s32 %s26, %s38
    %s285 = ssub.s32 %s27, %s34
    %s286 = sor.u32 %s284, %s285
    %p287 = scmp.eq.s32.totalorder %s286, 0
    %s289 = sadd.s32 %s288, 1
    %s290 = scalar_select %p287, %s288, %s289
    %p293 = pneg %p287
    %p294 = scmp.eq.s32.totalorder %s19, 3
    %p295 = por %p293, %p294
    %p296 = scmp.ne.s32.totalorder %s288, %s291
    %p297 = scmp.eq.s32.totalorder %s19, 0
    %p298 = por %p296, %p297
    %p299 = scmp.ne.s32.totalorder %s288, %s291
    %p300 = scmp.eq.s32.totalorder %s24, 3
    %p301 = por %p299, %p300
    %p302 = scmp.ne.s32.totalorder %s291, %s292
    %p303 = scmp.eq.s32.totalorder %s24, 0
    %p304 = por %p302, %p303
    %p305 = scmp.ne.s32.totalorder %s291, %s292
    %p306 = scmp.eq.s32.totalorder %s25, 3
    %p307 = por %p305, %p306
    %p309 = scmp.ne.s32.totalorder %s292, %s308
    %p310 = scmp.eq.s32.totalorder %s25, 0
    %p311 = por %p309, %p310
    %s312 = ssub.s32 %s26, %s38
    %s313 = ssub.s32 %s27, %s34
    %s314 = sor.u32 %s312, %s313
    %p315 = scmp.eq.s32.totalorder %s314, 0
    %s317 = sadd.s32 %s316, 1
    %s318 = scalar_select %p315, %s316, %s317
    %p321 = pneg %p315
    %p322 = scmp.eq.s32.totalorder %s19, 3
    %p323 = por %p321, %p322
    %p324 = scmp.ne.s32.totalorder %s316, %s319
    %p325 = scmp.eq.s32.totalorder %s19, 0
    %p326 = por %p324, %p325
    %p327 = scmp.ne.s32.totalorder %s316, %s319
    %p328 = scmp.eq.s32.totalorder %s24, 3
    %p329 = por %p327, %p328
    %p330 = scmp.ne.s32.totalorder %s319, %s320
    %p331 = scmp.eq.s32.totalorder %s24, 0
    %p332 = por %p330, %p331
    %p333 = scmp.ne.s32.totalorder %s319, %s320
    %p334 = scmp.eq.s32.totalorder %s25, 3
    %p335 = por %p333, %p334
    %p337 = scmp.ne.s32.totalorder %s320, %s336
    %p338 = scmp.eq.s32.totalorder %s25, 0
    %p339 = por %p337, %p338
    %p340 = scmp.le.s32.totalorder 1, %s19
    %p341 = scmp.lt.s32.totalorder %s19, 5
    %p342 = pnand %p340, %p341
    %p343 = pneg %p342
    // Predicated region
    $region9: #{deeplatte_forward.3} parent=5 // pred_check
      _
    $region10: #{deeplatte_forward.3} parent=5 // pred_check_branch
      %345 = sbr.rel (%p342) target = $region12
    $region11: #{deeplatte_forward.3} parent=5 // pred_region
      %s346 = ssub.s32 %s19, 1
      // Predicated region
      $region13: #{deeplatte_forward.3} parent=11 // pred_check
        %p347 = pneg %p80
      $region14: #{deeplatte_forward.3} parent=11 // pred_check_branch
        %349 = sbr.rel (%p347) target = $region16
      $region15: #{deeplatte_forward.3} parent=11 // pred_region
        _
      $region16: #{deeplatte_forward.3} parent=11 // pred_fallthru
        _
      // Predicated region
      $region17: #{deeplatte_forward.3} parent=11 // pred_check
        %p350 = pneg %p101
      $region18: #{deeplatte_forward.3} parent=11 // pred_check_branch
        %352 = sbr.rel (%p350) target = $region20
      $region19: #{deeplatte_forward.3} parent=11 // pred_region
        _
      $region20: #{deeplatte_forward.3} parent=11 // pred_fallthru
        _
      // Predicated region
      $region21: #{deeplatte_forward.3} parent=11 // pred_check
        %p353 = pneg %p122
      $region22: #{deeplatte_forward.3} parent=11 // pred_check_branch
        %355 = sbr.rel (%p353) target = $region24
      $region23: #{deeplatte_forward.3} parent=11 // pred_region
        _
      $region24: #{deeplatte_forward.3} parent=11 // pred_fallthru
        _
      // Predicated region
      $region25: #{deeplatte_forward.3} parent=11 // pred_check
        %p356 = pneg %p143
      $region26: #{deeplatte_forward.3} parent=11 // pred_check_branch
        %358 = sbr.rel (%p356) target = $region28
      $region27: #{deeplatte_forward.3} parent=11 // pred_region
        _
      $region28: #{deeplatte_forward.3} parent=11 // pred_fallthru
        _
      // Predicated region
      $region29: #{deeplatte_forward.3} parent=11 // pred_check
        %p359 = pneg %p164
      $region30: #{deeplatte_forward.3} parent=11 // pred_check_branch
        %361 = sbr.rel (%p359) target = $region32
      $region31: #{deeplatte_forward.3} parent=11 // pred_region
        _
      $region32: #{deeplatte_forward.3} parent=11 // pred_fallthru
        _
      // Predicated region
      $region33: #{deeplatte_forward.3} parent=11 // pred_check
        %p362 = pneg %p185
      $region34: #{deeplatte_forward.3} parent=11 // pred_check_branch
        %364 = sbr.rel (%p362) target = $region36
      $region35: #{deeplatte_forward.3} parent=11 // pred_region
        _
      $region36: #{deeplatte_forward.3} parent=11 // pred_fallthru
        _
      // Predicated region
      $region37: #{deeplatte_forward.3} parent=11 // pred_check
        %p365 = pneg %p206
      $region38: #{deeplatte_forward.3} parent=11 // pred_check_branch
        %367 = sbr.rel (%p365) target = $region40
      $region39: #{deeplatte_forward.3} parent=11 // pred_region
        _
      $region40: #{deeplatte_forward.3} parent=11 // pred_fallthru
        _
      // Predicated region
      $region41: #{deeplatte_forward.3} parent=11 // pred_check
        %p368 = pneg %p227
      $region42: #{deeplatte_forward.3} parent=11 // pred_check_branch
        %370 = sbr.rel (%p368) target = $region44
      $region43: #{deeplatte_forward.3} parent=11 // pred_region
        _
      $region44: #{deeplatte_forward.3} parent=11 // pred_fallthru
        _
      // Predicated region
      $region45: #{deeplatte_forward.3} parent=11 // pred_check
        %p371 = pneg %p248
      $region46: #{deeplatte_forward.3} parent=11 // pred_check_branch
        %373 = sbr.rel (%p371) target = $region48
      $region47: #{deeplatte_forward.3} parent=11 // pred_region
        _
      $region48: #{deeplatte_forward.3} parent=11 // pred_fallthru
        _
    $region12: #{deeplatte_forward.3} parent=5 // pred_fallthru
      _
    %p374 = scmp.lt.s32.totalorder %s19, 4
    // Predicated region
    $region49: #{deeplatte_forward.3} parent=5 // pred_check
      %p375 = pneg %p374
    $region50: #{deeplatte_forward.3} parent=5 // pred_check_branch
      %377 = sbr.rel (%p375) target = $region52
    $region51: #{deeplatte_forward.3} parent=5 // pred_region
      // Predicated region
      $region53: #{deeplatte_forward.3} parent=51 // pred_check
        %p378 = pneg %p53
      $region54: #{deeplatte_forward.3} parent=51 // pred_check_branch
        %380 = sbr.rel (%p378) target = $region56
      $region55: #{deeplatte_forward.3} parent=51 // pred_region
        %p381 = scmp.lt.s32.totalorder %s26, 3
        %s382 = scalar_select %p381, %s26, 3
        %p383 = scmp.lt.s32.totalorder %s27, 0
        %s384 = scalar_select %p383, %s27, 0
        %s385 = sadd.s32 %s384, %s382
        %s386 = smul.addr %s385, 4
        %s387 = scalar_lea.vmem %s0, %s386
      $region56: #{deeplatte_forward.3} parent=51 // pred_fallthru
        _
    $region52: #{deeplatte_forward.3} parent=5 // pred_fallthru
      _
    %p388 = scmp.le.s32.totalorder 1, %s19
    %p389 = scmp.lt.s32.totalorder %s19, 5
    %p390 = pnand %p388, %p389
    %p391 = pneg %p390
    // Predicated region
    $region57: #{deeplatte_forward.3} parent=5 // pred_check
      _
    $region58: #{deeplatte_forward.3} parent=5 // pred_check_branch
      %393 = sbr.rel (%p390) target = $region60
    $region59: #{deeplatte_forward.3} parent=5 // pred_region
      %s394 = ssub.s32 %s19, 1
      %p395 = scmp.lt.s32.totalorder %s28, 3
      %s396 = scalar_select %p395, %s28, 3
      %p397 = scmp.lt.s32.totalorder %s29, 0
      %s398 = scalar_select %p397, %s29, 0
      %s399 = sadd.s32 %s398, %s396
      %s400 = smul.addr %s399, 4
      %s401 = scalar_lea.vmem %s0, %s400
      %p402 = pneg %p59
      %p403 = pneg %p56
      %p404 = pneg %p80
      %p405 = pneg %p77
      %p406 = pneg %p101
      %p407 = pneg %p98
      %p408 = pneg %p122
      %p409 = pneg %p119
      %p410 = pneg %p143
      %p411 = pneg %p140
      %p412 = pneg %p164
      %p413 = pneg %p161
      %p414 = pneg %p185
      %p415 = pneg %p182
      %p416 = pneg %p206
      %p417 = pneg %p203
      %p418 = pneg %p227
      %p419 = pneg %p224
      %p420 = pneg %p248
      %p421 = pneg %p245
      %p422 = pneg %p276
      %p423 = pneg %p273
      %p424 = scmp.lt.s32.totalorder %s28, 3
      %s425 = scalar_select %p424, %s28, 3
      %p426 = scmp.lt.s32.totalorder %s29, 0
      %s427 = scalar_select %p426, %s29, 0
      %s428 = sadd.s32 %s427, %s425
      %s429 = smul.addr %s428, 4
      %s430 = scalar_lea.vmem %s10, %s429
      %p431 = pneg %p304
      %p432 = pneg %p301
      %p433 = scmp.lt.s32.totalorder %s28, 3
      %s434 = scalar_select %p433, %s28, 3
      %p435 = scmp.lt.s32.totalorder %s29, 0
      %s436 = scalar_select %p435, %s29, 0
      %s437 = sadd.s32 %s436, %s434
      %s438 = smul.addr %s437, 8
      %s439 = scalar_lea.vmem %s11, %s438
      %p440 = pneg %p332
      %p441 = pneg %p329
      %p442 = scmp.lt.s32.totalorder %s28, 3
      %s443 = scalar_select %p442, %s28, 3
      %p444 = scmp.lt.s32.totalorder %s29, 0
      %s445 = scalar_select %p444, %s29, 0
      %s446 = sadd.s32 %s445, %s443
      %s447 = smul.addr %s446, 4
      %s448 = scalar_lea.vmem %s12, %s447
      %p449 = scmp.lt.s32.totalorder %s28, 3
      %s450 = scalar_select %p449, %s28, 3
      %p451 = scmp.lt.s32.totalorder %s29, 0
      %s452 = scalar_select %p451, %s29, 0
      %s453 = sadd.s32 %s452, %s450
      %s454 = smul.addr %s453, 4
      %s455 = scalar_lea.vmem %s0, %s454
      %p456 = scmp.lt.s32.totalorder %s28, 3
      %s457 = scalar_select %p456, %s28, 3
      %p458 = scmp.lt.s32.totalorder %s29, 0
      %s459 = scalar_select %p458, %s29, 0
      %s460 = sadd.s32 %s459, %s457
      %s461 = smul.addr %s460, 4
      %s462 = scalar_lea.vmem %s10, %s461
      %p463 = scmp.lt.s32.totalorder %s28, 3
      %s464 = scalar_select %p463, %s28, 3
      %p465 = scmp.lt.s32.totalorder %s29, 0
      %s466 = scalar_select %p465, %s29, 0
      %s467 = sadd.s32 %s466, %s464
      %s468 = smul.addr %s467, 8
      %s469 = scalar_lea.vmem %s11, %s468
      %p470 = scmp.lt.s32.totalorder %s28, 3
      %s471 = scalar_select %p470, %s28, 3
      %p472 = scmp.lt.s32.totalorder %s29, 0
      %s473 = scalar_select %p472, %s29, 0
      %s474 = sadd.s32 %s473, %s471
      %s475 = smul.addr %s474, 4
      %s476 = scalar_lea.vmem %s12, %s475
      %v478 = vld [vmem:[%s455] sm:$0xf]
      %v479 = vld [vmem:[%s1] sm:$0xf]
      %481 = vset.pattern.permute.xlu0 0
      %482 = vperm.xlu0 %481, %v479
      %v483 = vpop.permute.xlu0 %482
      %v485 = vmul.f32 %v478, %v483
      %486 = vst [vmem:[%s462] sm:$0xf] %v485
      %v487 = vld [vmem:[%s2] sm:$0xf]
      %v488 = vld [vmem:[%s2 + $0x4] sm:$0xf]
      %v489 = vpack.c.bf16 %v485, %v485
      %v490 = vld [vmem:[%s3] sm:$0xff]
      %v491 = vld [vmem:[%s3 + $0x8] sm:$0xff]
      %493 = vset.pattern.permute.xlu0 0
      %494 = vperm.xlu0 %493, %v490
      %v495 = vpop.permute.xlu0 %494
      %498 = vset.pattern.permute.xlu0 0
      %499 = vperm.xlu0 %498, %v491
      %v500 = vpop.permute.xlu0 %499
      %v504 = vunpack.c.l.b16 %v487
      %v505 = vunpack.c.l.b16 %v488
      %v506 = vpack.c.b16 %v505, %v504
      %vm507 = vcmask 31744
      %v509 = vsel %vm507, %v506, 0
      %vm511 = vcmask 1041408
      %v513 = vsel %vm511, %v489, 0
      %515 = vmatprep.subr.bf16.mxu0 0
      %516 = vmatpush1.bf16.msra.mxu0 %v513
      %517 = vmatprep.subr.bf16.mxu0 0
      %518 = vmatpush1.bf16.msra.mxu0 0
      %519 = vmatprep.subr.bf16.mxu0 0
      %520 = vmatpush1.bf16.msra.mxu0 0
      %521 = vmatprep.subr.bf16.mxu0 0
      %522 = vmatpush1.bf16.msra.mxu0 0
      %523 = vmatprep.subr.bf16.mxu0 0
      %524 = vmatpush1.bf16.msra.mxu0 0
      %525 = vmatprep.subr.bf16.mxu0 0
      %526 = vmatpush1.bf16.msra.mxu0 0
      %527 = vmatprep.subr.bf16.mxu0 0
      %528 = vmatpush1.bf16.msra.mxu0 0
      %529 = vmatprep.subr.bf16.mxu0 0
      %530 = vmatpush1.bf16.msra.mxu0 0
      %531 = vmatprep.subr.bf16.mxu0 0
      %532 = vmatpush1.bf16.msra.mxu0 0
      %533 = vmatprep.subr.bf16.mxu0 0
      %534 = vmatpush1.bf16.msra.mxu0 0
      %535 = vmatprep.subr.bf16.mxu0 0
      %536 = vmatpush1.bf16.msra.mxu0 0
      %537 = vmatprep.subr.bf16.mxu0 0
      %538 = vmatpush1.bf16.msra.mxu0 0
      %539 = vmatprep.subr.bf16.mxu0 0
      %540 = vmatpush1.bf16.msra.mxu0 0
      %541 = vmatprep.subr.bf16.mxu0 0
      %542 = vmatpush1.bf16.msra.mxu0 0
      %543 = vmatprep.subr.bf16.mxu0 0
      %544 = vmatpush1.bf16.msra.mxu0 0
      %545 = vmatprep.subr.bf16.mxu0 0
      %546 = vmatpush1.bf16.msra.mxu0 0
      %547 = vmatprep.mubr.bf16.mxu0 0
      %548 = vmatmul.mubr.bf16.gmra.mrb[0].mxu0 %v509
      %v549 = vpop.f32.mrb[0].mxu0
      %v550 = vadd.f32 %v495, %v549
      %v551 = vpop.f32.mrb[0].mxu0
      %v552 = vpop.f32.mrb[0].mxu0
      %v553 = vadd.f32 %v500, %v552
      %v554 = vpop.f32.mrb[0].mxu0
      %555 = vdwg.mxu0
      %v556 = vmax.f32 %v550, 0.0
      %v557 = vmax.f32 %v553, 0.0
      %v558 = vld [vmem:[%s4] sm:$0xf]
      %v559 = vpack.c.bf16 %v557, %v556
      %v560 = vld [vmem:[%s5] sm:$0xff]
      %562 = vset.pattern.permute.xlu0 0
      %563 = vperm.xlu0 %562, %v560
      %v564 = vpop.permute.xlu0 %563
      %vm566 = vcmask 130048
      %v568 = vsel %vm566, %v558, 0
      %570 = vmatprep.subr.bf16.mxu0 0
      %571 = vmatpush1.bf16.msra.mxu0 %v559
      %572 = vmatprep.subr.bf16.mxu0 0
      %573 = vmatpush1.bf16.msra.mxu0 0
      %574 = vmatprep.subr.bf16.mxu0 0
      %575 = vmatpush1.bf16.msra.mxu0 0
      %576 = vmatprep.subr.bf16.mxu0 0
      %577 = vmatpush1.bf16.msra.mxu0 0
      %578 = vmatprep.subr.bf16.mxu0 0
      %579 = vmatpush1.bf16.msra.mxu0 0
      %580 = vmatprep.subr.bf16.mxu0 0
      %581 = vmatpush1.bf16.msra.mxu0 0
      %582 = vmatprep.subr.bf16.mxu0 0
      %583 = vmatpush1.bf16.msra.mxu0 0
      %584 = vmatprep.subr.bf16.mxu0 0
      %585 = vmatpush1.bf16.msra.mxu0 0
      %586 = vmatprep.subr.bf16.mxu0 0
      %587 = vmatpush1.bf16.msra.mxu0 0
      %588 = vmatprep.subr.bf16.mxu0 0
      %589 = vmatpush1.bf16.msra.mxu0 0
      %590 = vmatprep.subr.bf16.mxu0 0
      %591 = vmatpush1.bf16.msra.mxu0 0
      %592 = vmatprep.subr.bf16.mxu0 0
      %593 = vmatpush1.bf16.msra.mxu0 0
      %594 = vmatprep.subr.bf16.mxu0 0
      %595 = vmatpush1.bf16.msra.mxu0 0
      %596 = vmatprep.subr.bf16.mxu0 0
      %597 = vmatpush1.bf16.msra.mxu0 0
      %598 = vmatprep.subr.bf16.mxu0 0
      %599 = vmatpush1.bf16.msra.mxu0 0
      %600 = vmatprep.subr.bf16.mxu0 0
      %601 = vmatpush1.bf16.msra.mxu0 0
      %602 = vmatprep.mubr.bf16.mxu0 0
      %603 = vmatmul.mubr.bf16.gmra.mrb[0].mxu0 %v568
      %v604 = vpop.f32.mrb[0].mxu0
      %v605 = vadd.f32 %v564, %v604
      %v606 = vpop.f32.mrb[0].mxu0
      %v607 = vpop.f32.mrb[0].mxu0
      %v608 = vpop.f32.mrb[0].mxu0
      %609 = vdwg.mxu0
      %v610 = vmax.f32 %v605, 0.0
      %611 = vst [vmem:[%s469] sm:$0xff] %v610
      %v612 = vld [vmem:[%s6] sm:$0xf]
      %v613 = vld [vmem:[%s6 + $0x4] sm:$0xf]
      %v614 = vpack.c.bf16 %v610, %v610
      %v615 = vld [vmem:[%s7] sm:$0xff]
      %v616 = vld [vmem:[%s7 + $0x8] sm:$0xff]
      %618 = vset.pattern.permute.xlu0 0
      %619 = vperm.xlu0 %618, %v615
      %v620 = vpop.permute.xlu0 %619
      %623 = vset.pattern.permute.xlu0 0
      %624 = vperm.xlu0 %623, %v616
      %v625 = vpop.permute.xlu0 %624
      %v629 = vunpack.c.l.b16 %v612
      %v630 = vunpack.c.l.b16 %v613
      %v631 = vpack.c.b16 %v630, %v629
      %vm632 = vcmask 64512
      %v634 = vsel %vm632, %v631, 0
      %vm636 = vcmask 1043456
      %v638 = vsel %vm636, %v614, 0
      %640 = vmatprep.subr.bf16.mxu0 0
      %641 = vmatpush1.bf16.msra.mxu0 %v638
      %642 = vmatprep.subr.bf16.mxu0 0
      %643 = vmatpush1.bf16.msra.mxu0 0
      %644 = vmatprep.subr.bf16.mxu0 0
      %645 = vmatpush1.bf16.msra.mxu0 0
      %646 = vmatprep.subr.bf16.mxu0 0
      %647 = vmatpush1.bf16.msra.mxu0 0
      %648 = vmatprep.subr.bf16.mxu0 0
      %649 = vmatpush1.bf16.msra.mxu0 0
      %650 = vmatprep.subr.bf16.mxu0 0
      %651 = vmatpush1.bf16.msra.mxu0 0
      %652 = vmatprep.subr.bf16.mxu0 0
      %653 = vmatpush1.bf16.msra.mxu0 0
      %654 = vmatprep.subr.bf16.mxu0 0
      %655 = vmatpush1.bf16.msra.mxu0 0
      %656 = vmatprep.subr.bf16.mxu0 0
      %657 = vmatpush1.bf16.msra.mxu0 0
      %658 = vmatprep.subr.bf16.mxu0 0
      %659 = vmatpush1.bf16.msra.mxu0 0
      %660 = vmatprep.subr.bf16.mxu0 0
      %661 = vmatpush1.bf16.msra.mxu0 0
      %662 = vmatprep.subr.bf16.mxu0 0
      %663 = vmatpush1.bf16.msra.mxu0 0
      %664 = vmatprep.subr.bf16.mxu0 0
      %665 = vmatpush1.bf16.msra.mxu0 0
      %666 = vmatprep.subr.bf16.mxu0 0
      %667 = vmatpush1.bf16.msra.mxu0 0
      %668 = vmatprep.subr.bf16.mxu0 0
      %669 = vmatpush1.bf16.msra.mxu0 0
      %670 = vmatprep.subr.bf16.mxu0 0
      %671 = vmatpush1.bf16.msra.mxu0 0
      %672 = vmatprep.mubr.bf16.mxu0 0
      %673 = vmatmul.mubr.bf16.gmra.mrb[0].mxu0 %v634
      %v674 = vpop.f32.mrb[0].mxu0
      %v675 = vadd.f32 %v620, %v674
      %v676 = vpop.f32.mrb[0].mxu0
      %v677 = vpop.f32.mrb[0].mxu0
      %v678 = vadd.f32 %v625, %v677
      %v679 = vpop.f32.mrb[0].mxu0
      %680 = vdwg.mxu0
      %v681 = vmax.f32 %v675, 0.0
      %v682 = vmax.f32 %v678, 0.0
      %v683 = vld [vmem:[%s8] sm:$0x3]
      %v684 = vpack.c.bf16 %v682, %v681
      %v685 = vld [vmem:[%s9] sm:$0xf]
      %687 = vset.pattern.permute.xlu0 0
      %688 = vperm.xlu0 %687, %v685
      %v689 = vpop.permute.xlu0 %688
      %v692 = vsel %vm566, %v683, 0
      %694 = vmatprep.subr.bf16.mxu0 0
      %695 = vmatpush1.bf16.msra.mxu0 %v684
      %696 = vmatprep.subr.bf16.mxu0 0
      %697 = vmatpush1.bf16.msra.mxu0 0
      %698 = vmatprep.subr.bf16.mxu0 0
      %699 = vmatpush1.bf16.msra.mxu0 0
      %700 = vmatprep.subr.bf16.mxu0 0
      %701 = vmatpush1.bf16.msra.mxu0 0
      %702 = vmatprep.subr.bf16.mxu0 0
      %703 = vmatpush1.bf16.msra.mxu0 0
      %704 = vmatprep.subr.bf16.mxu0 0
      %705 = vmatpush1.bf16.msra.mxu0 0
      %706 = vmatprep.subr.bf16.mxu0 0
      %707 = vmatpush1.bf16.msra.mxu0 0
      %708 = vmatprep.subr.bf16.mxu0 0
      %709 = vmatpush1.bf16.msra.mxu0 0
      %710 = vmatprep.subr.bf16.mxu0 0
      %711 = vmatpush1.bf16.msra.mxu0 0
      %712 = vmatprep.subr.bf16.mxu0 0
      %713 = vmatpush1.bf16.msra.mxu0 0
      %714 = vmatprep.subr.bf16.mxu0 0
      %715 = vmatpush1.bf16.msra.mxu0 0
      %716 = vmatprep.subr.bf16.mxu0 0
      %717 = vmatpush1.bf16.msra.mxu0 0
      %718 = vmatprep.subr.bf16.mxu0 0
      %719 = vmatpush1.bf16.msra.mxu0 0
      %720 = vmatprep.subr.bf16.mxu0 0
      %721 = vmatpush1.bf16.msra.mxu0 0
      %722 = vmatprep.subr.bf16.mxu0 0
      %723 = vmatpush1.bf16.msra.mxu0 0
      %724 = vmatprep.subr.bf16.mxu0 0
      %725 = vmatpush1.bf16.msra.mxu0 0
      %726 = vmatprep.mubr.bf16.mxu0 0
      %727 = vmatmul.mubr.bf16.gmra.mrb[0].mxu0 %v692
      %v728 = vpop.f32.mrb[0].mxu0
      %v729 = vadd.f32 %v689, %v728
      %v730 = vpop.f32.mrb[0].mxu0
      %v731 = vpop.f32.mrb[0].mxu0
      %v732 = vpop.f32.mrb[0].mxu0
      %733 = vdwg.mxu0
      %v734 = vmax.f32 %v729, 0.0
      %735 = vst [vmem:[%s476] sm:$0xf] %v734
      %p736 = scmp.lt.s32.totalorder %s28, 3
      %s737 = scalar_select %p736, %s28, 3
      %p738 = scmp.lt.s32.totalorder %s29, 0
      %s739 = scalar_select %p738, %s29, 0
      %s740 = sadd.s32 %s739, %s737
      %s741 = smul.addr %s740, 4
      %s742 = scalar_lea.vmem %s10, %s741
      %p743 = scmp.lt.s32.totalorder %s28, 3
      %s744 = scalar_select %p743, %s28, 3
      %p745 = scmp.lt.s32.totalorder %s29, 0
      %s746 = scalar_select %p745, %s29, 0
      %s747 = sadd.s32 %s746, %s744
      %s748 = smul.addr %s747, 8
      %s749 = scalar_lea.vmem %s11, %s748
      %p750 = scmp.lt.s32.totalorder %s28, 3
      %s751 = scalar_select %p750, %s28, 3
      %p752 = scmp.lt.s32.totalorder %s29, 0
      %s753 = scalar_select %p752, %s29, 0
      %s754 = sadd.s32 %s753, %s751
      %s755 = smul.addr %s754, 4
      %s756 = scalar_lea.vmem %s12, %s755
      // Predicated region
      $region61: #{deeplatte_forward.3} parent=59 // pred_check
        %p757 = pneg %p273
      $region62: #{deeplatte_forward.3} parent=59 // pred_check_branch
        %759 = sbr.rel (%p757) target = $region64
      $region63: #{deeplatte_forward.3} parent=59 // pred_region
        _
      $region64: #{deeplatte_forward.3} parent=59 // pred_fallthru
        _
      // Predicated region
      $region65: #{deeplatte_forward.3} parent=59 // pred_check
        %p760 = pneg %p301
      $region66: #{deeplatte_forward.3} parent=59 // pred_check_branch
        %762 = sbr.rel (%p760) target = $region68
      $region67: #{deeplatte_forward.3} parent=59 // pred_region
        _
      $region68: #{deeplatte_forward.3} parent=59 // pred_fallthru
        _
      // Predicated region
      $region69: #{deeplatte_forward.3} parent=59 // pred_check
        %p763 = pneg %p329
      $region70: #{deeplatte_forward.3} parent=59 // pred_check_branch
        %765 = sbr.rel (%p763) target = $region72
      $region71: #{deeplatte_forward.3} parent=59 // pred_region
        _
      $region72: #{deeplatte_forward.3} parent=59 // pred_fallthru
        _
    $region60: #{deeplatte_forward.3} parent=5 // pred_fallthru
      _
    %p766 = scmp.le.s32.totalorder 2, %s19
    // Predicated region
    $region73: #{deeplatte_forward.3} parent=5 // pred_check
      %p767 = pneg %p766
    $region74: #{deeplatte_forward.3} parent=5 // pred_check_branch
      %769 = sbr.rel (%p767) target = $region76
    $region75: #{deeplatte_forward.3} parent=5 // pred_region
      %s770 = ssub.s32 %s19, 2
      // Predicated region
      $region77: #{deeplatte_forward.3} parent=75 // pred_check
        %p771 = pneg %p279
      $region78: #{deeplatte_forward.3} parent=75 // pred_check_branch
        %773 = sbr.rel (%p771) target = $region80
      $region79: #{deeplatte_forward.3} parent=75 // pred_region
        %p774 = scmp.lt.s32.totalorder %s30, 3
        %s775 = scalar_select %p774, %s30, 3
        %p776 = scmp.lt.s32.totalorder %s31, 0
        %s777 = scalar_select %p776, %s31, 0
        %s778 = sadd.s32 %s777, %s775
        %s779 = smul.addr %s778, 4
        %s780 = scalar_lea.vmem %s10, %s779
      $region80: #{deeplatte_forward.3} parent=75 // pred_fallthru
        _
      // Predicated region
      $region81: #{deeplatte_forward.3} parent=75 // pred_check
        %p781 = pneg %p307
      $region82: #{deeplatte_forward.3} parent=75 // pred_check_branch
        %783 = sbr.rel (%p781) target = $region84
      $region83: #{deeplatte_forward.3} parent=75 // pred_region
        %p784 = scmp.lt.s32.totalorder %s30, 3
        %s785 = scalar_select %p784, %s30, 3
        %p786 = scmp.lt.s32.totalorder %s31, 0
        %s787 = scalar_select %p786, %s31, 0
        %s788 = sadd.s32 %s787, %s785
        %s789 = smul.addr %s788, 8
        %s790 = scalar_lea.vmem %s11, %s789
      $region84: #{deeplatte_forward.3} parent=75 // pred_fallthru
        _
      // Predicated region
      $region85: #{deeplatte_forward.3} parent=75 // pred_check
        %p791 = pneg %p335
      $region86: #{deeplatte_forward.3} parent=75 // pred_check_branch
        %793 = sbr.rel (%p791) target = $region88
      $region87: #{deeplatte_forward.3} parent=75 // pred_region
        %p794 = scmp.lt.s32.totalorder %s30, 3
        %s795 = scalar_select %p794, %s30, 3
        %p796 = scmp.lt.s32.totalorder %s31, 0
        %s797 = scalar_select %p796, %s31, 0
        %s798 = sadd.s32 %s797, %s795
        %s799 = smul.addr %s798, 4
        %s800 = scalar_lea.vmem %s12, %s799
      $region88: #{deeplatte_forward.3} parent=75 // pred_fallthru
        _
    $region76: #{deeplatte_forward.3} parent=5 // pred_fallthru
      _
  $region6: #{deeplatte_forward.3} parent=0 // loop_footer
    %s23 = sadd.s32 1, %s19
  $region7: #{deeplatte_forward.3} parent=0 // loop_footer_branch
    %18 = sbr.rel target = $region3
  $region8: #{deeplatte_forward.3} parent=0 // loop_exit
    _

// kernel: deeplatte_forward.4
$region0: #{deeplatte_forward.4}
  #allocation0 [shape = 'u32[]', space=smem, size = 0x4, offset = 0x4, fixed_abs, tag = 'smem constant byte address 0x4 - core index']
  #allocation1 [shape = 'u32[144,128]{1,0:T(1,128)}', space=vmem, size = 0x12000, scoped, tag = 'internal scratch']
  #allocation2 [shape = 'bf16[400,128]{1,0:T(16,128)(2,1)}', space=vmem, size = 0x19000, scoped, tag = 'scratch operand']
  %s0 = inlined_call_operand.vmem [shape: f32[4,8,128], index: 0, kind: input, shape index: {}]
  %s1 = inlined_call_operand.vmem [shape: f32[25,1,128], index: 1, kind: input, shape index: {}]
  %s2 = inlined_call_operand.vmem [shape: bf16[2,32,400], index: 2, kind: input, shape index: {}]
  %s3 = inlined_call_operand.vmem [shape: f32[2,32,1], index: 3, kind: input, shape index: {}]
  %s4 = inlined_call_operand.vmem [shape: f32[2,8,128], index: 4, kind: output, shape index: {}]
  %s5 = sld [smem:[#allocation0]]
  $region49: #{deeplatte_forward.4} parent=0
    _
  %s7 = ssub.s32 1, %s5
  %s8 = scalar_select 0, %s7, %s5
  loop: start=0, step=1, limit=4
  $region2: #{deeplatte_forward.4} parent=0 // loop_pre_header
    _
  $region3: #{deeplatte_forward.4} parent=0 // loop_header
    %s10 = sphi 0, %s14
    %p11 = scmp.ge.s32.totalorder %s10, 4
    %s18 = sphi 0, %s18
    %s20 = sphi 0, %s18
    %s21 = sphi 0, %s20
    %s35 = sphi 0, %s21
    %s39 = sphi 0, %s39
    %s41 = sphi 0, %s39
    %s42 = sphi 0, %s41
    %s56 = sphi 0, %s42
    %s62 = sphi 0, %s64
    %s65 = sphi 0, %s62
    %s66 = sphi 0, %s65
    %s82 = sphi 0, %s66
    %s88 = sphi 0, %s90
    %s91 = sphi 0, %s88
    %s92 = sphi 0, %s91
    %s108 = sphi 0, %s92
    %s114 = sphi 0, %s116
    %s117 = sphi 0, %s114
    %s118 = sphi 0, %s117
    %s134 = sphi 0, %s118
  $region4: #{deeplatte_forward.4} parent=0 // loop_header_branch
    %13 = sbr.rel (%p11) target = $region8
  $region5: #{deeplatte_forward.4} parent=0 // loop_body
    %s15 = ssub.s32 %s10, 1
    %s16 = ssub.s32 %s10, 2
    %s17 = sadd.s32 %s10, 1
    %s19 = sadd.s32 %s18, 1
    %p22 = scmp.eq.s32.totalorder %s10, 1
    %p23 = scmp.ne.s32.totalorder %s18, %s20
    %p24 = scmp.eq.s32.totalorder %s10, 0
    %p25 = por %p23, %p24
    %p26 = scmp.ne.s32.totalorder %s18, %s20
    %p27 = scmp.eq.s32.totalorder %s15, 1
    %p28 = por %p26, %p27
    %p29 = scmp.ne.s32.totalorder %s20, %s21
    %p30 = scmp.eq.s32.totalorder %s15, 0
    %p31 = por %p29, %p30
    %p32 = scmp.ne.s32.totalorder %s20, %s21
    %p33 = scmp.eq.s32.totalorder %s16, 1
    %p34 = por %p32, %p33
    %p36 = scmp.ne.s32.totalorder %s21, %s35
    %p37 = scmp.eq.s32.totalorder %s16, 0
    %p38 = por %p36, %p37
    %s40 = sadd.s32 %s39, 1
    %p43 = scmp.eq.s32.totalorder %s10, 1
    %p44 = scmp.ne.s32.totalorder %s39, %s41
    %p45 = scmp.eq.s32.totalorder %s10, 0
    %p46 = por %p44, %p45
    %p47 = scmp.ne.s32.totalorder %s39, %s41
    %p48 = scmp.eq.s32.totalorder %s15, 1
    %p49 = por %p47, %p48
    %p50 = scmp.ne.s32.totalorder %s41, %s42
    %p51 = scmp.eq.s32.totalorder %s15, 0
    %p52 = por %p50, %p51
    %p53 = scmp.ne.s32.totalorder %s41, %s42
    %p54 = scmp.eq.s32.totalorder %s16, 1
    %p55 = por %p53, %p54
    %p57 = scmp.ne.s32.totalorder %s42, %s56
    %p58 = scmp.eq.s32.totalorder %s16, 0
    %p59 = por %p57, %p58
    %s60 = ssub.s32 %s10, %s17
    %p61 = scmp.eq.s32.totalorder %s60, 0
    %s63 = sadd.s32 %s62, 1
    %s64 = scalar_select %p61, %s62, %s63
    %p67 = pneg %p61
    %p68 = scmp.eq.s32.totalorder %s10, 1
    %p69 = por %p67, %p68
    %p70 = scmp.ne.s32.totalorder %s62, %s65
    %p71 = scmp.eq.s32.totalorder %s10, 0
    %p72 = por %p70, %p71
    %p73 = scmp.ne.s32.totalorder %s62, %s65
    %p74 = scmp.eq.s32.totalorder %s15, 1
    %p75 = por %p73, %p74
    %p76 = scmp.ne.s32.totalorder %s65, %s66
    %p77 = scmp.eq.s32.totalorder %s15, 0
    %p78 = por %p76, %p77
    %p79 = scmp.ne.s32.totalorder %s65, %s66
    %p80 = scmp.eq.s32.totalorder %s16, 1
    %p81 = por %p79, %p80
    %p83 = scmp.ne.s32.totalorder %s66, %s82
    %p84 = scmp.eq.s32.totalorder %s16, 0
    %p85 = por %p83, %p84
    %s86 = ssub.s32 %s10, %s17
    %p87 = scmp.eq.s32.totalorder %s86, 0
    %s89 = sadd.s32 %s88, 1
    %s90 = scalar_select %p87, %s88, %s89
    %p93 = pneg %p87
    %p94 = scmp.eq.s32.totalorder %s10, 1
    %p95 = por %p93, %p94
    %p96 = scmp.ne.s32.totalorder %s88, %s91
    %p97 = scmp.eq.s32.totalorder %s10, 0
    %p98 = por %p96, %p97
    %p99 = scmp.ne.s32.totalorder %s88, %s91
    %p100 = scmp.eq.s32.totalorder %s15, 1
    %p101 = por %p99, %p100
    %p102 = scmp.ne.s32.totalorder %s91, %s92
    %p103 = scmp.eq.s32.totalorder %s15, 0
    %p104 = por %p102, %p103
    %p105 = scmp.ne.s32.totalorder %s91, %s92
    %p106 = scmp.eq.s32.totalorder %s16, 1
    %p107 = por %p105, %p106
    %p109 = scmp.ne.s32.totalorder %s92, %s108
    %p110 = scmp.eq.s32.totalorder %s16, 0
    %p111 = por %p109, %p110
    %s112 = ssub.s32 %s10, %s17
    %p113 = scmp.eq.s32.totalorder %s112, 0
    %s115 = sadd.s32 %s114, 1
    %s116 = scalar_select %p113, %s114, %s115
    %p119 = pneg %p113
    %p120 = scmp.eq.s32.totalorder %s10, 1
    %p121 = por %p119, %p120
    %p122 = scmp.ne.s32.totalorder %s114, %s117
    %p123 = scmp.eq.s32.totalorder %s10, 0
    %p124 = por %p122, %p123
    %p125 = scmp.ne.s32.totalorder %s114, %s117
    %p126 = scmp.eq.s32.totalorder %s15, 1
    %p127 = por %p125, %p126
    %p128 = scmp.ne.s32.totalorder %s117, %s118
    %p129 = scmp.eq.s32.totalorder %s15, 0
    %p130 = por %p128, %p129
    %p131 = scmp.ne.s32.totalorder %s117, %s118
    %p132 = scmp.eq.s32.totalorder %s16, 1
    %p133 = por %p131, %p132
    %p135 = scmp.ne.s32.totalorder %s118, %s134
    %p136 = scmp.eq.s32.totalorder %s16, 0
    %p137 = por %p135, %p136
    %p138 = scmp.le.s32.totalorder 1, %s10
    %p139 = scmp.lt.s32.totalorder %s10, 3
    %p140 = pnand %p138, %p139
    %p141 = pneg %p140
    // Predicated region
    $region9: #{deeplatte_forward.4} parent=5 // pred_check
      _
    $region10: #{deeplatte_forward.4} parent=5 // pred_check_branch
      %143 = sbr.rel (%p140) target = $region12
    $region11: #{deeplatte_forward.4} parent=5 // pred_region
      %s144 = ssub.s32 %s10, 1
      // Predicated region
      $region13: #{deeplatte_forward.4} parent=11 // pred_check
        %p145 = pneg %p31
      $region14: #{deeplatte_forward.4} parent=11 // pred_check_branch
        %147 = sbr.rel (%p145) target = $region16
      $region15: #{deeplatte_forward.4} parent=11 // pred_region
        _
      $region16: #{deeplatte_forward.4} parent=11 // pred_fallthru
        _
      // Predicated region
      $region17: #{deeplatte_forward.4} parent=11 // pred_check
        %p148 = pneg %p52
      $region18: #{deeplatte_forward.4} parent=11 // pred_check_branch
        %150 = sbr.rel (%p148) target = $region20
      $region19: #{deeplatte_forward.4} parent=11 // pred_region
        _
      $region20: #{deeplatte_forward.4} parent=11 // pred_fallthru
        _
    $region12: #{deeplatte_forward.4} parent=5 // pred_fallthru
      _
    %p151 = scmp.lt.s32.totalorder %s10, 2
    // Predicated region
    $region21: #{deeplatte_forward.4} parent=5 // pred_check
      %p152 = pneg %p151
    $region22: #{deeplatte_forward.4} parent=5 // pred_check_branch
      %154 = sbr.rel (%p152) target = $region24
    $region23: #{deeplatte_forward.4} parent=5 // pred_region
      // Predicated region
      $region25: #{deeplatte_forward.4} parent=23 // pred_check
        %p155 = pneg %p72
      $region26: #{deeplatte_forward.4} parent=23 // pred_check_branch
        %157 = sbr.rel (%p155) target = $region28
      $region27: #{deeplatte_forward.4} parent=23 // pred_region
        %p158 = scmp.lt.s32.totalorder %s10, 1
        %s159 = scalar_select %p158, %s10, 1
        %s160 = smul.addr %s159, 16
        %s161 = smul.addr %s160, 4
        %s162 = scalar_lea.vmem %s2, %s161
      $region28: #{deeplatte_forward.4} parent=23 // pred_fallthru
        _
      // Predicated region
      $region29: #{deeplatte_forward.4} parent=23 // pred_check
        %p163 = pneg %p98
      $region30: #{deeplatte_forward.4} parent=23 // pred_check_branch
        %165 = sbr.rel (%p163) target = $region32
      $region31: #{deeplatte_forward.4} parent=23 // pred_region
        %p166 = scmp.lt.s32.totalorder %s10, 1
        %s167 = scalar_select %p166, %s10, 1
        %s168 = smul.addr %s167, 4
        %s169 = smul.addr %s168, 8
        %s170 = scalar_lea.vmem %s3, %s169
      $region32: #{deeplatte_forward.4} parent=23 // pred_fallthru
        _
    $region24: #{deeplatte_forward.4} parent=5 // pred_fallthru
      _
    %p171 = scmp.le.s32.totalorder 1, %s10
    %p172 = scmp.lt.s32.totalorder %s10, 3
    %p173 = pnand %p171, %p172
    %p174 = pneg %p173
    // Predicated region
    $region33: #{deeplatte_forward.4} parent=5 // pred_check
      _
    $region34: #{deeplatte_forward.4} parent=5 // pred_check_branch
      %176 = sbr.rel (%p173) target = $region36
    $region35: #{deeplatte_forward.4} parent=5 // pred_region
      %s177 = ssub.s32 %s10, 1
      %p178 = pneg %p31
      %p179 = pneg %p28
      %p180 = pneg %p52
      %p181 = pneg %p49
      %p182 = scmp.lt.s32.totalorder %s15, 1
      %s183 = scalar_select %p182, %s15, 1
      %s184 = smul.addr %s183, 16
      %s185 = smul.addr %s184, 4
      %s186 = scalar_lea.vmem %s2, %s185
      %p187 = pneg %p78
      %p188 = pneg %p75
      %p189 = scmp.lt.s32.totalorder %s15, 1
      %s190 = scalar_select %p189, %s15, 1
      %s191 = smul.addr %s190, 4
      %s192 = smul.addr %s191, 8
      %s193 = scalar_lea.vmem %s3, %s192
      %p194 = pneg %p104
      %p195 = pneg %p101
      %p196 = pneg %p130
      %p197 = pneg %p127
      %p198 = scmp.lt.s32.totalorder %s15, 1
      %s199 = scalar_select %p198, %s15, 1
      %s200 = smul.addr %s199, 8
      %s201 = scalar_lea.vmem %s4, %s200
      %p202 = scmp.lt.s32.totalorder %s15, 1
      %s203 = scalar_select %p202, %s15, 1
      %s204 = smul.addr %s203, 16
      %s205 = smul.addr %s204, 4
      %s206 = scalar_lea.vmem %s2, %s205
      %p207 = scmp.lt.s32.totalorder %s15, 1
      %s208 = scalar_select %p207, %s15, 1
      %s209 = smul.addr %s208, 4
      %s210 = smul.addr %s209, 8
      %s211 = scalar_lea.vmem %s3, %s210
      %p212 = scmp.lt.s32.totalorder %s15, 1
      %s213 = scalar_select %p212, %s15, 1
      %s214 = smul.addr %s213, 8
      %s215 = scalar_lea.vmem %s4, %s214
      %v217 = vld [vmem:[%s0] sm:$0xff]
      %218 = vrot.lane.b32.xlu0 %v217, 18
      %v219 = vpop.permute.xlu0 %218
      %v220 = vld [vmem:[%s1] sm:$0x1]
      %v222 = vlaneseq
      %v223 = vshrl.u32 %v222, 7
      %v224 = vsub.s32 0, %v223
      %v225 = vrot.slane %v220, %v224
      %v227 = vmul.f32 %v219, %v225
      %v228 = vpack.c.bf16 %v227, %v227
      %229 = vst [vmem:[#allocation2] sm:$0xf] %v228
      %230 = vrot.lane.b32.xlu0 %v217, 17
      %v231 = vpop.permute.xlu0 %230
      %s232 = scalar_lea.vmem %s1, 1
      %v233 = vld [vmem:[%s232] sm:$0x1]
      %v235 = vlaneseq
      %v236 = vshrl.u32 %v235, 7
      %v237 = vsub.s32 0, %v236
      %v238 = vrot.slane %v233, %v237
      %v240 = vmul.f32 %v231, %v238
      %v241 = vpack.c.bf16 %v240, %v240
      %v243 = vrot.slane %v241, 4
      %245 = vst [vmem:[#allocation2] sm:$0xf0] %v243
      %246 = vrot.lane.b32.xlu0 %v217, 16
      %v247 = vpop.permute.xlu0 %246
      %s248 = scalar_lea.vmem %s1, 2
      %v249 = vld [vmem:[%s248] sm:$0x1]
      %v251 = vlaneseq
      %v252 = vshrl.u32 %v251, 7
      %v253 = vsub.s32 0, %v252
      %v254 = vrot.slane %v249, %v253
      %v256 = vmul.f32 %v247, %v254
      %v257 = vpack.c.bf16 %v256, %v256
      %258 = vst [vmem:[#allocation2 + $0x8] sm:$0xf] %v257
      %259 = vrot.lane.b32.xlu0 %v217, 15
      %v260 = vpop.permute.xlu0 %259
      %s261 = scalar_lea.vmem %s1, 3
      %v262 = vld [vmem:[%s261] sm:$0x1]
      %v264 = vlaneseq
      %v265 = vshrl.u32 %v264, 7
      %v266 = vsub.s32 0, %v265
      %v267 = vrot.slane %v262, %v266
      %v269 = vmul.f32 %v260, %v267
      %v270 = vpack.c.bf16 %v269, %v269
      %v272 = vrot.slane %v270, 4
      %274 = vst [vmem:[#allocation2 + $0x8] sm:$0xf0] %v272
      %275 = vrot.lane.b32.xlu0 %v217, 14
      %v276 = vpop.permute.xlu0 %275
      %s277 = scalar_lea.vmem %s1, 4
      %v278 = vld [vmem:[%s277] sm:$0x1]
      %v280 = vlaneseq
      %v281 = vshrl.u32 %v280, 7
      %v282 = vsub.s32 0, %v281
      %v283 = vrot.slane %v278, %v282
      %v285 = vmul.f32 %v276, %v283
      %v286 = vpack.c.bf16 %v285, %v285
      %287 = vst [vmem:[#allocation2 + $0x10] sm:$0xf] %v286
      %288 = vrot.lane.b32.xlu0 %v217, 10
      %v289 = vpop.permute.xlu0 %288
      %s290 = scalar_lea.vmem %s1, 5
      %v291 = vld [vmem:[%s290] sm:$0x1]
      %v293 = vlaneseq
      %v294 = vshrl.u32 %v293, 7
      %v295 = vsub.s32 0, %v294
      %v296 = vrot.slane %v291, %v295
      %v298 = vmul.f32 %v289, %v296
      %v299 = vpack.c.bf16 %v298, %v298
      %v301 = vrot.slane %v299, 4
      %303 = vst [vmem:[#allocation2 + $0x10] sm:$0xf0] %v301
      %304 = vrot.lane.b32.xlu0 %v217, 9
      %v305 = vpop.permute.xlu0 %304
      %s306 = scalar_lea.vmem %s1, 6
      %v307 = vld [vmem:[%s306] sm:$0x1]
      %v309 = vlaneseq
      %v310 = vshrl.u32 %v309, 7
      %v311 = vsub.s32 0, %v310
      %v312 = vrot.slane %v307, %v311
      %v314 = vmul.f32 %v305, %v312
      %v315 = vpack.c.bf16 %v314, %v314
      %316 = vst [vmem:[#allocation2 + $0x18] sm:$0xf] %v315
      %317 = vrot.lane.b32.xlu0 %v217, 8
      %v318 = vpop.permute.xlu0 %317
      %s319 = scalar_lea.vmem %s1, 7
      %v320 = vld [vmem:[%s319] sm:$0x1]
      %v322 = vlaneseq
      %v323 = vshrl.u32 %v322, 7
      %v324 = vsub.s32 0, %v323
      %v325 = vrot.slane %v320, %v324
      %v327 = vmul.f32 %v318, %v325
      %v328 = vpack.c.bf16 %v327, %v327
      %v330 = vrot.slane %v328, 4
      %332 = vst [vmem:[#allocation2 + $0x18] sm:$0xf0] %v330
      %333 = vrot.lane.b32.xlu0 %v217, 7
      %v334 = vpop.permute.xlu0 %333
      %s335 = scalar_lea.vmem %s1, 8
      %v336 = vld [vmem:[%s335] sm:$0x1]
      %v338 = vlaneseq
      %v339 = vshrl.u32 %v338, 7
      %v340 = vsub.s32 0, %v339
      %v341 = vrot.slane %v336, %v340
      %v343 = vmul.f32 %v334, %v341
      %v344 = vpack.c.bf16 %v343, %v343
      %345 = vst [vmem:[#allocation2 + $0x20] sm:$0xf] %v344
      %346 = vrot.lane.b32.xlu0 %v217, 6
      %v347 = vpop.permute.xlu0 %346
      %s348 = scalar_lea.vmem %s1, 9
      %v349 = vld [vmem:[%s348] sm:$0x1]
      %v351 = vlaneseq
      %v352 = vshrl.u32 %v351, 7
      %v353 = vsub.s32 0, %v352
      %v354 = vrot.slane %v349, %v353
      %v356 = vmul.f32 %v347, %v354
      %v357 = vpack.c.bf16 %v356, %v356
      %v359 = vrot.slane %v357, 4
      %361 = vst [vmem:[#allocation2 + $0x20] sm:$0xf0] %v359
      %362 = vrot.lane.b32.xlu0 %v217, 2
      %v363 = vpop.permute.xlu0 %362
      %s364 = scalar_lea.vmem %s1, 10
      %v365 = vld [vmem:[%s364] sm:$0x1]
      %v367 = vlaneseq
      %v368 = vshrl.u32 %v367, 7
      %v369 = vsub.s32 0, %v368
      %v370 = vrot.slane %v365, %v369
      %v372 = vmul.f32 %v363, %v370
      %v373 = vpack.c.bf16 %v372, %v372
      %374 = vst [vmem:[#allocation2 + $0x28] sm:$0xf] %v373
      %375 = vrot.lane.b32.xlu0 %v217, 1
      %v376 = vpop.permute.xlu0 %375
      %s377 = scalar_lea.vmem %s1, 11
      %v378 = vld [vmem:[%s377] sm:$0x1]
      %v380 = vlaneseq
      %v381 = vshrl.u32 %v380, 7
      %v382 = vsub.s32 0, %v381
      %v383 = vrot.slane %v378, %v382
      %v385 = vmul.f32 %v376, %v383
      %v386 = vpack.c.bf16 %v385, %v385
      %v388 = vrot.slane %v386, 4
      %390 = vst [vmem:[#allocation2 + $0x28] sm:$0xf0] %v388
      %v391 = vpack.c.bf16 %v217, %v217
      %392 = vst [vmem:[#allocation2 + $0x30] sm:$0xf] %v391
      %393 = vrot.lane.b32.xlu0 %v217, 127
      %v394 = vpop.permute.xlu0 %393
      %s395 = scalar_lea.vmem %s1, 13
      %v396 = vld [vmem:[%s395] sm:$0x1]
      %v398 = vlaneseq
      %v399 = vshrl.u32 %v398, 7
      %v400 = vsub.s32 0, %v399
      %v401 = vrot.slane %v396, %v400
      %v403 = vmul.f32 %v394, %v401
      %v404 = vpack.c.bf16 %v403, %v403
      %v406 = vrot.slane %v404, 4
      %408 = vst [vmem:[#allocation2 + $0x30] sm:$0xf0] %v406
      %409 = vrot.lane.b32.xlu0 %v217, 126
      %v410 = vpop.permute.xlu0 %409
      %s411 = scalar_lea.vmem %s1, 14
      %v412 = vld [vmem:[%s411] sm:$0x1]
      %v414 = vlaneseq
      %v415 = vshrl.u32 %v414, 7
      %v416 = vsub.s32 0, %v415
      %v417 = vrot.slane %v412, %v416
      %v419 = vmul.f32 %v410, %v417
      %v420 = vpack.c.bf16 %v419, %v419
      %421 = vst [vmem:[#allocation2 + $0x38] sm:$0xf] %v420
      %422 = vrot.lane.b32.xlu0 %v217, 122
      %v423 = vpop.permute.xlu0 %422
      %s424 = scalar_lea.vmem %s1, 15
      %v425 = vld [vmem:[%s424] sm:$0x1]
      %v427 = vlaneseq
      %v428 = vshrl.u32 %v427, 7
      %v429 = vsub.s32 0, %v428
      %v430 = vrot.slane %v425, %v429
      %v432 = vmul.f32 %v423, %v430
      %v433 = vpack.c.bf16 %v432, %v432
      %v435 = vrot.slane %v433, 4
      %437 = vst [vmem:[#allocation2 + $0x38] sm:$0xf0] %v435
      %438 = vrot.lane.b32.xlu0 %v217, 121
      %v439 = vpop.permute.xlu0 %438
      %s440 = scalar_lea.vmem %s1, 16
      %v441 = vld [vmem:[%s440] sm:$0x1]
      %v443 = vlaneseq
      %v444 = vshrl.u32 %v443, 7
      %v445 = vsub.s32 0, %v444
      %v446 = vrot.slane %v441, %v445
      %v448 = vmul.f32 %v439, %v446
      %v449 = vpack.c.bf16 %v448, %v448
      %450 = vst [vmem:[#allocation2 + $0x40] sm:$0xf] %v449
      %451 = vrot.lane.b32.xlu0 %v217, 120
      %v452 = vpop.permute.xlu0 %451
      %s453 = scalar_lea.vmem %s1, 17
      %v454 = vld [vmem:[%s453] sm:$0x1]
      %v456 = vlaneseq
      %v457 = vshrl.u32 %v456, 7
      %v458 = vsub.s32 0, %v457
      %v459 = vrot.slane %v454, %v458
      %v461 = vmul.f32 %v452, %v459
      %v462 = vpack.c.bf16 %v461, %v461
      %v464 = vrot.slane %v462, 4
      %466 = vst [vmem:[#allocation2 + $0x40] sm:$0xf0] %v464
      %467 = vrot.lane.b32.xlu0 %v217, 119
      %v468 = vpop.permute.xlu0 %467
      %s469 = scalar_lea.vmem %s1, 18
      %v470 = vld [vmem:[%s469] sm:$0x1]
      %v472 = vlaneseq
      %v473 = vshrl.u32 %v472, 7
      %v474 = vsub.s32 0, %v473
      %v475 = vrot.slane %v470, %v474
      %v477 = vmul.f32 %v468, %v475
      %v478 = vpack.c.bf16 %v477, %v477
      %479 = vst [vmem:[#allocation2 + $0x48] sm:$0xf] %v478
      %480 = vrot.lane.b32.xlu0 %v217, 118
      %v481 = vpop.permute.xlu0 %480
      %s482 = scalar_lea.vmem %s1, 19
      %v483 = vld [vmem:[%s482] sm:$0x1]
      %v485 = vlaneseq
      %v486 = vshrl.u32 %v485, 7
      %v487 = vsub.s32 0, %v486
      %v488 = vrot.slane %v483, %v487
      %v490 = vmul.f32 %v481, %v488
      %v491 = vpack.c.bf16 %v490, %v490
      %v493 = vrot.slane %v491, 4
      %495 = vst [vmem:[#allocation2 + $0x48] sm:$0xf0] %v493
      %496 = vrot.lane.b32.xlu0 %v217, 114
      %v497 = vpop.permute.xlu0 %496
      %s498 = scalar_lea.vmem %s1, 20
      %v499 = vld [vmem:[%s498] sm:$0x1]
      %v501 = vlaneseq
      %v502 = vshrl.u32 %v501, 7
      %v503 = vsub.s32 0, %v502
      %v504 = vrot.slane %v499, %v503
      %v506 = vmul.f32 %v497, %v504
      %v507 = vpack.c.bf16 %v506, %v506
      %508 = vst [vmem:[#allocation2 + $0x50] sm:$0xf] %v507
      %509 = vrot.lane.b32.xlu0 %v217, 113
      %v510 = vpop.permute.xlu0 %509
      %s511 = scalar_lea.vmem %s1, 21
      %v512 = vld [vmem:[%s511] sm:$0x1]
      %v514 = vlaneseq
      %v515 = vshrl.u32 %v514, 7
      %v516 = vsub.s32 0, %v515
      %v517 = vrot.slane %v512, %v516
      %v519 = vmul.f32 %v510, %v517
      %v520 = vpack.c.bf16 %v519, %v519
      %v522 = vrot.slane %v520, 4
      %524 = vst [vmem:[#allocation2 + $0x50] sm:$0xf0] %v522
      %525 = vrot.lane.b32.xlu0 %v217, 112
      %v526 = vpop.permute.xlu0 %525
      %s527 = scalar_lea.vmem %s1, 22
      %v528 = vld [vmem:[%s527] sm:$0x1]
      %v530 = vlaneseq
      %v531 = vshrl.u32 %v530, 7
      %v532 = vsub.s32 0, %v531
      %v533 = vrot.slane %v528, %v532
      %v535 = vmul.f32 %v526, %v533
      %v536 = vpack.c.bf16 %v535, %v535
      %537 = vst [vmem:[#allocation2 + $0x58] sm:$0xf] %v536
      %538 = vrot.lane.b32.xlu0 %v217, 111
      %v539 = vpop.permute.xlu0 %538
      %s540 = scalar_lea.vmem %s1, 23
      %v541 = vld [vmem:[%s540] sm:$0x1]
      %v543 = vlaneseq
      %v544 = vshrl.u32 %v543, 7
      %v545 = vsub.s32 0, %v544
      %v546 = vrot.slane %v541, %v545
      %v548 = vmul.f32 %v539, %v546
      %v549 = vpack.c.bf16 %v548, %v548
      %v551 = vrot.slane %v549, 4
      %553 = vst [vmem:[#allocation2 + $0x58] sm:$0xf0] %v551
      %554 = vrot.lane.b32.xlu0 %v217, 110
      %v555 = vpop.permute.xlu0 %554
      %s556 = scalar_lea.vmem %s1, 24
      %v557 = vld [vmem:[%s556] sm:$0x1]
      %v559 = vlaneseq
      %v560 = vshrl.u32 %v559, 7
      %v561 = vsub.s32 0, %v560
      %v562 = vrot.slane %v557, %v561
      %v564 = vmul.f32 %v555, %v562
      %v565 = vpack.c.bf16 %v564, %v564
      %566 = vst [vmem:[#allocation2 + $0x60] sm:$0xf] %v565
      %567 = vrot.lane.b32.xlu0 0.0, 18
      %v568 = vpop.permute.xlu0 %567
      %v569 = vld [vmem:[%s1] sm:$0x1]
      %v571 = vlaneseq
      %v572 = vshrl.u32 %v571, 7
      %v573 = vsub.s32 0, %v572
      %v574 = vrot.slane %v569, %v573
      %v576 = vmul.f32 %v568, %v574
      %v577 = vpack.c.bf16 %v576, %v576
      %v579 = vrot.slane %v577, 4
      %581 = vst [vmem:[#allocation2 + $0x60] sm:$0xf0] %v579
      %582 = vrot.lane.b32.xlu0 0.0, 17
      %v583 = vpop.permute.xlu0 %582
      %v584 = vld [vmem:[%s232] sm:$0x1]
      %v586 = vlaneseq
      %v587 = vshrl.u32 %v586, 7
      %v588 = vsub.s32 0, %v587
      %v589 = vrot.slane %v584, %v588
      %v591 = vmul.f32 %v583, %v589
      %v592 = vpack.c.bf16 %v591, %v591
      %593 = vst [vmem:[#allocation2 + $0x68] sm:$0xf] %v592
      %594 = vrot.lane.b32.xlu0 0.0, 16
      %v595 = vpop.permute.xlu0 %594
      %v596 = vld [vmem:[%s248] sm:$0x1]
      %v598 = vlaneseq
      %v599 = vshrl.u32 %v598, 7
      %v600 = vsub.s32 0, %v599
      %v601 = vrot.slane %v596, %v600
      %v603 = vmul.f32 %v595, %v601
      %v604 = vpack.c.bf16 %v603, %v603
      %v606 = vrot.slane %v604, 4
      %608 = vst [vmem:[#allocation2 + $0x68] sm:$0xf0] %v606
      %609 = vrot.lane.b32.xlu0 0.0, 15
      %v610 = vpop.permute.xlu0 %609
      %v611 = vld [vmem:[%s261] sm:$0x1]
      %v613 = vlaneseq
      %v614 = vshrl.u32 %v613, 7
      %v615 = vsub.s32 0, %v614
      %v616 = vrot.slane %v611, %v615
      %v618 = vmul.f32 %v610, %v616
      %v619 = vpack.c.bf16 %v618, %v618
      %620 = vst [vmem:[#allocation2 + $0x70] sm:$0xf] %v619
      %621 = vrot.lane.b32.xlu0 0.0, 14
      %v622 = vpop.permute.xlu0 %621
      %v623 = vld [vmem:[%s277] sm:$0x1]
      %v625 = vlaneseq
      %v626 = vshrl.u32 %v625, 7
      %v627 = vsub.s32 0, %v626
      %v628 = vrot.slane %v623, %v627
      %v630 = vmul.f32 %v622, %v628
      %v631 = vpack.c.bf16 %v630, %v630
      %v633 = vrot.slane %v631, 4
      %635 = vst [vmem:[#allocation2 + $0x70] sm:$0xf0] %v633
      %636 = vrot.lane.b32.xlu0 0.0, 10
      %v637 = vpop.permute.xlu0 %636
      %v638 = vld [vmem:[%s290] sm:$0x1]
      %v640 = vlaneseq
      %v641 = vshrl.u32 %v640, 7
      %v642 = vsub.s32 0, %v641
      %v643 = vrot.slane %v638, %v642
      %v645 = vmul.f32 %v637, %v643
      %v646 = vpack.c.bf16 %v645, %v645
      %647 = vst [vmem:[#allocation2 + $0x78] sm:$0xf] %v646
      %648 = vrot.lane.b32.xlu0 0.0, 9
      %v649 = vpop.permute.xlu0 %648
      %v650 = vld [vmem:[%s306] sm:$0x1]
      %v652 = vlaneseq
      %v653 = vshrl.u32 %v652, 7
      %v654 = vsub.s32 0, %v653
      %v655 = vrot.slane %v650, %v654
      %v657 = vmul.f32 %v649, %v655
      %v658 = vpack.c.bf16 %v657, %v657
      %v660 = vrot.slane %v658, 4
      %662 = vst [vmem:[#allocation2 + $0x78] sm:$0xf0] %v660
      %663 = vrot.lane.b32.xlu0 0.0, 8
      %v664 = vpop.permute.xlu0 %663
      %v665 = vld [vmem:[%s319] sm:$0x1]
      %v667 = vlaneseq
      %v668 = vshrl.u32 %v667, 7
      %v669 = vsub.s32 0, %v668
      %v670 = vrot.slane %v665, %v669
      %v672 = vmul.f32 %v664, %v670
      %v673 = vpack.c.bf16 %v672, %v672
      %674 = vst [vmem:[#allocation2 + $0x80] sm:$0xf] %v673
      %675 = vrot.lane.b32.xlu0 0.0, 7
      %v676 = vpop.permute.xlu0 %675
      %v677 = vld [vmem:[%s335] sm:$0x1]
      %v679 = vlaneseq
      %v680 = vshrl.u32 %v679, 7
      %v681 = vsub.s32 0, %v680
      %v682 = vrot.slane %v677, %v681
      %v684 = vmul.f32 %v676, %v682
      %v685 = vpack.c.bf16 %v684, %v684
      %v687 = vrot.slane %v685, 4
      %689 = vst [vmem:[#allocation2 + $0x80] sm:$0xf0] %v687
      %690 = vrot.lane.b32.xlu0 0.0, 6
      %v691 = vpop.permute.xlu0 %690
      %v692 = vld [vmem:[%s348] sm:$0x1]
      %v694 = vlaneseq
      %v695 = vshrl.u32 %v694, 7
      %v696 = vsub.s32 0, %v695
      %v697 = vrot.slane %v692, %v696
      %v699 = vmul.f32 %v691, %v697
      %v700 = vpack.c.bf16 %v699, %v699
      %701 = vst [vmem:[#allocation2 + $0x88] sm:$0xf] %v700
      %702 = vrot.lane.b32.xlu0 0.0, 2
      %v703 = vpop.permute.xlu0 %702
      %v704 = vld [vmem:[%s364] sm:$0x1]
      %v706 = vlaneseq
      %v707 = vshrl.u32 %v706, 7
      %v708 = vsub.s32 0, %v707
      %v709 = vrot.slane %v704, %v708
      %v711 = vmul.f32 %v703, %v709
      %v712 = vpack.c.bf16 %v711, %v711
      %v714 = vrot.slane %v712, 4
      %716 = vst [vmem:[#allocation2 + $0x88] sm:$0xf0] %v714
      %717 = vrot.lane.b32.xlu0 0.0, 1
      %v718 = vpop.permute.xlu0 %717
      %v719 = vld [vmem:[%s377] sm:$0x1]
      %v721 = vlaneseq
      %v722 = vshrl.u32 %v721, 7
      %v723 = vsub.s32 0, %v722
      %v724 = vrot.slane %v719, %v723
      %v726 = vmul.f32 %v718, %v724
      %v727 = vpack.c.bf16 %v726, %v726
      %728 = vst [vmem:[#allocation2 + $0x90] sm:$0xf] %v727
      %729 = vst [vmem:[#allocation2 + $0x90] sm:$0xf0] 0
      %730 = vrot.lane.b32.xlu0 0.0, 127
      %v731 = vpop.permute.xlu0 %730
      %v732 = vld [vmem:[%s395] sm:$0x1]
      %v734 = vlaneseq
      %v735 = vshrl.u32 %v734, 7
      %v736 = vsub.s32 0, %v735
      %v737 = vrot.slane %v732, %v736
      %v739 = vmul.f32 %v731, %v737
      %v740 = vpack.c.bf16 %v739, %v739
      %741 = vst [vmem:[#allocation2 + $0x98] sm:$0xf] %v740
      %742 = vrot.lane.b32.xlu0 0.0, 126
      %v743 = vpop.permute.xlu0 %742
      %v744 = vld [vmem:[%s411] sm:$0x1]
      %v746 = vlaneseq
      %v747 = vshrl.u32 %v746, 7
      %v748 = vsub.s32 0, %v747
      %v749 = vrot.slane %v744, %v748
      %v751 = vmul.f32 %v743, %v749
      %v752 = vpack.c.bf16 %v751, %v751
      %v754 = vrot.slane %v752, 4
      %756 = vst [vmem:[#allocation2 + $0x98] sm:$0xf0] %v754
      %757 = vrot.lane.b32.xlu0 0.0, 122
      %v758 = vpop.permute.xlu0 %757
      %v759 = vld [vmem:[%s424] sm:$0x1]
      %v761 = vlaneseq
      %v762 = vshrl.u32 %v761, 7
      %v763 = vsub.s32 0, %v762
      %v764 = vrot.slane %v759, %v763
      %v766 = vmul.f32 %v758, %v764
      %v767 = vpack.c.bf16 %v766, %v766
      %768 = vst [vmem:[#allocation2 + $0xa0] sm:$0xf] %v767
      %769 = vrot.lane.b32.xlu0 0.0, 121
      %v770 = vpop.permute.xlu0 %769
      %v771 = vld [vmem:[%s440] sm:$0x1]
      %v773 = vlaneseq
      %v774 = vshrl.u32 %v773, 7
      %v775 = vsub.s32 0, %v774
      %v776 = vrot.slane %v771, %v775
      %v778 = vmul.f32 %v770, %v776
      %v779 = vpack.c.bf16 %v778, %v778
      %v781 = vrot.slane %v779, 4
      %783 = vst [vmem:[#allocation2 + $0xa0] sm:$0xf0] %v781
      %784 = vrot.lane.b32.xlu0 0.0, 120
      %v785 = vpop.permute.xlu0 %784
      %v786 = vld [vmem:[%s453] sm:$0x1]
      %v788 = vlaneseq
      %v789 = vshrl.u32 %v788, 7
      %v790 = vsub.s32 0, %v789
      %v791 = vrot.slane %v786, %v790
      %v793 = vmul.f32 %v785, %v791
      %v794 = vpack.c.bf16 %v793, %v793
      %795 = vst [vmem:[#allocation2 + $0xa8] sm:$0xf] %v794
      %796 = vrot.lane.b32.xlu0 0.0, 119
      %v797 = vpop.permute.xlu0 %796
      %v798 = vld [vmem:[%s469] sm:$0x1]
      %v800 = vlaneseq
      %v801 = vshrl.u32 %v800, 7
      %v802 = vsub.s32 0, %v801
      %v803 = vrot.slane %v798, %v802
      %v805 = vmul.f32 %v797, %v803
      %v806 = vpack.c.bf16 %v805, %v805
      %v808 = vrot.slane %v806, 4
      %810 = vst [vmem:[#allocation2 + $0xa8] sm:$0xf0] %v808
      %811 = vrot.lane.b32.xlu0 0.0, 118
      %v812 = vpop.permute.xlu0 %811
      %v813 = vld [vmem:[%s482] sm:$0x1]
      %v815 = vlaneseq
      %v816 = vshrl.u32 %v815, 7
      %v817 = vsub.s32 0, %v816
      %v818 = vrot.slane %v813, %v817
      %v820 = vmul.f32 %v812, %v818
      %v821 = vpack.c.bf16 %v820, %v820
      %822 = vst [vmem:[#allocation2 + $0xb0] sm:$0xf] %v821
      %823 = vrot.lane.b32.xlu0 0.0, 114
      %v824 = vpop.permute.xlu0 %823
      %v825 = vld [vmem:[%s498] sm:$0x1]
      %v827 = vlaneseq
      %v828 = vshrl.u32 %v827, 7
      %v829 = vsub.s32 0, %v828
      %v830 = vrot.slane %v825, %v829
      %v832 = vmul.f32 %v824, %v830
      %v833 = vpack.c.bf16 %v832, %v832
      %v835 = vrot.slane %v833, 4
      %837 = vst [vmem:[#allocation2 + $0xb0] sm:$0xf0] %v835
      %838 = vrot.lane.b32.xlu0 0.0, 113
      %v839 = vpop.permute.xlu0 %838
      %v840 = vld [vmem:[%s511] sm:$0x1]
      %v842 = vlaneseq
      %v843 = vshrl.u32 %v842, 7
      %v844 = vsub.s32 0, %v843
      %v845 = vrot.slane %v840, %v844
      %v847 = vmul.f32 %v839, %v845
      %v848 = vpack.c.bf16 %v847, %v847
      %849 = vst [vmem:[#allocation2 + $0xb8] sm:$0xf] %v848
      %850 = vrot.lane.b32.xlu0 0.0, 112
      %v851 = vpop.permute.xlu0 %850
      %v852 = vld [vmem:[%s527] sm:$0x1]
      %v854 = vlaneseq
      %v855 = vshrl.u32 %v854, 7
      %v856 = vsub.s32 0, %v855
      %v857 = vrot.slane %v852, %v856
      %v859 = vmul.f32 %v851, %v857
      %v860 = vpack.c.bf16 %v859, %v859
      %v862 = vrot.slane %v860, 4
      %864 = vst [vmem:[#allocation2 + $0xb8] sm:$0xf0] %v862
      %865 = vrot.lane.b32.xlu0 0.0, 111
      %v866 = vpop.permute.xlu0 %865
      %v867 = vld [vmem:[%s540] sm:$0x1]
      %v869 = vlaneseq
      %v870 = vshrl.u32 %v869, 7
      %v871 = vsub.s32 0, %v870
      %v872 = vrot.slane %v867, %v871
      %v874 = vmul.f32 %v866, %v872
      %v875 = vpack.c.bf16 %v874, %v874
      %876 = vst [vmem:[#allocation2 + $0xc0] sm:$0xf] %v875
      %877 = vrot.lane.b32.xlu0 0.0, 110
      %v878 = vpop.permute.xlu0 %877
      %v879 = vld [vmem:[%s556] sm:$0x1]
      %v881 = vlaneseq
      %v882 = vshrl.u32 %v881, 7
      %v883 = vsub.s32 0, %v882
      %v884 = vrot.slane %v879, %v883
      %v886 = vmul.f32 %v878, %v884
      %v887 = vpack.c.bf16 %v886, %v886
      %v889 = vrot.slane %v887, 4
      %891 = vst [vmem:[#allocation2 + $0xc0] sm:$0xf0] %v889
      %v892 = vld [vmem:[%s206] sm:$0xff]
      %v893 = vld [vmem:[%s206 + $0x8] sm:$0xff]
      %v894 = vld [vmem:[%s206 + $0x10] sm:$0xff]
      %v895 = vld [vmem:[%s206 + $0x18] sm:$0xff]
      %v896 = vld [vmem:[%s206 + $0x20] sm:$0xff]
      %v897 = vld [vmem:[%s206 + $0x28] sm:$0xff]
      %v898 = vld [vmem:[%s206 + $0x30] sm:$0xff]
      %v899 = vld [vmem:[%s206 + $0x38] sm:$0xff]
      %v900 = vld [vmem:[#allocation2] sm:$0xff]
      %v901 = vld [vmem:[#allocation2 + $0x8] sm:$0xff]
      %v902 = vld [vmem:[#allocation2 + $0x10] sm:$0xff]
      %v903 = vld [vmem:[#allocation2 + $0x18] sm:$0xff]
      %v904 = vld [vmem:[#allocation2 + $0x20] sm:$0xff]
      %v905 = vld [vmem:[#allocation2 + $0x28] sm:$0xff]
      %v906 = vld [vmem:[#allocation2 + $0x30] sm:$0xff]
      %v907 = vld [vmem:[#allocation2 + $0x38] sm:$0xff]
      %v908 = vld [vmem:[#allocation2 + $0x40] sm:$0xff]
      %v909 = vld [vmem:[#allocation2 + $0x48] sm:$0xff]
      %v910 = vld [vmem:[#allocation2 + $0x50] sm:$0xff]
      %v911 = vld [vmem:[#allocation2 + $0x58] sm:$0xff]
      %v912 = vld [vmem:[#allocation2 + $0x60] sm:$0xff]
      %v913 = vld [vmem:[#allocation2 + $0x68] sm:$0xff]
      %v914 = vld [vmem:[#allocation2 + $0x70] sm:$0xff]
      %v915 = vld [vmem:[#allocation2 + $0x78] sm:$0xff]
      %v916 = vld [vmem:[#allocation2 + $0x80] sm:$0xff]
      %v917 = vld [vmem:[#allocation2 + $0x88] sm:$0xff]
      %v918 = vld [vmem:[#allocation2 + $0x90] sm:$0xff]
      %v919 = vld [vmem:[#allocation2 + $0x98] sm:$0xff]
      %v920 = vld [vmem:[#allocation2 + $0xa0] sm:$0xff]
      %v921 = vld [vmem:[#allocation2 + $0xa8] sm:$0xff]
      %v922 = vld [vmem:[#allocation2 + $0xb0] sm:$0xff]
      %v923 = vld [vmem:[#allocation2 + $0xb8] sm:$0xff]
      %v924 = vld [vmem:[#allocation2 + $0xc0] sm:$0xff]
      %v925 = vld [vmem:[%s211] sm:$0xff]
      %v926 = vld [vmem:[%s211 + $0x8] sm:$0xff]
      %v927 = vld [vmem:[%s211 + $0x10] sm:$0xff]
      %v928 = vld [vmem:[%s211 + $0x18] sm:$0xff]
      %930 = vset.pattern.permute.xlu0 0
      %931 = vperm.xlu0 %930, %v925
      %v932 = vpop.permute.xlu0 %931
      %935 = vset.pattern.permute.xlu0 0
      %936 = vperm.xlu0 %935, %v926
      %v937 = vpop.permute.xlu0 %936
      %940 = vset.pattern.permute.xlu0 0
      %941 = vperm.xlu0 %940, %v927
      %v942 = vpop.permute.xlu0 %941
      %945 = vset.pattern.permute.xlu0 0
      %946 = vperm.xlu0 %945, %v928
      %v947 = vpop.permute.xlu0 %946
      %v957 = vunpack.c.l.b16 %v892
      %v958 = vunpack.c.h.b16 %v892
      %v959 = vunpack.c.l.b16 %v893
      %v960 = vunpack.c.h.b16 %v893
      %v961 = vunpack.c.l.b16 %v894
      %v962 = vunpack.c.h.b16 %v894
      %v963 = vunpack.c.l.b16 %v895
      %v964 = vunpack.c.h.b16 %v895
      %v965 = vunpack.c.l.b16 %v896
      %v966 = vunpack.c.h.b16 %v896
      %v967 = vunpack.c.l.b16 %v897
      %v968 = vunpack.c.h.b16 %v897
      %v969 = vunpack.c.l.b16 %v898
      %v970 = vunpack.c.h.b16 %v898
      %v971 = vunpack.c.l.b16 %v899
      %v972 = vunpack.c.h.b16 %v899
      %v973 = vpack.c.b16 %v961, %v957
      %v974 = vpack.c.b16 %v962, %v958
      %v975 = vpack.c.b16 %v963, %v959
      %v976 = vpack.c.b16 %v964, %v960
      %v977 = vpack.c.b16 %v969, %v965
      %v978 = vpack.c.b16 %v970, %v966
      %v979 = vpack.c.b16 %v971, %v967
      %v980 = vpack.c.b16 %v972, %v968
      %vm987 = vcmask 130048
      %v989 = vsel %vm987, %v976, 0
      %v992 = vsel %vm987, %v980, 0
      %994 = vmatprep.subr.bf16.mxu0 0
      %995 = vmatpush1.bf16.msra.mxu0 %v900
      %996 = vmatprep.subr.bf16.mxu0 0
      %997 = vmatpush1.bf16.msra.mxu0 %v901
      %998 = vmatprep.subr.bf16.mxu0 0
      %999 = vmatpush1.bf16.msra.mxu0 %v902
      %1000 = vmatprep.subr.bf16.mxu0 0
      %1001 = vmatpush1.bf16.msra.mxu0 %v903
      %1002 = vmatprep.subr.bf16.mxu0 0
      %1003 = vmatpush1.bf16.msra.mxu0 %v904
      %1004 = vmatprep.subr.bf16.mxu0 0
      %1005 = vmatpush1.bf16.msra.mxu0 %v905
      %1006 = vmatprep.subr.bf16.mxu0 0
      %1007 = vmatpush1.bf16.msra.mxu0 %v906
      %1008 = vmatprep.subr.bf16.mxu0 0
      %1009 = vmatpush1.bf16.msra.mxu0 %v907
      %1010 = vmatprep.subr.bf16.mxu0 0
      %1011 = vmatpush1.bf16.msra.mxu0 %v908
      %1012 = vmatprep.subr.bf16.mxu0 0
      %1013 = vmatpush1.bf16.msra.mxu0 %v909
      %1014 = vmatprep.subr.bf16.mxu0 0
      %1015 = vmatpush1.bf16.msra.mxu0 %v910
      %1016 = vmatprep.subr.bf16.mxu0 0
      %1017 = vmatpush1.bf16.msra.mxu0 %v911
      %1018 = vmatprep.subr.bf16.mxu0 0
      %1019 = vmatpush1.bf16.msra.mxu0 %v912
      %1020 = vmatprep.subr.bf16.mxu0 0
      %1021 = vmatpush1.bf16.msra.mxu0 %v913
      %1022 = vmatprep.subr.bf16.mxu0 0
      %1023 = vmatpush1.bf16.msra.mxu0 %v914
      %1024 = vmatprep.subr.bf16.mxu0 0
      %1025 = vmatpush1.bf16.msra.mxu0 %v915
      %1026 = vmatprep.mubr.bf16.mxu0 %v974
      %1027 = vmatmul.mubr.bf16.gmra.mrb[0].mxu0 %v973
      %v1028 = vpop.f32.mrb[0].mxu0
      %v1029 = vadd.f32 %v932, %v1028
      %v1030 = vpop.f32.mrb[0].mxu0
      %v1031 = vpop.f32.mrb[0].mxu0
      %v1032 = vadd.f32 %v937, %v1031
      %v1033 = vpop.f32.mrb[0].mxu0
      %1034 = vmatprep.mubr.bf16.mxu0 %v978
      %1035 = vmatmul.mubr.bf16.gmra.mrb[0].mxu0 %v977
      %v1036 = vpop.f32.mrb[0].mxu0
      %v1037 = vadd.f32 %v942, %v1036
      %v1038 = vpop.f32.mrb[0].mxu0
      %v1039 = vpop.f32.mrb[0].mxu0
      %v1040 = vadd.f32 %v947, %v1039
      %v1041 = vpop.f32.mrb[0].mxu0
      %1042 = vdwg.mxu0
      %1043 = vmatprep.subr.bf16.mxu0 0
      %1044 = vmatpush1.bf16.msra.mxu0 %v916
      %1045 = vmatprep.subr.bf16.mxu0 0
      %1046 = vmatpush1.bf16.msra.mxu0 %v917
      %1047 = vmatprep.subr.bf16.mxu0 0
      %1048 = vmatpush1.bf16.msra.mxu0 %v918
      %1049 = vmatprep.subr.bf16.mxu0 0
      %1050 = vmatpush1.bf16.msra.mxu0 %v919
      %1051 = vmatprep.subr.bf16.mxu0 0
      %1052 = vmatpush1.bf16.msra.mxu0 %v920
      %1053 = vmatprep.subr.bf16.mxu0 0
      %1054 = vmatpush1.bf16.msra.mxu0 %v921
      %1055 = vmatprep.subr.bf16.mxu0 0
      %1056 = vmatpush1.bf16.msra.mxu0 %v922
      %1057 = vmatprep.subr.bf16.mxu0 0
      %1058 = vmatpush1.bf16.msra.mxu0 %v923
      %1059 = vmatprep.subr.bf16.mxu0 0
      %1060 = vmatpush1.bf16.msra.mxu0 %v924
      %1061 = vmatprep.subr.bf16.mxu0 0
      %1062 = vmatpush1.bf16.msra.mxu0 0
      %1063 = vmatprep.subr.bf16.mxu0 0
      %1064 = vmatpush1.bf16.msra.mxu0 0
      %1065 = vmatprep.subr.bf16.mxu0 0
      %1066 = vmatpush1.bf16.msra.mxu0 0
      %1067 = vmatprep.subr.bf16.mxu0 0
      %1068 = vmatpush1.bf16.msra.mxu0 0
      %1069 = vmatprep.subr.bf16.mxu0 0
      %1070 = vmatpush1.bf16.msra.mxu0 0
      %1071 = vmatprep.subr.bf16.mxu0 0
      %1072 = vmatpush1.bf16.msra.mxu0 0
      %1073 = vmatprep.subr.bf16.mxu0 0
      %1074 = vmatpush1.bf16.msra.mxu0 0
      %1075 = vmatprep.mubr.bf16.mxu0 %v989
      %1076 = vmatmul.mubr.bf16.gmra.mrb[0].mxu0 %v975
      %v1077 = vpop.f32.mrb[0].mxu0
      %v1078 = vadd.f32 %v1029, %v1077
      %v1079 = vpop.f32.mrb[0].mxu0
      %v1080 = vpop.f32.mrb[0].mxu0
      %v1081 = vadd.f32 %v1032, %v1080
      %v1082 = vpop.f32.mrb[0].mxu0
      %1083 = vmatprep.mubr.bf16.mxu0 %v992
      %1084 = vmatmul.mubr.bf16.gmra.mrb[0].mxu0 %v979
      %v1085 = vpop.f32.mrb[0].mxu0
      %v1086 = vadd.f32 %v1037, %v1085
      %v1087 = vpop.f32.mrb[0].mxu0
      %v1088 = vpop.f32.mrb[0].mxu0
      %v1089 = vadd.f32 %v1040, %v1088
      %v1090 = vpop.f32.mrb[0].mxu0
      %1091 = vdwg.mxu0
      %v1092 = vxor.u32 %v1078, 2147483648
      %v1093 = vxor.u32 %v1081, 2147483648
      %v1094 = vxor.u32 %v1086, 2147483648
      %v1095 = vmul.f32 %v1092, 1.442695
      %v1096 = vpow.pop %v1095
      %v1097 = vmul.f32 %v1093, 1.442695
      %v1098 = vpow.pop %v1097
      %v1099 = vmul.f32 %v1094, 1.442695
      %v1100 = vpow.pop %v1099
      %v1101 = vadd.f32 %v1096, 1.0
      %v1102 = vadd.f32 %v1098, 1.0
      %v1103 = vadd.f32 %v1100, 1.0
      %v1104 = vrcp.pop %v1101
      %v1105 = vmul.f32 1.0, %v1104
      %v1106 = vrcp.pop %v1102
      %v1107 = vmul.f32 1.0, %v1106
      %v1108 = vrcp.pop %v1103
      %v1109 = vmul.f32 1.0, %v1108
      %v1110 = vtanh.pop %v1089
      %v1111 = vmul.f32 %v1107, 0.0
      %v1112 = vmul.f32 %v1105, %v1110
      %v1113 = vadd.f32 %v1111, %v1112
      %v1114 = vtanh.pop %v1113
      %v1115 = vmul.f32 %v1109, %v1114
      %s1116 = scalar_lea.vmem %s0, 8
      %v1117 = vld [vmem:[%s1116] sm:$0xff]
      %1118 = vrot.lane.b32.xlu0 %v1117, 18
      %v1119 = vpop.permute.xlu0 %1118
      %v1120 = vld [vmem:[%s1] sm:$0x1]
      %v1122 = vlaneseq
      %v1123 = vshrl.u32 %v1122, 7
      %v1124 = vsub.s32 0, %v1123
      %v1125 = vrot.slane %v1120, %v1124
      %v1127 = vmul.f32 %v1119, %v1125
      %v1128 = vpack.c.bf16 %v1127, %v1127
      %1129 = vst [vmem:[#allocation2] sm:$0xf] %v1128
      %1130 = vrot.lane.b32.xlu0 %v1117, 17
      %v1131 = vpop.permute.xlu0 %1130
      %v1132 = vld [vmem:[%s232] sm:$0x1]
      %v1134 = vlaneseq
      %v1135 = vshrl.u32 %v1134, 7
      %v1136 = vsub.s32 0, %v1135
      %v1137 = vrot.slane %v1132, %v1136
      %v1139 = vmul.f32 %v1131, %v1137
      %v1140 = vpack.c.bf16 %v1139, %v1139
      %v1142 = vrot.slane %v1140, 4
      %1144 = vst [vmem:[#allocation2] sm:$0xf0] %v1142
      %1145 = vrot.lane.b32.xlu0 %v1117, 16
      %v1146 = vpop.permute.xlu0 %1145
      %v1147 = vld [vmem:[%s248] sm:$0x1]
      %v1149 = vlaneseq
      %v1150 = vshrl.u32 %v1149, 7
      %v1151 = vsub.s32 0, %v1150
      %v1152 = vrot.slane %v1147, %v1151
      %v1154 = vmul.f32 %v1146, %v1152
      %v1155 = vpack.c.bf16 %v1154, %v1154
      %1156 = vst [vmem:[#allocation2 + $0x8] sm:$0xf] %v1155
      %1157 = vrot.lane.b32.xlu0 %v1117, 15
      %v1158 = vpop.permute.xlu0 %1157
      %v1159 = vld [vmem:[%s261] sm:$0x1]
      %v1161 = vlaneseq
      %v1162 = vshrl.u32 %v1161, 7
      %v1163 = vsub.s32 0, %v1162
      %v1164 = vrot.slane %v1159, %v1163
      %v1166 = vmul.f32 %v1158, %v1164
      %v1167 = vpack.c.bf16 %v1166, %v1166
      %v1169 = vrot.slane %v1167, 4
      %1171 = vst [vmem:[#allocation2 + $0x8] sm:$0xf0] %v1169
      %1172 = vrot.lane.b32.xlu0 %v1117, 14
      %v1173 = vpop.permute.xlu0 %1172
      %v1174 = vld [vmem:[%s277] sm:$0x1]
      %v1176 = vlaneseq
      %v1177 = vshrl.u32 %v1176, 7
      %v1178 = vsub.s32 0, %v1177
      %v1179 = vrot.slane %v1174, %v1178
      %v1181 = vmul.f32 %v1173, %v1179
      %v1182 = vpack.c.bf16 %v1181, %v1181
      %1183 = vst [vmem:[#allocation2 + $0x10] sm:$0xf] %v1182
      %1184 = vrot.lane.b32.xlu0 %v1117, 10
      %v1185 = vpop.permute.xlu0 %1184
      %v1186 = vld [vmem:[%s290] sm:$0x1]
      %v1188 = vlaneseq
      %v1189 = vshrl.u32 %v1188, 7
      %v1190 = vsub.s32 0, %v1189
      %v1191 = vrot.slane %v1186, %v1190
      %v1193 = vmul.f32 %v1185, %v1191
      %v1194 = vpack.c.bf16 %v1193, %v1193
      %v1196 = vrot.slane %v1194, 4
      %1198 = vst [vmem:[#allocation2 + $0x10] sm:$0xf0] %v1196
      %1199 = vrot.lane.b32.xlu0 %v1117, 9
      %v1200 = vpop.permute.xlu0 %1199
      %v1201 = vld [vmem:[%s306] sm:$0x1]
      %v1203 = vlaneseq
      %v1204 = vshrl.u32 %v1203, 7
      %v1205 = vsub.s32 0, %v1204
      %v1206 = vrot.slane %v1201, %v1205
      %v1208 = vmul.f32 %v1200, %v1206
      %v1209 = vpack.c.bf16 %v1208, %v1208
      %1210 = vst [vmem:[#allocation2 + $0x18] sm:$0xf] %v1209
      %1211 = vrot.lane.b32.xlu0 %v1117, 8
      %v1212 = vpop.permute.xlu0 %1211
      %v1213 = vld [vmem:[%s319] sm:$0x1]
      %v1215 = vlaneseq
      %v1216 = vshrl.u32 %v1215, 7
      %v1217 = vsub.s32 0, %v1216
      %v1218 = vrot.slane %v1213, %v1217
      %v1220 = vmul.f32 %v1212, %v1218
      %v1221 = vpack.c.bf16 %v1220, %v1220
      %v1223 = vrot.slane %v1221, 4
      %1225 = vst [vmem:[#allocation2 + $0x18] sm:$0xf0] %v1223
      %1226 = vrot.lane.b32.xlu0 %v1117, 7
      %v1227 = vpop.permute.xlu0 %1226
      %v1228 = vld [vmem:[%s335] sm:$0x1]
      %v1230 = vlaneseq
      %v1231 = vshrl.u32 %v1230, 7
      %v1232 = vsub.s32 0, %v1231
      %v1233 = vrot.slane %v1228, %v1232
      %v1235 = vmul.f32 %v1227, %v1233
      %v1236 = vpack.c.bf16 %v1235, %v1235
      %1237 = vst [vmem:[#allocation2 + $0x20] sm:$0xf] %v1236
      %1238 = vrot.lane.b32.xlu0 %v1117, 6
      %v1239 = vpop.permute.xlu0 %1238
      %v1240 = vld [vmem:[%s348] sm:$0x1]
      %v1242 = vlaneseq
      %v1243 = vshrl.u32 %v1242, 7
      %v1244 = vsub.s32 0, %v1243
      %v1245 = vrot.slane %v1240, %v1244
      %v1247 = vmul.f32 %v1239, %v1245
      %v1248 = vpack.c.bf16 %v1247, %v1247
      %v1250 = vrot.slane %v1248, 4
      %1252 = vst [vmem:[#allocation2 + $0x20] sm:$0xf0] %v1250
      %1253 = vrot.lane.b32.xlu0 %v1117, 2
      %v1254 = vpop.permute.xlu0 %1253
      %v1255 = vld [vmem:[%s364] sm:$0x1]
      %v1257 = vlaneseq
      %v1258 = vshrl.u32 %v1257, 7
      %v1259 = vsub.s32 0, %v1258
      %v1260 = vrot.slane %v1255, %v1259
      %v1262 = vmul.f32 %v1254, %v1260
      %v1263 = vpack.c.bf16 %v1262, %v1262
      %1264 = vst [vmem:[#allocation2 + $0x28] sm:$0xf] %v1263
      %1265 = vrot.lane.b32.xlu0 %v1117, 1
      %v1266 = vpop.permute.xlu0 %1265
      %v1267 = vld [vmem:[%s377] sm:$0x1]
      %v1269 = vlaneseq
      %v1270 = vshrl.u32 %v1269, 7
      %v1271 = vsub.s32 0, %v1270
      %v1272 = vrot.slane %v1267, %v1271
      %v1274 = vmul.f32 %v1266, %v1272
      %v1275 = vpack.c.bf16 %v1274, %v1274
      %v1277 = vrot.slane %v1275, 4
      %1279 = vst [vmem:[#allocation2 + $0x28] sm:$0xf0] %v1277
      %v1280 = vpack.c.bf16 %v1117, %v1117
      %1281 = vst [vmem:[#allocation2 + $0x30] sm:$0xf] %v1280
      %1282 = vrot.lane.b32.xlu0 %v1117, 127
      %v1283 = vpop.permute.xlu0 %1282
      %v1284 = vld [vmem:[%s395] sm:$0x1]
      %v1286 = vlaneseq
      %v1287 = vshrl.u32 %v1286, 7
      %v1288 = vsub.s32 0, %v1287
      %v1289 = vrot.slane %v1284, %v1288
      %v1291 = vmul.f32 %v1283, %v1289
      %v1292 = vpack.c.bf16 %v1291, %v1291
      %v1294 = vrot.slane %v1292, 4
      %1296 = vst [vmem:[#allocation2 + $0x30] sm:$0xf0] %v1294
      %1297 = vrot.lane.b32.xlu0 %v1117, 126
      %v1298 = vpop.permute.xlu0 %1297
      %v1299 = vld [vmem:[%s411] sm:$0x1]
      %v1301 = vlaneseq
      %v1302 = vshrl.u32 %v1301, 7
      %v1303 = vsub.s32 0, %v1302
      %v1304 = vrot.slane %v1299, %v1303
      %v1306 = vmul.f32 %v1298, %v1304
      %v1307 = vpack.c.bf16 %v1306, %v1306
      %1308 = vst [vmem:[#allocation2 + $0x38] sm:$0xf] %v1307
      %1309 = vrot.lane.b32.xlu0 %v1117, 122
      %v1310 = vpop.permute.xlu0 %1309
      %v1311 = vld [vmem:[%s424] sm:$0x1]
      %v1313 = vlaneseq
      %v1314 = vshrl.u32 %v1313, 7
      %v1315 = vsub.s32 0, %v1314
      %v1316 = vrot.slane %v1311, %v1315
      %v1318 = vmul.f32 %v1310, %v1316
      %v1319 = vpack.c.bf16 %v1318, %v1318
      %v1321 = vrot.slane %v1319, 4
      %1323 = vst [vmem:[#allocation2 + $0x38] sm:$0xf0] %v1321
      %1324 = vrot.lane.b32.xlu0 %v1117, 121
      %v1325 = vpop.permute.xlu0 %1324
      %v1326 = vld [vmem:[%s440] sm:$0x1]
      %v1328 = vlaneseq
      %v1329 = vshrl.u32 %v1328, 7
      %v1330 = vsub.s32 0, %v1329
      %v1331 = vrot.slane %v1326, %v1330
      %v1333 = vmul.f32 %v1325, %v1331
      %v1334 = vpack.c.bf16 %v1333, %v1333
      %1335 = vst [vmem:[#allocation2 + $0x40] sm:$0xf] %v1334
      %1336 = vrot.lane.b32.xlu0 %v1117, 120
      %v1337 = vpop.permute.xlu0 %1336
      %v1338 = vld [vmem:[%s453] sm:$0x1]
      %v1340 = vlaneseq
      %v1341 = vshrl.u32 %v1340, 7
      %v1342 = vsub.s32 0, %v1341
      %v1343 = vrot.slane %v1338, %v1342
      %v1345 = vmul.f32 %v1337, %v1343
      %v1346 = vpack.c.bf16 %v1345, %v1345
      %v1348 = vrot.slane %v1346, 4
      %1350 = vst [vmem:[#allocation2 + $0x40] sm:$0xf0] %v1348
      %1351 = vrot.lane.b32.xlu0 %v1117, 119
      %v1352 = vpop.permute.xlu0 %1351
      %v1353 = vld [vmem:[%s469] sm:$0x1]
      %v1355 = vlaneseq
      %v1356 = vshrl.u32 %v1355, 7
      %v1357 = vsub.s32 0, %v1356
      %v1358 = vrot.slane %v1353, %v1357
      %v1360 = vmul.f32 %v1352, %v1358
      %v1361 = vpack.c.bf16 %v1360, %v1360
      %1362 = vst [vmem:[#allocation2 + $0x48] sm:$0xf] %v1361
      %1363 = vrot.lane.b32.xlu0 %v1117, 118
      %v1364 = vpop.permute.xlu0 %1363
      %v1365 = vld [vmem:[%s482] sm:$0x1]
      %v1367 = vlaneseq
      %v1368 = vshrl.u32 %v1367, 7
      %v1369 = vsub.s32 0, %v1368
      %v1370 = vrot.slane %v1365, %v1369
      %v1372 = vmul.f32 %v1364, %v1370
      %v1373 = vpack.c.bf16 %v1372, %v1372
      %v1375 = vrot.slane %v1373, 4
      %1377 = vst [vmem:[#allocation2 + $0x48] sm:$0xf0] %v1375
      %1378 = vrot.lane.b32.xlu0 %v1117, 114
      %v1379 = vpop.permute.xlu0 %1378
      %v1380 = vld [vmem:[%s498] sm:$0x1]
      %v1382 = vlaneseq
      %v1383 = vshrl.u32 %v1382, 7
      %v1384 = vsub.s32 0, %v1383
      %v1385 = vrot.slane %v1380, %v1384
      %v1387 = vmul.f32 %v1379, %v1385
      %v1388 = vpack.c.bf16 %v1387, %v1387
      %1389 = vst [vmem:[#allocation2 + $0x50] sm:$0xf] %v1388
      %1390 = vrot.lane.b32.xlu0 %v1117, 113
      %v1391 = vpop.permute.xlu0 %1390
      %v1392 = vld [vmem:[%s511] sm:$0x1]
      %v1394 = vlaneseq
      %v1395 = vshrl.u32 %v1394, 7
      %v1396 = vsub.s32 0, %v1395
      %v1397 = vrot.slane %v1392, %v1396
      %v1399 = vmul.f32 %v1391, %v1397
      %v1400 = vpack.c.bf16 %v1399, %v1399
      %v1402 = vrot.slane %v1400, 4
      %1404 = vst [vmem:[#allocation2 + $0x50] sm:$0xf0] %v1402
      %1405 = vrot.lane.b32.xlu0 %v1117, 112
      %v1406 = vpop.permute.xlu0 %1405
      %v1407 = vld [vmem:[%s527] sm:$0x1]
      %v1409 = vlaneseq
      %v1410 = vshrl.u32 %v1409, 7
      %v1411 = vsub.s32 0, %v1410
      %v1412 = vrot.slane %v1407, %v1411
      %v1414 = vmul.f32 %v1406, %v1412
      %v1415 = vpack.c.bf16 %v1414, %v1414
      %1416 = vst [vmem:[#allocation2 + $0x58] sm:$0xf] %v1415
      %1417 = vrot.lane.b32.xlu0 %v1117, 111
      %v1418 = vpop.permute.xlu0 %1417
      %v1419 = vld [vmem:[%s540] sm:$0x1]
      %v1421 = vlaneseq
      %v1422 = vshrl.u32 %v1421, 7
      %v1423 = vsub.s32 0, %v1422
      %v1424 = vrot.slane %v1419, %v1423
      %v1426 = vmul.f32 %v1418, %v1424
      %v1427 = vpack.c.bf16 %v1426, %v1426
      %v1429 = vrot.slane %v1427, 4
      %1431 = vst [vmem:[#allocation2 + $0x58] sm:$0xf0] %v1429
      %1432 = vrot.lane.b32.xlu0 %v1117, 110
      %v1433 = vpop.permute.xlu0 %1432
      %v1434 = vld [vmem:[%s556] sm:$0x1]
      %v1436 = vlaneseq
      %v1437 = vshrl.u32 %v1436, 7
      %v1438 = vsub.s32 0, %v1437
      %v1439 = vrot.slane %v1434, %v1438
      %v1441 = vmul.f32 %v1433, %v1439
      %v1442 = vpack.c.bf16 %v1441, %v1441
      %1443 = vst [vmem:[#allocation2 + $0x60] sm:$0xf] %v1442
      %1444 = vrot.lane.b32.xlu0 %v1115, 18
      %v1445 = vpop.permute.xlu0 %1444
      %v1446 = vld [vmem:[%s1] sm:$0x1]
      %v1448 = vlaneseq
      %v1449 = vshrl.u32 %v1448, 7
      %v1450 = vsub.s32 0, %v1449
      %v1451 = vrot.slane %v1446, %v1450
      %v1453 = vmul.f32 %v1445, %v1451
      %v1454 = vpack.c.bf16 %v1453, %v1453
      %v1456 = vrot.slane %v1454, 4
      %1458 = vst [vmem:[#allocation2 + $0x60] sm:$0xf0] %v1456
      %1459 = vrot.lane.b32.xlu0 %v1115, 17
      %v1460 = vpop.permute.xlu0 %1459
      %v1461 = vld [vmem:[%s232] sm:$0x1]
      %v1463 = vlaneseq
      %v1464 = vshrl.u32 %v1463, 7
      %v1465 = vsub.s32 0, %v1464
      %v1466 = vrot.slane %v1461, %v1465
      %v1468 = vmul.f32 %v1460, %v1466
      %v1469 = vpack.c.bf16 %v1468, %v1468
      %1470 = vst [vmem:[#allocation2 + $0x68] sm:$0xf] %v1469
      %1471 = vrot.lane.b32.xlu0 %v1115, 16
      %v1472 = vpop.permute.xlu0 %1471
      %v1473 = vld [vmem:[%s248] sm:$0x1]
      %v1475 = vlaneseq
      %v1476 = vshrl.u32 %v1475, 7
      %v1477 = vsub.s32 0, %v1476
      %v1478 = vrot.slane %v1473, %v1477
      %v1480 = vmul.f32 %v1472, %v1478
      %v1481 = vpack.c.bf16 %v1480, %v1480
      %v1483 = vrot.slane %v1481, 4
      %1485 = vst [vmem:[#allocation2 + $0x68] sm:$0xf0] %v1483
      %1486 = vrot.lane.b32.xlu0 %v1115, 15
      %v1487 = vpop.permute.xlu0 %1486
      %v1488 = vld [vmem:[%s261] sm:$0x1]
      %v1490 = vlaneseq
      %v1491 = vshrl.u32 %v1490, 7
      %v1492 = vsub.s32 0, %v1491
      %v1493 = vrot.slane %v1488, %v1492
      %v1495 = vmul.f32 %v1487, %v1493
      %v1496 = vpack.c.bf16 %v1495, %v1495
      %1497 = vst [vmem:[#allocation2 + $0x70] sm:$0xf] %v1496
      %1498 = vrot.lane.b32.xlu0 %v1115, 14
      %v1499 = vpop.permute.xlu0 %1498
      %v1500 = vld [vmem:[%s277] sm:$0x1]
      %v1502 = vlaneseq
      %v1503 = vshrl.u32 %v1502, 7
      %v1504 = vsub.s32 0, %v1503
      %v1505 = vrot.slane %v1500, %v1504
      %v1507 = vmul.f32 %v1499, %v1505
      %v1508 = vpack.c.bf16 %v1507, %v1507
      %v1510 = vrot.slane %v1508, 4
      %1512 = vst [vmem:[#allocation2 + $0x70] sm:$0xf0] %v1510
      %1513 = vrot.lane.b32.xlu0 %v1115, 10
      %v1514 = vpop.permute.xlu0 %1513
      %v1515 = vld [vmem:[%s290] sm:$0x1]
      %v1517 = vlaneseq
      %v1518 = vshrl.u32 %v1517, 7
      %v1519 = vsub.s32 0, %v1518
      %v1520 = vrot.slane %v1515, %v1519
      %v1522 = vmul.f32 %v1514, %v1520
      %v1523 = vpack.c.bf16 %v1522, %v1522
      %1524 = vst [vmem:[#allocation2 + $0x78] sm:$0xf] %v1523
      %1525 = vrot.lane.b32.xlu0 %v1115, 9
      %v1526 = vpop.permute.xlu0 %1525
      %v1527 = vld [vmem:[%s306] sm:$0x1]
      %v1529 = vlaneseq
      %v1530 = vshrl.u32 %v1529, 7
      %v1531 = vsub.s32 0, %v1530
      %v1532 = vrot.slane %v1527, %v1531
      %v1534 = vmul.f32 %v1526, %v1532
      %v1535 = vpack.c.bf16 %v1534, %v1534
      %v1537 = vrot.slane %v1535, 4
      %1539 = vst [vmem:[#allocation2 + $0x78] sm:$0xf0] %v1537
      %1540 = vrot.lane.b32.xlu0 %v1115, 8
      %v1541 = vpop.permute.xlu0 %1540
      %v1542 = vld [vmem:[%s319] sm:$0x1]
      %v1544 = vlaneseq
      %v1545 = vshrl.u32 %v1544, 7
      %v1546 = vsub.s32 0, %v1545
      %v1547 = vrot.slane %v1542, %v1546
      %v1549 = vmul.f32 %v1541, %v1547
      %v1550 = vpack.c.bf16 %v1549, %v1549
      %1551 = vst [vmem:[#allocation2 + $0x80] sm:$0xf] %v1550
      %1552 = vrot.lane.b32.xlu0 %v1115, 7
      %v1553 = vpop.permute.xlu0 %1552
      %v1554 = vld [vmem:[%s335] sm:$0x1]
      %v1556 = vlaneseq
      %v1557 = vshrl.u32 %v1556, 7
      %v1558 = vsub.s32 0, %v1557
      %v1559 = vrot.slane %v1554, %v1558
      %v1561 = vmul.f32 %v1553, %v1559
      %v1562 = vpack.c.bf16 %v1561, %v1561
      %v1564 = vrot.slane %v1562, 4
      %1566 = vst [vmem:[#allocation2 + $0x80] sm:$0xf0] %v1564
      %1567 = vrot.lane.b32.xlu0 %v1115, 6
      %v1568 = vpop.permute.xlu0 %1567
      %v1569 = vld [vmem:[%s348] sm:$0x1]
      %v1571 = vlaneseq
      %v1572 = vshrl.u32 %v1571, 7
      %v1573 = vsub.s32 0, %v1572
      %v1574 = vrot.slane %v1569, %v1573
      %v1576 = vmul.f32 %v1568, %v1574
      %v1577 = vpack.c.bf16 %v1576, %v1576
      %1578 = vst [vmem:[#allocation2 + $0x88] sm:$0xf] %v1577
      %1579 = vrot.lane.b32.xlu0 %v1115, 2
      %v1580 = vpop.permute.xlu0 %1579
      %v1581 = vld [vmem:[%s364] sm:$0x1]
      %v1583 = vlaneseq
      %v1584 = vshrl.u32 %v1583, 7
      %v1585 = vsub.s32 0, %v1584
      %v1586 = vrot.slane %v1581, %v1585
      %v1588 = vmul.f32 %v1580, %v1586
      %v1589 = vpack.c.bf16 %v1588, %v1588
      %v1591 = vrot.slane %v1589, 4
      %1593 = vst [vmem:[#allocation2 + $0x88] sm:$0xf0] %v1591
      %1594 = vrot.lane.b32.xlu0 %v1115, 1
      %v1595 = vpop.permute.xlu0 %1594
      %v1596 = vld [vmem:[%s377] sm:$0x1]
      %v1598 = vlaneseq
      %v1599 = vshrl.u32 %v1598, 7
      %v1600 = vsub.s32 0, %v1599
      %v1601 = vrot.slane %v1596, %v1600
      %v1603 = vmul.f32 %v1595, %v1601
      %v1604 = vpack.c.bf16 %v1603, %v1603
      %1605 = vst [vmem:[#allocation2 + $0x90] sm:$0xf] %v1604
      %v1606 = vpack.c.bf16 %v1115, %v1115
      %v1608 = vrot.slane %v1606, 4
      %1610 = vst [vmem:[#allocation2 + $0x90] sm:$0xf0] %v1608
      %1611 = vrot.lane.b32.xlu0 %v1115, 127
      %v1612 = vpop.permute.xlu0 %1611
      %v1613 = vld [vmem:[%s395] sm:$0x1]
      %v1615 = vlaneseq
      %v1616 = vshrl.u32 %v1615, 7
      %v1617 = vsub.s32 0, %v1616
      %v1618 = vrot.slane %v1613, %v1617
      %v1620 = vmul.f32 %v1612, %v1618
      %v1621 = vpack.c.bf16 %v1620, %v1620
      %1622 = vst [vmem:[#allocation2 + $0x98] sm:$0xf] %v1621
      %1623 = vrot.lane.b32.xlu0 %v1115, 126
      %v1624 = vpop.permute.xlu0 %1623
      %v1625 = vld [vmem:[%s411] sm:$0x1]
      %v1627 = vlaneseq
      %v1628 = vshrl.u32 %v1627, 7
      %v1629 = vsub.s32 0, %v1628
      %v1630 = vrot.slane %v1625, %v1629
      %v1632 = vmul.f32 %v1624, %v1630
      %v1633 = vpack.c.bf16 %v1632, %v1632
      %v1635 = vrot.slane %v1633, 4
      %1637 = vst [vmem:[#allocation2 + $0x98] sm:$0xf0] %v1635
      %1638 = vrot.lane.b32.xlu0 %v1115, 122
      %v1639 = vpop.permute.xlu0 %1638
      %v1640 = vld [vmem:[%s424] sm:$0x1]
      %v1642 = vlaneseq
      %v1643 = vshrl.u32 %v1642, 7
      %v1644 = vsub.s32 0, %v1643
      %v1645 = vrot.slane %v1640, %v1644
      %v1647 = vmul.f32 %v1639, %v1645
      %v1648 = vpack.c.bf16 %v1647, %v1647
      %1649 = vst [vmem:[#allocation2 + $0xa0] sm:$0xf] %v1648
      %1650 = vrot.lane.b32.xlu0 %v1115, 121
      %v1651 = vpop.permute.xlu0 %1650
      %v1652 = vld [vmem:[%s440] sm:$0x1]
      %v1654 = vlaneseq
      %v1655 = vshrl.u32 %v1654, 7
      %v1656 = vsub.s32 0, %v1655
      %v1657 = vrot.slane %v1652, %v1656
      %v1659 = vmul.f32 %v1651, %v1657
      %v1660 = vpack.c.bf16 %v1659, %v1659
      %v1662 = vrot.slane %v1660, 4
      %1664 = vst [vmem:[#allocation2 + $0xa0] sm:$0xf0] %v1662
      %1665 = vrot.lane.b32.xlu0 %v1115, 120
      %v1666 = vpop.permute.xlu0 %1665
      %v1667 = vld [vmem:[%s453] sm:$0x1]
      %v1669 = vlaneseq
      %v1670 = vshrl.u32 %v1669, 7
      %v1671 = vsub.s32 0, %v1670
      %v1672 = vrot.slane %v1667, %v1671
      %v1674 = vmul.f32 %v1666, %v1672
      %v1675 = vpack.c.bf16 %v1674, %v1674
      %1676 = vst [vmem:[#allocation2 + $0xa8] sm:$0xf] %v1675
      %1677 = vrot.lane.b32.xlu0 %v1115, 119
      %v1678 = vpop.permute.xlu0 %1677
      %v1679 = vld [vmem:[%s469] sm:$0x1]
      %v1681 = vlaneseq
      %v1682 = vshrl.u32 %v1681, 7
      %v1683 = vsub.s32 0, %v1682
      %v1684 = vrot.slane %v1679, %v1683
      %v1686 = vmul.f32 %v1678, %v1684
      %v1687 = vpack.c.bf16 %v1686, %v1686
      %v1689 = vrot.slane %v1687, 4
      %1691 = vst [vmem:[#allocation2 + $0xa8] sm:$0xf0] %v1689
      %1692 = vrot.lane.b32.xlu0 %v1115, 118
      %v1693 = vpop.permute.xlu0 %1692
      %v1694 = vld [vmem:[%s482] sm:$0x1]
      %v1696 = vlaneseq
      %v1697 = vshrl.u32 %v1696, 7
      %v1698 = vsub.s32 0, %v1697
      %v1699 = vrot.slane %v1694, %v1698
      %v1701 = vmul.f32 %v1693, %v1699
      %v1702 = vpack.c.bf16 %v1701, %v1701
      %1703 = vst [vmem:[#allocation2 + $0xb0] sm:$0xf] %v1702
      %1704 = vrot.lane.b32.xlu0 %v1115, 114
      %v1705 = vpop.permute.xlu0 %1704
      %v1706 = vld [vmem:[%s498] sm:$0x1]
      %v1708 = vlaneseq
      %v1709 = vshrl.u32 %v1708, 7
      %v1710 = vsub.s32 0, %v1709
      %v1711 = vrot.slane %v1706, %v1710
      %v1713 = vmul.f32 %v1705, %v1711
      %v1714 = vpack.c.bf16 %v1713, %v1713
      %v1716 = vrot.slane %v1714, 4
      %1718 = vst [vmem:[#allocation2 + $0xb0] sm:$0xf0] %v1716
      %1719 = vrot.lane.b32.xlu0 %v1115, 113
      %v1720 = vpop.permute.xlu0 %1719
      %v1721 = vld [vmem:[%s511] sm:$0x1]
      %v1723 = vlaneseq
      %v1724 = vshrl.u32 %v1723, 7
      %v1725 = vsub.s32 0, %v1724
      %v1726 = vrot.slane %v1721, %v1725
      %v1728 = vmul.f32 %v1720, %v1726
      %v1729 = vpack.c.bf16 %v1728, %v1728
      %1730 = vst [vmem:[#allocation2 + $0xb8] sm:$0xf] %v1729
      %1731 = vrot.lane.b32.xlu0 %v1115, 112
      %v1732 = vpop.permute.xlu0 %1731
      %v1733 = vld [vmem:[%s527] sm:$0x1]
      %v1735 = vlaneseq
      %v1736 = vshrl.u32 %v1735, 7
      %v1737 = vsub.s32 0, %v1736
      %v1738 = vrot.slane %v1733, %v1737
      %v1740 = vmul.f32 %v1732, %v1738
      %v1741 = vpack.c.bf16 %v1740, %v1740
      %v1743 = vrot.slane %v1741, 4
      %1745 = vst [vmem:[#allocation2 + $0xb8] sm:$0xf0] %v1743
      %1746 = vrot.lane.b32.xlu0 %v1115, 111
      %v1747 = vpop.permute.xlu0 %1746
      %v1748 = vld [vmem:[%s540] sm:$0x1]
      %v1750 = vlaneseq
      %v1751 = vshrl.u32 %v1750, 7
      %v1752 = vsub.s32 0, %v1751
      %v1753 = vrot.slane %v1748, %v1752
      %v1755 = vmul.f32 %v1747, %v1753
      %v1756 = vpack.c.bf16 %v1755, %v1755
      %1757 = vst [vmem:[#allocation2 + $0xc0] sm:$0xf] %v1756
      %1758 = vrot.lane.b32.xlu0 %v1115, 110
      %v1759 = vpop.permute.xlu0 %1758
      %v1760 = vld [vmem:[%s556] sm:$0x1]
      %v1762 = vlaneseq
      %v1763 = vshrl.u32 %v1762, 7
      %v1764 = vsub.s32 0, %v1763
      %v1765 = vrot.slane %v1760, %v1764
      %v1767 = vmul.f32 %v1759, %v1765
      %v1768 = vpack.c.bf16 %v1767, %v1767
      %v1770 = vrot.slane %v1768, 4
      %1772 = vst [vmem:[#allocation2 + $0xc0] sm:$0xf0] %v1770
      %v1773 = vld [vmem:[%s206] sm:$0xff]
      %v1774 = vld [vmem:[%s206 + $0x8] sm:$0xff]
      %v1775 = vld [vmem:[%s206 + $0x10] sm:$0xff]
      %v1776 = vld [vmem:[%s206 + $0x18] sm:$0xff]
      %v1777 = vld [vmem:[%s206 + $0x20] sm:$0xff]
      %v1778 = vld [vmem:[%s206 + $0x28] sm:$0xff]
      %v1779 = vld [vmem:[%s206 + $0x30] sm:$0xff]
      %v1780 = vld [vmem:[%s206 + $0x38] sm:$0xff]
      %v1781 = vld [vmem:[#allocation2] sm:$0xff]
      %v1782 = vld [vmem:[#allocation2 + $0x8] sm:$0xff]
      %v1783 = vld [vmem:[#allocation2 + $0x10] sm:$0xff]
      %v1784 = vld [vmem:[#allocation2 + $0x18] sm:$0xff]
      %v1785 = vld [vmem:[#allocation2 + $0x20] sm:$0xff]
      %v1786 = vld [vmem:[#allocation2 + $0x28] sm:$0xff]
      %v1787 = vld [vmem:[#allocation2 + $0x30] sm:$0xff]
      %v1788 = vld [vmem:[#allocation2 + $0x38] sm:$0xff]
      %v1789 = vld [vmem:[#allocation2 + $0x40] sm:$0xff]
      %v1790 = vld [vmem:[#allocation2 + $0x48] sm:$0xff]
      %v1791 = vld [vmem:[#allocation2 + $0x50] sm:$0xff]
      %v1792 = vld [vmem:[#allocation2 + $0x58] sm:$0xff]
      %v1793 = vld [vmem:[#allocation2 + $0x60] sm:$0xff]
      %v1794 = vld [vmem:[#allocation2 + $0x68] sm:$0xff]
      %v1795 = vld [vmem:[#allocation2 + $0x70] sm:$0xff]
      %v1796 = vld [vmem:[#allocation2 + $0x78] sm:$0xff]
      %v1797 = vld [vmem:[#allocation2 + $0x80] sm:$0xff]
      %v1798 = vld [vmem:[#allocation2 + $0x88] sm:$0xff]
      %v1799 = vld [vmem:[#allocation2 + $0x90] sm:$0xff]
      %v1800 = vld [vmem:[#allocation2 + $0x98] sm:$0xff]
      %v1801 = vld [vmem:[#allocation2 + $0xa0] sm:$0xff]
      %v1802 = vld [vmem:[#allocation2 + $0xa8] sm:$0xff]
      %v1803 = vld [vmem:[#allocation2 + $0xb0] sm:$0xff]
      %v1804 = vld [vmem:[#allocation2 + $0xb8] sm:$0xff]
      %v1805 = vld [vmem:[#allocation2 + $0xc0] sm:$0xff]
      %v1806 = vld [vmem:[%s211] sm:$0xff]
      %v1807 = vld [vmem:[%s211 + $0x8] sm:$0xff]
      %v1808 = vld [vmem:[%s211 + $0x10] sm:$0xff]
      %v1809 = vld [vmem:[%s211 + $0x18] sm:$0xff]
      %1811 = vset.pattern.permute.xlu0 0
      %1812 = vperm.xlu0 %1811, %v1806
      %v1813 = vpop.permute.xlu0 %1812
      %1816 = vset.pattern.permute.xlu0 0
      %1817 = vperm.xlu0 %1816, %v1807
      %v1818 = vpop.permute.xlu0 %1817
      %1821 = vset.pattern.permute.xlu0 0
      %1822 = vperm.xlu0 %1821, %v1808
      %v1823 = vpop.permute.xlu0 %1822
      %1826 = vset.pattern.permute.xlu0 0
      %1827 = vperm.xlu0 %1826, %v1809
      %v1828 = vpop.permute.xlu0 %1827
      %v1838 = vunpack.c.l.b16 %v1773
      %v1839 = vunpack.c.h.b16 %v1773
      %v1840 = vunpack.c.l.b16 %v1774
      %v1841 = vunpack.c.h.b16 %v1774
      %v1842 = vunpack.c.l.b16 %v1775
      %v1843 = vunpack.c.h.b16 %v1775
      %v1844 = vunpack.c.l.b16 %v1776
      %v1845 = vunpack.c.h.b16 %v1776
      %v1846 = vunpack.c.l.b16 %v1777
      %v1847 = vunpack.c.h.b16 %v1777
      %v1848 = vunpack.c.l.b16 %v1778
      %v1849 = vunpack.c.h.b16 %v1778
      %v1850 = vunpack.c.l.b16 %v1779
      %v1851 = vunpack.c.h.b16 %v1779
      %v1852 = vunpack.c.l.b16 %v1780
      %v1853 = vunpack.c.h.b16 %v1780
      %v1854 = vpack.c.b16 %v1842, %v1838
      %v1855 = vpack.c.b16 %v1843, %v1839
      %v1856 = vpack.c.b16 %v1844, %v1840
      %v1857 = vpack.c.b16 %v1845, %v1841
      %v1858 = vpack.c.b16 %v1850, %v1846
      %v1859 = vpack.c.b16 %v1851, %v1847
      %v1860 = vpack.c.b16 %v1852, %v1848
      %v1861 = vpack.c.b16 %v1853, %v1849
      %v1869 = vsel %vm987, %v1857, 0
      %v1872 = vsel %vm987, %v1861, 0
      %1874 = vmatprep.subr.bf16.mxu0 0
      %1875 = vmatpush1.bf16.msra.mxu0 %v1781
      %1876 = vmatprep.subr.bf16.mxu0 0
      %1877 = vmatpush1.bf16.msra.mxu0 %v1782
      %1878 = vmatprep.subr.bf16.mxu0 0
      %1879 = vmatpush1.bf16.msra.mxu0 %v1783
      %1880 = vmatprep.subr.bf16.mxu0 0
      %1881 = vmatpush1.bf16.msra.mxu0 %v1784
      %1882 = vmatprep.subr.bf16.mxu0 0
      %1883 = vmatpush1.bf16.msra.mxu0 %v1785
      %1884 = vmatprep.subr.bf16.mxu0 0
      %1885 = vmatpush1.bf16.msra.mxu0 %v1786
      %1886 = vmatprep.subr.bf16.mxu0 0
      %1887 = vmatpush1.bf16.msra.mxu0 %v1787
      %1888 = vmatprep.subr.bf16.mxu0 0
      %1889 = vmatpush1.bf16.msra.mxu0 %v1788
      %1890 = vmatprep.subr.bf16.mxu0 0
      %1891 = vmatpush1.bf16.msra.mxu0 %v1789
      %1892 = vmatprep.subr.bf16.mxu0 0
      %1893 = vmatpush1.bf16.msra.mxu0 %v1790
      %1894 = vmatprep.subr.bf16.mxu0 0
      %1895 = vmatpush1.bf16.msra.mxu0 %v1791
      %1896 = vmatprep.subr.bf16.mxu0 0
      %1897 = vmatpush1.bf16.msra.mxu0 %v1792
      %1898 = vmatprep.subr.bf16.mxu0 0
      %1899 = vmatpush1.bf16.msra.mxu0 %v1793
      %1900 = vmatprep.subr.bf16.mxu0 0
      %1901 = vmatpush1.bf16.msra.mxu0 %v1794
      %1902 = vmatprep.subr.bf16.mxu0 0
      %1903 = vmatpush1.bf16.msra.mxu0 %v1795
      %1904 = vmatprep.subr.bf16.mxu0 0
      %1905 = vmatpush1.bf16.msra.mxu0 %v1796
      %1906 = vmatprep.mubr.bf16.mxu0 %v1855
      %1907 = vmatmul.mubr.bf16.gmra.mrb[0].mxu0 %v1854
      %v1908 = vpop.f32.mrb[0].mxu0
      %v1909 = vadd.f32 %v1813, %v1908
      %v1910 = vpop.f32.mrb[0].mxu0
      %v1911 = vpop.f32.mrb[0].mxu0
      %v1912 = vadd.f32 %v1818, %v1911
      %v1913 = vpop.f32.mrb[0].mxu0
      %1914 = vmatprep.mubr.bf16.mxu0 %v1859
      %1915 = vmatmul.mubr.bf16.gmra.mrb[0].mxu0 %v1858
      %v1916 = vpop.f32.mrb[0].mxu0
      %v1917 = vadd.f32 %v1823, %v1916
      %v1918 = vpop.f32.mrb[0].mxu0
      %v1919 = vpop.f32.mrb[0].mxu0
      %v1920 = vadd.f32 %v1828, %v1919
      %v1921 = vpop.f32.mrb[0].mxu0
      %1922 = vdwg.mxu0
      %1923 = vmatprep.subr.bf16.mxu0 0
      %1924 = vmatpush1.bf16.msra.mxu0 %v1797
      %1925 = vmatprep.subr.bf16.mxu0 0
      %1926 = vmatpush1.bf16.msra.mxu0 %v1798
      %1927 = vmatprep.subr.bf16.mxu0 0
      %1928 = vmatpush1.bf16.msra.mxu0 %v1799
      %1929 = vmatprep.subr.bf16.mxu0 0
      %1930 = vmatpush1.bf16.msra.mxu0 %v1800
      %1931 = vmatprep.subr.bf16.mxu0 0
      %1932 = vmatpush1.bf16.msra.mxu0 %v1801
      %1933 = vmatprep.subr.bf16.mxu0 0
      %1934 = vmatpush1.bf16.msra.mxu0 %v1802
      %1935 = vmatprep.subr.bf16.mxu0 0
      %1936 = vmatpush1.bf16.msra.mxu0 %v1803
      %1937 = vmatprep.subr.bf16.mxu0 0
      %1938 = vmatpush1.bf16.msra.mxu0 %v1804
      %1939 = vmatprep.subr.bf16.mxu0 0
      %1940 = vmatpush1.bf16.msra.mxu0 %v1805
      %1941 = vmatprep.subr.bf16.mxu0 0
      %1942 = vmatpush1.bf16.msra.mxu0 0
      %1943 = vmatprep.subr.bf16.mxu0 0
      %1944 = vmatpush1.bf16.msra.mxu0 0
      %1945 = vmatprep.subr.bf16.mxu0 0
      %1946 = vmatpush1.bf16.msra.mxu0 0
      %1947 = vmatprep.subr.bf16.mxu0 0
      %1948 = vmatpush1.bf16.msra.mxu0 0
      %1949 = vmatprep.subr.bf16.mxu0 0
      %1950 = vmatpush1.bf16.msra.mxu0 0
      %1951 = vmatprep.subr.bf16.mxu0 0
      %1952 = vmatpush1.bf16.msra.mxu0 0
      %1953 = vmatprep.subr.bf16.mxu0 0
      %1954 = vmatpush1.bf16.msra.mxu0 0
      %1955 = vmatprep.mubr.bf16.mxu0 %v1869
      %1956 = vmatmul.mubr.bf16.gmra.mrb[0].mxu0 %v1856
      %v1957 = vpop.f32.mrb[0].mxu0
      %v1958 = vadd.f32 %v1909, %v1957
      %v1959 = vpop.f32.mrb[0].mxu0
      %v1960 = vpop.f32.mrb[0].mxu0
      %v1961 = vadd.f32 %v1912, %v1960
      %v1962 = vpop.f32.mrb[0].mxu0
      %1963 = vmatprep.mubr.bf16.mxu0 %v1872
      %1964 = vmatmul.mubr.bf16.gmra.mrb[0].mxu0 %v1860
      %v1965 = vpop.f32.mrb[0].mxu0
      %v1966 = vadd.f32 %v1917, %v1965
      %v1967 = vpop.f32.mrb[0].mxu0
      %v1968 = vpop.f32.mrb[0].mxu0
      %v1969 = vadd.f32 %v1920, %v1968
      %v1970 = vpop.f32.mrb[0].mxu0
      %1971 = vdwg.mxu0
      %v1972 = vxor.u32 %v1958, 2147483648
      %v1973 = vxor.u32 %v1961, 2147483648
      %v1974 = vxor.u32 %v1966, 2147483648
      %v1975 = vmul.f32 %v1972, 1.442695
      %v1976 = vpow.pop %v1975
      %v1977 = vmul.f32 %v1973, 1.442695
      %v1978 = vpow.pop %v1977
      %v1979 = vmul.f32 %v1974, 1.442695
      %v1980 = vpow.pop %v1979
      %v1981 = vadd.f32 %v1976, 1.0
      %v1982 = vadd.f32 %v1978, 1.0
      %v1983 = vadd.f32 %v1980, 1.0
      %v1984 = vrcp.pop %v1981
      %v1985 = vmul.f32 1.0, %v1984
      %v1986 = vrcp.pop %v1982
      %v1987 = vmul.f32 1.0, %v1986
      %v1988 = vrcp.pop %v1983
      %v1989 = vmul.f32 1.0, %v1988
      %v1990 = vtanh.pop %v1969
      %v1991 = vmul.f32 %v1987, %v1113
      %v1992 = vmul.f32 %v1985, %v1990
      %v1993 = vadd.f32 %v1991, %v1992
      %v1994 = vtanh.pop %v1993
      %v1995 = vmul.f32 %v1989, %v1994
      %s1996 = scalar_lea.vmem %s0, 16
      %v1997 = vld [vmem:[%s1996] sm:$0xff]
      %1998 = vrot.lane.b32.xlu0 %v1997, 18
      %v1999 = vpop.permute.xlu0 %1998
      %v2000 = vld [vmem:[%s1] sm:$0x1]
      %v2002 = vlaneseq
      %v2003 = vshrl.u32 %v2002, 7
      %v2004 = vsub.s32 0, %v2003
      %v2005 = vrot.slane %v2000, %v2004
      %v2007 = vmul.f32 %v1999, %v2005
      %v2008 = vpack.c.bf16 %v2007, %v2007
      %2009 = vst [vmem:[#allocation2] sm:$0xf] %v2008
      %2010 = vrot.lane.b32.xlu0 %v1997, 17
      %v2011 = vpop.permute.xlu0 %2010
      %v2012 = vld [vmem:[%s232] sm:$0x1]
      %v2014 = vlaneseq
      %v2015 = vshrl.u32 %v2014, 7
      %v2016 = vsub.s32 0, %v2015
      %v2017 = vrot.slane %v2012, %v2016
      %v2019 = vmul.f32 %v2011, %v2017
      %v2020 = vpack.c.bf16 %v2019, %v2019
      %v2022 = vrot.slane %v2020, 4
      %2024 = vst [vmem:[#allocation2] sm:$0xf0] %v2022
      %2025 = vrot.lane.b32.xlu0 %v1997, 16
      %v2026 = vpop.permute.xlu0 %2025
      %v2027 = vld [vmem:[%s248] sm:$0x1]
      %v2029 = vlaneseq
      %v2030 = vshrl.u32 %v2029, 7
      %v2031 = vsub.s32 0, %v2030
      %v2032 = vrot.slane %v2027, %v2031
      %v2034 = vmul.f32 %v2026, %v2032
      %v2035 = vpack.c.bf16 %v2034, %v2034
      %2036 = vst [vmem:[#allocation2 + $0x8] sm:$0xf] %v2035
      %2037 = vrot.lane.b32.xlu0 %v1997, 15
      %v2038 = vpop.permute.xlu0 %2037
      %v2039 = vld [vmem:[%s261] sm:$0x1]
      %v2041 = vlaneseq
      %v2042 = vshrl.u32 %v2041, 7
      %v2043 = vsub.s32 0, %v2042
      %v2044 = vrot.slane %v2039, %v2043
      %v2046 = vmul.f32 %v2038, %v2044
      %v2047 = vpack.c.bf16 %v2046, %v2046
      %v2049 = vrot.slane %v2047, 4
      %2051 = vst [vmem:[#allocation2 + $0x8] sm:$0xf0] %v2049
      %2052 = vrot.lane.b32.xlu0 %v1997, 14
      %v2053 = vpop.permute.xlu0 %2052
      %v2054 = vld [vmem:[%s277] sm:$0x1]
      %v2056 = vlaneseq
      %v2057 = vshrl.u32 %v2056, 7
      %v2058 = vsub.s32 0, %v2057
      %v2059 = vrot.slane %v2054, %v2058
      %v2061 = vmul.f32 %v2053, %v2059
      %v2062 = vpack.c.bf16 %v2061, %v2061
      %2063 = vst [vmem:[#allocation2 + $0x10] sm:$0xf] %v2062
      %2064 = vrot.lane.b32.xlu0 %v1997, 10
      %v2065 = vpop.permute.xlu0 %2064
      %v2066 = vld [vmem:[%s290] sm:$0x1]
      %v2068 = vlaneseq
      %v2069 = vshrl.u32 %v2068, 7
      %v2070 = vsub.s32 0, %v2069
      %v2071 = vrot.slane %v2066, %v2070
      %v2073 = vmul.f32 %v2065, %v2071
      %v2074 = vpack.c.bf16 %v2073, %v2073
      %v2076 = vrot.slane %v2074, 4
      %2078 = vst [vmem:[#allocation2 + $0x10] sm:$0xf0] %v2076
      %2079 = vrot.lane.b32.xlu0 %v1997, 9
      %v2080 = vpop.permute.xlu0 %2079
      %v2081 = vld [vmem:[%s306] sm:$0x1]
      %v2083 = vlaneseq
      %v2084 = vshrl.u32 %v2083, 7
      %v2085 = vsub.s32 0, %v2084
      %v2086 = vrot.slane %v2081, %v2085
      %v2088 = vmul.f32 %v2080, %v2086
      %v2089 = vpack.c.bf16 %v2088, %v2088
      %2090 = vst [vmem:[#allocation2 + $0x18] sm:$0xf] %v2089
      %2091 = vrot.lane.b32.xlu0 %v1997, 8
      %v2092 = vpop.permute.xlu0 %2091
      %v2093 = vld [vmem:[%s319] sm:$0x1]
      %v2095 = vlaneseq
      %v2096 = vshrl.u32 %v2095, 7
      %v2097 = vsub.s32 0, %v2096
      %v2098 = vrot.slane %v2093, %v2097
      %v2100 = vmul.f32 %v2092, %v2098
      %v2101 = vpack.c.bf16 %v2100, %v2100
      %v2103 = vrot.slane %v2101, 4
      %2105 = vst [vmem:[#allocation2 + $0x18] sm:$0xf0] %v2103
      %2106 = vrot.lane.b32.xlu0 %v1997, 7
      %v2107 = vpop.permute.xlu0 %2106
      %v2108 = vld [vmem:[%s335] sm:$0x1]
      %v2110 = vlaneseq
      %v2111 = vshrl.u32 %v2110, 7
      %v2112 = vsub.s32 0, %v2111
      %v2113 = vrot.slane %v2108, %v2112
      %v2115 = vmul.f32 %v2107, %v2113
      %v2116 = vpack.c.bf16 %v2115, %v2115
      %2117 = vst [vmem:[#allocation2 + $0x20] sm:$0xf] %v2116
      %2118 = vrot.lane.b32.xlu0 %v1997, 6
      %v2119 = vpop.permute.xlu0 %2118
      %v2120 = vld [vmem:[%s348] sm:$0x1]
      %v2122 = vlaneseq
      %v2123 = vshrl.u32 %v2122, 7
      %v2124 = vsub.s32 0, %v2123
      %v2125 = vrot.slane %v2120, %v2124
      %v2127 = vmul.f32 %v2119, %v2125
      %v2128 = vpack.c.bf16 %v2127, %v2127
      %v2130 = vrot.slane %v2128, 4
      %2132 = vst [vmem:[#allocation2 + $0x20] sm:$0xf0] %v2130
      %2133 = vrot.lane.b32.xlu0 %v1997, 2
      %v2134 = vpop.permute.xlu0 %2133
      %v2135 = vld [vmem:[%s364] sm:$0x1]
      %v2137 = vlaneseq
      %v2138 = vshrl.u32 %v2137, 7
      %v2139 = vsub.s32 0, %v2138
      %v2140 = vrot.slane %v2135, %v2139
      %v2142 = vmul.f32 %v2134, %v2140
      %v2143 = vpack.c.bf16 %v2142, %v2142
      %2144 = vst [vmem:[#allocation2 + $0x28] sm:$0xf] %v2143
      %2145 = vrot.lane.b32.xlu0 %v1997, 1
      %v2146 = vpop.permute.xlu0 %2145
      %v2147 = vld [vmem:[%s377] sm:$0x1]
      %v2149 = vlaneseq
      %v2150 = vshrl.u32 %v2149, 7
      %v2151 = vsub.s32 0, %v2150
      %v2152 = vrot.slane %v2147, %v2151
      %v2154 = vmul.f32 %v2146, %v2152
      %v2155 = vpack.c.bf16 %v2154, %v2154
      %v2157 = vrot.slane %v2155, 4
      %2159 = vst [vmem:[#allocation2 + $0x28] sm:$0xf0] %v2157
      %v2160 = vpack.c.bf16 %v1997, %v1997
      %2161 = vst [vmem:[#allocation2 + $0x30] sm:$0xf] %v2160
      %2162 = vrot.lane.b32.xlu0 %v1997, 127
      %v2163 = vpop.permute.xlu0 %2162
      %v2164 = vld [vmem:[%s395] sm:$0x1]
      %v2166 = vlaneseq
      %v2167 = vshrl.u32 %v2166, 7
      %v2168 = vsub.s32 0, %v2167
      %v2169 = vrot.slane %v2164, %v2168
      %v2171 = vmul.f32 %v2163, %v2169
      %v2172 = vpack.c.bf16 %v2171, %v2171
      %v2174 = vrot.slane %v2172, 4
      %2176 = vst [vmem:[#allocation2 + $0x30] sm:$0xf0] %v2174
      %2177 = vrot.lane.b32.xlu0 %v1997, 126
      %v2178 = vpop.permute.xlu0 %2177
      %v2179 = vld [vmem:[%s411] sm:$0x1]
      %v2181 = vlaneseq
      %v2182 = vshrl.u32 %v2181, 7
      %v2183 = vsub.s32 0, %v2182
      %v2184 = vrot.slane %v2179, %v2183
      %v2186 = vmul.f32 %v2178, %v2184
      %v2187 = vpack.c.bf16 %v2186, %v2186
      %2188 = vst [vmem:[#allocation2 + $0x38] sm:$0xf] %v2187
      %2189 = vrot.lane.b32.xlu0 %v1997, 122
      %v2190 = vpop.permute.xlu0 %2189
      %v2191 = vld [vmem:[%s424] sm:$0x1]
      %v2193 = vlaneseq
      %v2194 = vshrl.u32 %v2193, 7
      %v2195 = vsub.s32 0, %v2194
      %v2196 = vrot.slane %v2191, %v2195
      %v2198 = vmul.f32 %v2190, %v2196
      %v2199 = vpack.c.bf16 %v2198, %v2198
      %v2201 = vrot.slane %v2199, 4
      %2203 = vst [vmem:[#allocation2 + $0x38] sm:$0xf0] %v2201
      %2204 = vrot.lane.b32.xlu0 %v1997, 121
      %v2205 = vpop.permute.xlu0 %2204
      %v2206 = vld [vmem:[%s440] sm:$0x1]
      %v2208 = vlaneseq
      %v2209 = vshrl.u32 %v2208, 7
      %v2210 = vsub.s32 0, %v2209
      %v2211 = vrot.slane %v2206, %v2210
      %v2213 = vmul.f32 %v2205, %v2211
      %v2214 = vpack.c.bf16 %v2213, %v2213
      %2215 = vst [vmem:[#allocation2 + $0x40] sm:$0xf] %v2214
      %2216 = vrot.lane.b32.xlu0 %v1997, 120
      %v2217 = vpop.permute.xlu0 %2216
      %v2218 = vld [vmem:[%s453] sm:$0x1]
      %v2220 = vlaneseq
      %v2221 = vshrl.u32 %v2220, 7
      %v2222 = vsub.s32 0, %v2221
      %v2223 = vrot.slane %v2218, %v2222
      %v2225 = vmul.f32 %v2217, %v2223
      %v2226 = vpack.c.bf16 %v2225, %v2225
      %v2228 = vrot.slane %v2226, 4
      %2230 = vst [vmem:[#allocation2 + $0x40] sm:$0xf0] %v2228
      %2231 = vrot.lane.b32.xlu0 %v1997, 119
      %v2232 = vpop.permute.xlu0 %2231
      %v2233 = vld [vmem:[%s469] sm:$0x1]
      %v2235 = vlaneseq
      %v2236 = vshrl.u32 %v2235, 7
      %v2237 = vsub.s32 0, %v2236
      %v2238 = vrot.slane %v2233, %v2237
      %v2240 = vmul.f32 %v2232, %v2238
      %v2241 = vpack.c.bf16 %v2240, %v2240
      %2242 = vst [vmem:[#allocation2 + $0x48] sm:$0xf] %v2241
      %2243 = vrot.lane.b32.xlu0 %v1997, 118
      %v2244 = vpop.permute.xlu0 %2243
      %v2245 = vld [vmem:[%s482] sm:$0x1]
      %v2247 = vlaneseq
      %v2248 = vshrl.u32 %v2247, 7
      %v2249 = vsub.s32 0, %v2248
      %v2250 = vrot.slane %v2245, %v2249
      %v2252 = vmul.f32 %v2244, %v2250
      %v2253 = vpack.c.bf16 %v2252, %v2252
      %v2255 = vrot.slane %v2253, 4
      %2257 = vst [vmem:[#allocation2 + $0x48] sm:$0xf0] %v2255
      %2258 = vrot.lane.b32.xlu0 %v1997, 114
      %v2259 = vpop.permute.xlu0 %2258
      %v2260 = vld [vmem:[%s498] sm:$0x1]
      %v2262 = vlaneseq
      %v2263 = vshrl.u32 %v2262, 7
      %v2264 = vsub.s32 0, %v2263
      %v2265 = vrot.slane %v2260, %v2264
      %v2267 = vmul.f32 %v2259, %v2265
      %v2268 = vpack.c.bf16 %v2267, %v2267
      %2269 = vst [vmem:[#allocation2 + $0x50] sm:$0xf] %v2268
      %2270 = vrot.lane.b32.xlu0 %v1997, 113
      %v2271 = vpop.permute.xlu0 %2270
      %v2272 = vld [vmem:[%s511] sm:$0x1]
      %v2274 = vlaneseq
      %v2275 = vshrl.u32 %v2274, 7
      %v2276 = vsub.s32 0, %v2275
      %v2277 = vrot.slane %v2272, %v2276
      %v2279 = vmul.f32 %v2271, %v2277
      %v2280 = vpack.c.bf16 %v2279, %v2279
      %v2282 = vrot.slane %v2280, 4
      %2284 = vst [vmem:[#allocation2 + $0x50] sm:$0xf0] %v2282
      %2285 = vrot.lane.b32.xlu0 %v1997, 112
      %v2286 = vpop.permute.xlu0 %2285
      %v2287 = vld [vmem:[%s527] sm:$0x1]
      %v2289 = vlaneseq
      %v2290 = vshrl.u32 %v2289, 7
      %v2291 = vsub.s32 0, %v2290
      %v2292 = vrot.slane %v2287, %v2291
      %v2294 = vmul.f32 %v2286, %v2292
      %v2295 = vpack.c.bf16 %v2294, %v2294
      %2296 = vst [vmem:[#allocation2 + $0x58] sm:$0xf] %v2295
      %2297 = vrot.lane.b32.xlu0 %v1997, 111
      %v2298 = vpop.permute.xlu0 %2297
      %v2299 = vld [vmem:[%s540] sm:$0x1]
      %v2301 = vlaneseq
      %v2302 = vshrl.u32 %v2301, 7
      %v2303 = vsub.s32 0, %v2302
      %v2304 = vrot.slane %v2299, %v2303
      %v2306 = vmul.f32 %v2298, %v2304
      %v2307 = vpack.c.bf16 %v2306, %v2306
      %v2309 = vrot.slane %v2307, 4
      %2311 = vst [vmem:[#allocation2 + $0x58] sm:$0xf0] %v2309
      %2312 = vrot.lane.b32.xlu0 %v1997, 110
      %v2313 = vpop.permute.xlu0 %2312
      %v2314 = vld [vmem:[%s556] sm:$0x1]
      %v2316 = vlaneseq
      %v2317 = vshrl.u32 %v2316, 7
      %v2318 = vsub.s32 0, %v2317
      %v2319 = vrot.slane %v2314, %v2318
      %v2321 = vmul.f32 %v2313, %v2319
      %v2322 = vpack.c.bf16 %v2321, %v2321
      %2323 = vst [vmem:[#allocation2 + $0x60] sm:$0xf] %v2322
      %2324 = vrot.lane.b32.xlu0 %v1995, 18
      %v2325 = vpop.permute.xlu0 %2324
      %v2326 = vld [vmem:[%s1] sm:$0x1]
      %v2328 = vlaneseq
      %v2329 = vshrl.u32 %v2328, 7
      %v2330 = vsub.s32 0, %v2329
      %v2331 = vrot.slane %v2326, %v2330
      %v2333 = vmul.f32 %v2325, %v2331
      %v2334 = vpack.c.bf16 %v2333, %v2333
      %v2336 = vrot.slane %v2334, 4
      %2338 = vst [vmem:[#allocation2 + $0x60] sm:$0xf0] %v2336
      %2339 = vrot.lane.b32.xlu0 %v1995, 17
      %v2340 = vpop.permute.xlu0 %2339
      %v2341 = vld [vmem:[%s232] sm:$0x1]
      %v2343 = vlaneseq
      %v2344 = vshrl.u32 %v2343, 7
      %v2345 = vsub.s32 0, %v2344
      %v2346 = vrot.slane %v2341, %v2345
      %v2348 = vmul.f32 %v2340, %v2346
      %v2349 = vpack.c.bf16 %v2348, %v2348
      %2350 = vst [vmem:[#allocation2 + $0x68] sm:$0xf] %v2349
      %2351 = vrot.lane.b32.xlu0 %v1995, 16
      %v2352 = vpop.permute.xlu0 %2351
      %v2353 = vld [vmem:[%s248] sm:$0x1]
      %v2355 = vlaneseq
      %v2356 = vshrl.u32 %v2355, 7
      %v2357 = vsub.s32 0, %v2356
      %v2358 = vrot.slane %v2353, %v2357
      %v2360 = vmul.f32 %v2352, %v2358
      %v2361 = vpack.c.bf16 %v2360, %v2360
      %v2363 = vrot.slane %v2361, 4
      %2365 = vst [vmem:[#allocation2 + $0x68] sm:$0xf0] %v2363
      %2366 = vrot.lane.b32.xlu0 %v1995, 15
      %v2367 = vpop.permute.xlu0 %2366
      %v2368 = vld [vmem:[%s261] sm:$0x1]
      %v2370 = vlaneseq
      %v2371 = vshrl.u32 %v2370, 7
      %v2372 = vsub.s32 0, %v2371
      %v2373 = vrot.slane %v2368, %v2372
      %v2375 = vmul.f32 %v2367, %v2373
      %v2376 = vpack.c.bf16 %v2375, %v2375
      %2377 = vst [vmem:[#allocation2 + $0x70] sm:$0xf] %v2376
      %2378 = vrot.lane.b32.xlu0 %v1995, 14
      %v2379 = vpop.permute.xlu0 %2378
      %v2380 = vld [vmem:[%s277] sm:$0x1]
      %v2382 = vlaneseq
      %v2383 = vshrl.u32 %v2382, 7
      %v2384 = vsub.s32 0, %v2383
      %v2385 = vrot.slane %v2380, %v2384
      %v2387 = vmul.f32 %v2379, %v2385
      %v2388 = vpack.c.bf16 %v2387, %v2387
      %v2390 = vrot.slane %v2388, 4
      %2392 = vst [vmem:[#allocation2 + $0x70] sm:$0xf0] %v2390
      %2393 = vrot.lane.b32.xlu0 %v1995, 10
      %v2394 = vpop.permute.xlu0 %2393
      %v2395 = vld [vmem:[%s290] sm:$0x1]
      %v2397 = vlaneseq
      %v2398 = vshrl.u32 %v2397, 7
      %v2399 = vsub.s32 0, %v2398
      %v2400 = vrot.slane %v2395, %v2399
      %v2402 = vmul.f32 %v2394, %v2400
      %v2403 = vpack.c.bf16 %v2402, %v2402
      %2404 = vst [vmem:[#allocation2 + $0x78] sm:$0xf] %v2403
      %2405 = vrot.lane.b32.xlu0 %v1995, 9
      %v2406 = vpop.permute.xlu0 %2405
      %v2407 = vld [vmem:[%s306] sm:$0x1]
      %v2409 = vlaneseq
      %v2410 = vshrl.u32 %v2409, 7
      %v2411 = vsub.s32 0, %v2410
      %v2412 = vrot.slane %v2407, %v2411
      %v2414 = vmul.f32 %v2406, %v2412
      %v2415 = vpack.c.bf16 %v2414, %v2414
      %v2417 = vrot.slane %v2415, 4
      %2419 = vst [vmem:[#allocation2 + $0x78] sm:$0xf0] %v2417
      %2420 = vrot.lane.b32.xlu0 %v1995, 8
      %v2421 = vpop.permute.xlu0 %2420
      %v2422 = vld [vmem:[%s319] sm:$0x1]
      %v2424 = vlaneseq
      %v2425 = vshrl.u32 %v2424, 7
      %v2426 = vsub.s32 0, %v2425
      %v2427 = vrot.slane %v2422, %v2426
      %v2429 = vmul.f32 %v2421, %v2427
      %v2430 = vpack.c.bf16 %v2429, %v2429
      %2431 = vst [vmem:[#allocation2 + $0x80] sm:$0xf] %v2430
      %2432 = vrot.lane.b32.xlu0 %v1995, 7
      %v2433 = vpop.permute.xlu0 %2432
      %v2434 = vld [vmem:[%s335] sm:$0x1]
      %v2436 = vlaneseq
      %v2437 = vshrl.u32 %v2436, 7
      %v2438 = vsub.s32 0, %v2437
      %v2439 = vrot.slane %v2434, %v2438
      %v2441 = vmul.f32 %v2433, %v2439
      %v2442 = vpack.c.bf16 %v2441, %v2441
      %v2444 = vrot.slane %v2442, 4
      %2446 = vst [vmem:[#allocation2 + $0x80] sm:$0xf0] %v2444
      %2447 = vrot.lane.b32.xlu0 %v1995, 6
      %v2448 = vpop.permute.xlu0 %2447
      %v2449 = vld [vmem:[%s348] sm:$0x1]
      %v2451 = vlaneseq
      %v2452 = vshrl.u32 %v2451, 7
      %v2453 = vsub.s32 0, %v2452
      %v2454 = vrot.slane %v2449, %v2453
      %v2456 = vmul.f32 %v2448, %v2454
      %v2457 = vpack.c.bf16 %v2456, %v2456
      %2458 = vst [vmem:[#allocation2 + $0x88] sm:$0xf] %v2457
      %2459 = vrot.lane.b32.xlu0 %v1995, 2
      %v2460 = vpop.permute.xlu0 %2459
      %v2461 = vld [vmem:[%s364] sm:$0x1]
      %v2463 = vlaneseq
      %v2464 = vshrl.u32 %v2463, 7
      %v2465 = vsub.s32 0, %v2464
      %v2466 = vrot.slane %v2461, %v2465
      %v2468 = vmul.f32 %v2460, %v2466
      %v2469 = vpack.c.bf16 %v2468, %v2468
      %v2471 = vrot.slane %v2469, 4
      %2473 = vst [vmem:[#allocation2 + $0x88] sm:$0xf0] %v2471
      %2474 = vrot.lane.b32.xlu0 %v1995, 1
      %v2475 = vpop.permute.xlu0 %2474
      %v2476 = vld [vmem:[%s377] sm:$0x1]
      %v2478 = vlaneseq
      %v2479 = vshrl.u32 %v2478, 7
      %v2480 = vsub.s32 0, %v2479
      %v2481 = vrot.slane %v2476, %v2480
      %v2483 = vmul.f32 %v2475, %v2481
      %v2484 = vpack.c.bf16 %v2483, %v2483
      %2485 = vst [vmem:[#allocation2 + $0x90] sm:$0xf] %v2484
      %v2486 = vpack.c.bf16 %v1995, %v1995
      %v2488 = vrot.slane %v2486, 4
      %2490 = vst [vmem:[#allocation2 + $0x90] sm:$0xf0] %v2488
      %2491 = vrot.lane.b32.xlu0 %v1995, 127
      %v2492 = vpop.permute.xlu0 %2491
      %v2493 = vld [vmem:[%s395] sm:$0x1]
      %v2495 = vlaneseq
      %v2496 = vshrl.u32 %v2495, 7
      %v2497 = vsub.s32 0, %v2496
      %v2498 = vrot.slane %v2493, %v2497
      %v2500 = vmul.f32 %v2492, %v2498
      %v2501 = vpack.c.bf16 %v2500, %v2500
      %2502 = vst [vmem:[#allocation2 + $0x98] sm:$0xf] %v2501
      %2503 = vrot.lane.b32.xlu0 %v1995, 126
      %v2504 = vpop.permute.xlu0 %2503
      %v2505 = vld [vmem:[%s411] sm:$0x1]
      %v2507 = vlaneseq
      %v2508 = vshrl.u32 %v2507, 7
      %v2509 = vsub.s32 0, %v2508
      %v2510 = vrot.slane %v2505, %v2509
      %v2512 = vmul.f32 %v2504, %v2510
      %v2513 = vpack.c.bf16 %v2512, %v2512
      %v2515 = vrot.slane %v2513, 4
      %2517 = vst [vmem:[#allocation2 + $0x98] sm:$0xf0] %v2515
      %2518 = vrot.lane.b32.xlu0 %v1995, 122
      %v2519 = vpop.permute.xlu0 %2518
      %v2520 = vld [vmem:[%s424] sm:$0x1]
      %v2522 = vlaneseq
      %v2523 = vshrl.u32 %v2522, 7
      %v2524 = vsub.s32 0, %v2523
      %v2525 = vrot.slane %v2520, %v2524
      %v2527 = vmul.f32 %v2519, %v2525
      %v2528 = vpack.c.bf16 %v2527, %v2527
      %2529 = vst [vmem:[#allocation2 + $0xa0] sm:$0xf] %v2528
      %2530 = vrot.lane.b32.xlu0 %v1995, 121
      %v2531 = vpop.permute.xlu0 %2530
      %v2532 = vld [vmem:[%s440] sm:$0x1]
      %v2534 = vlaneseq
      %v2535 = vshrl.u32 %v2534, 7
      %v2536 = vsub.s32 0, %v2535
      %v2537 = vrot.slane %v2532, %v2536
      %v2539 = vmul.f32 %v2531, %v2537
      %v2540 = vpack.c.bf16 %v2539, %v2539
      %v2542 = vrot.slane %v2540, 4
      %2544 = vst [vmem:[#allocation2 + $0xa0] sm:$0xf0] %v2542
      %2545 = vrot.lane.b32.xlu0 %v1995, 120
      %v2546 = vpop.permute.xlu0 %2545
      %v2547 = vld [vmem:[%s453] sm:$0x1]
      %v2549 = vlaneseq
      %v2550 = vshrl.u32 %v2549, 7
      %v2551 = vsub.s32 0, %v2550
      %v2552 = vrot.slane %v2547, %v2551
      %v2554 = vmul.f32 %v2546, %v2552
      %v2555 = vpack.c.bf16 %v2554, %v2554
      %2556 = vst [vmem:[#allocation2 + $0xa8] sm:$0xf] %v2555
      %2557 = vrot.lane.b32.xlu0 %v1995, 119
      %v2558 = vpop.permute.xlu0 %2557
      %v2559 = vld [vmem:[%s469] sm:$0x1]
      %v2561 = vlaneseq
      %v2562 = vshrl.u32 %v2561, 7
      %v2563 = vsub.s32 0, %v2562
      %v2564 = vrot.slane %v2559, %v2563
      %v2566 = vmul.f32 %v2558, %v2564
      %v2567 = vpack.c.bf16 %v2566, %v2566
      %v2569 = vrot.slane %v2567, 4
      %2571 = vst [vmem:[#allocation2 + $0xa8] sm:$0xf0] %v2569
      %2572 = vrot.lane.b32.xlu0 %v1995, 118
      %v2573 = vpop.permute.xlu0 %2572
      %v2574 = vld [vmem:[%s482] sm:$0x1]
      %v2576 = vlaneseq
      %v2577 = vshrl.u32 %v2576, 7
      %v2578 = vsub.s32 0, %v2577
      %v2579 = vrot.slane %v2574, %v2578
      %v2581 = vmul.f32 %v2573, %v2579
      %v2582 = vpack.c.bf16 %v2581, %v2581
      %2583 = vst [vmem:[#allocation2 + $0xb0] sm:$0xf] %v2582
      %2584 = vrot.lane.b32.xlu0 %v1995, 114
      %v2585 = vpop.permute.xlu0 %2584
      %v2586 = vld [vmem:[%s498] sm:$0x1]
      %v2588 = vlaneseq
      %v2589 = vshrl.u32 %v2588, 7
      %v2590 = vsub.s32 0, %v2589
      %v2591 = vrot.slane %v2586, %v2590
      %v2593 = vmul.f32 %v2585, %v2591
      %v2594 = vpack.c.bf16 %v2593, %v2593
      %v2596 = vrot.slane %v2594, 4
      %2598 = vst [vmem:[#allocation2 + $0xb0] sm:$0xf0] %v2596
      %2599 = vrot.lane.b32.xlu0 %v1995, 113
      %v2600 = vpop.permute.xlu0 %2599
      %v2601 = vld [vmem:[%s511] sm:$0x1]
      %v2603 = vlaneseq
      %v2604 = vshrl.u32 %v2603, 7
      %v2605 = vsub.s32 0, %v2604
      %v2606 = vrot.slane %v2601, %v2605
      %v2608 = vmul.f32 %v2600, %v2606
      %v2609 = vpack.c.bf16 %v2608, %v2608
      %2610 = vst [vmem:[#allocation2 + $0xb8] sm:$0xf] %v2609
      %2611 = vrot.lane.b32.xlu0 %v1995, 112
      %v2612 = vpop.permute.xlu0 %2611
      %v2613 = vld [vmem:[%s527] sm:$0x1]
      %v2615 = vlaneseq
      %v2616 = vshrl.u32 %v2615, 7
      %v2617 = vsub.s32 0, %v2616
      %v2618 = vrot.slane %v2613, %v2617
      %v2620 = vmul.f32 %v2612, %v2618
      %v2621 = vpack.c.bf16 %v2620, %v2620
      %v2623 = vrot.slane %v2621, 4
      %2625 = vst [vmem:[#allocation2 + $0xb8] sm:$0xf0] %v2623
      %2626 = vrot.lane.b32.xlu0 %v1995, 111
      %v2627 = vpop.permute.xlu0 %2626
      %v2628 = vld [vmem:[%s540] sm:$0x1]
      %v2630 = vlaneseq
      %v2631 = vshrl.u32 %v2630, 7
      %v2632 = vsub.s32 0, %v2631
      %v2633 = vrot.slane %v2628, %v2632
      %v2635 = vmul.f32 %v2627, %v2633
      %v2636 = vpack.c.bf16 %v2635, %v2635
      %2637 = vst [vmem:[#allocation2 + $0xc0] sm:$0xf] %v2636
      %2638 = vrot.lane.b32.xlu0 %v1995, 110
      %v2639 = vpop.permute.xlu0 %2638
      %v2640 = vld [vmem:[%s556] sm:$0x1]
      %v2642 = vlaneseq
      %v2643 = vshrl.u32 %v2642, 7
      %v2644 = vsub.s32 0, %v2643
      %v2645 = vrot.slane %v2640, %v2644
      %v2647 = vmul.f32 %v2639, %v2645
      %v2648 = vpack.c.bf16 %v2647, %v2647
      %v2650 = vrot.slane %v2648, 4
      %2652 = vst [vmem:[#allocation2 + $0xc0] sm:$0xf0] %v2650
      %v2653 = vld [vmem:[%s206] sm:$0xff]
      %v2654 = vld [vmem:[%s206 + $0x8] sm:$0xff]
      %v2655 = vld [vmem:[%s206 + $0x10] sm:$0xff]
      %v2656 = vld [vmem:[%s206 + $0x18] sm:$0xff]
      %v2657 = vld [vmem:[%s206 + $0x20] sm:$0xff]
      %v2658 = vld [vmem:[%s206 + $0x28] sm:$0xff]
      %v2659 = vld [vmem:[%s206 + $0x30] sm:$0xff]
      %v2660 = vld [vmem:[%s206 + $0x38] sm:$0xff]
      %v2661 = vld [vmem:[#allocation2] sm:$0xff]
      %v2662 = vld [vmem:[#allocation2 + $0x8] sm:$0xff]
      %v2663 = vld [vmem:[#allocation2 + $0x10] sm:$0xff]
      %v2664 = vld [vmem:[#allocation2 + $0x18] sm:$0xff]
      %v2665 = vld [vmem:[#allocation2 + $0x20] sm:$0xff]
      %v2666 = vld [vmem:[#allocation2 + $0x28] sm:$0xff]
      %v2667 = vld [vmem:[#allocation2 + $0x30] sm:$0xff]
      %v2668 = vld [vmem:[#allocation2 + $0x38] sm:$0xff]
      %v2669 = vld [vmem:[#allocation2 + $0x40] sm:$0xff]
      %v2670 = vld [vmem:[#allocation2 + $0x48] sm:$0xff]
      %v2671 = vld [vmem:[#allocation2 + $0x50] sm:$0xff]
      %v2672 = vld [vmem:[#allocation2 + $0x58] sm:$0xff]
      %v2673 = vld [vmem:[#allocation2 + $0x60] sm:$0xff]
      %v2674 = vld [vmem:[#allocation2 + $0x68] sm:$0xff]
      %v2675 = vld [vmem:[#allocation2 + $0x70] sm:$0xff]
      %v2676 = vld [vmem:[#allocation2 + $0x78] sm:$0xff]
      %v2677 = vld [vmem:[#allocation2 + $0x80] sm:$0xff]
      %v2678 = vld [vmem:[#allocation2 + $0x88] sm:$0xff]
      %v2679 = vld [vmem:[#allocation2 + $0x90] sm:$0xff]
      %v2680 = vld [vmem:[#allocation2 + $0x98] sm:$0xff]
      %v2681 = vld [vmem:[#allocation2 + $0xa0] sm:$0xff]
      %v2682 = vld [vmem:[#allocation2 + $0xa8] sm:$0xff]
      %v2683 = vld [vmem:[#allocation2 + $0xb0] sm:$0xff]
      %v2684 = vld [vmem:[#allocation2 + $0xb8] sm:$0xff]
      %v2685 = vld [vmem:[#allocation2 + $0xc0] sm:$0xff]
      %v2686 = vld [vmem:[%s211] sm:$0xff]
      %v2687 = vld [vmem:[%s211 + $0x8] sm:$0xff]
      %v2688 = vld [vmem:[%s211 + $0x10] sm:$0xff]
      %v2689 = vld [vmem:[%s211 + $0x18] sm:$0xff]
      %2691 = vset.pattern.permute.xlu0 0
      %2692 = vperm.xlu0 %2691, %v2686
      %v2693 = vpop.permute.xlu0 %2692
      %2696 = vset.pattern.permute.xlu0 0
      %2697 = vperm.xlu0 %2696, %v2687
      %v2698 = vpop.permute.xlu0 %2697
      %2701 = vset.pattern.permute.xlu0 0
      %2702 = vperm.xlu0 %2701, %v2688
      %v2703 = vpop.permute.xlu0 %2702
      %2706 = vset.pattern.permute.xlu0 0
      %2707 = vperm.xlu0 %2706, %v2689
      %v2708 = vpop.permute.xlu0 %2707
      %v2718 = vunpack.c.l.b16 %v2653
      %v2719 = vunpack.c.h.b16 %v2653
      %v2720 = vunpack.c.l.b16 %v2654
      %v2721 = vunpack.c.h.b16 %v2654
      %v2722 = vunpack.c.l.b16 %v2655
      %v2723 = vunpack.c.h.b16 %v2655
      %v2724 = vunpack.c.l.b16 %v2656
      %v2725 = vunpack.c.h.b16 %v2656
      %v2726 = vunpack.c.l.b16 %v2657
      %v2727 = vunpack.c.h.b16 %v2657
      %v2728 = vunpack.c.l.b16 %v2658
      %v2729 = vunpack.c.h.b16 %v2658
      %v2730 = vunpack.c.l.b16 %v2659
      %v2731 = vunpack.c.h.b16 %v2659
      %v2732 = vunpack.c.l.b16 %v2660
      %v2733 = vunpack.c.h.b16 %v2660
      %v2734 = vpack.c.b16 %v2722, %v2718
      %v2735 = vpack.c.b16 %v2723, %v2719
      %v2736 = vpack.c.b16 %v2724, %v2720
      %v2737 = vpack.c.b16 %v2725, %v2721
      %v2738 = vpack.c.b16 %v2730, %v2726
      %v2739 = vpack.c.b16 %v2731, %v2727
      %v2740 = vpack.c.b16 %v2732, %v2728
      %v2741 = vpack.c.b16 %v2733, %v2729
      %v2749 = vsel %vm987, %v2737, 0
      %v2752 = vsel %vm987, %v2741, 0
      %2754 = vmatprep.subr.bf16.mxu0 0
      %2755 = vmatpush1.bf16.msra.mxu0 %v2661
      %2756 = vmatprep.subr.bf16.mxu0 0
      %2757 = vmatpush1.bf16.msra.mxu0 %v2662
      %2758 = vmatprep.subr.bf16.mxu0 0
      %2759 = vmatpush1.bf16.msra.mxu0 %v2663
      %2760 = vmatprep.subr.bf16.mxu0 0
      %2761 = vmatpush1.bf16.msra.mxu0 %v2664
      %2762 = vmatprep.subr.bf16.mxu0 0
      %2763 = vmatpush1.bf16.msra.mxu0 %v2665
      %2764 = vmatprep.subr.bf16.mxu0 0
      %2765 = vmatpush1.bf16.msra.mxu0 %v2666
      %2766 = vmatprep.subr.bf16.mxu0 0
      %2767 = vmatpush1.bf16.msra.mxu0 %v2667
      %2768 = vmatprep.subr.bf16.mxu0 0
      %2769 = vmatpush1.bf16.msra.mxu0 %v2668
      %2770 = vmatprep.subr.bf16.mxu0 0
      %2771 = vmatpush1.bf16.msra.mxu0 %v2669
      %2772 = vmatprep.subr.bf16.mxu0 0
      %2773 = vmatpush1.bf16.msra.mxu0 %v2670
      %2774 = vmatprep.subr.bf16.mxu0 0
      %2775 = vmatpush1.bf16.msra.mxu0 %v2671
      %2776 = vmatprep.subr.bf16.mxu0 0
      %2777 = vmatpush1.bf16.msra.mxu0 %v2672
      %2778 = vmatprep.subr.bf16.mxu0 0
      %2779 = vmatpush1.bf16.msra.mxu0 %v2673
      %2780 = vmatprep.subr.bf16.mxu0 0
      %2781 = vmatpush1.bf16.msra.mxu0 %v2674
      %2782 = vmatprep.subr.bf16.mxu0 0
      %2783 = vmatpush1.bf16.msra.mxu0 %v2675
      %2784 = vmatprep.subr.bf16.mxu0 0
      %2785 = vmatpush1.bf16.msra.mxu0 %v2676
      %2786 = vmatprep.mubr.bf16.mxu0 %v2735
      %2787 = vmatmul.mubr.bf16.gmra.mrb[0].mxu0 %v2734
      %v2788 = vpop.f32.mrb[0].mxu0
      %v2789 = vadd.f32 %v2693, %v2788
      %v2790 = vpop.f32.mrb[0].mxu0
      %v2791 = vpop.f32.mrb[0].mxu0
      %v2792 = vadd.f32 %v2698, %v2791
      %v2793 = vpop.f32.mrb[0].mxu0
      %2794 = vmatprep.mubr.bf16.mxu0 %v2739
      %2795 = vmatmul.mubr.bf16.gmra.mrb[0].mxu0 %v2738
      %v2796 = vpop.f32.mrb[0].mxu0
      %v2797 = vadd.f32 %v2703, %v2796
      %v2798 = vpop.f32.mrb[0].mxu0
      %v2799 = vpop.f32.mrb[0].mxu0
      %v2800 = vadd.f32 %v2708, %v2799
      %v2801 = vpop.f32.mrb[0].mxu0
      %2802 = vdwg.mxu0
      %2803 = vmatprep.subr.bf16.mxu0 0
      %2804 = vmatpush1.bf16.msra.mxu0 %v2677
      %2805 = vmatprep.subr.bf16.mxu0 0
      %2806 = vmatpush1.bf16.msra.mxu0 %v2678
      %2807 = vmatprep.subr.bf16.mxu0 0
      %2808 = vmatpush1.bf16.msra.mxu0 %v2679
      %2809 = vmatprep.subr.bf16.mxu0 0
      %2810 = vmatpush1.bf16.msra.mxu0 %v2680
      %2811 = vmatprep.subr.bf16.mxu0 0
      %2812 = vmatpush1.bf16.msra.mxu0 %v2681
      %2813 = vmatprep.subr.bf16.mxu0 0
      %2814 = vmatpush1.bf16.msra.mxu0 %v2682
      %2815 = vmatprep.subr.bf16.mxu0 0
      %2816 = vmatpush1.bf16.msra.mxu0 %v2683
      %2817 = vmatprep.subr.bf16.mxu0 0
      %2818 = vmatpush1.bf16.msra.mxu0 %v2684
      %2819 = vmatprep.subr.bf16.mxu0 0
      %2820 = vmatpush1.bf16.msra.mxu0 %v2685
      %2821 = vmatprep.subr.bf16.mxu0 0
      %2822 = vmatpush1.bf16.msra.mxu0 0
      %2823 = vmatprep.subr.bf16.mxu0 0
      %2824 = vmatpush1.bf16.msra.mxu0 0
      %2825 = vmatprep.subr.bf16.mxu0 0
      %2826 = vmatpush1.bf16.msra.mxu0 0
      %2827 = vmatprep.subr.bf16.mxu0 0
      %2828 = vmatpush1.bf16.msra.mxu0 0
      %2829 = vmatprep.subr.bf16.mxu0 0
      %2830 = vmatpush1.bf16.msra.mxu0 0
      %2831 = vmatprep.subr.bf16.mxu0 0
      %2832 = vmatpush1.bf16.msra.mxu0 0
      %2833 = vmatprep.subr.bf16.mxu0 0
      %2834 = vmatpush1.bf16.msra.mxu0 0
      %2835 = vmatprep.mubr.bf16.mxu0 %v2749
      %2836 = vmatmul.mubr.bf16.gmra.mrb[0].mxu0 %v2736
      %v2837 = vpop.f32.mrb[0].mxu0
      %v2838 = vadd.f32 %v2789, %v2837
      %v2839 = vpop.f32.mrb[0].mxu0
      %v2840 = vpop.f32.mrb[0].mxu0
      %v2841 = vadd.f32 %v2792, %v2840
      %v2842 = vpop.f32.mrb[0].mxu0
      %2843 = vmatprep.mubr.bf16.mxu0 %v2752
      %2844 = vmatmul.mubr.bf16.gmra.mrb[0].mxu0 %v2740
      %v2845 = vpop.f32.mrb[0].mxu0
      %v2846 = vadd.f32 %v2797, %v2845
      %v2847 = vpop.f32.mrb[0].mxu0
      %v2848 = vpop.f32.mrb[0].mxu0
      %v2849 = vadd.f32 %v2800, %v2848
      %v2850 = vpop.f32.mrb[0].mxu0
      %2851 = vdwg.mxu0
      %v2852 = vxor.u32 %v2838, 2147483648
      %v2853 = vxor.u32 %v2841, 2147483648
      %v2854 = vxor.u32 %v2846, 2147483648
      %v2855 = vmul.f32 %v2852, 1.442695
      %v2856 = vpow.pop %v2855
      %v2857 = vmul.f32 %v2853, 1.442695
      %v2858 = vpow.pop %v2857
      %v2859 = vmul.f32 %v2854, 1.442695
      %v2860 = vpow.pop %v2859
      %v2861 = vadd.f32 %v2856, 1.0
      %v2862 = vadd.f32 %v2858, 1.0
      %v2863 = vadd.f32 %v2860, 1.0
      %v2864 = vrcp.pop %v2861
      %v2865 = vmul.f32 1.0, %v2864
      %v2866 = vrcp.pop %v2862
      %v2867 = vmul.f32 1.0, %v2866
      %v2868 = vrcp.pop %v2863
      %v2869 = vmul.f32 1.0, %v2868
      %v2870 = vtanh.pop %v2849
      %v2871 = vmul.f32 %v2867, %v1993
      %v2872 = vmul.f32 %v2865, %v2870
      %v2873 = vadd.f32 %v2871, %v2872
      %v2874 = vtanh.pop %v2873
      %v2875 = vmul.f32 %v2869, %v2874
      %s2876 = scalar_lea.vmem %s0, 24
      %v2877 = vld [vmem:[%s2876] sm:$0xff]
      %2878 = vrot.lane.b32.xlu0 %v2877, 18
      %v2879 = vpop.permute.xlu0 %2878
      %v2880 = vld [vmem:[%s1] sm:$0x1]
      %v2882 = vlaneseq
      %v2883 = vshrl.u32 %v2882, 7
      %v2884 = vsub.s32 0, %v2883
      %v2885 = vrot.slane %v2880, %v2884
      %v2887 = vmul.f32 %v2879, %v2885
      %v2888 = vpack.c.bf16 %v2887, %v2887
      %2889 = vst [vmem:[#allocation2] sm:$0xf] %v2888
      %2890 = vrot.lane.b32.xlu0 %v2877, 17
      %v2891 = vpop.permute.xlu0 %2890
      %v2892 = vld [vmem:[%s232] sm:$0x1]
      %v2894 = vlaneseq
      %v2895 = vshrl.u32 %v2894, 7
      %v2896 = vsub.s32 0, %v2895
      %v2897 = vrot.slane %v2892, %v2896
      %v2899 = vmul.f32 %v2891, %v2897
      %v2900 = vpack.c.bf16 %v2899, %v2899
      %v2902 = vrot.slane %v2900, 4
      %2904 = vst [vmem:[#allocation2] sm:$0xf0] %v2902
      %2905 = vrot.lane.b32.xlu0 %v2877, 16
      %v2906 = vpop.permute.xlu0 %2905
      %v2907 = vld [vmem:[%s248] sm:$0x1]
      %v2909 = vlaneseq
      %v2910 = vshrl.u32 %v2909, 7
      %v2911 = vsub.s32 0, %v2910
      %v2912 = vrot.slane %v2907, %v2911
      %v2914 = vmul.f32 %v2906, %v2912
      %v2915 = vpack.c.bf16 %v2914, %v2914
      %2916 = vst [vmem:[#allocation2 + $0x8] sm:$0xf] %v2915
      %2917 = vrot.lane.b32.xlu0 %v2877, 15
      %v2918 = vpop.permute.xlu0 %2917
      %v2919 = vld [vmem:[%s261] sm:$0x1]
      %v2921 = vlaneseq
      %v2922 = vshrl.u32 %v2921, 7
      %v2923 = vsub.s32 0, %v2922
      %v2924 = vrot.slane %v2919, %v2923
      %v2926 = vmul.f32 %v2918, %v2924
      %v2927 = vpack.c.bf16 %v2926, %v2926
      %v2929 = vrot.slane %v2927, 4
      %2931 = vst [vmem:[#allocation2 + $0x8] sm:$0xf0] %v2929
      %2932 = vrot.lane.b32.xlu0 %v2877, 14
      %v2933 = vpop.permute.xlu0 %2932
      %v2934 = vld [vmem:[%s277] sm:$0x1]
      %v2936 = vlaneseq
      %v2937 = vshrl.u32 %v2936, 7
      %v2938 = vsub.s32 0, %v2937
      %v2939 = vrot.slane %v2934, %v2938
      %v2941 = vmul.f32 %v2933, %v2939
      %v2942 = vpack.c.bf16 %v2941, %v2941
      %2943 = vst [vmem:[#allocation2 + $0x10] sm:$0xf] %v2942
      %2944 = vrot.lane.b32.xlu0 %v2877, 10
      %v2945 = vpop.permute.xlu0 %2944
      %v2946 = vld [vmem:[%s290] sm:$0x1]
      %v2948 = vlaneseq
      %v2949 = vshrl.u32 %v2948, 7
      %v2950 = vsub.s32 0, %v2949
      %v2951 = vrot.slane %v2946, %v2950
      %v2953 = vmul.f32 %v2945, %v2951
      %v2954 = vpack.c.bf16 %v2953, %v2953
      %v2956 = vrot.slane %v2954, 4
      %2958 = vst [vmem:[#allocation2 + $0x10] sm:$0xf0] %v2956
      %2959 = vrot.lane.b32.xlu0 %v2877, 9
      %v2960 = vpop.permute.xlu0 %2959
      %v2961 = vld [vmem:[%s306] sm:$0x1]
      %v2963 = vlaneseq
      %v2964 = vshrl.u32 %v2963, 7
      %v2965 = vsub.s32 0, %v2964
      %v2966 = vrot.slane %v2961, %v2965
      %v2968 = vmul.f32 %v2960, %v2966
      %v2969 = vpack.c.bf16 %v2968, %v2968
      %2970 = vst [vmem:[#allocation2 + $0x18] sm:$0xf] %v2969
      %2971 = vrot.lane.b32.xlu0 %v2877, 8
      %v2972 = vpop.permute.xlu0 %2971
      %v2973 = vld [vmem:[%s319] sm:$0x1]
      %v2975 = vlaneseq
      %v2976 = vshrl.u32 %v2975, 7
      %v2977 = vsub.s32 0, %v2976
      %v2978 = vrot.slane %v2973, %v2977
      %v2980 = vmul.f32 %v2972, %v2978
      %v2981 = vpack.c.bf16 %v2980, %v2980
      %v2983 = vrot.slane %v2981, 4
      %2985 = vst [vmem:[#allocation2 + $0x18] sm:$0xf0] %v2983
      %2986 = vrot.lane.b32.xlu0 %v2877, 7
      %v2987 = vpop.permute.xlu0 %2986
      %v2988 = vld [vmem:[%s335] sm:$0x1]
      %v2990 = vlaneseq
      %v2991 = vshrl.u32 %v2990, 7
      %v2992 = vsub.s32 0, %v2991
      %v2993 = vrot.slane %v2988, %v2992
      %v2995 = vmul.f32 %v2987, %v2993
      %v2996 = vpack.c.bf16 %v2995, %v2995
      %2997 = vst [vmem:[#allocation2 + $0x20] sm:$0xf] %v2996
      %2998 = vrot.lane.b32.xlu0 %v2877, 6
      %v2999 = vpop.permute.xlu0 %2998
      %v3000 = vld [vmem:[%s348] sm:$0x1]
      %v3002 = vlaneseq
      %v3003 = vshrl.u32 %v3002, 7
      %v3004 = vsub.s32 0, %v3003
      %v3005 = vrot.slane %v3000, %v3004
      %v3007 = vmul.f32 %v2999, %v3005
      %v3008 = vpack.c.bf16 %v3007, %v3007
      %v3010 = vrot.slane %v3008, 4
      %3012 = vst [vmem:[#allocation2 + $0x20] sm:$0xf0] %v3010
      %3013 = vrot.lane.b32.xlu0 %v2877, 2
      %v3014 = vpop.permute.xlu0 %3013
      %v3015 = vld [vmem:[%s364] sm:$0x1]
      %v3017 = vlaneseq
      %v3018 = vshrl.u32 %v3017, 7
      %v3019 = vsub.s32 0, %v3018
      %v3020 = vrot.slane %v3015, %v3019
      %v3022 = vmul.f32 %v3014, %v3020
      %v3023 = vpack.c.bf16 %v3022, %v3022
      %3024 = vst [vmem:[#allocation2 + $0x28] sm:$0xf] %v3023
      %3025 = vrot.lane.b32.xlu0 %v2877, 1
      %v3026 = vpop.permute.xlu0 %3025
      %v3027 = vld [vmem:[%s377] sm:$0x1]
      %v3029 = vlaneseq
      %v3030 = vshrl.u32 %v3029, 7
      %v3031 = vsub.s32 0, %v3030
      %v3032 = vrot.slane %v3027, %v3031
      %v3034 = vmul.f32 %v3026, %v3032
      %v3035 = vpack.c.bf16 %v3034, %v3034
      %v3037 = vrot.slane %v3035, 4
      %3039 = vst [vmem:[#allocation2 + $0x28] sm:$0xf0] %v3037
      %v3040 = vpack.c.bf16 %v2877, %v2877
      %3041 = vst [vmem:[#allocation2 + $0x30] sm:$0xf] %v3040
      %3042 = vrot.lane.b32.xlu0 %v2877, 127
      %v3043 = vpop.permute.xlu0 %3042
      %v3044 = vld [vmem:[%s395] sm:$0x1]
      %v3046 = vlaneseq
      %v3047 = vshrl.u32 %v3046, 7
      %v3048 = vsub.s32 0, %v3047
      %v3049 = vrot.slane %v3044, %v3048
      %v3051 = vmul.f32 %v3043, %v3049
      %v3052 = vpack.c.bf16 %v3051, %v3051
      %v3054 = vrot.slane %v3052, 4
      %3056 = vst [vmem:[#allocation2 + $0x30] sm:$0xf0] %v3054
      %3057 = vrot.lane.b32.xlu0 %v2877, 126
      %v3058 = vpop.permute.xlu0 %3057
      %v3059 = vld [vmem:[%s411] sm:$0x1]
      %v3061 = vlaneseq
      %v3062 = vshrl.u32 %v3061, 7
      %v3063 = vsub.s32 0, %v3062
      %v3064 = vrot.slane %v3059, %v3063
      %v3066 = vmul.f32 %v3058, %v3064
      %v3067 = vpack.c.bf16 %v3066, %v3066
      %3068 = vst [vmem:[#allocation2 + $0x38] sm:$0xf] %v3067
      %3069 = vrot.lane.b32.xlu0 %v2877, 122
      %v3070 = vpop.permute.xlu0 %3069
      %v3071 = vld [vmem:[%s424] sm:$0x1]
      %v3073 = vlaneseq
      %v3074 = vshrl.u32 %v3073, 7
      %v3075 = vsub.s32 0, %v3074
      %v3076 = vrot.slane %v3071, %v3075
      %v3078 = vmul.f32 %v3070, %v3076
      %v3079 = vpack.c.bf16 %v3078, %v3078
      %v3081 = vrot.slane %v3079, 4
      %3083 = vst [vmem:[#allocation2 + $0x38] sm:$0xf0] %v3081
      %3084 = vrot.lane.b32.xlu0 %v2877, 121
      %v3085 = vpop.permute.xlu0 %3084
      %v3086 = vld [vmem:[%s440] sm:$0x1]
      %v3088 = vlaneseq
      %v3089 = vshrl.u32 %v3088, 7
      %v3090 = vsub.s32 0, %v3089
      %v3091 = vrot.slane %v3086, %v3090
      %v3093 = vmul.f32 %v3085, %v3091
      %v3094 = vpack.c.bf16 %v3093, %v3093
      %3095 = vst [vmem:[#allocation2 + $0x40] sm:$0xf] %v3094
      %3096 = vrot.lane.b32.xlu0 %v2877, 120
      %v3097 = vpop.permute.xlu0 %3096
      %v3098 = vld [vmem:[%s453] sm:$0x1]
      %v3100 = vlaneseq
      %v3101 = vshrl.u32 %v3100, 7
      %v3102 = vsub.s32 0, %v3101
      %v3103 = vrot.slane %v3098, %v3102
      %v3105 = vmul.f32 %v3097, %v3103
      %v3106 = vpack.c.bf16 %v3105, %v3105
      %v3108 = vrot.slane %v3106, 4
      %3110 = vst [vmem:[#allocation2 + $0x40] sm:$0xf0] %v3108
      %3111 = vrot.lane.b32.xlu0 %v2877, 119
      %v3112 = vpop.permute.xlu0 %3111
      %v3113 = vld [vmem:[%s469] sm:$0x1]
      %v3115 = vlaneseq
      %v3116 = vshrl.u32 %v3115, 7
      %v3117 = vsub.s32 0, %v3116
      %v3118 = vrot.slane %v3113, %v3117
      %v3120 = vmul.f32 %v3112, %v3118
      %v3121 = vpack.c.bf16 %v3120, %v3120
      %3122 = vst [vmem:[#allocation2 + $0x48] sm:$0xf] %v3121
      %3123 = vrot.lane.b32.xlu0 %v2877, 118
      %v3124 = vpop.permute.xlu0 %3123
      %v3125 = vld [vmem:[%s482] sm:$0x1]
      %v3127 = vlaneseq
      %v3128 = vshrl.u32 %v3127, 7
      %v3129 = vsub.s32 0, %v3128
      %v3130 = vrot.slane %v3125, %v3129
      %v3132 = vmul.f32 %v3124, %v3130
      %v3133 = vpack.c.bf16 %v3132, %v3132
      %v3135 = vrot.slane %v3133, 4
      %3137 = vst [vmem:[#allocation2 + $0x48] sm:$0xf0] %v3135
      %3138 = vrot.lane.b32.xlu0 %v2877, 114
      %v3139 = vpop.permute.xlu0 %3138
      %v3140 = vld [vmem:[%s498] sm:$0x1]
      %v3142 = vlaneseq
      %v3143 = vshrl.u32 %v3142, 7
      %v3144 = vsub.s32 0, %v3143
      %v3145 = vrot.slane %v3140, %v3144
      %v3147 = vmul.f32 %v3139, %v3145
      %v3148 = vpack.c.bf16 %v3147, %v3147
      %3149 = vst [vmem:[#allocation2 + $0x50] sm:$0xf] %v3148
      %3150 = vrot.lane.b32.xlu0 %v2877, 113
      %v3151 = vpop.permute.xlu0 %3150
      %v3152 = vld [vmem:[%s511] sm:$0x1]
      %v3154 = vlaneseq
      %v3155 = vshrl.u32 %v3154, 7
      %v3156 = vsub.s32 0, %v3155
      %v3157 = vrot.slane %v3152, %v3156
      %v3159 = vmul.f32 %v3151, %v3157
      %v3160 = vpack.c.bf16 %v3159, %v3159
      %v3162 = vrot.slane %v3160, 4
      %3164 = vst [vmem:[#allocation2 + $0x50] sm:$0xf0] %v3162
      %3165 = vrot.lane.b32.xlu0 %v2877, 112
      %v3166 = vpop.permute.xlu0 %3165
      %v3167 = vld [vmem:[%s527] sm:$0x1]
      %v3169 = vlaneseq
      %v3170 = vshrl.u32 %v3169, 7
      %v3171 = vsub.s32 0, %v3170
      %v3172 = vrot.slane %v3167, %v3171
      %v3174 = vmul.f32 %v3166, %v3172
      %v3175 = vpack.c.bf16 %v3174, %v3174
      %3176 = vst [vmem:[#allocation2 + $0x58] sm:$0xf] %v3175
      %3177 = vrot.lane.b32.xlu0 %v2877, 111
      %v3178 = vpop.permute.xlu0 %3177
      %v3179 = vld [vmem:[%s540] sm:$0x1]
      %v3181 = vlaneseq
      %v3182 = vshrl.u32 %v3181, 7
      %v3183 = vsub.s32 0, %v3182
      %v3184 = vrot.slane %v3179, %v3183
      %v3186 = vmul.f32 %v3178, %v3184
      %v3187 = vpack.c.bf16 %v3186, %v3186
      %v3189 = vrot.slane %v3187, 4
      %3191 = vst [vmem:[#allocation2 + $0x58] sm:$0xf0] %v3189
      %3192 = vrot.lane.b32.xlu0 %v2877, 110
      %v3193 = vpop.permute.xlu0 %3192
      %v3194 = vld [vmem:[%s556] sm:$0x1]
      %v3196 = vlaneseq
      %v3197 = vshrl.u32 %v3196, 7
      %v3198 = vsub.s32 0, %v3197
      %v3199 = vrot.slane %v3194, %v3198
      %v3201 = vmul.f32 %v3193, %v3199
      %v3202 = vpack.c.bf16 %v3201, %v3201
      %3203 = vst [vmem:[#allocation2 + $0x60] sm:$0xf] %v3202
      %3204 = vrot.lane.b32.xlu0 %v2875, 18
      %v3205 = vpop.permute.xlu0 %3204
      %v3206 = vld [vmem:[%s1] sm:$0x1]
      %v3208 = vlaneseq
      %v3209 = vshrl.u32 %v3208, 7
      %v3210 = vsub.s32 0, %v3209
      %v3211 = vrot.slane %v3206, %v3210
      %v3213 = vmul.f32 %v3205, %v3211
      %v3214 = vpack.c.bf16 %v3213, %v3213
      %v3216 = vrot.slane %v3214, 4
      %3218 = vst [vmem:[#allocation2 + $0x60] sm:$0xf0] %v3216
      %3219 = vrot.lane.b32.xlu0 %v2875, 17
      %v3220 = vpop.permute.xlu0 %3219
      %v3221 = vld [vmem:[%s232] sm:$0x1]
      %v3223 = vlaneseq
      %v3224 = vshrl.u32 %v3223, 7
      %v3225 = vsub.s32 0, %v3224
      %v3226 = vrot.slane %v3221, %v3225
      %v3228 = vmul.f32 %v3220, %v3226
      %v3229 = vpack.c.bf16 %v3228, %v3228
      %3230 = vst [vmem:[#allocation2 + $0x68] sm:$0xf] %v3229
      %3231 = vrot.lane.b32.xlu0 %v2875, 16
      %v3232 = vpop.permute.xlu0 %3231
      %v3233 = vld [vmem:[%s248] sm:$0x1]
      %v3235 = vlaneseq
      %v3236 = vshrl.u32 %v3235, 7
      %v3237 = vsub.s32 0, %v3236
      %v3238 = vrot.slane %v3233, %v3237
      %v3240 = vmul.f32 %v3232, %v3238
      %v3241 = vpack.c.bf16 %v3240, %v3240
      %v3243 = vrot.slane %v3241, 4
      %3245 = vst [vmem:[#allocation2 + $0x68] sm:$0xf0] %v3243
      %3246 = vrot.lane.b32.xlu0 %v2875, 15
      %v3247 = vpop.permute.xlu0 %3246
      %v3248 = vld [vmem:[%s261] sm:$0x1]
      %v3250 = vlaneseq
      %v3251 = vshrl.u32 %v3250, 7
      %v3252 = vsub.s32 0, %v3251
      %v3253 = vrot.slane %v3248, %v3252
      %v3255 = vmul.f32 %v3247, %v3253
      %v3256 = vpack.c.bf16 %v3255, %v3255
      %3257 = vst [vmem:[#allocation2 + $0x70] sm:$0xf] %v3256
      %3258 = vrot.lane.b32.xlu0 %v2875, 14
      %v3259 = vpop.permute.xlu0 %3258
      %v3260 = vld [vmem:[%s277] sm:$0x1]
      %v3262 = vlaneseq
      %v3263 = vshrl.u32 %v3262, 7
      %v3264 = vsub.s32 0, %v3263
      %v3265 = vrot.slane %v3260, %v3264
      %v3267 = vmul.f32 %v3259, %v3265
      %v3268 = vpack.c.bf16 %v3267, %v3267
      %v3270 = vrot.slane %v3268, 4
      %3272 = vst [vmem:[#allocation2 + $0x70] sm:$0xf0] %v3270
      %3273 = vrot.lane.b32.xlu0 %v2875, 10
      %v3274 = vpop.permute.xlu0 %3273
      %v3275 = vld [vmem:[%s290] sm:$0x1]
      %v3277 = vlaneseq
      %v3278 = vshrl.u32 %v3277, 7
      %v3279 = vsub.s32 0, %v3278
      %v3280 = vrot.slane %v3275, %v3279
      %v3282 = vmul.f32 %v3274, %v3280
      %v3283 = vpack.c.bf16 %v3282, %v3282
      %3284 = vst [vmem:[#allocation2 + $0x78] sm:$0xf] %v3283
      %3285 = vrot.lane.b32.xlu0 %v2875, 9
      %v3286 = vpop.permute.xlu0 %3285
      %v3287 = vld [vmem:[%s306] sm:$0x1]
      %v3289 = vlaneseq
      %v3290 = vshrl.u32 %v3289, 7
      %v3291 = vsub.s32 0, %v3290
      %v3292 = vrot.slane %v3287, %v3291
      %v3294 = vmul.f32 %v3286, %v3292
      %v3295 = vpack.c.bf16 %v3294, %v3294
      %v3297 = vrot.slane %v3295, 4
      %3299 = vst [vmem:[#allocation2 + $0x78] sm:$0xf0] %v3297
      %3300 = vrot.lane.b32.xlu0 %v2875, 8
      %v3301 = vpop.permute.xlu0 %3300
      %v3302 = vld [vmem:[%s319] sm:$0x1]
      %v3304 = vlaneseq
      %v3305 = vshrl.u32 %v3304, 7
      %v3306 = vsub.s32 0, %v3305
      %v3307 = vrot.slane %v3302, %v3306
      %v3309 = vmul.f32 %v3301, %v3307
      %v3310 = vpack.c.bf16 %v3309, %v3309
      %3311 = vst [vmem:[#allocation2 + $0x80] sm:$0xf] %v3310
      %3312 = vrot.lane.b32.xlu0 %v2875, 7
      %v3313 = vpop.permute.xlu0 %3312
      %v3314 = vld [vmem:[%s335] sm:$0x1]
      %v3316 = vlaneseq
      %v3317 = vshrl.u32 %v3316, 7
      %v3318 = vsub.s32 0, %v3317
      %v3319 = vrot.slane %v3314, %v3318
      %v3321 = vmul.f32 %v3313, %v3319
      %v3322 = vpack.c.bf16 %v3321, %v3321
      %v3324 = vrot.slane %v3322, 4
      %3326 = vst [vmem:[#allocation2 + $0x80] sm:$0xf0] %v3324
      %3327 = vrot.lane.b32.xlu0 %v2875, 6
      %v3328 = vpop.permute.xlu0 %3327
      %v3329 = vld [vmem:[%s348] sm:$0x1]
      %v3331 = vlaneseq
      %v3332 = vshrl.u32 %v3331, 7
      %v3333 = vsub.s32 0, %v3332
      %v3334 = vrot.slane %v3329, %v3333
      %v3336 = vmul.f32 %v3328, %v3334
      %v3337 = vpack.c.bf16 %v3336, %v3336
      %3338 = vst [vmem:[#allocation2 + $0x88] sm:$0xf] %v3337
      %3339 = vrot.lane.b32.xlu0 %v2875, 2
      %v3340 = vpop.permute.xlu0 %3339
      %v3341 = vld [vmem:[%s364] sm:$0x1]
      %v3343 = vlaneseq
      %v3344 = vshrl.u32 %v3343, 7
      %v3345 = vsub.s32 0, %v3344
      %v3346 = vrot.slane %v3341, %v3345
      %v3348 = vmul.f32 %v3340, %v3346
      %v3349 = vpack.c.bf16 %v3348, %v3348
      %v3351 = vrot.slane %v3349, 4
      %3353 = vst [vmem:[#allocation2 + $0x88] sm:$0xf0] %v3351
      %3354 = vrot.lane.b32.xlu0 %v2875, 1
      %v3355 = vpop.permute.xlu0 %3354
      %v3356 = vld [vmem:[%s377] sm:$0x1]
      %v3358 = vlaneseq
      %v3359 = vshrl.u32 %v3358, 7
      %v3360 = vsub.s32 0, %v3359
      %v3361 = vrot.slane %v3356, %v3360
      %v3363 = vmul.f32 %v3355, %v3361
      %v3364 = vpack.c.bf16 %v3363, %v3363
      %3365 = vst [vmem:[#allocation2 + $0x90] sm:$0xf] %v3364
      %v3366 = vpack.c.bf16 %v2875, %v2875
      %v3368 = vrot.slane %v3366, 4
      %3370 = vst [vmem:[#allocation2 + $0x90] sm:$0xf0] %v3368
      %3371 = vrot.lane.b32.xlu0 %v2875, 127
      %v3372 = vpop.permute.xlu0 %3371
      %v3373 = vld [vmem:[%s395] sm:$0x1]
      %v3375 = vlaneseq
      %v3376 = vshrl.u32 %v3375, 7
      %v3377 = vsub.s32 0, %v3376
      %v3378 = vrot.slane %v3373, %v3377
      %v3380 = vmul.f32 %v3372, %v3378
      %v3381 = vpack.c.bf16 %v3380, %v3380
      %3382 = vst [vmem:[#allocation2 + $0x98] sm:$0xf] %v3381
      %3383 = vrot.lane.b32.xlu0 %v2875, 126
      %v3384 = vpop.permute.xlu0 %3383
      %v3385 = vld [vmem:[%s411] sm:$0x1]
      %v3387 = vlaneseq
      %v3388 = vshrl.u32 %v3387, 7
      %v3389 = vsub.s32 0, %v3388
      %v3390 = vrot.slane %v3385, %v3389
      %v3392 = vmul.f32 %v3384, %v3390
      %v3393 = vpack.c.bf16 %v3392, %v3392
      %v3395 = vrot.slane %v3393, 4
      %3397 = vst [vmem:[#allocation2 + $0x98] sm:$0xf0] %v3395
      %3398 = vrot.lane.b32.xlu0 %v2875, 122
      %v3399 = vpop.permute.xlu0 %3398
      %v3400 = vld [vmem:[%s424] sm:$0x1]
      %v3402 = vlaneseq
      %v3403 = vshrl.u32 %v3402, 7
      %v3404 = vsub.s32 0, %v3403
      %v3405 = vrot.slane %v3400, %v3404
      %v3407 = vmul.f32 %v3399, %v3405
      %v3408 = vpack.c.bf16 %v3407, %v3407
      %3409 = vst [vmem:[#allocation2 + $0xa0] sm:$0xf] %v3408
      %3410 = vrot.lane.b32.xlu0 %v2875, 121
      %v3411 = vpop.permute.xlu0 %3410
      %v3412 = vld [vmem:[%s440] sm:$0x1]
      %v3414 = vlaneseq
      %v3415 = vshrl.u32 %v3414, 7
      %v3416 = vsub.s32 0, %v3415
      %v3417 = vrot.slane %v3412, %v3416
      %v3419 = vmul.f32 %v3411, %v3417
      %v3420 = vpack.c.bf16 %v3419, %v3419
      %v3422 = vrot.slane %v3420, 4
      %3424 = vst [vmem:[#allocation2 + $0xa0] sm:$0xf0] %v3422
      %3425 = vrot.lane.b32.xlu0 %v2875, 120
      %v3426 = vpop.permute.xlu0 %3425
      %v3427 = vld [vmem:[%s453] sm:$0x1]
      %v3429 = vlaneseq
      %v3430 = vshrl.u32 %v3429, 7
      %v3431 = vsub.s32 0, %v3430
      %v3432 = vrot.slane %v3427, %v3431
      %v3434 = vmul.f32 %v3426, %v3432
      %v3435 = vpack.c.bf16 %v3434, %v3434
      %3436 = vst [vmem:[#allocation2 + $0xa8] sm:$0xf] %v3435
      %3437 = vrot.lane.b32.xlu0 %v2875, 119
      %v3438 = vpop.permute.xlu0 %3437
      %v3439 = vld [vmem:[%s469] sm:$0x1]
      %v3441 = vlaneseq
      %v3442 = vshrl.u32 %v3441, 7
      %v3443 = vsub.s32 0, %v3442
      %v3444 = vrot.slane %v3439, %v3443
      %v3446 = vmul.f32 %v3438, %v3444
      %v3447 = vpack.c.bf16 %v3446, %v3446
      %v3449 = vrot.slane %v3447, 4
      %3451 = vst [vmem:[#allocation2 + $0xa8] sm:$0xf0] %v3449
      %3452 = vrot.lane.b32.xlu0 %v2875, 118
      %v3453 = vpop.permute.xlu0 %3452
      %v3454 = vld [vmem:[%s482] sm:$0x1]
      %v3456 = vlaneseq
      %v3457 = vshrl.u32 %v3456, 7
      %v3458 = vsub.s32 0, %v3457
      %v3459 = vrot.slane %v3454, %v3458
      %v3461 = vmul.f32 %v3453, %v3459
      %v3462 = vpack.c.bf16 %v3461, %v3461
      %3463 = vst [vmem:[#allocation2 + $0xb0] sm:$0xf] %v3462
      %3464 = vrot.lane.b32.xlu0 %v2875, 114
      %v3465 = vpop.permute.xlu0 %3464
      %v3466 = vld [vmem:[%s498] sm:$0x1]
      %v3468 = vlaneseq
      %v3469 = vshrl.u32 %v3468, 7
      %v3470 = vsub.s32 0, %v3469
      %v3471 = vrot.slane %v3466, %v3470
      %v3473 = vmul.f32 %v3465, %v3471
      %v3474 = vpack.c.bf16 %v3473, %v3473
      %v3476 = vrot.slane %v3474, 4
      %3478 = vst [vmem:[#allocation2 + $0xb0] sm:$0xf0] %v3476
      %3479 = vrot.lane.b32.xlu0 %v2875, 113
      %v3480 = vpop.permute.xlu0 %3479
      %v3481 = vld [vmem:[%s511] sm:$0x1]
      %v3483 = vlaneseq
      %v3484 = vshrl.u32 %v3483, 7
      %v3485 = vsub.s32 0, %v3484
      %v3486 = vrot.slane %v3481, %v3485
      %v3488 = vmul.f32 %v3480, %v3486
      %v3489 = vpack.c.bf16 %v3488, %v3488
      %3490 = vst [vmem:[#allocation2 + $0xb8] sm:$0xf] %v3489
      %3491 = vrot.lane.b32.xlu0 %v2875, 112
      %v3492 = vpop.permute.xlu0 %3491
      %v3493 = vld [vmem:[%s527] sm:$0x1]
      %v3495 = vlaneseq
      %v3496 = vshrl.u32 %v3495, 7
      %v3497 = vsub.s32 0, %v3496
      %v3498 = vrot.slane %v3493, %v3497
      %v3500 = vmul.f32 %v3492, %v3498
      %v3501 = vpack.c.bf16 %v3500, %v3500
      %v3503 = vrot.slane %v3501, 4
      %3505 = vst [vmem:[#allocation2 + $0xb8] sm:$0xf0] %v3503
      %3506 = vrot.lane.b32.xlu0 %v2875, 111
      %v3507 = vpop.permute.xlu0 %3506
      %v3508 = vld [vmem:[%s540] sm:$0x1]
      %v3510 = vlaneseq
      %v3511 = vshrl.u32 %v3510, 7
      %v3512 = vsub.s32 0, %v3511
      %v3513 = vrot.slane %v3508, %v3512
      %v3515 = vmul.f32 %v3507, %v3513
      %v3516 = vpack.c.bf16 %v3515, %v3515
      %3517 = vst [vmem:[#allocation2 + $0xc0] sm:$0xf] %v3516
      %3518 = vrot.lane.b32.xlu0 %v2875, 110
      %v3519 = vpop.permute.xlu0 %3518
      %v3520 = vld [vmem:[%s556] sm:$0x1]
      %v3522 = vlaneseq
      %v3523 = vshrl.u32 %v3522, 7
      %v3524 = vsub.s32 0, %v3523
      %v3525 = vrot.slane %v3520, %v3524
      %v3527 = vmul.f32 %v3519, %v3525
      %v3528 = vpack.c.bf16 %v3527, %v3527
      %v3530 = vrot.slane %v3528, 4
      %3532 = vst [vmem:[#allocation2 + $0xc0] sm:$0xf0] %v3530
      %v3533 = vld [vmem:[%s206] sm:$0xff]
      %v3534 = vld [vmem:[%s206 + $0x8] sm:$0xff]
      %v3535 = vld [vmem:[%s206 + $0x10] sm:$0xff]
      %v3536 = vld [vmem:[%s206 + $0x18] sm:$0xff]
      %v3537 = vld [vmem:[%s206 + $0x20] sm:$0xff]
      %v3538 = vld [vmem:[%s206 + $0x28] sm:$0xff]
      %v3539 = vld [vmem:[%s206 + $0x30] sm:$0xff]
      %v3540 = vld [vmem:[%s206 + $0x38] sm:$0xff]
      %v3541 = vld [vmem:[#allocation2] sm:$0xff]
      %v3542 = vld [vmem:[#allocation2 + $0x8] sm:$0xff]
      %v3543 = vld [vmem:[#allocation2 + $0x10] sm:$0xff]
      %v3544 = vld [vmem:[#allocation2 + $0x18] sm:$0xff]
      %v3545 = vld [vmem:[#allocation2 + $0x20] sm:$0xff]
      %v3546 = vld [vmem:[#allocation2 + $0x28] sm:$0xff]
      %v3547 = vld [vmem:[#allocation2 + $0x30] sm:$0xff]
      %v3548 = vld [vmem:[#allocation2 + $0x38] sm:$0xff]
      %v3549 = vld [vmem:[#allocation2 + $0x40] sm:$0xff]
      %v3550 = vld [vmem:[#allocation2 + $0x48] sm:$0xff]
      %v3551 = vld [vmem:[#allocation2 + $0x50] sm:$0xff]
      %v3552 = vld [vmem:[#allocation2 + $0x58] sm:$0xff]
      %v3553 = vld [vmem:[#allocation2 + $0x60] sm:$0xff]
      %v3554 = vld [vmem:[#allocation2 + $0x68] sm:$0xff]
      %v3555 = vld [vmem:[#allocation2 + $0x70] sm:$0xff]
      %v3556 = vld [vmem:[#allocation2 + $0x78] sm:$0xff]
      %v3557 = vld [vmem:[#allocation2 + $0x80] sm:$0xff]
      %v3558 = vld [vmem:[#allocation2 + $0x88] sm:$0xff]
      %v3559 = vld [vmem:[#allocation2 + $0x90] sm:$0xff]
      %v3560 = vld [vmem:[#allocation2 + $0x98] sm:$0xff]
      %v3561 = vld [vmem:[#allocation2 + $0xa0] sm:$0xff]
      %v3562 = vld [vmem:[#allocation2 + $0xa8] sm:$0xff]
      %v3563 = vld [vmem:[#allocation2 + $0xb0] sm:$0xff]
      %v3564 = vld [vmem:[#allocation2 + $0xb8] sm:$0xff]
      %v3565 = vld [vmem:[#allocation2 + $0xc0] sm:$0xff]
      %v3566 = vld [vmem:[%s211] sm:$0xff]
      %v3567 = vld [vmem:[%s211 + $0x8] sm:$0xff]
      %v3568 = vld [vmem:[%s211 + $0x10] sm:$0xff]
      %v3569 = vld [vmem:[%s211 + $0x18] sm:$0xff]
      %3571 = vset.pattern.permute.xlu0 0
      %3572 = vperm.xlu0 %3571, %v3566
      %v3573 = vpop.permute.xlu0 %3572
      %3576 = vset.pattern.permute.xlu0 0
      %3577 = vperm.xlu0 %3576, %v3567
      %v3578 = vpop.permute.xlu0 %3577
      %3581 = vset.pattern.permute.xlu0 0
      %3582 = vperm.xlu0 %3581, %v3568
      %v3583 = vpop.permute.xlu0 %3582
      %3585 = vset.pattern.permute.xlu0 0
      %3586 = vperm.xlu0 %3585, %v3569
      %v3587 = vpop.permute.xlu0 %3586
      %v3597 = vunpack.c.l.b16 %v3533
      %v3598 = vunpack.c.h.b16 %v3533
      %v3599 = vunpack.c.l.b16 %v3534
      %v3600 = vunpack.c.h.b16 %v3534
      %v3601 = vunpack.c.l.b16 %v3535
      %v3602 = vunpack.c.h.b16 %v3535
      %v3603 = vunpack.c.l.b16 %v3536
      %v3604 = vunpack.c.h.b16 %v3536
      %v3605 = vunpack.c.l.b16 %v3537
      %v3606 = vunpack.c.h.b16 %v3537
      %v3607 = vunpack.c.l.b16 %v3538
      %v3608 = vunpack.c.h.b16 %v3538
      %v3609 = vunpack.c.l.b16 %v3539
      %v3610 = vunpack.c.h.b16 %v3539
      %v3611 = vunpack.c.l.b16 %v3540
      %v3612 = vunpack.c.h.b16 %v3540
      %v3613 = vpack.c.b16 %v3601, %v3597
      %v3614 = vpack.c.b16 %v3602, %v3598
      %v3615 = vpack.c.b16 %v3603, %v3599
      %v3616 = vpack.c.b16 %v3604, %v3600
      %v3617 = vpack.c.b16 %v3609, %v3605
      %v3618 = vpack.c.b16 %v3610, %v3606
      %v3619 = vpack.c.b16 %v3611, %v3607
      %v3620 = vpack.c.b16 %v3612, %v3608
      %v3628 = vsel %vm987, %v3616, 0
      %v3631 = vsel %vm987, %v3620, 0
      %3633 = vmatprep.subr.bf16.mxu0 0
      %3634 = vmatpush1.bf16.msra.mxu0 %v3541
      %3635 = vmatprep.subr.bf16.mxu0 0
      %3636 = vmatpush1.bf16.msra.mxu0 %v3542
      %3637 = vmatprep.subr.bf16.mxu0 0
      %3638 = vmatpush1.bf16.msra.mxu0 %v3543
      %3639 = vmatprep.subr.bf16.mxu0 0
      %3640 = vmatpush1.bf16.msra.mxu0 %v3544
      %3641 = vmatprep.subr.bf16.mxu0 0
      %3642 = vmatpush1.bf16.msra.mxu0 %v3545
      %3643 = vmatprep.subr.bf16.mxu0 0
      %3644 = vmatpush1.bf16.msra.mxu0 %v3546
      %3645 = vmatprep.subr.bf16.mxu0 0
      %3646 = vmatpush1.bf16.msra.mxu0 %v3547
      %3647 = vmatprep.subr.bf16.mxu0 0
      %3648 = vmatpush1.bf16.msra.mxu0 %v3548
      %3649 = vmatprep.subr.bf16.mxu0 0
      %3650 = vmatpush1.bf16.msra.mxu0 %v3549
      %3651 = vmatprep.subr.bf16.mxu0 0
      %3652 = vmatpush1.bf16.msra.mxu0 %v3550
      %3653 = vmatprep.subr.bf16.mxu0 0
      %3654 = vmatpush1.bf16.msra.mxu0 %v3551
      %3655 = vmatprep.subr.bf16.mxu0 0
      %3656 = vmatpush1.bf16.msra.mxu0 %v3552
      %3657 = vmatprep.subr.bf16.mxu0 0
      %3658 = vmatpush1.bf16.msra.mxu0 %v3553
      %3659 = vmatprep.subr.bf16.mxu0 0
      %3660 = vmatpush1.bf16.msra.mxu0 %v3554
      %3661 = vmatprep.subr.bf16.mxu0 0
      %3662 = vmatpush1.bf16.msra.mxu0 %v3555
      %3663 = vmatprep.subr.bf16.mxu0 0
      %3664 = vmatpush1.bf16.msra.mxu0 %v3556
      %3665 = vmatprep.mubr.bf16.mxu0 %v3614
      %3666 = vmatmul.mubr.bf16.gmra.mrb[0].mxu0 %v3613
      %v3667 = vpop.f32.mrb[0].mxu0
      %v3668 = vadd.f32 %v3573, %v3667
      %v3669 = vpop.f32.mrb[0].mxu0
      %v3670 = vpop.f32.mrb[0].mxu0
      %v3671 = vadd.f32 %v3578, %v3670
      %v3672 = vpop.f32.mrb[0].mxu0
      %3673 = vmatprep.mubr.bf16.mxu0 %v3618
      %3674 = vmatmul.mubr.bf16.gmra.mrb[0].mxu0 %v3617
      %v3675 = vpop.f32.mrb[0].mxu0
      %v3676 = vpop.f32.mrb[0].mxu0
      %v3677 = vpop.f32.mrb[0].mxu0
      %v3678 = vadd.f32 %v3587, %v3677
      %v3679 = vpop.f32.mrb[0].mxu0
      %3680 = vdwg.mxu0
      %3681 = vmatprep.subr.bf16.mxu0 0
      %3682 = vmatpush1.bf16.msra.mxu0 %v3557
      %3683 = vmatprep.subr.bf16.mxu0 0
      %3684 = vmatpush1.bf16.msra.mxu0 %v3558
      %3685 = vmatprep.subr.bf16.mxu0 0
      %3686 = vmatpush1.bf16.msra.mxu0 %v3559
      %3687 = vmatprep.subr.bf16.mxu0 0
      %3688 = vmatpush1.bf16.msra.mxu0 %v3560
      %3689 = vmatprep.subr.bf16.mxu0 0
      %3690 = vmatpush1.bf16.msra.mxu0 %v3561
      %3691 = vmatprep.subr.bf16.mxu0 0
      %3692 = vmatpush1.bf16.msra.mxu0 %v3562
      %3693 = vmatprep.subr.bf16.mxu0 0
      %3694 = vmatpush1.bf16.msra.mxu0 %v3563
      %3695 = vmatprep.subr.bf16.mxu0 0
      %3696 = vmatpush1.bf16.msra.mxu0 %v3564
      %3697 = vmatprep.subr.bf16.mxu0 0
      %3698 = vmatpush1.bf16.msra.mxu0 %v3565
      %3699 = vmatprep.subr.bf16.mxu0 0
      %3700 = vmatpush1.bf16.msra.mxu0 0
      %3701 = vmatprep.subr.bf16.mxu0 0
      %3702 = vmatpush1.bf16.msra.mxu0 0
      %3703 = vmatprep.subr.bf16.mxu0 0
      %3704 = vmatpush1.bf16.msra.mxu0 0
      %3705 = vmatprep.subr.bf16.mxu0 0
      %3706 = vmatpush1.bf16.msra.mxu0 0
      %3707 = vmatprep.subr.bf16.mxu0 0
      %3708 = vmatpush1.bf16.msra.mxu0 0
      %3709 = vmatprep.subr.bf16.mxu0 0
      %3710 = vmatpush1.bf16.msra.mxu0 0
      %3711 = vmatprep.subr.bf16.mxu0 0
      %3712 = vmatpush1.bf16.msra.mxu0 0
      %3713 = vmatprep.mubr.bf16.mxu0 %v3628
      %3714 = vmatmul.mubr.bf16.gmra.mrb[0].mxu0 %v3615
      %v3715 = vpop.f32.mrb[0].mxu0
      %v3716 = vadd.f32 %v3668, %v3715
      %v3717 = vpop.f32.mrb[0].mxu0
      %v3718 = vpop.f32.mrb[0].mxu0
      %v3719 = vadd.f32 %v3671, %v3718
      %v3720 = vpop.f32.mrb[0].mxu0
      %3721 = vmatprep.mubr.bf16.mxu0 %v3631
      %3722 = vmatmul.mubr.bf16.gmra.mrb[0].mxu0 %v3619
      %v3723 = vpop.f32.mrb[0].mxu0
      %v3724 = vpop.f32.mrb[0].mxu0
      %v3725 = vpop.f32.mrb[0].mxu0
      %v3726 = vadd.f32 %v3678, %v3725
      %v3727 = vpop.f32.mrb[0].mxu0
      %3728 = vdwg.mxu0
      %v3729 = vxor.u32 %v3716, 2147483648
      %v3730 = vxor.u32 %v3719, 2147483648
      %v3731 = vmul.f32 %v3729, 1.442695
      %v3732 = vpow.pop %v3731
      %v3733 = vmul.f32 %v3730, 1.442695
      %v3734 = vpow.pop %v3733
      %v3735 = vadd.f32 %v3732, 1.0
      %v3736 = vadd.f32 %v3734, 1.0
      %v3737 = vrcp.pop %v3735
      %v3738 = vmul.f32 1.0, %v3737
      %v3739 = vrcp.pop %v3736
      %v3740 = vmul.f32 1.0, %v3739
      %v3741 = vtanh.pop %v3726
      %v3742 = vmul.f32 %v3740, %v2873
      %v3743 = vmul.f32 %v3738, %v3741
      %v3744 = vadd.f32 %v3742, %v3743
      %3745 = vst [vmem:[%s215] sm:$0xff] %v3744
      %p3746 = scmp.lt.s32.totalorder %s15, 1
      %s3747 = scalar_select %p3746, %s15, 1
      %s3748 = smul.addr %s3747, 8
      %s3749 = scalar_lea.vmem %s4, %s3748
      // Predicated region
      $region37: #{deeplatte_forward.4} parent=35 // pred_check
        %p3750 = pneg %p127
      $region38: #{deeplatte_forward.4} parent=35 // pred_check_branch
        %3752 = sbr.rel (%p3750) target = $region40
      $region39: #{deeplatte_forward.4} parent=35 // pred_region
        _
      $region40: #{deeplatte_forward.4} parent=35 // pred_fallthru
        _
    $region36: #{deeplatte_forward.4} parent=5 // pred_fallthru
      _
    %p3753 = scmp.le.s32.totalorder 2, %s10
    // Predicated region
    $region41: #{deeplatte_forward.4} parent=5 // pred_check
      %p3754 = pneg %p3753
    $region42: #{deeplatte_forward.4} parent=5 // pred_check_branch
      %3756 = sbr.rel (%p3754) target = $region44
    $region43: #{deeplatte_forward.4} parent=5 // pred_region
      %s3757 = ssub.s32 %s10, 2
      // Predicated region
      $region45: #{deeplatte_forward.4} parent=43 // pred_check
        %p3758 = pneg %p133
      $region46: #{deeplatte_forward.4} parent=43 // pred_check_branch
        %3760 = sbr.rel (%p3758) target = $region48
      $region47: #{deeplatte_forward.4} parent=43 // pred_region
        %p3761 = scmp.lt.s32.totalorder %s16, 1
        %s3762 = scalar_select %p3761, %s16, 1
        %s3763 = smul.addr %s3762, 8
        %s3764 = scalar_lea.vmem %s4, %s3763
      $region48: #{deeplatte_forward.4} parent=43 // pred_fallthru
        _
    $region44: #{deeplatte_forward.4} parent=5 // pred_fallthru
      _
  $region6: #{deeplatte_forward.4} parent=0 // loop_footer
    %s14 = sadd.s32 1, %s10
  $region7: #{deeplatte_forward.4} parent=0 // loop_footer_branch
    %9 = sbr.rel target = $region3
  $region8: #{deeplatte_forward.4} parent=0 // loop_exit
    _

</llo_original>
